<compile_context>
chip_gen: v7x
topology: tpu7x:2x2x1
jax: 0.10.0
libtpu: 0.0.40
codegen_flags: <defaults>
</compile_context>

<pallas_src>
import numpy as np
import jax
import jax.numpy as jnp
from jax.experimental import pallas as pl
from jax.experimental.pallas import tpu as pltpu

LANE = 128  # TPU lane width; all channel axes are padded to a multiple of this


def _bilinear_matrix(in_size, out_size):
    """align_corners=True bilinear interpolation matrix, shape (out, in)."""
    m = np.zeros((out_size, in_size), np.float32)
    for o in range(out_size):
        src = 0.0 if out_size == 1 else o * (in_size - 1) / (out_size - 1)
        i0 = min(int(np.floor(src)), in_size - 1)
        i1 = min(i0 + 1, in_size - 1)
        frac = src - i0
        m[o, i0] += 1.0 - frac
        m[o, i1] += frac
    return m


def _make_up_kernel(N, ih, iw, H2, W2, CP, eps, py0, px0):
    """Single-invocation kernel; all shapes static. CP = padded channel width."""
    H1u, W1u = 2 * ih, 2 * iw
    NHW = N * H2 * W2
    exact_fit = (py0 == 0 and px0 == 0 and H1u == H2 and W1u == W2)

    def zero_halo(ref):
        # zero only the 1-pixel conv-padding ring (interior is fully written)
        zr = jnp.zeros((N, 1, W2 + 2, CP), jnp.float32)
        zc = jnp.zeros((N, H2 + 2, 1, CP), jnp.float32)
        ref[:, 0:1, :, :] = zr
        ref[:, H2 + 1:H2 + 2, :, :] = zr
        ref[:, :, 0:1, :] = zc
        ref[:, :, W2 + 1:W2 + 2, :] = zc

    def build_patch(src_ref, patch_ref):
        # im2col: tap t of the 3x3 stencil goes to lanes [t*CP, (t+1)*CP)
        for t, (dy, dx) in enumerate((dy, dx) for dy in range(3)
                                     for dx in range(3)):
            win = src_ref[:, dy:dy + H2, dx:dx + W2, :]          # (N,H2,W2,CP)
            patch_ref[:, t * CP:(t + 1) * CP] = (
                win.reshape(NHW, CP).astype(jnp.bfloat16))

    def bn_relu(x, gamma, beta):
        # training-mode BatchNorm2d (batch stats, biased variance) + ReLU, f32.
        mean = jnp.mean(x, axis=0, keepdims=True)                # (1,CP)
        var = jnp.mean(jnp.square(x - mean), axis=0, keepdims=True)
        scale = gamma * jax.lax.rsqrt(var + eps)
        return jnp.maximum((x - mean) * scale + beta, 0.0)

    def kernel(x1_ref, x2_ref, u3_ref, w1_ref, g1_ref, be1_ref,
               w2_ref, g2_ref, be2_ref, out_ref,
               padcat_ref, padmid_ref, patch_ref):
        # ---- bilinear upsample (align_corners=True) as a single matmul ----
        up = jnp.dot(u3_ref[...], x1_ref[...],
                     preferred_element_type=jnp.float32)         # (N*H1u*W1u,CP)
        up = up.reshape(N, H1u, W1u, CP)

        # ---- conv1 input: cat([x2, up(x1)]) lives in disjoint channel slots,
        #      placed in the interior of a zero-halo buffer ----
        zero_halo(padcat_ref)
        if exact_fit:
            padcat_ref[:, 1:1 + H2, 1:1 + W2, :] = x2_ref[...] + up
        else:  # general F.pad placement of the upsampled tensor
            padcat_ref[:, 1:1 + H2, 1:1 + W2, :] = x2_ref[...]
            sl = (slice(None), slice(1 + py0, 1 + py0 + H1u),
                  slice(1 + px0, 1 + px0 + W1u), slice(None))
            padcat_ref[sl] = padcat_ref[sl] + up

        # ---- conv1: one im2col matmul (bias dropped; cancels under BN) ----
        build_patch(padcat_ref, patch_ref)
        acc1 = jnp.dot(patch_ref[...], w1_ref[...],
                       preferred_element_type=jnp.float32)       # (NHW,CP) f32
        y1 = bn_relu(acc1, g1_ref[...], be1_ref[...])

        zero_halo(padmid_ref)
        padmid_ref[:, 1:1 + H2, 1:1 + W2, :] = y1.reshape(N, H2, W2, CP)

        # ---- conv2: one im2col matmul (patch buffer reused) ----
        build_patch(padmid_ref, patch_ref)
        acc2 = jnp.dot(patch_ref[...], w2_ref[...],
                       preferred_element_type=jnp.float32)       # (NHW,CP) f32
        out_ref[...] = bn_relu(acc2, g2_ref[...], be2_ref[...])

    return kernel


def up_forward(x1_nchw, x2_nchw, params, eps=1e-5):
    """Wrapper: NCHW in / NCHW out, like the PyTorch module."""
    x1 = jnp.transpose(x1_nchw, (0, 2, 3, 1)).astype(jnp.float32)  # (N,ih,iw,C1)
    x2 = jnp.transpose(x2_nchw, (0, 2, 3, 1)).astype(jnp.float32)  # (N,H2,W2,C2)
    N, ih, iw, C1 = x1.shape
    _, H2, W2, C2 = x2.shape
    H1u, W1u = 2 * ih, 2 * iw
    diffY, diffX = H2 - H1u, W2 - W1u
    assert diffY >= 0 and diffX >= 0, "negative padding (crop) not supported"
    py0, px0 = diffY // 2, diffX // 2

    w1 = params["w1"]                      # (3,3,C1+C2,Cmid)
    w2 = params["w2"]                      # (3,3,Cmid,Cout)
    Ccat = C1 + C2
    Cmid, Cout = w1.shape[-1], w2.shape[-1]
    assert w1.shape[2] == Ccat and w2.shape[2] == Cmid
    CP = max(LANE, ((max(Ccat, Cmid, Cout) + LANE - 1) // LANE) * LANE)

    # lane-dense channel padding; concat becomes an add of disjoint slots
    x2p = jnp.zeros((N, H2, W2, CP), jnp.float32).at[..., :C2].set(x2)
    x1p = jnp.zeros((N, ih, iw, CP), jnp.float32).at[..., C2:C2 + C1].set(x1)
    x1flat = x1p.reshape(N * ih * iw, CP)

    # single-matmul bilinear upsample operator (block-diagonal over batch)
    u2 = np.kron(_bilinear_matrix(ih, H1u), _bilinear_matrix(iw, W1u))
    u3 = jnp.asarray(np.kron(np.eye(N, dtype=np.float32), u2), jnp.float32)

    def pad_w(w, cin, cout):               # (3,3,cin,cout) -> (9*CP, CP) bf16
        wp = jnp.zeros((3, 3, CP, CP), jnp.float32).at[:, :, :cin, :cout].set(w)
        return wp.reshape(9 * CP, CP).astype(jnp.bfloat16)

    def pad_vec(v, c):
        return jnp.zeros((1, CP), jnp.float32).at[0, :c].set(v)

    w1m, w2m = pad_w(w1, Ccat, Cmid), pad_w(w2, Cmid, Cout)
    g1, be1 = pad_vec(params["g1"], Cmid), pad_vec(params["be1"], Cmid)
    g2, be2 = pad_vec(params["g2"], Cout), pad_vec(params["be2"], Cout)
    # conv biases b1/b2 intentionally omitted: training-mode BN's mean
    # subtraction cancels any per-channel constant exactly.

    NHW = N * H2 * W2
    kernel = _make_up_kernel(N, ih, iw, H2, W2, CP, eps, py0, px0)
    vmem = pl.BlockSpec(memory_space=pltpu.MemorySpace.VMEM)

    out_flat = pl.pallas_call(
        kernel,
        out_shape=jax.ShapeDtypeStruct((NHW, CP), jnp.float32),
        in_specs=[vmem] * 9,
        out_specs=vmem,
        scratch_shapes=[
            pltpu.VMEM((N, H2 + 2, W2 + 2, CP), jnp.float32),  # padded concat in
            pltpu.VMEM((N, H2 + 2, W2 + 2, CP), jnp.float32),  # padded mid act
            pltpu.VMEM((NHW, 9 * CP), jnp.bfloat16),           # shared im2col
        ],
        compiler_params=pltpu.CompilerParams(
            vmem_limit_bytes=32 * 1024 * 1024),
    )(x1flat, x2p, u3, w1m, g1, be1, w2m, g2, be2)

    out = out_flat.reshape(N, H2, W2, CP)[..., :Cout]
    return jnp.transpose(out, (0, 3, 1, 2))                     # back to NCHW


def up_reference_numpy(x1_nchw, x2_nchw, p, eps=1e-5):
    """Independent NumPy reference of the same forward pass (with biases)."""
    x1 = np.transpose(x1_nchw, (0, 2, 3, 1)).astype(np.float32)
    x2 = np.transpose(x2_nchw, (0, 2, 3, 1)).astype(np.float32)
    N, ih, iw, C1 = x1.shape
    _, H2, W2, C2 = x2.shape
    H1u, W1u = 2 * ih, 2 * iw
    UH, UW = _bilinear_matrix(ih, H1u), _bilinear_matrix(iw, W1u)
    up = np.einsum("oi,nijc->nojc", UH, x1)
    up = np.einsum("pj,nojc->nopc", UW, up)
    dY, dX = H2 - H1u, W2 - W1u
    up = np.pad(up, ((0, 0), (dY // 2, dY - dY // 2),
                     (dX // 2, dX - dX // 2), (0, 0)))
    x = np.concatenate([x2, up], axis=-1)

    def conv3(x, w, b):
        Np, H, W, _ = x.shape
        xp = np.pad(x, ((0, 0), (1, 1), (1, 1), (0, 0)))
        out = np.zeros((Np, H, W, w.shape[-1]), np.float32) + b.reshape(1, 1, 1, -1)
        for dy in range(3):
            for dx in range(3):
                out += np.einsum("nhwc,cd->nhwd",
                                 xp[:, dy:dy + H, dx:dx + W, :], w[dy, dx])
        return out

    def bn_relu(x, g, b):
        m = x.mean(axis=(0, 1, 2))
        v = ((x - m) ** 2).mean(axis=(0, 1, 2))
        return np.maximum((x - m) / np.sqrt(v + eps) * g + b, 0.0)

    y = bn_relu(conv3(x, p["w1"], p["b1"]), p["g1"], p["be1"])
    y = bn_relu(conv3(y, p["w2"], p["b2"]), p["g2"], p["be2"])
    return np.transpose(y, (0, 3, 1, 2))


if __name__ == "__main__":
    # Up(in_channels=8, out_channels=4, bilinear=True):
    #   x1: (N, 4, 8, 8)   -- features from below
    #   x2: (N, 4, 16, 16) -- skip connection
    N, in_channels, out_channels = 2, 8, 4
    C1 = C2 = in_channels // 2
    Cmid = in_channels // 2          # DoubleConv mid_channels = in_channels // 2
    Cout = out_channels

    key = jax.random.PRNGKey(0)
    ks = jax.random.split(key, 10)
    x1 = jax.random.normal(ks[0], (N, C1, 8, 8), jnp.float32)
    x2 = jax.random.normal(ks[1], (N, C2, 16, 16), jnp.float32)

    # deterministic synthetic parameters (torch conv layout, then converted)
    w1_t = 0.1 * jax.random.normal(ks[2], (Cmid, in_channels, 3, 3), jnp.float32)
    b1 = 0.1 * jax.random.normal(ks[3], (Cmid,), jnp.float32)
    g1 = 1.0 + 0.1 * jax.random.normal(ks[4], (Cmid,), jnp.float32)
    be1 = 0.1 * jax.random.normal(ks[5], (Cmid,), jnp.float32)
    w2_t = 0.1 * jax.random.normal(ks[6], (Cout, Cmid, 3, 3), jnp.float32)
    b2 = 0.1 * jax.random.normal(ks[7], (Cout,), jnp.float32)
    g2 = 1.0 + 0.1 * jax.random.normal(ks[8], (Cout,), jnp.float32)
    be2 = 0.1 * jax.random.normal(ks[9], (Cout,), jnp.float32)

    params = dict(
        w1=jnp.transpose(w1_t, (2, 3, 1, 0)),   # (3,3,Cin,Cmid)
        b1=b1, g1=g1, be1=be1,
        w2=jnp.transpose(w2_t, (2, 3, 1, 0)),   # (3,3,Cmid,Cout)
        b2=b2, g2=g2, be2=be2,
    )

    out = jax.block_until_ready(up_forward(x1, x2, params))

    ref = up_reference_numpy(np.asarray(x1), np.asarray(x2),
                             {k: np.asarray(v) for k, v in params.items()})
    # loose tolerance: MXU operands are bf16 (reference is exact f32)
    np.testing.assert_allclose(np.asarray(out), ref, rtol=5e-2, atol=5e-2)
    print("KERNEL_OK")
</pallas_src>

<mosaic_0001>
module attributes {stable_mosaic.version = 11 : i64} {
  func.func @kernel(%arg0: memref<128x128xf32, #tpu.memory_space<vmem>>, %arg1: memref<2x16x16x128xf32, #tpu.memory_space<vmem>>, %arg2: memref<512x128xf32, #tpu.memory_space<vmem>>, %arg3: memref<1152x128xbf16, #tpu.memory_space<vmem>>, %arg4: memref<1x128xf32, #tpu.memory_space<vmem>>, %arg5: memref<1x128xf32, #tpu.memory_space<vmem>>, %arg6: memref<1152x128xbf16, #tpu.memory_space<vmem>>, %arg7: memref<1x128xf32, #tpu.memory_space<vmem>>, %arg8: memref<1x128xf32, #tpu.memory_space<vmem>>, %arg9: memref<512x128xf32, #tpu.memory_space<vmem>>, %arg10: memref<2x18x18x128xf32, #tpu.memory_space<vmem>>, %arg11: memref<2x18x18x128xf32, #tpu.memory_space<vmem>>, %arg12: memref<512x1152xbf16, #tpu.memory_space<vmem>>) attributes {dimension_semantics = [], scalar_prefetch = 0 : i64, scratch_operands = 3 : i64, tpu.core_type = #tpu.core_type<tc>} {
    %c0 = arith.constant 0 : index
    %c0_0 = arith.constant 0 : index
    %0 = vector.load %arg2[%c0, %c0_0] : memref<512x128xf32, #tpu.memory_space<vmem>>, vector<512x128xf32>
    %c0_1 = arith.constant 0 : index
    %c0_2 = arith.constant 0 : index
    %1 = vector.load %arg0[%c0_1, %c0_2] : memref<128x128xf32, #tpu.memory_space<vmem>>, vector<128x128xf32>
    %cst = arith.constant dense<0.000000e+00> : vector<512x128xf32>
    %2 = tpu.matmul %0, %1, %cst {dimension_numbers = #tpu.dot_dimension_numbers<[1], [0], [0], [1], [0, 0, 1, 1], [], []>} : vector<512x128xf32>, vector<128x128xf32>, vector<512x128xf32> -> vector<512x128xf32>
    %3 = vector.shape_cast %2 : vector<512x128xf32> to vector<2x16x16x128xf32>
    %cst_3 = arith.constant 0.000000e+00 : f32
    %4 = vector.broadcast %cst_3 : f32 to vector<2x1x18x128xf32>
    %cst_4 = arith.constant 0.000000e+00 : f32
    %5 = vector.broadcast %cst_4 : f32 to vector<2x18x1x128xf32>
    %c0_5 = arith.constant 0 : index
    %c0_6 = arith.constant 0 : index
    %c0_7 = arith.constant 0 : index
    %c0_8 = arith.constant 0 : index
    %6 = vector.load %arg10[%c0_5, %c0_6, %c0_7, %c0_8] : memref<2x18x18x128xf32, #tpu.memory_space<vmem>>, vector<2x1x18x128xf32>
    tpu.vector_store %arg10[%c0_5, %c0_6, %c0_7, %c0_8], %4 {strides = array<i32>} : memref<2x18x18x128xf32, #tpu.memory_space<vmem>>, vector<2x1x18x128xf32>,
    %c0_9 = arith.constant 0 : index
    %c17 = arith.constant 17 : index
    %c0_10 = arith.constant 0 : index
    %c0_11 = arith.constant 0 : index
    %7 = vector.load %arg10[%c0_9, %c17, %c0_10, %c0_11] : memref<2x18x18x128xf32, #tpu.memory_space<vmem>>, vector<2x1x18x128xf32>
    tpu.vector_store %arg10[%c0_9, %c17, %c0_10, %c0_11], %4 {strides = array<i32>} : memref<2x18x18x128xf32, #tpu.memory_space<vmem>>, vector<2x1x18x128xf32>,
    %c0_12 = arith.constant 0 : index
    %c0_13 = arith.constant 0 : index
    %c0_14 = arith.constant 0 : index
    %c0_15 = arith.constant 0 : index
    %8 = vector.load %arg10[%c0_12, %c0_13, %c0_14, %c0_15] : memref<2x18x18x128xf32, #tpu.memory_space<vmem>>, vector<2x18x1x128xf32>
    tpu.vector_store %arg10[%c0_12, %c0_13, %c0_14, %c0_15], %5 {strides = array<i32>} : memref<2x18x18x128xf32, #tpu.memory_space<vmem>>, vector<2x18x1x128xf32>,
    %c0_16 = arith.constant 0 : index
    %c0_17 = arith.constant 0 : index
    %c17_18 = arith.constant 17 : index
    %c0_19 = arith.constant 0 : index
    %9 = vector.load %arg10[%c0_16, %c0_17, %c17_18, %c0_19] : memref<2x18x18x128xf32, #tpu.memory_space<vmem>>, vector<2x18x1x128xf32>
    tpu.vector_store %arg10[%c0_16, %c0_17, %c17_18, %c0_19], %5 {strides = array<i32>} : memref<2x18x18x128xf32, #tpu.memory_space<vmem>>, vector<2x18x1x128xf32>,
    %c0_20 = arith.constant 0 : index
    %c0_21 = arith.constant 0 : index
    %c0_22 = arith.constant 0 : index
    %c0_23 = arith.constant 0 : index
    %10 = vector.load %arg1[%c0_20, %c0_21, %c0_22, %c0_23] : memref<2x16x16x128xf32, #tpu.memory_space<vmem>>, vector<2x16x16x128xf32>
    %11 = arith.addf %10, %3 : vector<2x16x16x128xf32>
    %c0_24 = arith.constant 0 : index
    %c1 = arith.constant 1 : index
    %c1_25 = arith.constant 1 : index
    %c0_26 = arith.constant 0 : index
    %12 = vector.load %arg10[%c0_24, %c1, %c1_25, %c0_26] : memref<2x18x18x128xf32, #tpu.memory_space<vmem>>, vector<2x16x16x128xf32>
    tpu.vector_store %arg10[%c0_24, %c1, %c1_25, %c0_26], %11 {strides = array<i32>} : memref<2x18x18x128xf32, #tpu.memory_space<vmem>>, vector<2x16x16x128xf32>,
    %c0_27 = arith.constant 0 : index
    %c0_28 = arith.constant 0 : index
    %c0_29 = arith.constant 0 : index
    %c0_30 = arith.constant 0 : index
    %13 = vector.load %arg10[%c0_27, %c0_28, %c0_29, %c0_30] : memref<2x18x18x128xf32, #tpu.memory_space<vmem>>, vector<2x16x16x128xf32>
    %14 = vector.shape_cast %13 : vector<2x16x16x128xf32> to vector<512x128xf32>
    %15 = arith.truncf %14 : vector<512x128xf32> to vector<512x128xbf16>
    %c0_31 = arith.constant 0 : index
    %c0_32 = arith.constant 0 : index
    %16 = vector.load %arg12[%c0_31, %c0_32] : memref<512x1152xbf16, #tpu.memory_space<vmem>>, vector<512x128xbf16>
    tpu.vector_store %arg12[%c0_31, %c0_32], %15 {strides = array<i32>} : memref<512x1152xbf16, #tpu.memory_space<vmem>>, vector<512x128xbf16>,
    %c0_33 = arith.constant 0 : index
    %c0_34 = arith.constant 0 : index
    %c1_35 = arith.constant 1 : index
    %c0_36 = arith.constant 0 : index
    %17 = vector.load %arg10[%c0_33, %c0_34, %c1_35, %c0_36] : memref<2x18x18x128xf32, #tpu.memory_space<vmem>>, vector<2x16x16x128xf32>
    %18 = vector.shape_cast %17 : vector<2x16x16x128xf32> to vector<512x128xf32>
    %19 = arith.truncf %18 : vector<512x128xf32> to vector<512x128xbf16>
    %c0_37 = arith.constant 0 : index
    %c128 = arith.constant 128 : index
    %20 = vector.load %arg12[%c0_37, %c128] : memref<512x1152xbf16, #tpu.memory_space<vmem>>, vector<512x128xbf16>
    tpu.vector_store %arg12[%c0_37, %c128], %19 {strides = array<i32>} : memref<512x1152xbf16, #tpu.memory_space<vmem>>, vector<512x128xbf16>,
    %c0_38 = arith.constant 0 : index
    %c0_39 = arith.constant 0 : index
    %c2 = arith.constant 2 : index
    %c0_40 = arith.constant 0 : index
    %21 = vector.load %arg10[%c0_38, %c0_39, %c2, %c0_40] : memref<2x18x18x128xf32, #tpu.memory_space<vmem>>, vector<2x16x16x128xf32>
    %22 = vector.shape_cast %21 : vector<2x16x16x128xf32> to vector<512x128xf32>
    %23 = arith.truncf %22 : vector<512x128xf32> to vector<512x128xbf16>
    %c0_41 = arith.constant 0 : index
    %c256 = arith.constant 256 : index
    %24 = vector.load %arg12[%c0_41, %c256] : memref<512x1152xbf16, #tpu.memory_space<vmem>>, vector<512x128xbf16>
    tpu.vector_store %arg12[%c0_41, %c256], %23 {strides = array<i32>} : memref<512x1152xbf16, #tpu.memory_space<vmem>>, vector<512x128xbf16>,
    %c0_42 = arith.constant 0 : index
    %c1_43 = arith.constant 1 : index
    %c0_44 = arith.constant 0 : index
    %c0_45 = arith.constant 0 : index
    %25 = vector.load %arg10[%c0_42, %c1_43, %c0_44, %c0_45] : memref<2x18x18x128xf32, #tpu.memory_space<vmem>>, vector<2x16x16x128xf32>
    %26 = vector.shape_cast %25 : vector<2x16x16x128xf32> to vector<512x128xf32>
    %27 = arith.truncf %26 : vector<512x128xf32> to vector<512x128xbf16>
    %c0_46 = arith.constant 0 : index
    %c384 = arith.constant 384 : index
    %28 = vector.load %arg12[%c0_46, %c384] : memref<512x1152xbf16, #tpu.memory_space<vmem>>, vector<512x128xbf16>
    tpu.vector_store %arg12[%c0_46, %c384], %27 {strides = array<i32>} : memref<512x1152xbf16, #tpu.memory_space<vmem>>, vector<512x128xbf16>,
    %c0_47 = arith.constant 0 : index
    %c1_48 = arith.constant 1 : index
    %c1_49 = arith.constant 1 : index
    %c0_50 = arith.constant 0 : index
    %29 = vector.load %arg10[%c0_47, %c1_48, %c1_49, %c0_50] : memref<2x18x18x128xf32, #tpu.memory_space<vmem>>, vector<2x16x16x128xf32>
    %30 = vector.shape_cast %29 : vector<2x16x16x128xf32> to vector<512x128xf32>
    %31 = arith.truncf %30 : vector<512x128xf32> to vector<512x128xbf16>
    %c0_51 = arith.constant 0 : index
    %c512 = arith.constant 512 : index
    %32 = vector.load %arg12[%c0_51, %c512] : memref<512x1152xbf16, #tpu.memory_space<vmem>>, vector<512x128xbf16>
    tpu.vector_store %arg12[%c0_51, %c512], %31 {strides = array<i32>} : memref<512x1152xbf16, #tpu.memory_space<vmem>>, vector<512x128xbf16>,
    %c0_52 = arith.constant 0 : index
    %c1_53 = arith.constant 1 : index
    %c2_54 = arith.constant 2 : index
    %c0_55 = arith.constant 0 : index
    %33 = vector.load %arg10[%c0_52, %c1_53, %c2_54, %c0_55] : memref<2x18x18x128xf32, #tpu.memory_space<vmem>>, vector<2x16x16x128xf32>
    %34 = vector.shape_cast %33 : vector<2x16x16x128xf32> to vector<512x128xf32>
    %35 = arith.truncf %34 : vector<512x128xf32> to vector<512x128xbf16>
    %c0_56 = arith.constant 0 : index
    %c640 = arith.constant 640 : index
    %36 = vector.load %arg12[%c0_56, %c640] : memref<512x1152xbf16, #tpu.memory_space<vmem>>, vector<512x128xbf16>
    tpu.vector_store %arg12[%c0_56, %c640], %35 {strides = array<i32>} : memref<512x1152xbf16, #tpu.memory_space<vmem>>, vector<512x128xbf16>,
    %c0_57 = arith.constant 0 : index
    %c2_58 = arith.constant 2 : index
    %c0_59 = arith.constant 0 : index
    %c0_60 = arith.constant 0 : index
    %37 = vector.load %arg10[%c0_57, %c2_58, %c0_59, %c0_60] : memref<2x18x18x128xf32, #tpu.memory_space<vmem>>, vector<2x16x16x128xf32>
    %38 = vector.shape_cast %37 : vector<2x16x16x128xf32> to vector<512x128xf32>
    %39 = arith.truncf %38 : vector<512x128xf32> to vector<512x128xbf16>
    %c0_61 = arith.constant 0 : index
    %c768 = arith.constant 768 : index
    %40 = vector.load %arg12[%c0_61, %c768] : memref<512x1152xbf16, #tpu.memory_space<vmem>>, vector<512x128xbf16>
    tpu.vector_store %arg12[%c0_61, %c768], %39 {strides = array<i32>} : memref<512x1152xbf16, #tpu.memory_space<vmem>>, vector<512x128xbf16>,
    %c0_62 = arith.constant 0 : index
    %c2_63 = arith.constant 2 : index
    %c1_64 = arith.constant 1 : index
    %c0_65 = arith.constant 0 : index
    %41 = vector.load %arg10[%c0_62, %c2_63, %c1_64, %c0_65] : memref<2x18x18x128xf32, #tpu.memory_space<vmem>>, vector<2x16x16x128xf32>
    %42 = vector.shape_cast %41 : vector<2x16x16x128xf32> to vector<512x128xf32>
    %43 = arith.truncf %42 : vector<512x128xf32> to vector<512x128xbf16>
    %c0_66 = arith.constant 0 : index
    %c896 = arith.constant 896 : index
    %44 = vector.load %arg12[%c0_66, %c896] : memref<512x1152xbf16, #tpu.memory_space<vmem>>, vector<512x128xbf16>
    tpu.vector_store %arg12[%c0_66, %c896], %43 {strides = array<i32>} : memref<512x1152xbf16, #tpu.memory_space<vmem>>, vector<512x128xbf16>,
    %c0_67 = arith.constant 0 : index
    %c2_68 = arith.constant 2 : index
    %c2_69 = arith.constant 2 : index
    %c0_70 = arith.constant 0 : index
    %45 = vector.load %arg10[%c0_67, %c2_68, %c2_69, %c0_70] : memref<2x18x18x128xf32, #tpu.memory_space<vmem>>, vector<2x16x16x128xf32>
    %46 = vector.shape_cast %45 : vector<2x16x16x128xf32> to vector<512x128xf32>
    %47 = arith.truncf %46 : vector<512x128xf32> to vector<512x128xbf16>
    %c0_71 = arith.constant 0 : index
    %c1024 = arith.constant 1024 : index
    %48 = vector.load %arg12[%c0_71, %c1024] : memref<512x1152xbf16, #tpu.memory_space<vmem>>, vector<512x128xbf16>
    tpu.vector_store %arg12[%c0_71, %c1024], %47 {strides = array<i32>} : memref<512x1152xbf16, #tpu.memory_space<vmem>>, vector<512x128xbf16>,
    %c0_72 = arith.constant 0 : index
    %c0_73 = arith.constant 0 : index
    %49 = vector.load %arg12[%c0_72, %c0_73] : memref<512x1152xbf16, #tpu.memory_space<vmem>>, vector<512x1152xbf16>
    %c0_74 = arith.constant 0 : index
    %c0_75 = arith.constant 0 : index
    %50 = vector.load %arg3[%c0_74, %c0_75] : memref<1152x128xbf16, #tpu.memory_space<vmem>>, vector<1152x128xbf16>
    %cst_76 = arith.constant dense<0.000000e+00> : vector<512x128xf32>
    %51 = tpu.matmul %49, %50, %cst_76 {dimension_numbers = #tpu.dot_dimension_numbers<[1], [0], [0], [1], [0, 0, 1, 1], [], []>} : vector<512x1152xbf16>, vector<1152x128xbf16>, vector<512x128xf32> -> vector<512x128xf32>
    %c0_77 = arith.constant 0 : index
    %c0_78 = arith.constant 0 : index
    %52 = vector.load %arg4[%c0_77, %c0_78] : memref<1x128xf32, #tpu.memory_space<vmem>>, vector<1x128xf32>
    %c0_79 = arith.constant 0 : index
    %c0_80 = arith.constant 0 : index
    %53 = vector.load %arg5[%c0_79, %c0_80] : memref<1x128xf32, #tpu.memory_space<vmem>>, vector<1x128xf32>
    %cst_81 = arith.constant dense<0.000000e+00> : vector<128xf32>
    %54 = vector.multi_reduction <add>, %51, %cst_81 [0] : vector<512x128xf32> to vector<128xf32>
    %55 = vector.shape_cast %54 : vector<128xf32> to vector<1x128xf32>
    %cst_82 = arith.constant 5.120000e+02 : f32
    %56 = vector.broadcast %cst_82 : f32 to vector<1x128xf32>
    %57 = arith.divf %55, %56 : vector<1x128xf32>
    %58 = vector.broadcast %57 : vector<1x128xf32> to vector<512x128xf32>
    %59 = arith.subf %51, %58 : vector<512x128xf32>
    %60 = arith.mulf %59, %59 : vector<512x128xf32>
    %cst_83 = arith.constant dense<0.000000e+00> : vector<128xf32>
    %61 = vector.multi_reduction <add>, %60, %cst_83 [0] : vector<512x128xf32> to vector<128xf32>
    %62 = vector.shape_cast %61 : vector<128xf32> to vector<1x128xf32>
    %cst_84 = arith.constant 5.120000e+02 : f32
    %63 = vector.broadcast %cst_84 : f32 to vector<1x128xf32>
    %64 = arith.divf %62, %63 : vector<1x128xf32>
    %cst_85 = arith.constant 9.99999974E-6 : f32
    %65 = vector.broadcast %cst_85 : f32 to vector<1x128xf32>
    %66 = arith.addf %64, %65 : vector<1x128xf32>
    %67 = math.rsqrt %66 : vector<1x128xf32>
    %68 = arith.mulf %52, %67 : vector<1x128xf32>
    %69 = vector.broadcast %57 : vector<1x128xf32> to vector<512x128xf32>
    %70 = arith.subf %51, %69 : vector<512x128xf32>
    %71 = vector.broadcast %68 : vector<1x128xf32> to vector<512x128xf32>
    %72 = arith.mulf %70, %71 : vector<512x128xf32>
    %73 = vector.broadcast %53 : vector<1x128xf32> to vector<512x128xf32>
    %74 = arith.addf %72, %73 : vector<512x128xf32>
    %cst_86 = arith.constant 0.000000e+00 : f32
    %75 = vector.broadcast %cst_86 : f32 to vector<512x128xf32>
    %76 = arith.maximumf %74, %75 : vector<512x128xf32>
    %cst_87 = arith.constant 0.000000e+00 : f32
    %77 = vector.broadcast %cst_87 : f32 to vector<2x1x18x128xf32>
    %cst_88 = arith.constant 0.000000e+00 : f32
    %78 = vector.broadcast %cst_88 : f32 to vector<2x18x1x128xf32>
    %c0_89 = arith.constant 0 : index
    %c0_90 = arith.constant 0 : index
    %c0_91 = arith.constant 0 : index
    %c0_92 = arith.constant 0 : index
    %79 = vector.load %arg11[%c0_89, %c0_90, %c0_91, %c0_92] : memref<2x18x18x128xf32, #tpu.memory_space<vmem>>, vector<2x1x18x128xf32>
    tpu.vector_store %arg11[%c0_89, %c0_90, %c0_91, %c0_92], %77 {strides = array<i32>} : memref<2x18x18x128xf32, #tpu.memory_space<vmem>>, vector<2x1x18x128xf32>,
    %c0_93 = arith.constant 0 : index
    %c17_94 = arith.constant 17 : index
    %c0_95 = arith.constant 0 : index
    %c0_96 = arith.constant 0 : index
    %80 = vector.load %arg11[%c0_93, %c17_94, %c0_95, %c0_96] : memref<2x18x18x128xf32, #tpu.memory_space<vmem>>, vector<2x1x18x128xf32>
    tpu.vector_store %arg11[%c0_93, %c17_94, %c0_95, %c0_96], %77 {strides = array<i32>} : memref<2x18x18x128xf32, #tpu.memory_space<vmem>>, vector<2x1x18x128xf32>,
    %c0_97 = arith.constant 0 : index
    %c0_98 = arith.constant 0 : index
    %c0_99 = arith.constant 0 : index
    %c0_100 = arith.constant 0 : index
    %81 = vector.load %arg11[%c0_97, %c0_98, %c0_99, %c0_100] : memref<2x18x18x128xf32, #tpu.memory_space<vmem>>, vector<2x18x1x128xf32>
    tpu.vector_store %arg11[%c0_97, %c0_98, %c0_99, %c0_100], %78 {strides = array<i32>} : memref<2x18x18x128xf32, #tpu.memory_space<vmem>>, vector<2x18x1x128xf32>,
    %c0_101 = arith.constant 0 : index
    %c0_102 = arith.constant 0 : index
    %c17_103 = arith.constant 17 : index
    %c0_104 = arith.constant 0 : index
    %82 = vector.load %arg11[%c0_101, %c0_102, %c17_103, %c0_104] : memref<2x18x18x128xf32, #tpu.memory_space<vmem>>, vector<2x18x1x128xf32>
    tpu.vector_store %arg11[%c0_101, %c0_102, %c17_103, %c0_104], %78 {strides = array<i32>} : memref<2x18x18x128xf32, #tpu.memory_space<vmem>>, vector<2x18x1x128xf32>,
    %83 = vector.shape_cast %76 : vector<512x128xf32> to vector<2x16x16x128xf32>
    %c0_105 = arith.constant 0 : index
    %c1_106 = arith.constant 1 : index
    %c1_107 = arith.constant 1 : index
    %c0_108 = arith.constant 0 : index
    %84 = vector.load %arg11[%c0_105, %c1_106, %c1_107, %c0_108] : memref<2x18x18x128xf32, #tpu.memory_space<vmem>>, vector<2x16x16x128xf32>
    tpu.vector_store %arg11[%c0_105, %c1_106, %c1_107, %c0_108], %83 {strides = array<i32>} : memref<2x18x18x128xf32, #tpu.memory_space<vmem>>, vector<2x16x16x128xf32>,
    %c0_109 = arith.constant 0 : index
    %c0_110 = arith.constant 0 : index
    %c0_111 = arith.constant 0 : index
    %c0_112 = arith.constant 0 : index
    %85 = vector.load %arg11[%c0_109, %c0_110, %c0_111, %c0_112] : memref<2x18x18x128xf32, #tpu.memory_space<vmem>>, vector<2x16x16x128xf32>
    %86 = vector.shape_cast %85 : vector<2x16x16x128xf32> to vector<512x128xf32>
    %87 = arith.truncf %86 : vector<512x128xf32> to vector<512x128xbf16>
    %c0_113 = arith.constant 0 : index
    %c0_114 = arith.constant 0 : index
    %88 = vector.load %arg12[%c0_113, %c0_114] : memref<512x1152xbf16, #tpu.memory_space<vmem>>, vector<512x128xbf16>
    tpu.vector_store %arg12[%c0_113, %c0_114], %87 {strides = array<i32>} : memref<512x1152xbf16, #tpu.memory_space<vmem>>, vector<512x128xbf16>,
    %c0_115 = arith.constant 0 : index
    %c0_116 = arith.constant 0 : index
    %c1_117 = arith.constant 1 : index
    %c0_118 = arith.constant 0 : index
    %89 = vector.load %arg11[%c0_115, %c0_116, %c1_117, %c0_118] : memref<2x18x18x128xf32, #tpu.memory_space<vmem>>, vector<2x16x16x128xf32>
    %90 = vector.shape_cast %89 : vector<2x16x16x128xf32> to vector<512x128xf32>
    %91 = arith.truncf %90 : vector<512x128xf32> to vector<512x128xbf16>
    %c0_119 = arith.constant 0 : index
    %c128_120 = arith.constant 128 : index
    %92 = vector.load %arg12[%c0_119, %c128_120] : memref<512x1152xbf16, #tpu.memory_space<vmem>>, vector<512x128xbf16>
    tpu.vector_store %arg12[%c0_119, %c128_120], %91 {strides = array<i32>} : memref<512x1152xbf16, #tpu.memory_space<vmem>>, vector<512x128xbf16>,
    %c0_121 = arith.constant 0 : index
    %c0_122 = arith.constant 0 : index
    %c2_123 = arith.constant 2 : index
    %c0_124 = arith.constant 0 : index
    %93 = vector.load %arg11[%c0_121, %c0_122, %c2_123, %c0_124] : memref<2x18x18x128xf32, #tpu.memory_space<vmem>>, vector<2x16x16x128xf32>
    %94 = vector.shape_cast %93 : vector<2x16x16x128xf32> to vector<512x128xf32>
    %95 = arith.truncf %94 : vector<512x128xf32> to vector<512x128xbf16>
    %c0_125 = arith.constant 0 : index
    %c256_126 = arith.constant 256 : index
    %96 = vector.load %arg12[%c0_125, %c256_126] : memref<512x1152xbf16, #tpu.memory_space<vmem>>, vector<512x128xbf16>
    tpu.vector_store %arg12[%c0_125, %c256_126], %95 {strides = array<i32>} : memref<512x1152xbf16, #tpu.memory_space<vmem>>, vector<512x128xbf16>,
    %c0_127 = arith.constant 0 : index
    %c1_128 = arith.constant 1 : index
    %c0_129 = arith.constant 0 : index
    %c0_130 = arith.constant 0 : index
    %97 = vector.load %arg11[%c0_127, %c1_128, %c0_129, %c0_130] : memref<2x18x18x128xf32, #tpu.memory_space<vmem>>, vector<2x16x16x128xf32>
    %98 = vector.shape_cast %97 : vector<2x16x16x128xf32> to vector<512x128xf32>
    %99 = arith.truncf %98 : vector<512x128xf32> to vector<512x128xbf16>
    %c0_131 = arith.constant 0 : index
    %c384_132 = arith.constant 384 : index
    %100 = vector.load %arg12[%c0_131, %c384_132] : memref<512x1152xbf16, #tpu.memory_space<vmem>>, vector<512x128xbf16>
    tpu.vector_store %arg12[%c0_131, %c384_132], %99 {strides = array<i32>} : memref<512x1152xbf16, #tpu.memory_space<vmem>>, vector<512x128xbf16>,
    %c0_133 = arith.constant 0 : index
    %c1_134 = arith.constant 1 : index
    %c1_135 = arith.constant 1 : index
    %c0_136 = arith.constant 0 : index
    %101 = vector.load %arg11[%c0_133, %c1_134, %c1_135, %c0_136] : memref<2x18x18x128xf32, #tpu.memory_space<vmem>>, vector<2x16x16x128xf32>
    %102 = vector.shape_cast %101 : vector<2x16x16x128xf32> to vector<512x128xf32>
    %103 = arith.truncf %102 : vector<512x128xf32> to vector<512x128xbf16>
    %c0_137 = arith.constant 0 : index
    %c512_138 = arith.constant 512 : index
    %104 = vector.load %arg12[%c0_137, %c512_138] : memref<512x1152xbf16, #tpu.memory_space<vmem>>, vector<512x128xbf16>
    tpu.vector_store %arg12[%c0_137, %c512_138], %103 {strides = array<i32>} : memref<512x1152xbf16, #tpu.memory_space<vmem>>, vector<512x128xbf16>,
    %c0_139 = arith.constant 0 : index
    %c1_140 = arith.constant 1 : index
    %c2_141 = arith.constant 2 : index
    %c0_142 = arith.constant 0 : index
    %105 = vector.load %arg11[%c0_139, %c1_140, %c2_141, %c0_142] : memref<2x18x18x128xf32, #tpu.memory_space<vmem>>, vector<2x16x16x128xf32>
    %106 = vector.shape_cast %105 : vector<2x16x16x128xf32> to vector<512x128xf32>
    %107 = arith.truncf %106 : vector<512x128xf32> to vector<512x128xbf16>
    %c0_143 = arith.constant 0 : index
    %c640_144 = arith.constant 640 : index
    %108 = vector.load %arg12[%c0_143, %c640_144] : memref<512x1152xbf16, #tpu.memory_space<vmem>>, vector<512x128xbf16>
    tpu.vector_store %arg12[%c0_143, %c640_144], %107 {strides = array<i32>} : memref<512x1152xbf16, #tpu.memory_space<vmem>>, vector<512x128xbf16>,
    %c0_145 = arith.constant 0 : index
    %c2_146 = arith.constant 2 : index
    %c0_147 = arith.constant 0 : index
    %c0_148 = arith.constant 0 : index
    %109 = vector.load %arg11[%c0_145, %c2_146, %c0_147, %c0_148] : memref<2x18x18x128xf32, #tpu.memory_space<vmem>>, vector<2x16x16x128xf32>
    %110 = vector.shape_cast %109 : vector<2x16x16x128xf32> to vector<512x128xf32>
    %111 = arith.truncf %110 : vector<512x128xf32> to vector<512x128xbf16>
    %c0_149 = arith.constant 0 : index
    %c768_150 = arith.constant 768 : index
    %112 = vector.load %arg12[%c0_149, %c768_150] : memref<512x1152xbf16, #tpu.memory_space<vmem>>, vector<512x128xbf16>
    tpu.vector_store %arg12[%c0_149, %c768_150], %111 {strides = array<i32>} : memref<512x1152xbf16, #tpu.memory_space<vmem>>, vector<512x128xbf16>,
    %c0_151 = arith.constant 0 : index
    %c2_152 = arith.constant 2 : index
    %c1_153 = arith.constant 1 : index
    %c0_154 = arith.constant 0 : index
    %113 = vector.load %arg11[%c0_151, %c2_152, %c1_153, %c0_154] : memref<2x18x18x128xf32, #tpu.memory_space<vmem>>, vector<2x16x16x128xf32>
    %114 = vector.shape_cast %113 : vector<2x16x16x128xf32> to vector<512x128xf32>
    %115 = arith.truncf %114 : vector<512x128xf32> to vector<512x128xbf16>
    %c0_155 = arith.constant 0 : index
    %c896_156 = arith.constant 896 : index
    %116 = vector.load %arg12[%c0_155, %c896_156] : memref<512x1152xbf16, #tpu.memory_space<vmem>>, vector<512x128xbf16>
    tpu.vector_store %arg12[%c0_155, %c896_156], %115 {strides = array<i32>} : memref<512x1152xbf16, #tpu.memory_space<vmem>>, vector<512x128xbf16>,
    %c0_157 = arith.constant 0 : index
    %c2_158 = arith.constant 2 : index
    %c2_159 = arith.constant 2 : index
    %c0_160 = arith.constant 0 : index
    %117 = vector.load %arg11[%c0_157, %c2_158, %c2_159, %c0_160] : memref<2x18x18x128xf32, #tpu.memory_space<vmem>>, vector<2x16x16x128xf32>
    %118 = vector.shape_cast %117 : vector<2x16x16x128xf32> to vector<512x128xf32>
    %119 = arith.truncf %118 : vector<512x128xf32> to vector<512x128xbf16>
    %c0_161 = arith.constant 0 : index
    %c1024_162 = arith.constant 1024 : index
    %120 = vector.load %arg12[%c0_161, %c1024_162] : memref<512x1152xbf16, #tpu.memory_space<vmem>>, vector<512x128xbf16>
    tpu.vector_store %arg12[%c0_161, %c1024_162], %119 {strides = array<i32>} : memref<512x1152xbf16, #tpu.memory_space<vmem>>, vector<512x128xbf16>,
    %c0_163 = arith.constant 0 : index
    %c0_164 = arith.constant 0 : index
    %121 = vector.load %arg12[%c0_163, %c0_164] : memref<512x1152xbf16, #tpu.memory_space<vmem>>, vector<512x1152xbf16>
    %c0_165 = arith.constant 0 : index
    %c0_166 = arith.constant 0 : index
    %122 = vector.load %arg6[%c0_165, %c0_166] : memref<1152x128xbf16, #tpu.memory_space<vmem>>, vector<1152x128xbf16>
    %cst_167 = arith.constant dense<0.000000e+00> : vector<512x128xf32>
    %123 = tpu.matmul %121, %122, %cst_167 {dimension_numbers = #tpu.dot_dimension_numbers<[1], [0], [0], [1], [0, 0, 1, 1], [], []>} : vector<512x1152xbf16>, vector<1152x128xbf16>, vector<512x128xf32> -> vector<512x128xf32>
    %c0_168 = arith.constant 0 : index
    %c0_169 = arith.constant 0 : index
    %124 = vector.load %arg7[%c0_168, %c0_169] : memref<1x128xf32, #tpu.memory_space<vmem>>, vector<1x128xf32>
    %c0_170 = arith.constant 0 : index
    %c0_171 = arith.constant 0 : index
    %125 = vector.load %arg8[%c0_170, %c0_171] : memref<1x128xf32, #tpu.memory_space<vmem>>, vector<1x128xf32>
    %cst_172 = arith.constant dense<0.000000e+00> : vector<128xf32>
    %126 = vector.multi_reduction <add>, %123, %cst_172 [0] : vector<512x128xf32> to vector<128xf32>
    %127 = vector.shape_cast %126 : vector<128xf32> to vector<1x128xf32>
    %cst_173 = arith.constant 5.120000e+02 : f32
    %128 = vector.broadcast %cst_173 : f32 to vector<1x128xf32>
    %129 = arith.divf %127, %128 : vector<1x128xf32>
    %130 = vector.broadcast %129 : vector<1x128xf32> to vector<512x128xf32>
    %131 = arith.subf %123, %130 : vector<512x128xf32>
    %132 = arith.mulf %131, %131 : vector<512x128xf32>
    %cst_174 = arith.constant dense<0.000000e+00> : vector<128xf32>
    %133 = vector.multi_reduction <add>, %132, %cst_174 [0] : vector<512x128xf32> to vector<128xf32>
    %134 = vector.shape_cast %133 : vector<128xf32> to vector<1x128xf32>
    %cst_175 = arith.constant 5.120000e+02 : f32
    %135 = vector.broadcast %cst_175 : f32 to vector<1x128xf32>
    %136 = arith.divf %134, %135 : vector<1x128xf32>
    %cst_176 = arith.constant 9.99999974E-6 : f32
    %137 = vector.broadcast %cst_176 : f32 to vector<1x128xf32>
    %138 = arith.addf %136, %137 : vector<1x128xf32>
    %139 = math.rsqrt %138 : vector<1x128xf32>
    %140 = arith.mulf %124, %139 : vector<1x128xf32>
    %141 = vector.broadcast %129 : vector<1x128xf32> to vector<512x128xf32>
    %142 = arith.subf %123, %141 : vector<512x128xf32>
    %143 = vector.broadcast %140 : vector<1x128xf32> to vector<512x128xf32>
    %144 = arith.mulf %142, %143 : vector<512x128xf32>
    %145 = vector.broadcast %125 : vector<1x128xf32> to vector<512x128xf32>
    %146 = arith.addf %144, %145 : vector<512x128xf32>
    %cst_177 = arith.constant 0.000000e+00 : f32
    %147 = vector.broadcast %cst_177 : f32 to vector<512x128xf32>
    %148 = arith.maximumf %146, %147 : vector<512x128xf32>
    %c0_178 = arith.constant 0 : index
    %c0_179 = arith.constant 0 : index
    %149 = vector.load %arg9[%c0_178, %c0_179] : memref<512x128xf32, #tpu.memory_space<vmem>>, vector<512x128xf32>
    tpu.vector_store %arg9[%c0_178, %c0_179], %148 {strides = array<i32>} : memref<512x128xf32, #tpu.memory_space<vmem>>, vector<512x128xf32>,
    return
  }
}

</mosaic_0001>

<llo_original>
// kernel: tpu_custom_call.1
$region0: #{tpu_custom_call.1}
  #allocation0 [shape = 'u32[]', space=smem, size = 0x4, offset = 0x4, fixed_abs, tag = 'smem constant byte address 0x4 - core index']
  #allocation1 [shape = 'u32[144,128]{1,0:T(1,128)}', space=vmem, size = 0x12000, scoped, tag = 'internal scratch']
  #allocation2 [shape = 'f32[2,18,18,128]{3,2,1,0:T(8,128)}', space=vmem, size = 0x6c000, scoped, tag = 'scratch operand']
  #allocation3 [shape = 'f32[2,18,18,128]{3,2,1,0:T(8,128)}', space=vmem, size = 0x6c000, scoped, tag = 'scratch operand']
  #allocation4 [shape = 'bf16[512,1152]{1,0:T(16,128)(2,1)}', space=vmem, size = 0x120000, scoped, tag = 'scratch operand']
  %s0 = inlined_call_operand.hbm [shape: f32[128,128], index: 0, kind: input, shape index: {}]
  %s1 = inlined_call_operand.hbm [shape: f32[2,16,16,128], index: 1, kind: input, shape index: {}]
  %s2 = inlined_call_operand.hbm [shape: f32[512,128], index: 2, kind: input, shape index: {}]
  %s3 = inlined_call_operand.hbm [shape: bf16[1152,128], index: 3, kind: input, shape index: {}]
  %s4 = inlined_call_operand.vmem [shape: f32[1,128], index: 4, kind: input, shape index: {}]
  %s5 = inlined_call_operand.vmem [shape: f32[1,128], index: 5, kind: input, shape index: {}]
  %s6 = inlined_call_operand.hbm [shape: bf16[1152,128], index: 6, kind: input, shape index: {}]
  %s7 = inlined_call_operand.vmem [shape: f32[1,128], index: 7, kind: input, shape index: {}]
  %s8 = inlined_call_operand.vmem [shape: f32[1,128], index: 8, kind: input, shape index: {}]
  %s9 = inlined_call_operand.hbm [shape: f32[512,128], index: 9, kind: output, shape index: {}]
  %s10 = sld [smem:[#allocation0]]
  $region66: #{tpu_custom_call.1} parent=0
    _
  %s12 = ssub.s32 1, %s10
  %s13 = scalar_select 0, %s12, %s10
  $region1: #{tpu_custom_call.1} parent=0
    #allocation5 [shape = 'u8[65536]{0}', space=vmem, size = 0x10000, scoped, tag = 'input window, operand 0, single buffered']
    #allocation6 [shape = 's32[1]{0}', space=sflag, size = 0x4, scoped, tag = 'scoped memory for tpu_custom_call.1']
    #allocation7 [shape = 's32[1]{0}', space=sflag, size = 0x4, scoped, tag = 'scoped memory for tpu_custom_call.1']
    #allocation8 [shape = 'u8[262144]{0}', space=vmem, size = 0x40000, scoped, tag = 'input window, operand 1, single buffered']
    #allocation9 [shape = 's32[1]{0}', space=sflag, size = 0x4, scoped, tag = 'scoped memory for tpu_custom_call.1']
    #allocation10 [shape = 'u8[262144]{0}', space=vmem, size = 0x40000, scoped, tag = 'input window, operand 2, single buffered']
    #allocation11 [shape = 'u8[294912]{0}', space=vmem, size = 0x48000, scoped, tag = 'input window, operand 3, single buffered']
    #allocation12 [shape = 's32[1]{0}', space=sflag, size = 0x4, scoped, tag = 'scoped memory for tpu_custom_call.1']
    #allocation13 [shape = 'u8[294912]{0}', space=vmem, size = 0x48000, scoped, tag = 'input window, operand 6, single buffered']
    #allocation14 [shape = 'u8[262144]{0}', space=vmem, size = 0x40000, scoped, tag = 'output window, operand 0, single buffered']
    %14 = vsyncpa [#allocation6], 0
    %15 = vsyncpa [#allocation9], 0
    %16 = vsyncpa [#allocation12], 0
    %17 = vsyncpa [#allocation7], 0
    // Predicated region
    $region2: #{tpu_custom_call.1} parent=1 // pred_check
      _
    $region3: #{tpu_custom_call.1} parent=1 // pred_check_branch
      %19 = sbr.rel (0) target = $region5
    $region4: #{tpu_custom_call.1} parent=1 // pred_region
      %s21 = ssub.s32 2048, 2048
      %22 = vsyncadd [#allocation6], %s21
      %s23 = sshll.u32 [#allocation5], 4
      %s24 = int_to_ptr.vmem [resolvable:$true] %s23
      %29 = dma.hbm_to_vmem [thread:$0]  %s0, 2048, %s24, [#allocation6], 128, 128, 8
    $region5: #{tpu_custom_call.1} parent=1 // pred_fallthru
      _
    // Predicated region
    $region6: #{tpu_custom_call.1} parent=1 // pred_check
      _
    $region7: #{tpu_custom_call.1} parent=1 // pred_check_branch
      %31 = sbr.rel (0) target = $region9
    $region8: #{tpu_custom_call.1} parent=1 // pred_region
      %s33 = ssub.s32 8192, 8192
      %34 = vsyncadd [#allocation9], %s33
      %s35 = sshll.u32 [#allocation8], 4
      %s36 = int_to_ptr.vmem [resolvable:$true] %s35
      %41 = dma.hbm_to_vmem [thread:$0]  %s1, 8192, %s36, [#allocation9], 128, 128, 8
    $region9: #{tpu_custom_call.1} parent=1 // pred_fallthru
      _
    // Predicated region
    $region10: #{tpu_custom_call.1} parent=1 // pred_check
      _
    $region11: #{tpu_custom_call.1} parent=1 // pred_check_branch
      %43 = sbr.rel (0) target = $region13
    $region12: #{tpu_custom_call.1} parent=1 // pred_region
      %s45 = ssub.s32 8192, 8192
      %46 = vsyncadd [#allocation9], %s45
      %s47 = sshll.u32 [#allocation10], 4
      %s48 = int_to_ptr.vmem [resolvable:$true] %s47
      %53 = dma.hbm_to_vmem [thread:$0]  %s2, 8192, %s48, [#allocation9], 128, 128, 8
    $region13: #{tpu_custom_call.1} parent=1 // pred_fallthru
      _
    // Predicated region
    $region14: #{tpu_custom_call.1} parent=1 // pred_check
      _
    $region15: #{tpu_custom_call.1} parent=1 // pred_check_branch
      %55 = sbr.rel (0) target = $region17
    $region16: #{tpu_custom_call.1} parent=1 // pred_region
      %s57 = ssub.s32 9216, 9216
      %58 = vsyncadd [#allocation12], %s57
      %s59 = sshll.u32 [#allocation11], 4
      %s60 = int_to_ptr.vmem [resolvable:$true] %s59
      %65 = dma.hbm_to_vmem [thread:$0]  %s3, 9216, %s60, [#allocation12], 64, 64, 4
    $region17: #{tpu_custom_call.1} parent=1 // pred_fallthru
      _
    // Predicated region
    $region18: #{tpu_custom_call.1} parent=1 // pred_check
      _
    $region19: #{tpu_custom_call.1} parent=1 // pred_check_branch
      %67 = sbr.rel (0) target = $region21
    $region20: #{tpu_custom_call.1} parent=1 // pred_region
      _
    $region21: #{tpu_custom_call.1} parent=1 // pred_fallthru
      _
    // Predicated region
    $region22: #{tpu_custom_call.1} parent=1 // pred_check
      _
    $region23: #{tpu_custom_call.1} parent=1 // pred_check_branch
      %69 = sbr.rel (0) target = $region25
    $region24: #{tpu_custom_call.1} parent=1 // pred_region
      _
    $region25: #{tpu_custom_call.1} parent=1 // pred_fallthru
      _
    // Predicated region
    $region26: #{tpu_custom_call.1} parent=1 // pred_check
      _
    $region27: #{tpu_custom_call.1} parent=1 // pred_check_branch
      %71 = sbr.rel (0) target = $region29
    $region28: #{tpu_custom_call.1} parent=1 // pred_region
      %s73 = ssub.s32 9216, 9216
      %74 = vsyncadd [#allocation12], %s73
      %s75 = sshll.u32 [#allocation13], 4
      %s76 = int_to_ptr.vmem [resolvable:$true] %s75
      %81 = dma.hbm_to_vmem [thread:$0]  %s6, 9216, %s76, [#allocation12], 64, 64, 4
    $region29: #{tpu_custom_call.1} parent=1 // pred_fallthru
      _
    // Predicated region
    $region30: #{tpu_custom_call.1} parent=1 // pred_check
      _
    $region31: #{tpu_custom_call.1} parent=1 // pred_check_branch
      %83 = sbr.rel (0) target = $region33
    $region32: #{tpu_custom_call.1} parent=1 // pred_region
      _
    $region33: #{tpu_custom_call.1} parent=1 // pred_fallthru
      _
    // Predicated region
    $region34: #{tpu_custom_call.1} parent=1 // pred_check
      _
    $region35: #{tpu_custom_call.1} parent=1 // pred_check_branch
      %85 = sbr.rel (0) target = $region37
    $region36: #{tpu_custom_call.1} parent=1 // pred_region
      _
    $region37: #{tpu_custom_call.1} parent=1 // pred_fallthru
      _
    // Predicated region
    $region38: #{tpu_custom_call.1} parent=1 // pred_check
      _
    $region39: #{tpu_custom_call.1} parent=1 // pred_check_branch
      %87 = sbr.rel (0) target = $region41
    $region40: #{tpu_custom_call.1} parent=1 // pred_region
      %88 = dma.done [#allocation6], 2048
    $region41: #{tpu_custom_call.1} parent=1 // pred_fallthru
      _
    // Predicated region
    $region42: #{tpu_custom_call.1} parent=1 // pred_check
      _
    $region43: #{tpu_custom_call.1} parent=1 // pred_check_branch
      %90 = sbr.rel (0) target = $region45
    $region44: #{tpu_custom_call.1} parent=1 // pred_region
      %91 = dma.done [#allocation9], 8192
    $region45: #{tpu_custom_call.1} parent=1 // pred_fallthru
      _
    // Predicated region
    $region46: #{tpu_custom_call.1} parent=1 // pred_check
      _
    $region47: #{tpu_custom_call.1} parent=1 // pred_check_branch
      %93 = sbr.rel (0) target = $region49
    $region48: #{tpu_custom_call.1} parent=1 // pred_region
      %94 = dma.done [#allocation9], 8192
    $region49: #{tpu_custom_call.1} parent=1 // pred_fallthru
      _
    // Predicated region
    $region50: #{tpu_custom_call.1} parent=1 // pred_check
      _
    $region51: #{tpu_custom_call.1} parent=1 // pred_check_branch
      %96 = sbr.rel (0) target = $region53
    $region52: #{tpu_custom_call.1} parent=1 // pred_region
      %97 = dma.done [#allocation12], 9216
    $region53: #{tpu_custom_call.1} parent=1 // pred_fallthru
      _
    // Predicated region
    $region54: #{tpu_custom_call.1} parent=1 // pred_check
      _
    $region55: #{tpu_custom_call.1} parent=1 // pred_check_branch
      %99 = sbr.rel (0) target = $region57
    $region56: #{tpu_custom_call.1} parent=1 // pred_region
      %100 = dma.done [#allocation12], 9216
    $region57: #{tpu_custom_call.1} parent=1 // pred_fallthru
      _
    %v102 = vld [vmem:[#allocation10] sm:$0xff]
    %v103 = vld [vmem:[#allocation10 + $0x8] sm:$0xff]
    %v104 = vld [vmem:[#allocation10 + $0x10] sm:$0xff]
    %v105 = vld [vmem:[#allocation10 + $0x18] sm:$0xff]
    %v106 = vld [vmem:[#allocation10 + $0x20] sm:$0xff]
    %v107 = vld [vmem:[#allocation10 + $0x28] sm:$0xff]
    %v108 = vld [vmem:[#allocation10 + $0x30] sm:$0xff]
    %v109 = vld [vmem:[#allocation10 + $0x38] sm:$0xff]
    %v110 = vld [vmem:[#allocation10 + $0x40] sm:$0xff]
    %v111 = vld [vmem:[#allocation10 + $0x48] sm:$0xff]
    %v112 = vld [vmem:[#allocation10 + $0x50] sm:$0xff]
    %v113 = vld [vmem:[#allocation10 + $0x58] sm:$0xff]
    %v114 = vld [vmem:[#allocation10 + $0x60] sm:$0xff]
    %v115 = vld [vmem:[#allocation10 + $0x68] sm:$0xff]
    %v116 = vld [vmem:[#allocation10 + $0x70] sm:$0xff]
    %v117 = vld [vmem:[#allocation10 + $0x78] sm:$0xff]
    %v118 = vld [vmem:[#allocation10 + $0x80] sm:$0xff]
    %v119 = vld [vmem:[#allocation10 + $0x88] sm:$0xff]
    %v120 = vld [vmem:[#allocation10 + $0x90] sm:$0xff]
    %v121 = vld [vmem:[#allocation10 + $0x98] sm:$0xff]
    %v122 = vld [vmem:[#allocation10 + $0xa0] sm:$0xff]
    %v123 = vld [vmem:[#allocation10 + $0xa8] sm:$0xff]
    %v124 = vld [vmem:[#allocation10 + $0xb0] sm:$0xff]
    %v125 = vld [vmem:[#allocation10 + $0xb8] sm:$0xff]
    %v126 = vld [vmem:[#allocation10 + $0xc0] sm:$0xff]
    %v127 = vld [vmem:[#allocation10 + $0xc8] sm:$0xff]
    %v128 = vld [vmem:[#allocation10 + $0xd0] sm:$0xff]
    %v129 = vld [vmem:[#allocation10 + $0xd8] sm:$0xff]
    %v130 = vld [vmem:[#allocation10 + $0xe0] sm:$0xff]
    %v131 = vld [vmem:[#allocation10 + $0xe8] sm:$0xff]
    %v132 = vld [vmem:[#allocation10 + $0xf0] sm:$0xff]
    %v133 = vld [vmem:[#allocation10 + $0xf8] sm:$0xff]
    %v134 = vld [vmem:[#allocation10 + $0x100] sm:$0xff]
    %v135 = vld [vmem:[#allocation10 + $0x108] sm:$0xff]
    %v136 = vld [vmem:[#allocation10 + $0x110] sm:$0xff]
    %v137 = vld [vmem:[#allocation10 + $0x118] sm:$0xff]
    %v138 = vld [vmem:[#allocation10 + $0x120] sm:$0xff]
    %v139 = vld [vmem:[#allocation10 + $0x128] sm:$0xff]
    %v140 = vld [vmem:[#allocation10 + $0x130] sm:$0xff]
    %v141 = vld [vmem:[#allocation10 + $0x138] sm:$0xff]
    %v142 = vld [vmem:[#allocation10 + $0x140] sm:$0xff]
    %v143 = vld [vmem:[#allocation10 + $0x148] sm:$0xff]
    %v144 = vld [vmem:[#allocation10 + $0x150] sm:$0xff]
    %v145 = vld [vmem:[#allocation10 + $0x158] sm:$0xff]
    %v146 = vld [vmem:[#allocation10 + $0x160] sm:$0xff]
    %v147 = vld [vmem:[#allocation10 + $0x168] sm:$0xff]
    %v148 = vld [vmem:[#allocation10 + $0x170] sm:$0xff]
    %v149 = vld [vmem:[#allocation10 + $0x178] sm:$0xff]
    %v150 = vld [vmem:[#allocation10 + $0x180] sm:$0xff]
    %v151 = vld [vmem:[#allocation10 + $0x188] sm:$0xff]
    %v152 = vld [vmem:[#allocation10 + $0x190] sm:$0xff]
    %v153 = vld [vmem:[#allocation10 + $0x198] sm:$0xff]
    %v154 = vld [vmem:[#allocation10 + $0x1a0] sm:$0xff]
    %v155 = vld [vmem:[#allocation10 + $0x1a8] sm:$0xff]
    %v156 = vld [vmem:[#allocation10 + $0x1b0] sm:$0xff]
    %v157 = vld [vmem:[#allocation10 + $0x1b8] sm:$0xff]
    %v158 = vld [vmem:[#allocation10 + $0x1c0] sm:$0xff]
    %v159 = vld [vmem:[#allocation10 + $0x1c8] sm:$0xff]
    %v160 = vld [vmem:[#allocation10 + $0x1d0] sm:$0xff]
    %v161 = vld [vmem:[#allocation10 + $0x1d8] sm:$0xff]
    %v162 = vld [vmem:[#allocation10 + $0x1e0] sm:$0xff]
    %v163 = vld [vmem:[#allocation10 + $0x1e8] sm:$0xff]
    %v164 = vld [vmem:[#allocation10 + $0x1f0] sm:$0xff]
    %v165 = vld [vmem:[#allocation10 + $0x1f8] sm:$0xff]
    %v166 = vld [vmem:[#allocation5] sm:$0xff]
    %v167 = vld [vmem:[#allocation5 + $0x8] sm:$0xff]
    %v168 = vld [vmem:[#allocation5 + $0x10] sm:$0xff]
    %v169 = vld [vmem:[#allocation5 + $0x18] sm:$0xff]
    %v170 = vld [vmem:[#allocation5 + $0x20] sm:$0xff]
    %v171 = vld [vmem:[#allocation5 + $0x28] sm:$0xff]
    %v172 = vld [vmem:[#allocation5 + $0x30] sm:$0xff]
    %v173 = vld [vmem:[#allocation5 + $0x38] sm:$0xff]
    %v174 = vld [vmem:[#allocation5 + $0x40] sm:$0xff]
    %v175 = vld [vmem:[#allocation5 + $0x48] sm:$0xff]
    %v176 = vld [vmem:[#allocation5 + $0x50] sm:$0xff]
    %v177 = vld [vmem:[#allocation5 + $0x58] sm:$0xff]
    %v178 = vld [vmem:[#allocation5 + $0x60] sm:$0xff]
    %v179 = vld [vmem:[#allocation5 + $0x68] sm:$0xff]
    %v180 = vld [vmem:[#allocation5 + $0x70] sm:$0xff]
    %v181 = vld [vmem:[#allocation5 + $0x78] sm:$0xff]
    %182 = vmatprep.subr.mxu0 0.0
    %183 = vmatpush1.msra.mxu0 %v166
    %184 = vmatprep.subr.mxu0 0.0
    %185 = vmatpush1.msra.mxu0 %v167
    %186 = vmatprep.subr.mxu0 0.0
    %187 = vmatpush1.msra.mxu0 %v168
    %188 = vmatprep.subr.mxu0 0.0
    %189 = vmatpush1.msra.mxu0 %v169
    %190 = vmatprep.subr.mxu0 0.0
    %191 = vmatpush1.msra.mxu0 %v170
    %192 = vmatprep.subr.mxu0 0.0
    %193 = vmatpush1.msra.mxu0 %v171
    %194 = vmatprep.subr.mxu0 0.0
    %195 = vmatpush1.msra.mxu0 %v172
    %196 = vmatprep.subr.mxu0 0.0
    %197 = vmatpush1.msra.mxu0 %v173
    %198 = vmatprep.subr.mxu0 0.0
    %199 = vmatpush1.msra.mxu0 %v174
    %200 = vmatprep.subr.mxu0 0.0
    %201 = vmatpush1.msra.mxu0 %v175
    %202 = vmatprep.subr.mxu0 0.0
    %203 = vmatpush1.msra.mxu0 %v176
    %204 = vmatprep.subr.mxu0 0.0
    %205 = vmatpush1.msra.mxu0 %v177
    %206 = vmatprep.subr.mxu0 0.0
    %207 = vmatpush1.msra.mxu0 %v178
    %208 = vmatprep.subr.mxu0 0.0
    %209 = vmatpush1.msra.mxu0 %v179
    %210 = vmatprep.subr.mxu0 0.0
    %211 = vmatpush1.msra.mxu0 %v180
    %212 = vmatprep.subr.mxu0 0.0
    %213 = vmatpush1.msra.mxu0 %v181
    %214 = vmatprep.subr.mxu0 0.0
    %215 = vmatpush1.msra.mxu0 0.0
    %216 = vmatprep.subr.mxu0 0.0
    %217 = vmatpush1.msra.mxu0 0.0
    %218 = vmatprep.subr.mxu0 0.0
    %219 = vmatpush1.msra.mxu0 0.0
    %220 = vmatprep.subr.mxu0 0.0
    %221 = vmatpush1.msra.mxu0 0.0
    %222 = vmatprep.subr.mxu0 0.0
    %223 = vmatpush1.msra.mxu0 0.0
    %224 = vmatprep.subr.mxu0 0.0
    %225 = vmatpush1.msra.mxu0 0.0
    %226 = vmatprep.subr.mxu0 0.0
    %227 = vmatpush1.msra.mxu0 0.0
    %228 = vmatprep.subr.mxu0 0.0
    %229 = vmatpush1.msra.mxu0 0.0
    %230 = vmatprep.subr.mxu0 0.0
    %231 = vmatpush1.msra.mxu0 0.0
    %232 = vmatprep.subr.mxu0 0.0
    %233 = vmatpush1.msra.mxu0 0.0
    %234 = vmatprep.subr.mxu0 0.0
    %235 = vmatpush1.msra.mxu0 0.0
    %236 = vmatprep.subr.mxu0 0.0
    %237 = vmatpush1.msra.mxu0 0.0
    %238 = vmatprep.subr.mxu0 0.0
    %239 = vmatpush1.msra.mxu0 0.0
    %240 = vmatprep.subr.mxu0 0.0
    %241 = vmatpush1.msra.mxu0 0.0
    %242 = vmatprep.subr.mxu0 0.0
    %243 = vmatpush1.msra.mxu0 0.0
    %244 = vmatprep.subr.mxu0 0.0
    %245 = vmatpush1.msra.mxu0 0.0
    %246 = vmatprep.mubr.f32.mxu0 0.0
    %247 = vmatmul.mubr.f32.gmra.mrb[0].mxu0 %v102
    %v248 = vpop.f32.mrb[0].mxu0
    %v249 = vadd.f32 0.0, %v248
    %v250 = vpop.f32.mrb[0].mxu0
    %251 = vmatprep.mubr.f32.mxu0 0.0
    %252 = vmatmul.mubr.f32.gmra.mrb[0].mxu0 %v103
    %v253 = vpop.f32.mrb[0].mxu0
    %v254 = vadd.f32 0.0, %v253
    %v255 = vpop.f32.mrb[0].mxu0
    %256 = vmatprep.mubr.f32.mxu0 0.0
    %257 = vmatmul.mubr.f32.gmra.mrb[0].mxu0 %v104
    %v258 = vpop.f32.mrb[0].mxu0
    %v259 = vadd.f32 0.0, %v258
    %v260 = vpop.f32.mrb[0].mxu0
    %261 = vmatprep.mubr.f32.mxu0 0.0
    %262 = vmatmul.mubr.f32.gmra.mrb[0].mxu0 %v105
    %v263 = vpop.f32.mrb[0].mxu0
    %v264 = vadd.f32 0.0, %v263
    %v265 = vpop.f32.mrb[0].mxu0
    %266 = vmatprep.mubr.f32.mxu0 0.0
    %267 = vmatmul.mubr.f32.gmra.mrb[0].mxu0 %v106
    %v268 = vpop.f32.mrb[0].mxu0
    %v269 = vadd.f32 0.0, %v268
    %v270 = vpop.f32.mrb[0].mxu0
    %271 = vmatprep.mubr.f32.mxu0 0.0
    %272 = vmatmul.mubr.f32.gmra.mrb[0].mxu0 %v107
    %v273 = vpop.f32.mrb[0].mxu0
    %v274 = vadd.f32 0.0, %v273
    %v275 = vpop.f32.mrb[0].mxu0
    %276 = vmatprep.mubr.f32.mxu0 0.0
    %277 = vmatmul.mubr.f32.gmra.mrb[0].mxu0 %v108
    %v278 = vpop.f32.mrb[0].mxu0
    %v279 = vadd.f32 0.0, %v278
    %v280 = vpop.f32.mrb[0].mxu0
    %281 = vmatprep.mubr.f32.mxu0 0.0
    %282 = vmatmul.mubr.f32.gmra.mrb[0].mxu0 %v109
    %v283 = vpop.f32.mrb[0].mxu0
    %v284 = vadd.f32 0.0, %v283
    %v285 = vpop.f32.mrb[0].mxu0
    %286 = vmatprep.mubr.f32.mxu0 0.0
    %287 = vmatmul.mubr.f32.gmra.mrb[0].mxu0 %v110
    %v288 = vpop.f32.mrb[0].mxu0
    %v289 = vadd.f32 0.0, %v288
    %v290 = vpop.f32.mrb[0].mxu0
    %291 = vmatprep.mubr.f32.mxu0 0.0
    %292 = vmatmul.mubr.f32.gmra.mrb[0].mxu0 %v111
    %v293 = vpop.f32.mrb[0].mxu0
    %v294 = vadd.f32 0.0, %v293
    %v295 = vpop.f32.mrb[0].mxu0
    %296 = vmatprep.mubr.f32.mxu0 0.0
    %297 = vmatmul.mubr.f32.gmra.mrb[0].mxu0 %v112
    %v298 = vpop.f32.mrb[0].mxu0
    %v299 = vadd.f32 0.0, %v298
    %v300 = vpop.f32.mrb[0].mxu0
    %301 = vmatprep.mubr.f32.mxu0 0.0
    %302 = vmatmul.mubr.f32.gmra.mrb[0].mxu0 %v113
    %v303 = vpop.f32.mrb[0].mxu0
    %v304 = vadd.f32 0.0, %v303
    %v305 = vpop.f32.mrb[0].mxu0
    %306 = vmatprep.mubr.f32.mxu0 0.0
    %307 = vmatmul.mubr.f32.gmra.mrb[0].mxu0 %v114
    %v308 = vpop.f32.mrb[0].mxu0
    %v309 = vadd.f32 0.0, %v308
    %v310 = vpop.f32.mrb[0].mxu0
    %311 = vmatprep.mubr.f32.mxu0 0.0
    %312 = vmatmul.mubr.f32.gmra.mrb[0].mxu0 %v115
    %v313 = vpop.f32.mrb[0].mxu0
    %v314 = vadd.f32 0.0, %v313
    %v315 = vpop.f32.mrb[0].mxu0
    %316 = vmatprep.mubr.f32.mxu0 0.0
    %317 = vmatmul.mubr.f32.gmra.mrb[0].mxu0 %v116
    %v318 = vpop.f32.mrb[0].mxu0
    %v319 = vadd.f32 0.0, %v318
    %v320 = vpop.f32.mrb[0].mxu0
    %321 = vmatprep.mubr.f32.mxu0 0.0
    %322 = vmatmul.mubr.f32.gmra.mrb[0].mxu0 %v117
    %v323 = vpop.f32.mrb[0].mxu0
    %v324 = vadd.f32 0.0, %v323
    %v325 = vpop.f32.mrb[0].mxu0
    %326 = vmatprep.mubr.f32.mxu0 0.0
    %327 = vmatmul.mubr.f32.gmra.mrb[0].mxu0 %v118
    %v328 = vpop.f32.mrb[0].mxu0
    %v329 = vadd.f32 0.0, %v328
    %v330 = vpop.f32.mrb[0].mxu0
    %331 = vmatprep.mubr.f32.mxu0 0.0
    %332 = vmatmul.mubr.f32.gmra.mrb[0].mxu0 %v119
    %v333 = vpop.f32.mrb[0].mxu0
    %v334 = vadd.f32 0.0, %v333
    %v335 = vpop.f32.mrb[0].mxu0
    %336 = vmatprep.mubr.f32.mxu0 0.0
    %337 = vmatmul.mubr.f32.gmra.mrb[0].mxu0 %v120
    %v338 = vpop.f32.mrb[0].mxu0
    %v339 = vadd.f32 0.0, %v338
    %v340 = vpop.f32.mrb[0].mxu0
    %341 = vmatprep.mubr.f32.mxu0 0.0
    %342 = vmatmul.mubr.f32.gmra.mrb[0].mxu0 %v121
    %v343 = vpop.f32.mrb[0].mxu0
    %v344 = vadd.f32 0.0, %v343
    %v345 = vpop.f32.mrb[0].mxu0
    %346 = vmatprep.mubr.f32.mxu0 0.0
    %347 = vmatmul.mubr.f32.gmra.mrb[0].mxu0 %v122
    %v348 = vpop.f32.mrb[0].mxu0
    %v349 = vadd.f32 0.0, %v348
    %v350 = vpop.f32.mrb[0].mxu0
    %351 = vmatprep.mubr.f32.mxu0 0.0
    %352 = vmatmul.mubr.f32.gmra.mrb[0].mxu0 %v123
    %v353 = vpop.f32.mrb[0].mxu0
    %v354 = vadd.f32 0.0, %v353
    %v355 = vpop.f32.mrb[0].mxu0
    %356 = vmatprep.mubr.f32.mxu0 0.0
    %357 = vmatmul.mubr.f32.gmra.mrb[0].mxu0 %v124
    %v358 = vpop.f32.mrb[0].mxu0
    %v359 = vadd.f32 0.0, %v358
    %v360 = vpop.f32.mrb[0].mxu0
    %361 = vmatprep.mubr.f32.mxu0 0.0
    %362 = vmatmul.mubr.f32.gmra.mrb[0].mxu0 %v125
    %v363 = vpop.f32.mrb[0].mxu0
    %v364 = vadd.f32 0.0, %v363
    %v365 = vpop.f32.mrb[0].mxu0
    %366 = vmatprep.mubr.f32.mxu0 0.0
    %367 = vmatmul.mubr.f32.gmra.mrb[0].mxu0 %v126
    %v368 = vpop.f32.mrb[0].mxu0
    %v369 = vadd.f32 0.0, %v368
    %v370 = vpop.f32.mrb[0].mxu0
    %371 = vmatprep.mubr.f32.mxu0 0.0
    %372 = vmatmul.mubr.f32.gmra.mrb[0].mxu0 %v127
    %v373 = vpop.f32.mrb[0].mxu0
    %v374 = vadd.f32 0.0, %v373
    %v375 = vpop.f32.mrb[0].mxu0
    %376 = vmatprep.mubr.f32.mxu0 0.0
    %377 = vmatmul.mubr.f32.gmra.mrb[0].mxu0 %v128
    %v378 = vpop.f32.mrb[0].mxu0
    %v379 = vadd.f32 0.0, %v378
    %v380 = vpop.f32.mrb[0].mxu0
    %381 = vmatprep.mubr.f32.mxu0 0.0
    %382 = vmatmul.mubr.f32.gmra.mrb[0].mxu0 %v129
    %v383 = vpop.f32.mrb[0].mxu0
    %v384 = vadd.f32 0.0, %v383
    %v385 = vpop.f32.mrb[0].mxu0
    %386 = vmatprep.mubr.f32.mxu0 0.0
    %387 = vmatmul.mubr.f32.gmra.mrb[0].mxu0 %v130
    %v388 = vpop.f32.mrb[0].mxu0
    %v389 = vadd.f32 0.0, %v388
    %v390 = vpop.f32.mrb[0].mxu0
    %391 = vmatprep.mubr.f32.mxu0 0.0
    %392 = vmatmul.mubr.f32.gmra.mrb[0].mxu0 %v131
    %v393 = vpop.f32.mrb[0].mxu0
    %v394 = vadd.f32 0.0, %v393
    %v395 = vpop.f32.mrb[0].mxu0
    %396 = vmatprep.mubr.f32.mxu0 0.0
    %397 = vmatmul.mubr.f32.gmra.mrb[0].mxu0 %v132
    %v398 = vpop.f32.mrb[0].mxu0
    %v399 = vadd.f32 0.0, %v398
    %v400 = vpop.f32.mrb[0].mxu0
    %401 = vmatprep.mubr.f32.mxu0 0.0
    %402 = vmatmul.mubr.f32.gmra.mrb[0].mxu0 %v133
    %v403 = vpop.f32.mrb[0].mxu0
    %v404 = vadd.f32 0.0, %v403
    %v405 = vpop.f32.mrb[0].mxu0
    %406 = vmatprep.mubr.f32.mxu0 0.0
    %407 = vmatmul.mubr.f32.gmra.mrb[0].mxu0 %v134
    %v408 = vpop.f32.mrb[0].mxu0
    %v409 = vadd.f32 0.0, %v408
    %v410 = vpop.f32.mrb[0].mxu0
    %411 = vmatprep.mubr.f32.mxu0 0.0
    %412 = vmatmul.mubr.f32.gmra.mrb[0].mxu0 %v135
    %v413 = vpop.f32.mrb[0].mxu0
    %v414 = vadd.f32 0.0, %v413
    %v415 = vpop.f32.mrb[0].mxu0
    %416 = vmatprep.mubr.f32.mxu0 0.0
    %417 = vmatmul.mubr.f32.gmra.mrb[0].mxu0 %v136
    %v418 = vpop.f32.mrb[0].mxu0
    %v419 = vadd.f32 0.0, %v418
    %v420 = vpop.f32.mrb[0].mxu0
    %421 = vmatprep.mubr.f32.mxu0 0.0
    %422 = vmatmul.mubr.f32.gmra.mrb[0].mxu0 %v137
    %v423 = vpop.f32.mrb[0].mxu0
    %v424 = vadd.f32 0.0, %v423
    %v425 = vpop.f32.mrb[0].mxu0
    %426 = vmatprep.mubr.f32.mxu0 0.0
    %427 = vmatmul.mubr.f32.gmra.mrb[0].mxu0 %v138
    %v428 = vpop.f32.mrb[0].mxu0
    %v429 = vadd.f32 0.0, %v428
    %v430 = vpop.f32.mrb[0].mxu0
    %431 = vmatprep.mubr.f32.mxu0 0.0
    %432 = vmatmul.mubr.f32.gmra.mrb[0].mxu0 %v139
    %v433 = vpop.f32.mrb[0].mxu0
    %v434 = vadd.f32 0.0, %v433
    %v435 = vpop.f32.mrb[0].mxu0
    %436 = vmatprep.mubr.f32.mxu0 0.0
    %437 = vmatmul.mubr.f32.gmra.mrb[0].mxu0 %v140
    %v438 = vpop.f32.mrb[0].mxu0
    %v439 = vadd.f32 0.0, %v438
    %v440 = vpop.f32.mrb[0].mxu0
    %441 = vmatprep.mubr.f32.mxu0 0.0
    %442 = vmatmul.mubr.f32.gmra.mrb[0].mxu0 %v141
    %v443 = vpop.f32.mrb[0].mxu0
    %v444 = vadd.f32 0.0, %v443
    %v445 = vpop.f32.mrb[0].mxu0
    %446 = vmatprep.mubr.f32.mxu0 0.0
    %447 = vmatmul.mubr.f32.gmra.mrb[0].mxu0 %v142
    %v448 = vpop.f32.mrb[0].mxu0
    %v449 = vadd.f32 0.0, %v448
    %v450 = vpop.f32.mrb[0].mxu0
    %451 = vmatprep.mubr.f32.mxu0 0.0
    %452 = vmatmul.mubr.f32.gmra.mrb[0].mxu0 %v143
    %v453 = vpop.f32.mrb[0].mxu0
    %v454 = vadd.f32 0.0, %v453
    %v455 = vpop.f32.mrb[0].mxu0
    %456 = vmatprep.mubr.f32.mxu0 0.0
    %457 = vmatmul.mubr.f32.gmra.mrb[0].mxu0 %v144
    %v458 = vpop.f32.mrb[0].mxu0
    %v459 = vadd.f32 0.0, %v458
    %v460 = vpop.f32.mrb[0].mxu0
    %461 = vmatprep.mubr.f32.mxu0 0.0
    %462 = vmatmul.mubr.f32.gmra.mrb[0].mxu0 %v145
    %v463 = vpop.f32.mrb[0].mxu0
    %v464 = vadd.f32 0.0, %v463
    %v465 = vpop.f32.mrb[0].mxu0
    %466 = vmatprep.mubr.f32.mxu0 0.0
    %467 = vmatmul.mubr.f32.gmra.mrb[0].mxu0 %v146
    %v468 = vpop.f32.mrb[0].mxu0
    %v469 = vadd.f32 0.0, %v468
    %v470 = vpop.f32.mrb[0].mxu0
    %471 = vmatprep.mubr.f32.mxu0 0.0
    %472 = vmatmul.mubr.f32.gmra.mrb[0].mxu0 %v147
    %v473 = vpop.f32.mrb[0].mxu0
    %v474 = vadd.f32 0.0, %v473
    %v475 = vpop.f32.mrb[0].mxu0
    %476 = vmatprep.mubr.f32.mxu0 0.0
    %477 = vmatmul.mubr.f32.gmra.mrb[0].mxu0 %v148
    %v478 = vpop.f32.mrb[0].mxu0
    %v479 = vadd.f32 0.0, %v478
    %v480 = vpop.f32.mrb[0].mxu0
    %481 = vmatprep.mubr.f32.mxu0 0.0
    %482 = vmatmul.mubr.f32.gmra.mrb[0].mxu0 %v149
    %v483 = vpop.f32.mrb[0].mxu0
    %v484 = vadd.f32 0.0, %v483
    %v485 = vpop.f32.mrb[0].mxu0
    %486 = vmatprep.mubr.f32.mxu0 0.0
    %487 = vmatmul.mubr.f32.gmra.mrb[0].mxu0 %v150
    %v488 = vpop.f32.mrb[0].mxu0
    %v489 = vadd.f32 0.0, %v488
    %v490 = vpop.f32.mrb[0].mxu0
    %491 = vmatprep.mubr.f32.mxu0 0.0
    %492 = vmatmul.mubr.f32.gmra.mrb[0].mxu0 %v151
    %v493 = vpop.f32.mrb[0].mxu0
    %v494 = vadd.f32 0.0, %v493
    %v495 = vpop.f32.mrb[0].mxu0
    %496 = vmatprep.mubr.f32.mxu0 0.0
    %497 = vmatmul.mubr.f32.gmra.mrb[0].mxu0 %v152
    %v498 = vpop.f32.mrb[0].mxu0
    %v499 = vadd.f32 0.0, %v498
    %v500 = vpop.f32.mrb[0].mxu0
    %501 = vmatprep.mubr.f32.mxu0 0.0
    %502 = vmatmul.mubr.f32.gmra.mrb[0].mxu0 %v153
    %v503 = vpop.f32.mrb[0].mxu0
    %v504 = vadd.f32 0.0, %v503
    %v505 = vpop.f32.mrb[0].mxu0
    %506 = vmatprep.mubr.f32.mxu0 0.0
    %507 = vmatmul.mubr.f32.gmra.mrb[0].mxu0 %v154
    %v508 = vpop.f32.mrb[0].mxu0
    %v509 = vadd.f32 0.0, %v508
    %v510 = vpop.f32.mrb[0].mxu0
    %511 = vmatprep.mubr.f32.mxu0 0.0
    %512 = vmatmul.mubr.f32.gmra.mrb[0].mxu0 %v155
    %v513 = vpop.f32.mrb[0].mxu0
    %v514 = vadd.f32 0.0, %v513
    %v515 = vpop.f32.mrb[0].mxu0
    %516 = vmatprep.mubr.f32.mxu0 0.0
    %517 = vmatmul.mubr.f32.gmra.mrb[0].mxu0 %v156
    %v518 = vpop.f32.mrb[0].mxu0
    %v519 = vadd.f32 0.0, %v518
    %v520 = vpop.f32.mrb[0].mxu0
    %521 = vmatprep.mubr.f32.mxu0 0.0
    %522 = vmatmul.mubr.f32.gmra.mrb[0].mxu0 %v157
    %v523 = vpop.f32.mrb[0].mxu0
    %v524 = vadd.f32 0.0, %v523
    %v525 = vpop.f32.mrb[0].mxu0
    %526 = vmatprep.mubr.f32.mxu0 0.0
    %527 = vmatmul.mubr.f32.gmra.mrb[0].mxu0 %v158
    %v528 = vpop.f32.mrb[0].mxu0
    %v529 = vadd.f32 0.0, %v528
    %v530 = vpop.f32.mrb[0].mxu0
    %531 = vmatprep.mubr.f32.mxu0 0.0
    %532 = vmatmul.mubr.f32.gmra.mrb[0].mxu0 %v159
    %v533 = vpop.f32.mrb[0].mxu0
    %v534 = vadd.f32 0.0, %v533
    %v535 = vpop.f32.mrb[0].mxu0
    %536 = vmatprep.mubr.f32.mxu0 0.0
    %537 = vmatmul.mubr.f32.gmra.mrb[0].mxu0 %v160
    %v538 = vpop.f32.mrb[0].mxu0
    %v539 = vadd.f32 0.0, %v538
    %v540 = vpop.f32.mrb[0].mxu0
    %541 = vmatprep.mubr.f32.mxu0 0.0
    %542 = vmatmul.mubr.f32.gmra.mrb[0].mxu0 %v161
    %v543 = vpop.f32.mrb[0].mxu0
    %v544 = vadd.f32 0.0, %v543
    %v545 = vpop.f32.mrb[0].mxu0
    %546 = vmatprep.mubr.f32.mxu0 0.0
    %547 = vmatmul.mubr.f32.gmra.mrb[0].mxu0 %v162
    %v548 = vpop.f32.mrb[0].mxu0
    %v549 = vadd.f32 0.0, %v548
    %v550 = vpop.f32.mrb[0].mxu0
    %551 = vmatprep.mubr.f32.mxu0 0.0
    %552 = vmatmul.mubr.f32.gmra.mrb[0].mxu0 %v163
    %v553 = vpop.f32.mrb[0].mxu0
    %v554 = vadd.f32 0.0, %v553
    %v555 = vpop.f32.mrb[0].mxu0
    %556 = vmatprep.mubr.f32.mxu0 0.0
    %557 = vmatmul.mubr.f32.gmra.mrb[0].mxu0 %v164
    %v558 = vpop.f32.mrb[0].mxu0
    %v559 = vadd.f32 0.0, %v558
    %v560 = vpop.f32.mrb[0].mxu0
    %561 = vmatprep.mubr.f32.mxu0 0.0
    %562 = vmatmul.mubr.f32.gmra.mrb[0].mxu0 %v165
    %v563 = vpop.f32.mrb[0].mxu0
    %v564 = vadd.f32 0.0, %v563
    %v565 = vpop.f32.mrb[0].mxu0
    %566 = vdwg.mxu0
    %567 = vst [vmem:[#allocation2] sm:$0xff] 0.0
    %568 = vst [vmem:[#allocation2 + $0x8] sm:$0xff] 0.0
    %569 = vst [vmem:[#allocation2 + $0x10] sm:$0x3] 0.0
    %570 = vst [vmem:[#allocation2 + $0x1b0] sm:$0xff] 0.0
    %571 = vst [vmem:[#allocation2 + $0x1b8] sm:$0xff] 0.0
    %572 = vst [vmem:[#allocation2 + $0x1c0] sm:$0x3] 0.0
    %s573 = scalar_lea.vmem [#allocation2], 408
    %574 = vst [vmem:[%s573] sm:$0xff] 0.0
    %575 = vst [vmem:[%s573 + $0x8] sm:$0xff] 0.0
    %576 = vst [vmem:[%s573 + $0x10] sm:$0x3] 0.0
    %577 = vst [vmem:[%s573 + $0x1b0] sm:$0xff] 0.0
    %578 = vst [vmem:[%s573 + $0x1b8] sm:$0xff] 0.0
    %579 = vst [vmem:[%s573 + $0x1c0] sm:$0x3] 0.0
    %580 = vst [vmem:[#allocation2] sm:$0x1] 0.0
    %581 = vst [vmem:[#allocation2 + $0x18] sm:$0x1] 0.0
    %582 = vst [vmem:[#allocation2 + $0x30] sm:$0x1] 0.0
    %583 = vst [vmem:[#allocation2 + $0x48] sm:$0x1] 0.0
    %584 = vst [vmem:[#allocation2 + $0x60] sm:$0x1] 0.0
    %585 = vst [vmem:[#allocation2 + $0x78] sm:$0x1] 0.0
    %586 = vst [vmem:[#allocation2 + $0x90] sm:$0x1] 0.0
    %587 = vst [vmem:[#allocation2 + $0xa8] sm:$0x1] 0.0
    %588 = vst [vmem:[#allocation2 + $0xc0] sm:$0x1] 0.0
    %589 = vst [vmem:[#allocation2 + $0xd8] sm:$0x1] 0.0
    %590 = vst [vmem:[#allocation2 + $0xf0] sm:$0x1] 0.0
    %591 = vst [vmem:[#allocation2 + $0x108] sm:$0x1] 0.0
    %592 = vst [vmem:[#allocation2 + $0x120] sm:$0x1] 0.0
    %593 = vst [vmem:[#allocation2 + $0x138] sm:$0x1] 0.0
    %594 = vst [vmem:[#allocation2 + $0x150] sm:$0x1] 0.0
    %595 = vst [vmem:[#allocation2 + $0x168] sm:$0x1] 0.0
    %596 = vst [vmem:[#allocation2 + $0x180] sm:$0x1] 0.0
    %597 = vst [vmem:[#allocation2 + $0x198] sm:$0x1] 0.0
    %598 = vst [vmem:[#allocation2 + $0x1b0] sm:$0x1] 0.0
    %599 = vst [vmem:[#allocation2 + $0x1c8] sm:$0x1] 0.0
    %600 = vst [vmem:[#allocation2 + $0x1e0] sm:$0x1] 0.0
    %601 = vst [vmem:[#allocation2 + $0x1f8] sm:$0x1] 0.0
    %602 = vst [vmem:[#allocation2 + $0x210] sm:$0x1] 0.0
    %603 = vst [vmem:[#allocation2 + $0x228] sm:$0x1] 0.0
    %604 = vst [vmem:[#allocation2 + $0x240] sm:$0x1] 0.0
    %605 = vst [vmem:[#allocation2 + $0x258] sm:$0x1] 0.0
    %606 = vst [vmem:[#allocation2 + $0x270] sm:$0x1] 0.0
    %607 = vst [vmem:[#allocation2 + $0x288] sm:$0x1] 0.0
    %608 = vst [vmem:[#allocation2 + $0x2a0] sm:$0x1] 0.0
    %609 = vst [vmem:[#allocation2 + $0x2b8] sm:$0x1] 0.0
    %610 = vst [vmem:[#allocation2 + $0x2d0] sm:$0x1] 0.0
    %611 = vst [vmem:[#allocation2 + $0x2e8] sm:$0x1] 0.0
    %612 = vst [vmem:[#allocation2 + $0x300] sm:$0x1] 0.0
    %613 = vst [vmem:[#allocation2 + $0x318] sm:$0x1] 0.0
    %614 = vst [vmem:[#allocation2 + $0x330] sm:$0x1] 0.0
    %615 = vst [vmem:[#allocation2 + $0x348] sm:$0x1] 0.0
    %616 = vst [vmem:[#allocation2 + $0x11] sm:$0x1] 0.0
    %617 = vst [vmem:[#allocation2 + $0x29] sm:$0x1] 0.0
    %618 = vst [vmem:[#allocation2 + $0x41] sm:$0x1] 0.0
    %619 = vst [vmem:[#allocation2 + $0x59] sm:$0x1] 0.0
    %620 = vst [vmem:[#allocation2 + $0x71] sm:$0x1] 0.0
    %621 = vst [vmem:[#allocation2 + $0x89] sm:$0x1] 0.0
    %622 = vst [vmem:[#allocation2 + $0xa1] sm:$0x1] 0.0
    %623 = vst [vmem:[#allocation2 + $0xb9] sm:$0x1] 0.0
    %624 = vst [vmem:[#allocation2 + $0xd1] sm:$0x1] 0.0
    %625 = vst [vmem:[#allocation2 + $0xe9] sm:$0x1] 0.0
    %626 = vst [vmem:[#allocation2 + $0x101] sm:$0x1] 0.0
    %627 = vst [vmem:[#allocation2 + $0x119] sm:$0x1] 0.0
    %628 = vst [vmem:[#allocation2 + $0x131] sm:$0x1] 0.0
    %629 = vst [vmem:[#allocation2 + $0x149] sm:$0x1] 0.0
    %630 = vst [vmem:[#allocation2 + $0x161] sm:$0x1] 0.0
    %631 = vst [vmem:[#allocation2 + $0x179] sm:$0x1] 0.0
    %632 = vst [vmem:[#allocation2 + $0x191] sm:$0x1] 0.0
    %633 = vst [vmem:[#allocation2 + $0x1a9] sm:$0x1] 0.0
    %634 = vst [vmem:[#allocation2 + $0x1c1] sm:$0x1] 0.0
    %635 = vst [vmem:[#allocation2 + $0x1d9] sm:$0x1] 0.0
    %636 = vst [vmem:[#allocation2 + $0x1f1] sm:$0x1] 0.0
    %637 = vst [vmem:[#allocation2 + $0x209] sm:$0x1] 0.0
    %638 = vst [vmem:[#allocation2 + $0x221] sm:$0x1] 0.0
    %639 = vst [vmem:[#allocation2 + $0x239] sm:$0x1] 0.0
    %640 = vst [vmem:[#allocation2 + $0x251] sm:$0x1] 0.0
    %641 = vst [vmem:[#allocation2 + $0x269] sm:$0x1] 0.0
    %642 = vst [vmem:[#allocation2 + $0x281] sm:$0x1] 0.0
    %643 = vst [vmem:[#allocation2 + $0x299] sm:$0x1] 0.0
    %644 = vst [vmem:[#allocation2 + $0x2b1] sm:$0x1] 0.0
    %645 = vst [vmem:[#allocation2 + $0x2c9] sm:$0x1] 0.0
    %646 = vst [vmem:[#allocation2 + $0x2e1] sm:$0x1] 0.0
    %647 = vst [vmem:[#allocation2 + $0x2f9] sm:$0x1] 0.0
    %648 = vst [vmem:[#allocation2 + $0x311] sm:$0x1] 0.0
    %649 = vst [vmem:[#allocation2 + $0x329] sm:$0x1] 0.0
    %650 = vst [vmem:[#allocation2 + $0x341] sm:$0x1] 0.0
    %651 = vst [vmem:[#allocation2 + $0x359] sm:$0x1] 0.0
    %v652 = vld [vmem:[#allocation8] sm:$0xff]
    %v653 = vld [vmem:[#allocation8 + $0x8] sm:$0xff]
    %v654 = vld [vmem:[#allocation8 + $0x10] sm:$0xff]
    %v655 = vld [vmem:[#allocation8 + $0x18] sm:$0xff]
    %v656 = vld [vmem:[#allocation8 + $0x20] sm:$0xff]
    %v657 = vld [vmem:[#allocation8 + $0x28] sm:$0xff]
    %v658 = vld [vmem:[#allocation8 + $0x30] sm:$0xff]
    %v659 = vld [vmem:[#allocation8 + $0x38] sm:$0xff]
    %v660 = vld [vmem:[#allocation8 + $0x40] sm:$0xff]
    %v661 = vld [vmem:[#allocation8 + $0x48] sm:$0xff]
    %v662 = vld [vmem:[#allocation8 + $0x50] sm:$0xff]
    %v663 = vld [vmem:[#allocation8 + $0x58] sm:$0xff]
    %v664 = vld [vmem:[#allocation8 + $0x60] sm:$0xff]
    %v665 = vld [vmem:[#allocation8 + $0x68] sm:$0xff]
    %v666 = vld [vmem:[#allocation8 + $0x70] sm:$0xff]
    %v667 = vld [vmem:[#allocation8 + $0x78] sm:$0xff]
    %v668 = vld [vmem:[#allocation8 + $0x80] sm:$0xff]
    %v669 = vld [vmem:[#allocation8 + $0x88] sm:$0xff]
    %v670 = vld [vmem:[#allocation8 + $0x90] sm:$0xff]
    %v671 = vld [vmem:[#allocation8 + $0x98] sm:$0xff]
    %v672 = vld [vmem:[#allocation8 + $0xa0] sm:$0xff]
    %v673 = vld [vmem:[#allocation8 + $0xa8] sm:$0xff]
    %v674 = vld [vmem:[#allocation8 + $0xb0] sm:$0xff]
    %v675 = vld [vmem:[#allocation8 + $0xb8] sm:$0xff]
    %v676 = vld [vmem:[#allocation8 + $0xc0] sm:$0xff]
    %v677 = vld [vmem:[#allocation8 + $0xc8] sm:$0xff]
    %v678 = vld [vmem:[#allocation8 + $0xd0] sm:$0xff]
    %v679 = vld [vmem:[#allocation8 + $0xd8] sm:$0xff]
    %v680 = vld [vmem:[#allocation8 + $0xe0] sm:$0xff]
    %v681 = vld [vmem:[#allocation8 + $0xe8] sm:$0xff]
    %v682 = vld [vmem:[#allocation8 + $0xf0] sm:$0xff]
    %v683 = vld [vmem:[#allocation8 + $0xf8] sm:$0xff]
    %v684 = vld [vmem:[#allocation8 + $0x100] sm:$0xff]
    %v685 = vld [vmem:[#allocation8 + $0x108] sm:$0xff]
    %v686 = vld [vmem:[#allocation8 + $0x110] sm:$0xff]
    %v687 = vld [vmem:[#allocation8 + $0x118] sm:$0xff]
    %v688 = vld [vmem:[#allocation8 + $0x120] sm:$0xff]
    %v689 = vld [vmem:[#allocation8 + $0x128] sm:$0xff]
    %v690 = vld [vmem:[#allocation8 + $0x130] sm:$0xff]
    %v691 = vld [vmem:[#allocation8 + $0x138] sm:$0xff]
    %v692 = vld [vmem:[#allocation8 + $0x140] sm:$0xff]
    %v693 = vld [vmem:[#allocation8 + $0x148] sm:$0xff]
    %v694 = vld [vmem:[#allocation8 + $0x150] sm:$0xff]
    %v695 = vld [vmem:[#allocation8 + $0x158] sm:$0xff]
    %v696 = vld [vmem:[#allocation8 + $0x160] sm:$0xff]
    %v697 = vld [vmem:[#allocation8 + $0x168] sm:$0xff]
    %v698 = vld [vmem:[#allocation8 + $0x170] sm:$0xff]
    %v699 = vld [vmem:[#allocation8 + $0x178] sm:$0xff]
    %v700 = vld [vmem:[#allocation8 + $0x180] sm:$0xff]
    %v701 = vld [vmem:[#allocation8 + $0x188] sm:$0xff]
    %v702 = vld [vmem:[#allocation8 + $0x190] sm:$0xff]
    %v703 = vld [vmem:[#allocation8 + $0x198] sm:$0xff]
    %v704 = vld [vmem:[#allocation8 + $0x1a0] sm:$0xff]
    %v705 = vld [vmem:[#allocation8 + $0x1a8] sm:$0xff]
    %v706 = vld [vmem:[#allocation8 + $0x1b0] sm:$0xff]
    %v707 = vld [vmem:[#allocation8 + $0x1b8] sm:$0xff]
    %v708 = vld [vmem:[#allocation8 + $0x1c0] sm:$0xff]
    %v709 = vld [vmem:[#allocation8 + $0x1c8] sm:$0xff]
    %v710 = vld [vmem:[#allocation8 + $0x1d0] sm:$0xff]
    %v711 = vld [vmem:[#allocation8 + $0x1d8] sm:$0xff]
    %v712 = vld [vmem:[#allocation8 + $0x1e0] sm:$0xff]
    %v713 = vld [vmem:[#allocation8 + $0x1e8] sm:$0xff]
    %v714 = vld [vmem:[#allocation8 + $0x1f0] sm:$0xff]
    %v715 = vld [vmem:[#allocation8 + $0x1f8] sm:$0xff]
    %v716 = vadd.f32 %v652, %v249
    %v717 = vadd.f32 %v653, %v254
    %v718 = vadd.f32 %v654, %v259
    %v719 = vadd.f32 %v655, %v264
    %v720 = vadd.f32 %v656, %v269
    %v721 = vadd.f32 %v657, %v274
    %v722 = vadd.f32 %v658, %v279
    %v723 = vadd.f32 %v659, %v284
    %v724 = vadd.f32 %v660, %v289
    %v725 = vadd.f32 %v661, %v294
    %v726 = vadd.f32 %v662, %v299
    %v727 = vadd.f32 %v663, %v304
    %v728 = vadd.f32 %v664, %v309
    %v729 = vadd.f32 %v665, %v314
    %v730 = vadd.f32 %v666, %v319
    %v731 = vadd.f32 %v667, %v324
    %v732 = vadd.f32 %v668, %v329
    %v733 = vadd.f32 %v669, %v334
    %v734 = vadd.f32 %v670, %v339
    %v735 = vadd.f32 %v671, %v344
    %v736 = vadd.f32 %v672, %v349
    %v737 = vadd.f32 %v673, %v354
    %v738 = vadd.f32 %v674, %v359
    %v739 = vadd.f32 %v675, %v364
    %v740 = vadd.f32 %v676, %v369
    %v741 = vadd.f32 %v677, %v374
    %v742 = vadd.f32 %v678, %v379
    %v743 = vadd.f32 %v679, %v384
    %v744 = vadd.f32 %v680, %v389
    %v745 = vadd.f32 %v681, %v394
    %v746 = vadd.f32 %v682, %v399
    %v747 = vadd.f32 %v683, %v404
    %v748 = vadd.f32 %v684, %v409
    %v749 = vadd.f32 %v685, %v414
    %v750 = vadd.f32 %v686, %v419
    %v751 = vadd.f32 %v687, %v424
    %v752 = vadd.f32 %v688, %v429
    %v753 = vadd.f32 %v689, %v434
    %v754 = vadd.f32 %v690, %v439
    %v755 = vadd.f32 %v691, %v444
    %v756 = vadd.f32 %v692, %v449
    %v757 = vadd.f32 %v693, %v454
    %v758 = vadd.f32 %v694, %v459
    %v759 = vadd.f32 %v695, %v464
    %v760 = vadd.f32 %v696, %v469
    %v761 = vadd.f32 %v697, %v474
    %v762 = vadd.f32 %v698, %v479
    %v763 = vadd.f32 %v699, %v484
    %v764 = vadd.f32 %v700, %v489
    %v765 = vadd.f32 %v701, %v494
    %v766 = vadd.f32 %v702, %v499
    %v767 = vadd.f32 %v703, %v504
    %v768 = vadd.f32 %v704, %v509
    %v769 = vadd.f32 %v705, %v514
    %v770 = vadd.f32 %v706, %v519
    %v771 = vadd.f32 %v707, %v524
    %v772 = vadd.f32 %v708, %v529
    %v773 = vadd.f32 %v709, %v534
    %v774 = vadd.f32 %v710, %v539
    %v775 = vadd.f32 %v711, %v544
    %v776 = vadd.f32 %v712, %v549
    %v777 = vadd.f32 %v713, %v554
    %v778 = vadd.f32 %v714, %v559
    %v779 = vadd.f32 %v715, %v564
    %s780 = scalar_lea.vmem [#allocation2], 24
    %781 = vst [vmem:[%s780 + $0x1] sm:$0xff] %v716
    %782 = vst [vmem:[%s780 + $0x9] sm:$0xff] %v717
    %783 = vst [vmem:[%s780 + $0x19] sm:$0xff] %v718
    %784 = vst [vmem:[%s780 + $0x21] sm:$0xff] %v719
    %785 = vst [vmem:[%s780 + $0x31] sm:$0xff] %v720
    %786 = vst [vmem:[%s780 + $0x39] sm:$0xff] %v721
    %787 = vst [vmem:[%s780 + $0x49] sm:$0xff] %v722
    %788 = vst [vmem:[%s780 + $0x51] sm:$0xff] %v723
    %789 = vst [vmem:[%s780 + $0x61] sm:$0xff] %v724
    %790 = vst [vmem:[%s780 + $0x69] sm:$0xff] %v725
    %791 = vst [vmem:[%s780 + $0x79] sm:$0xff] %v726
    %792 = vst [vmem:[%s780 + $0x81] sm:$0xff] %v727
    %793 = vst [vmem:[%s780 + $0x91] sm:$0xff] %v728
    %794 = vst [vmem:[%s780 + $0x99] sm:$0xff] %v729
    %795 = vst [vmem:[%s780 + $0xa9] sm:$0xff] %v730
    %796 = vst [vmem:[%s780 + $0xb1] sm:$0xff] %v731
    %797 = vst [vmem:[%s780 + $0xc1] sm:$0xff] %v732
    %798 = vst [vmem:[%s780 + $0xc9] sm:$0xff] %v733
    %799 = vst [vmem:[%s780 + $0xd9] sm:$0xff] %v734
    %800 = vst [vmem:[%s780 + $0xe1] sm:$0xff] %v735
    %801 = vst [vmem:[%s780 + $0xf1] sm:$0xff] %v736
    %802 = vst [vmem:[%s780 + $0xf9] sm:$0xff] %v737
    %803 = vst [vmem:[%s780 + $0x109] sm:$0xff] %v738
    %804 = vst [vmem:[%s780 + $0x111] sm:$0xff] %v739
    %805 = vst [vmem:[%s780 + $0x121] sm:$0xff] %v740
    %806 = vst [vmem:[%s780 + $0x129] sm:$0xff] %v741
    %807 = vst [vmem:[%s780 + $0x139] sm:$0xff] %v742
    %808 = vst [vmem:[%s780 + $0x141] sm:$0xff] %v743
    %809 = vst [vmem:[%s780 + $0x151] sm:$0xff] %v744
    %810 = vst [vmem:[%s780 + $0x159] sm:$0xff] %v745
    %811 = vst [vmem:[%s780 + $0x169] sm:$0xff] %v746
    %812 = vst [vmem:[%s780 + $0x171] sm:$0xff] %v747
    %813 = vst [vmem:[%s780 + $0x1b1] sm:$0xff] %v748
    %814 = vst [vmem:[%s780 + $0x1b9] sm:$0xff] %v749
    %815 = vst [vmem:[%s780 + $0x1c9] sm:$0xff] %v750
    %816 = vst [vmem:[%s780 + $0x1d1] sm:$0xff] %v751
    %817 = vst [vmem:[%s780 + $0x1e1] sm:$0xff] %v752
    %818 = vst [vmem:[%s780 + $0x1e9] sm:$0xff] %v753
    %819 = vst [vmem:[%s780 + $0x1f9] sm:$0xff] %v754
    %820 = vst [vmem:[%s780 + $0x201] sm:$0xff] %v755
    %821 = vst [vmem:[%s780 + $0x211] sm:$0xff] %v756
    %822 = vst [vmem:[%s780 + $0x219] sm:$0xff] %v757
    %823 = vst [vmem:[%s780 + $0x229] sm:$0xff] %v758
    %824 = vst [vmem:[%s780 + $0x231] sm:$0xff] %v759
    %825 = vst [vmem:[%s780 + $0x241] sm:$0xff] %v760
    %826 = vst [vmem:[%s780 + $0x249] sm:$0xff] %v761
    %827 = vst [vmem:[%s780 + $0x259] sm:$0xff] %v762
    %828 = vst [vmem:[%s780 + $0x261] sm:$0xff] %v763
    %829 = vst [vmem:[%s780 + $0x271] sm:$0xff] %v764
    %830 = vst [vmem:[%s780 + $0x279] sm:$0xff] %v765
    %831 = vst [vmem:[%s780 + $0x289] sm:$0xff] %v766
    %832 = vst [vmem:[%s780 + $0x291] sm:$0xff] %v767
    %833 = vst [vmem:[%s780 + $0x2a1] sm:$0xff] %v768
    %834 = vst [vmem:[%s780 + $0x2a9] sm:$0xff] %v769
    %835 = vst [vmem:[%s780 + $0x2b9] sm:$0xff] %v770
    %836 = vst [vmem:[%s780 + $0x2c1] sm:$0xff] %v771
    %837 = vst [vmem:[%s780 + $0x2d1] sm:$0xff] %v772
    %838 = vst [vmem:[%s780 + $0x2d9] sm:$0xff] %v773
    %839 = vst [vmem:[%s780 + $0x2e9] sm:$0xff] %v774
    %840 = vst [vmem:[%s780 + $0x2f1] sm:$0xff] %v775
    %841 = vst [vmem:[%s780 + $0x301] sm:$0xff] %v776
    %842 = vst [vmem:[%s780 + $0x309] sm:$0xff] %v777
    %843 = vst [vmem:[%s780 + $0x319] sm:$0xff] %v778
    %844 = vst [vmem:[%s780 + $0x321] sm:$0xff] %v779
    %v845 = vld [vmem:[#allocation2] sm:$0xff]
    %v846 = vld [vmem:[#allocation2 + $0x8] sm:$0xff]
    %v847 = vld [vmem:[#allocation2 + $0x18] sm:$0xff]
    %v848 = vld [vmem:[#allocation2 + $0x20] sm:$0xff]
    %v849 = vld [vmem:[#allocation2 + $0x30] sm:$0xff]
    %v850 = vld [vmem:[#allocation2 + $0x38] sm:$0xff]
    %v851 = vld [vmem:[#allocation2 + $0x48] sm:$0xff]
    %v852 = vld [vmem:[#allocation2 + $0x50] sm:$0xff]
    %v853 = vld [vmem:[#allocation2 + $0x60] sm:$0xff]
    %v854 = vld [vmem:[#allocation2 + $0x68] sm:$0xff]
    %v855 = vld [vmem:[#allocation2 + $0x78] sm:$0xff]
    %v856 = vld [vmem:[#allocation2 + $0x80] sm:$0xff]
    %v857 = vld [vmem:[#allocation2 + $0x90] sm:$0xff]
    %v858 = vld [vmem:[#allocation2 + $0x98] sm:$0xff]
    %v859 = vld [vmem:[#allocation2 + $0xa8] sm:$0xff]
    %v860 = vld [vmem:[#allocation2 + $0xb0] sm:$0xff]
    %v861 = vld [vmem:[#allocation2 + $0xc0] sm:$0xff]
    %v862 = vld [vmem:[#allocation2 + $0xc8] sm:$0xff]
    %v863 = vld [vmem:[#allocation2 + $0xd8] sm:$0xff]
    %v864 = vld [vmem:[#allocation2 + $0xe0] sm:$0xff]
    %v865 = vld [vmem:[#allocation2 + $0xf0] sm:$0xff]
    %v866 = vld [vmem:[#allocation2 + $0xf8] sm:$0xff]
    %v867 = vld [vmem:[#allocation2 + $0x108] sm:$0xff]
    %v868 = vld [vmem:[#allocation2 + $0x110] sm:$0xff]
    %v869 = vld [vmem:[#allocation2 + $0x120] sm:$0xff]
    %v870 = vld [vmem:[#allocation2 + $0x128] sm:$0xff]
    %v871 = vld [vmem:[#allocation2 + $0x138] sm:$0xff]
    %v872 = vld [vmem:[#allocation2 + $0x140] sm:$0xff]
    %v873 = vld [vmem:[#allocation2 + $0x150] sm:$0xff]
    %v874 = vld [vmem:[#allocation2 + $0x158] sm:$0xff]
    %v875 = vld [vmem:[#allocation2 + $0x168] sm:$0xff]
    %v876 = vld [vmem:[#allocation2 + $0x170] sm:$0xff]
    %v877 = vld [vmem:[#allocation2 + $0x1b0] sm:$0xff]
    %v878 = vld [vmem:[#allocation2 + $0x1b8] sm:$0xff]
    %v879 = vld [vmem:[#allocation2 + $0x1c8] sm:$0xff]
    %v880 = vld [vmem:[#allocation2 + $0x1d0] sm:$0xff]
    %v881 = vld [vmem:[#allocation2 + $0x1e0] sm:$0xff]
    %v882 = vld [vmem:[#allocation2 + $0x1e8] sm:$0xff]
    %v883 = vld [vmem:[#allocation2 + $0x1f8] sm:$0xff]
    %v884 = vld [vmem:[#allocation2 + $0x200] sm:$0xff]
    %v885 = vld [vmem:[#allocation2 + $0x210] sm:$0xff]
    %v886 = vld [vmem:[#allocation2 + $0x218] sm:$0xff]
    %v887 = vld [vmem:[#allocation2 + $0x228] sm:$0xff]
    %v888 = vld [vmem:[#allocation2 + $0x230] sm:$0xff]
    %v889 = vld [vmem:[#allocation2 + $0x240] sm:$0xff]
    %v890 = vld [vmem:[#allocation2 + $0x248] sm:$0xff]
    %v891 = vld [vmem:[#allocation2 + $0x258] sm:$0xff]
    %v892 = vld [vmem:[#allocation2 + $0x260] sm:$0xff]
    %v893 = vld [vmem:[#allocation2 + $0x270] sm:$0xff]
    %v894 = vld [vmem:[#allocation2 + $0x278] sm:$0xff]
    %v895 = vld [vmem:[#allocation2 + $0x288] sm:$0xff]
    %v896 = vld [vmem:[#allocation2 + $0x290] sm:$0xff]
    %v897 = vld [vmem:[#allocation2 + $0x2a0] sm:$0xff]
    %v898 = vld [vmem:[#allocation2 + $0x2a8] sm:$0xff]
    %v899 = vld [vmem:[#allocation2 + $0x2b8] sm:$0xff]
    %v900 = vld [vmem:[#allocation2 + $0x2c0] sm:$0xff]
    %v901 = vld [vmem:[#allocation2 + $0x2d0] sm:$0xff]
    %v902 = vld [vmem:[#allocation2 + $0x2d8] sm:$0xff]
    %v903 = vld [vmem:[#allocation2 + $0x2e8] sm:$0xff]
    %v904 = vld [vmem:[#allocation2 + $0x2f0] sm:$0xff]
    %v905 = vld [vmem:[#allocation2 + $0x300] sm:$0xff]
    %v906 = vld [vmem:[#allocation2 + $0x308] sm:$0xff]
    %v907 = vld [vmem:[#allocation2 + $0x318] sm:$0xff]
    %v908 = vld [vmem:[#allocation2 + $0x320] sm:$0xff]
    %v909 = vpack.c.bf16 %v846, %v845
    %v910 = vpack.c.bf16 %v848, %v847
    %v911 = vpack.c.bf16 %v850, %v849
    %v912 = vpack.c.bf16 %v852, %v851
    %v913 = vpack.c.bf16 %v854, %v853
    %v914 = vpack.c.bf16 %v856, %v855
    %v915 = vpack.c.bf16 %v858, %v857
    %v916 = vpack.c.bf16 %v860, %v859
    %v917 = vpack.c.bf16 %v862, %v861
    %v918 = vpack.c.bf16 %v864, %v863
    %v919 = vpack.c.bf16 %v866, %v865
    %v920 = vpack.c.bf16 %v868, %v867
    %v921 = vpack.c.bf16 %v870, %v869
    %v922 = vpack.c.bf16 %v872, %v871
    %v923 = vpack.c.bf16 %v874, %v873
    %v924 = vpack.c.bf16 %v876, %v875
    %v925 = vpack.c.bf16 %v878, %v877
    %v926 = vpack.c.bf16 %v880, %v879
    %v927 = vpack.c.bf16 %v882, %v881
    %v928 = vpack.c.bf16 %v884, %v883
    %v929 = vpack.c.bf16 %v886, %v885
    %v930 = vpack.c.bf16 %v888, %v887
    %v931 = vpack.c.bf16 %v890, %v889
    %v932 = vpack.c.bf16 %v892, %v891
    %v933 = vpack.c.bf16 %v894, %v893
    %v934 = vpack.c.bf16 %v896, %v895
    %v935 = vpack.c.bf16 %v898, %v897
    %v936 = vpack.c.bf16 %v900, %v899
    %v937 = vpack.c.bf16 %v902, %v901
    %v938 = vpack.c.bf16 %v904, %v903
    %v939 = vpack.c.bf16 %v906, %v905
    %v940 = vpack.c.bf16 %v908, %v907
    %941 = vst [vmem:[#allocation4] sm:$0xff] %v909
    %942 = vst [vmem:[#allocation4 + $0x48] sm:$0xff] %v910
    %943 = vst [vmem:[#allocation4 + $0x90] sm:$0xff] %v911
    %944 = vst [vmem:[#allocation4 + $0xd8] sm:$0xff] %v912
    %945 = vst [vmem:[#allocation4 + $0x120] sm:$0xff] %v913
    %946 = vst [vmem:[#allocation4 + $0x168] sm:$0xff] %v914
    %947 = vst [vmem:[#allocation4 + $0x1b0] sm:$0xff] %v915
    %948 = vst [vmem:[#allocation4 + $0x1f8] sm:$0xff] %v916
    %949 = vst [vmem:[#allocation4 + $0x240] sm:$0xff] %v917
    %950 = vst [vmem:[#allocation4 + $0x288] sm:$0xff] %v918
    %951 = vst [vmem:[#allocation4 + $0x2d0] sm:$0xff] %v919
    %952 = vst [vmem:[#allocation4 + $0x318] sm:$0xff] %v920
    %953 = vst [vmem:[#allocation4 + $0x360] sm:$0xff] %v921
    %954 = vst [vmem:[#allocation4 + $0x3a8] sm:$0xff] %v922
    %955 = vst [vmem:[#allocation4 + $0x3f0] sm:$0xff] %v923
    %956 = vst [vmem:[#allocation4 + $0x438] sm:$0xff] %v924
    %957 = vst [vmem:[#allocation4 + $0x480] sm:$0xff] %v925
    %958 = vst [vmem:[#allocation4 + $0x4c8] sm:$0xff] %v926
    %959 = vst [vmem:[#allocation4 + $0x510] sm:$0xff] %v927
    %960 = vst [vmem:[#allocation4 + $0x558] sm:$0xff] %v928
    %961 = vst [vmem:[#allocation4 + $0x5a0] sm:$0xff] %v929
    %962 = vst [vmem:[#allocation4 + $0x5e8] sm:$0xff] %v930
    %963 = vst [vmem:[#allocation4 + $0x630] sm:$0xff] %v931
    %964 = vst [vmem:[#allocation4 + $0x678] sm:$0xff] %v932
    %965 = vst [vmem:[#allocation4 + $0x6c0] sm:$0xff] %v933
    %966 = vst [vmem:[#allocation4 + $0x708] sm:$0xff] %v934
    %967 = vst [vmem:[#allocation4 + $0x750] sm:$0xff] %v935
    %968 = vst [vmem:[#allocation4 + $0x798] sm:$0xff] %v936
    %969 = vst [vmem:[#allocation4 + $0x7e0] sm:$0xff] %v937
    %970 = vst [vmem:[#allocation4 + $0x828] sm:$0xff] %v938
    %971 = vst [vmem:[#allocation4 + $0x870] sm:$0xff] %v939
    %972 = vst [vmem:[#allocation4 + $0x8b8] sm:$0xff] %v940
    %v973 = vld [vmem:[#allocation2 + $0x1] sm:$0xff]
    %v974 = vld [vmem:[#allocation2 + $0x9] sm:$0xff]
    %v975 = vld [vmem:[#allocation2 + $0x19] sm:$0xff]
    %v976 = vld [vmem:[#allocation2 + $0x21] sm:$0xff]
    %v977 = vld [vmem:[#allocation2 + $0x31] sm:$0xff]
    %v978 = vld [vmem:[#allocation2 + $0x39] sm:$0xff]
    %v979 = vld [vmem:[#allocation2 + $0x49] sm:$0xff]
    %v980 = vld [vmem:[#allocation2 + $0x51] sm:$0xff]
    %v981 = vld [vmem:[#allocation2 + $0x61] sm:$0xff]
    %v982 = vld [vmem:[#allocation2 + $0x69] sm:$0xff]
    %v983 = vld [vmem:[#allocation2 + $0x79] sm:$0xff]
    %v984 = vld [vmem:[#allocation2 + $0x81] sm:$0xff]
    %v985 = vld [vmem:[#allocation2 + $0x91] sm:$0xff]
    %v986 = vld [vmem:[#allocation2 + $0x99] sm:$0xff]
    %v987 = vld [vmem:[#allocation2 + $0xa9] sm:$0xff]
    %v988 = vld [vmem:[#allocation2 + $0xb1] sm:$0xff]
    %v989 = vld [vmem:[#allocation2 + $0xc1] sm:$0xff]
    %v990 = vld [vmem:[#allocation2 + $0xc9] sm:$0xff]
    %v991 = vld [vmem:[#allocation2 + $0xd9] sm:$0xff]
    %v992 = vld [vmem:[#allocation2 + $0xe1] sm:$0xff]
    %v993 = vld [vmem:[#allocation2 + $0xf1] sm:$0xff]
    %v994 = vld [vmem:[#allocation2 + $0xf9] sm:$0xff]
    %v995 = vld [vmem:[#allocation2 + $0x109] sm:$0xff]
    %v996 = vld [vmem:[#allocation2 + $0x111] sm:$0xff]
    %v997 = vld [vmem:[#allocation2 + $0x121] sm:$0xff]
    %v998 = vld [vmem:[#allocation2 + $0x129] sm:$0xff]
    %v999 = vld [vmem:[#allocation2 + $0x139] sm:$0xff]
    %v1000 = vld [vmem:[#allocation2 + $0x141] sm:$0xff]
    %v1001 = vld [vmem:[#allocation2 + $0x151] sm:$0xff]
    %v1002 = vld [vmem:[#allocation2 + $0x159] sm:$0xff]
    %v1003 = vld [vmem:[#allocation2 + $0x169] sm:$0xff]
    %v1004 = vld [vmem:[#allocation2 + $0x171] sm:$0xff]
    %v1005 = vld [vmem:[#allocation2 + $0x1b1] sm:$0xff]
    %v1006 = vld [vmem:[#allocation2 + $0x1b9] sm:$0xff]
    %v1007 = vld [vmem:[#allocation2 + $0x1c9] sm:$0xff]
    %v1008 = vld [vmem:[#allocation2 + $0x1d1] sm:$0xff]
    %v1009 = vld [vmem:[#allocation2 + $0x1e1] sm:$0xff]
    %v1010 = vld [vmem:[#allocation2 + $0x1e9] sm:$0xff]
    %v1011 = vld [vmem:[#allocation2 + $0x1f9] sm:$0xff]
    %v1012 = vld [vmem:[#allocation2 + $0x201] sm:$0xff]
    %v1013 = vld [vmem:[#allocation2 + $0x211] sm:$0xff]
    %v1014 = vld [vmem:[#allocation2 + $0x219] sm:$0xff]
    %v1015 = vld [vmem:[#allocation2 + $0x229] sm:$0xff]
    %v1016 = vld [vmem:[#allocation2 + $0x231] sm:$0xff]
    %v1017 = vld [vmem:[#allocation2 + $0x241] sm:$0xff]
    %v1018 = vld [vmem:[#allocation2 + $0x249] sm:$0xff]
    %v1019 = vld [vmem:[#allocation2 + $0x259] sm:$0xff]
    %v1020 = vld [vmem:[#allocation2 + $0x261] sm:$0xff]
    %v1021 = vld [vmem:[#allocation2 + $0x271] sm:$0xff]
    %v1022 = vld [vmem:[#allocation2 + $0x279] sm:$0xff]
    %v1023 = vld [vmem:[#allocation2 + $0x289] sm:$0xff]
    %v1024 = vld [vmem:[#allocation2 + $0x291] sm:$0xff]
    %v1025 = vld [vmem:[#allocation2 + $0x2a1] sm:$0xff]
    %v1026 = vld [vmem:[#allocation2 + $0x2a9] sm:$0xff]
    %v1027 = vld [vmem:[#allocation2 + $0x2b9] sm:$0xff]
    %v1028 = vld [vmem:[#allocation2 + $0x2c1] sm:$0xff]
    %v1029 = vld [vmem:[#allocation2 + $0x2d1] sm:$0xff]
    %v1030 = vld [vmem:[#allocation2 + $0x2d9] sm:$0xff]
    %v1031 = vld [vmem:[#allocation2 + $0x2e9] sm:$0xff]
    %v1032 = vld [vmem:[#allocation2 + $0x2f1] sm:$0xff]
    %v1033 = vld [vmem:[#allocation2 + $0x301] sm:$0xff]
    %v1034 = vld [vmem:[#allocation2 + $0x309] sm:$0xff]
    %v1035 = vld [vmem:[#allocation2 + $0x319] sm:$0xff]
    %v1036 = vld [vmem:[#allocation2 + $0x321] sm:$0xff]
    %v1037 = vpack.c.bf16 %v974, %v973
    %v1038 = vpack.c.bf16 %v976, %v975
    %v1039 = vpack.c.bf16 %v978, %v977
    %v1040 = vpack.c.bf16 %v980, %v979
    %v1041 = vpack.c.bf16 %v982, %v981
    %v1042 = vpack.c.bf16 %v984, %v983
    %v1043 = vpack.c.bf16 %v986, %v985
    %v1044 = vpack.c.bf16 %v988, %v987
    %v1045 = vpack.c.bf16 %v990, %v989
    %v1046 = vpack.c.bf16 %v992, %v991
    %v1047 = vpack.c.bf16 %v994, %v993
    %v1048 = vpack.c.bf16 %v996, %v995
    %v1049 = vpack.c.bf16 %v998, %v997
    %v1050 = vpack.c.bf16 %v1000, %v999
    %v1051 = vpack.c.bf16 %v1002, %v1001
    %v1052 = vpack.c.bf16 %v1004, %v1003
    %v1053 = vpack.c.bf16 %v1006, %v1005
    %v1054 = vpack.c.bf16 %v1008, %v1007
    %v1055 = vpack.c.bf16 %v1010, %v1009
    %v1056 = vpack.c.bf16 %v1012, %v1011
    %v1057 = vpack.c.bf16 %v1014, %v1013
    %v1058 = vpack.c.bf16 %v1016, %v1015
    %v1059 = vpack.c.bf16 %v1018, %v1017
    %v1060 = vpack.c.bf16 %v1020, %v1019
    %v1061 = vpack.c.bf16 %v1022, %v1021
    %v1062 = vpack.c.bf16 %v1024, %v1023
    %v1063 = vpack.c.bf16 %v1026, %v1025
    %v1064 = vpack.c.bf16 %v1028, %v1027
    %v1065 = vpack.c.bf16 %v1030, %v1029
    %v1066 = vpack.c.bf16 %v1032, %v1031
    %v1067 = vpack.c.bf16 %v1034, %v1033
    %v1068 = vpack.c.bf16 %v1036, %v1035
    %1069 = vst [vmem:[#allocation4 + $0x8] sm:$0xff] %v1037
    %1070 = vst [vmem:[#allocation4 + $0x50] sm:$0xff] %v1038
    %1071 = vst [vmem:[#allocation4 + $0x98] sm:$0xff] %v1039
    %1072 = vst [vmem:[#allocation4 + $0xe0] sm:$0xff] %v1040
    %1073 = vst [vmem:[#allocation4 + $0x128] sm:$0xff] %v1041
    %1074 = vst [vmem:[#allocation4 + $0x170] sm:$0xff] %v1042
    %1075 = vst [vmem:[#allocation4 + $0x1b8] sm:$0xff] %v1043
    %1076 = vst [vmem:[#allocation4 + $0x200] sm:$0xff] %v1044
    %1077 = vst [vmem:[#allocation4 + $0x248] sm:$0xff] %v1045
    %1078 = vst [vmem:[#allocation4 + $0x290] sm:$0xff] %v1046
    %1079 = vst [vmem:[#allocation4 + $0x2d8] sm:$0xff] %v1047
    %1080 = vst [vmem:[#allocation4 + $0x320] sm:$0xff] %v1048
    %1081 = vst [vmem:[#allocation4 + $0x368] sm:$0xff] %v1049
    %1082 = vst [vmem:[#allocation4 + $0x3b0] sm:$0xff] %v1050
    %1083 = vst [vmem:[#allocation4 + $0x3f8] sm:$0xff] %v1051
    %1084 = vst [vmem:[#allocation4 + $0x440] sm:$0xff] %v1052
    %1085 = vst [vmem:[#allocation4 + $0x488] sm:$0xff] %v1053
    %1086 = vst [vmem:[#allocation4 + $0x4d0] sm:$0xff] %v1054
    %1087 = vst [vmem:[#allocation4 + $0x518] sm:$0xff] %v1055
    %1088 = vst [vmem:[#allocation4 + $0x560] sm:$0xff] %v1056
    %1089 = vst [vmem:[#allocation4 + $0x5a8] sm:$0xff] %v1057
    %1090 = vst [vmem:[#allocation4 + $0x5f0] sm:$0xff] %v1058
    %1091 = vst [vmem:[#allocation4 + $0x638] sm:$0xff] %v1059
    %1092 = vst [vmem:[#allocation4 + $0x680] sm:$0xff] %v1060
    %1093 = vst [vmem:[#allocation4 + $0x6c8] sm:$0xff] %v1061
    %1094 = vst [vmem:[#allocation4 + $0x710] sm:$0xff] %v1062
    %1095 = vst [vmem:[#allocation4 + $0x758] sm:$0xff] %v1063
    %1096 = vst [vmem:[#allocation4 + $0x7a0] sm:$0xff] %v1064
    %1097 = vst [vmem:[#allocation4 + $0x7e8] sm:$0xff] %v1065
    %1098 = vst [vmem:[#allocation4 + $0x830] sm:$0xff] %v1066
    %1099 = vst [vmem:[#allocation4 + $0x878] sm:$0xff] %v1067
    %1100 = vst [vmem:[#allocation4 + $0x8c0] sm:$0xff] %v1068
    %v1101 = vld [vmem:[#allocation2 + $0x2] sm:$0xff]
    %v1102 = vld [vmem:[#allocation2 + $0xa] sm:$0xff]
    %v1103 = vld [vmem:[#allocation2 + $0x1a] sm:$0xff]
    %v1104 = vld [vmem:[#allocation2 + $0x22] sm:$0xff]
    %v1105 = vld [vmem:[#allocation2 + $0x32] sm:$0xff]
    %v1106 = vld [vmem:[#allocation2 + $0x3a] sm:$0xff]
    %v1107 = vld [vmem:[#allocation2 + $0x4a] sm:$0xff]
    %v1108 = vld [vmem:[#allocation2 + $0x52] sm:$0xff]
    %v1109 = vld [vmem:[#allocation2 + $0x62] sm:$0xff]
    %v1110 = vld [vmem:[#allocation2 + $0x6a] sm:$0xff]
    %v1111 = vld [vmem:[#allocation2 + $0x7a] sm:$0xff]
    %v1112 = vld [vmem:[#allocation2 + $0x82] sm:$0xff]
    %v1113 = vld [vmem:[#allocation2 + $0x92] sm:$0xff]
    %v1114 = vld [vmem:[#allocation2 + $0x9a] sm:$0xff]
    %v1115 = vld [vmem:[#allocation2 + $0xaa] sm:$0xff]
    %v1116 = vld [vmem:[#allocation2 + $0xb2] sm:$0xff]
    %v1117 = vld [vmem:[#allocation2 + $0xc2] sm:$0xff]
    %v1118 = vld [vmem:[#allocation2 + $0xca] sm:$0xff]
    %v1119 = vld [vmem:[#allocation2 + $0xda] sm:$0xff]
    %v1120 = vld [vmem:[#allocation2 + $0xe2] sm:$0xff]
    %v1121 = vld [vmem:[#allocation2 + $0xf2] sm:$0xff]
    %v1122 = vld [vmem:[#allocation2 + $0xfa] sm:$0xff]
    %v1123 = vld [vmem:[#allocation2 + $0x10a] sm:$0xff]
    %v1124 = vld [vmem:[#allocation2 + $0x112] sm:$0xff]
    %v1125 = vld [vmem:[#allocation2 + $0x122] sm:$0xff]
    %v1126 = vld [vmem:[#allocation2 + $0x12a] sm:$0xff]
    %v1127 = vld [vmem:[#allocation2 + $0x13a] sm:$0xff]
    %v1128 = vld [vmem:[#allocation2 + $0x142] sm:$0xff]
    %v1129 = vld [vmem:[#allocation2 + $0x152] sm:$0xff]
    %v1130 = vld [vmem:[#allocation2 + $0x15a] sm:$0xff]
    %v1131 = vld [vmem:[#allocation2 + $0x16a] sm:$0xff]
    %v1132 = vld [vmem:[#allocation2 + $0x172] sm:$0xff]
    %v1133 = vld [vmem:[#allocation2 + $0x1b2] sm:$0xff]
    %v1134 = vld [vmem:[#allocation2 + $0x1ba] sm:$0xff]
    %v1135 = vld [vmem:[#allocation2 + $0x1ca] sm:$0xff]
    %v1136 = vld [vmem:[#allocation2 + $0x1d2] sm:$0xff]
    %v1137 = vld [vmem:[#allocation2 + $0x1e2] sm:$0xff]
    %v1138 = vld [vmem:[#allocation2 + $0x1ea] sm:$0xff]
    %v1139 = vld [vmem:[#allocation2 + $0x1fa] sm:$0xff]
    %v1140 = vld [vmem:[#allocation2 + $0x202] sm:$0xff]
    %v1141 = vld [vmem:[#allocation2 + $0x212] sm:$0xff]
    %v1142 = vld [vmem:[#allocation2 + $0x21a] sm:$0xff]
    %v1143 = vld [vmem:[#allocation2 + $0x22a] sm:$0xff]
    %v1144 = vld [vmem:[#allocation2 + $0x232] sm:$0xff]
    %v1145 = vld [vmem:[#allocation2 + $0x242] sm:$0xff]
    %v1146 = vld [vmem:[#allocation2 + $0x24a] sm:$0xff]
    %v1147 = vld [vmem:[#allocation2 + $0x25a] sm:$0xff]
    %v1148 = vld [vmem:[#allocation2 + $0x262] sm:$0xff]
    %v1149 = vld [vmem:[#allocation2 + $0x272] sm:$0xff]
    %v1150 = vld [vmem:[#allocation2 + $0x27a] sm:$0xff]
    %v1151 = vld [vmem:[#allocation2 + $0x28a] sm:$0xff]
    %v1152 = vld [vmem:[#allocation2 + $0x292] sm:$0xff]
    %v1153 = vld [vmem:[#allocation2 + $0x2a2] sm:$0xff]
    %v1154 = vld [vmem:[#allocation2 + $0x2aa] sm:$0xff]
    %v1155 = vld [vmem:[#allocation2 + $0x2ba] sm:$0xff]
    %v1156 = vld [vmem:[#allocation2 + $0x2c2] sm:$0xff]
    %v1157 = vld [vmem:[#allocation2 + $0x2d2] sm:$0xff]
    %v1158 = vld [vmem:[#allocation2 + $0x2da] sm:$0xff]
    %v1159 = vld [vmem:[#allocation2 + $0x2ea] sm:$0xff]
    %v1160 = vld [vmem:[#allocation2 + $0x2f2] sm:$0xff]
    %v1161 = vld [vmem:[#allocation2 + $0x302] sm:$0xff]
    %v1162 = vld [vmem:[#allocation2 + $0x30a] sm:$0xff]
    %v1163 = vld [vmem:[#allocation2 + $0x31a] sm:$0xff]
    %v1164 = vld [vmem:[#allocation2 + $0x322] sm:$0xff]
    %v1165 = vpack.c.bf16 %v1102, %v1101
    %v1166 = vpack.c.bf16 %v1104, %v1103
    %v1167 = vpack.c.bf16 %v1106, %v1105
    %v1168 = vpack.c.bf16 %v1108, %v1107
    %v1169 = vpack.c.bf16 %v1110, %v1109
    %v1170 = vpack.c.bf16 %v1112, %v1111
    %v1171 = vpack.c.bf16 %v1114, %v1113
    %v1172 = vpack.c.bf16 %v1116, %v1115
    %v1173 = vpack.c.bf16 %v1118, %v1117
    %v1174 = vpack.c.bf16 %v1120, %v1119
    %v1175 = vpack.c.bf16 %v1122, %v1121
    %v1176 = vpack.c.bf16 %v1124, %v1123
    %v1177 = vpack.c.bf16 %v1126, %v1125
    %v1178 = vpack.c.bf16 %v1128, %v1127
    %v1179 = vpack.c.bf16 %v1130, %v1129
    %v1180 = vpack.c.bf16 %v1132, %v1131
    %v1181 = vpack.c.bf16 %v1134, %v1133
    %v1182 = vpack.c.bf16 %v1136, %v1135
    %v1183 = vpack.c.bf16 %v1138, %v1137
    %v1184 = vpack.c.bf16 %v1140, %v1139
    %v1185 = vpack.c.bf16 %v1142, %v1141
    %v1186 = vpack.c.bf16 %v1144, %v1143
    %v1187 = vpack.c.bf16 %v1146, %v1145
    %v1188 = vpack.c.bf16 %v1148, %v1147
    %v1189 = vpack.c.bf16 %v1150, %v1149
    %v1190 = vpack.c.bf16 %v1152, %v1151
    %v1191 = vpack.c.bf16 %v1154, %v1153
    %v1192 = vpack.c.bf16 %v1156, %v1155
    %v1193 = vpack.c.bf16 %v1158, %v1157
    %v1194 = vpack.c.bf16 %v1160, %v1159
    %v1195 = vpack.c.bf16 %v1162, %v1161
    %v1196 = vpack.c.bf16 %v1164, %v1163
    %1197 = vst [vmem:[#allocation4 + $0x10] sm:$0xff] %v1165
    %1198 = vst [vmem:[#allocation4 + $0x58] sm:$0xff] %v1166
    %1199 = vst [vmem:[#allocation4 + $0xa0] sm:$0xff] %v1167
    %1200 = vst [vmem:[#allocation4 + $0xe8] sm:$0xff] %v1168
    %1201 = vst [vmem:[#allocation4 + $0x130] sm:$0xff] %v1169
    %1202 = vst [vmem:[#allocation4 + $0x178] sm:$0xff] %v1170
    %1203 = vst [vmem:[#allocation4 + $0x1c0] sm:$0xff] %v1171
    %1204 = vst [vmem:[#allocation4 + $0x208] sm:$0xff] %v1172
    %1205 = vst [vmem:[#allocation4 + $0x250] sm:$0xff] %v1173
    %1206 = vst [vmem:[#allocation4 + $0x298] sm:$0xff] %v1174
    %1207 = vst [vmem:[#allocation4 + $0x2e0] sm:$0xff] %v1175
    %1208 = vst [vmem:[#allocation4 + $0x328] sm:$0xff] %v1176
    %1209 = vst [vmem:[#allocation4 + $0x370] sm:$0xff] %v1177
    %1210 = vst [vmem:[#allocation4 + $0x3b8] sm:$0xff] %v1178
    %1211 = vst [vmem:[#allocation4 + $0x400] sm:$0xff] %v1179
    %1212 = vst [vmem:[#allocation4 + $0x448] sm:$0xff] %v1180
    %1213 = vst [vmem:[#allocation4 + $0x490] sm:$0xff] %v1181
    %1214 = vst [vmem:[#allocation4 + $0x4d8] sm:$0xff] %v1182
    %1215 = vst [vmem:[#allocation4 + $0x520] sm:$0xff] %v1183
    %1216 = vst [vmem:[#allocation4 + $0x568] sm:$0xff] %v1184
    %1217 = vst [vmem:[#allocation4 + $0x5b0] sm:$0xff] %v1185
    %1218 = vst [vmem:[#allocation4 + $0x5f8] sm:$0xff] %v1186
    %1219 = vst [vmem:[#allocation4 + $0x640] sm:$0xff] %v1187
    %1220 = vst [vmem:[#allocation4 + $0x688] sm:$0xff] %v1188
    %1221 = vst [vmem:[#allocation4 + $0x6d0] sm:$0xff] %v1189
    %1222 = vst [vmem:[#allocation4 + $0x718] sm:$0xff] %v1190
    %1223 = vst [vmem:[#allocation4 + $0x760] sm:$0xff] %v1191
    %1224 = vst [vmem:[#allocation4 + $0x7a8] sm:$0xff] %v1192
    %1225 = vst [vmem:[#allocation4 + $0x7f0] sm:$0xff] %v1193
    %1226 = vst [vmem:[#allocation4 + $0x838] sm:$0xff] %v1194
    %1227 = vst [vmem:[#allocation4 + $0x880] sm:$0xff] %v1195
    %1228 = vst [vmem:[#allocation4 + $0x8c8] sm:$0xff] %v1196
    %v1229 = vld [vmem:[%s780] sm:$0xff]
    %v1230 = vld [vmem:[%s780 + $0x8] sm:$0xff]
    %v1231 = vld [vmem:[%s780 + $0x18] sm:$0xff]
    %v1232 = vld [vmem:[%s780 + $0x20] sm:$0xff]
    %v1233 = vld [vmem:[%s780 + $0x30] sm:$0xff]
    %v1234 = vld [vmem:[%s780 + $0x38] sm:$0xff]
    %v1235 = vld [vmem:[%s780 + $0x48] sm:$0xff]
    %v1236 = vld [vmem:[%s780 + $0x50] sm:$0xff]
    %v1237 = vld [vmem:[%s780 + $0x60] sm:$0xff]
    %v1238 = vld [vmem:[%s780 + $0x68] sm:$0xff]
    %v1239 = vld [vmem:[%s780 + $0x78] sm:$0xff]
    %v1240 = vld [vmem:[%s780 + $0x80] sm:$0xff]
    %v1241 = vld [vmem:[%s780 + $0x90] sm:$0xff]
    %v1242 = vld [vmem:[%s780 + $0x98] sm:$0xff]
    %v1243 = vld [vmem:[%s780 + $0xa8] sm:$0xff]
    %v1244 = vld [vmem:[%s780 + $0xb0] sm:$0xff]
    %v1245 = vld [vmem:[%s780 + $0xc0] sm:$0xff]
    %v1246 = vld [vmem:[%s780 + $0xc8] sm:$0xff]
    %v1247 = vld [vmem:[%s780 + $0xd8] sm:$0xff]
    %v1248 = vld [vmem:[%s780 + $0xe0] sm:$0xff]
    %v1249 = vld [vmem:[%s780 + $0xf0] sm:$0xff]
    %v1250 = vld [vmem:[%s780 + $0xf8] sm:$0xff]
    %v1251 = vld [vmem:[%s780 + $0x108] sm:$0xff]
    %v1252 = vld [vmem:[%s780 + $0x110] sm:$0xff]
    %v1253 = vld [vmem:[%s780 + $0x120] sm:$0xff]
    %v1254 = vld [vmem:[%s780 + $0x128] sm:$0xff]
    %v1255 = vld [vmem:[%s780 + $0x138] sm:$0xff]
    %v1256 = vld [vmem:[%s780 + $0x140] sm:$0xff]
    %v1257 = vld [vmem:[%s780 + $0x150] sm:$0xff]
    %v1258 = vld [vmem:[%s780 + $0x158] sm:$0xff]
    %v1259 = vld [vmem:[%s780 + $0x168] sm:$0xff]
    %v1260 = vld [vmem:[%s780 + $0x170] sm:$0xff]
    %v1261 = vld [vmem:[%s780 + $0x1b0] sm:$0xff]
    %v1262 = vld [vmem:[%s780 + $0x1b8] sm:$0xff]
    %v1263 = vld [vmem:[%s780 + $0x1c8] sm:$0xff]
    %v1264 = vld [vmem:[%s780 + $0x1d0] sm:$0xff]
    %v1265 = vld [vmem:[%s780 + $0x1e0] sm:$0xff]
    %v1266 = vld [vmem:[%s780 + $0x1e8] sm:$0xff]
    %v1267 = vld [vmem:[%s780 + $0x1f8] sm:$0xff]
    %v1268 = vld [vmem:[%s780 + $0x200] sm:$0xff]
    %v1269 = vld [vmem:[%s780 + $0x210] sm:$0xff]
    %v1270 = vld [vmem:[%s780 + $0x218] sm:$0xff]
    %v1271 = vld [vmem:[%s780 + $0x228] sm:$0xff]
    %v1272 = vld [vmem:[%s780 + $0x230] sm:$0xff]
    %v1273 = vld [vmem:[%s780 + $0x240] sm:$0xff]
    %v1274 = vld [vmem:[%s780 + $0x248] sm:$0xff]
    %v1275 = vld [vmem:[%s780 + $0x258] sm:$0xff]
    %v1276 = vld [vmem:[%s780 + $0x260] sm:$0xff]
    %v1277 = vld [vmem:[%s780 + $0x270] sm:$0xff]
    %v1278 = vld [vmem:[%s780 + $0x278] sm:$0xff]
    %v1279 = vld [vmem:[%s780 + $0x288] sm:$0xff]
    %v1280 = vld [vmem:[%s780 + $0x290] sm:$0xff]
    %v1281 = vld [vmem:[%s780 + $0x2a0] sm:$0xff]
    %v1282 = vld [vmem:[%s780 + $0x2a8] sm:$0xff]
    %v1283 = vld [vmem:[%s780 + $0x2b8] sm:$0xff]
    %v1284 = vld [vmem:[%s780 + $0x2c0] sm:$0xff]
    %v1285 = vld [vmem:[%s780 + $0x2d0] sm:$0xff]
    %v1286 = vld [vmem:[%s780 + $0x2d8] sm:$0xff]
    %v1287 = vld [vmem:[%s780 + $0x2e8] sm:$0xff]
    %v1288 = vld [vmem:[%s780 + $0x2f0] sm:$0xff]
    %v1289 = vld [vmem:[%s780 + $0x300] sm:$0xff]
    %v1290 = vld [vmem:[%s780 + $0x308] sm:$0xff]
    %v1291 = vld [vmem:[%s780 + $0x318] sm:$0xff]
    %v1292 = vld [vmem:[%s780 + $0x320] sm:$0xff]
    %v1293 = vpack.c.bf16 %v1230, %v1229
    %v1294 = vpack.c.bf16 %v1232, %v1231
    %v1295 = vpack.c.bf16 %v1234, %v1233
    %v1296 = vpack.c.bf16 %v1236, %v1235
    %v1297 = vpack.c.bf16 %v1238, %v1237
    %v1298 = vpack.c.bf16 %v1240, %v1239
    %v1299 = vpack.c.bf16 %v1242, %v1241
    %v1300 = vpack.c.bf16 %v1244, %v1243
    %v1301 = vpack.c.bf16 %v1246, %v1245
    %v1302 = vpack.c.bf16 %v1248, %v1247
    %v1303 = vpack.c.bf16 %v1250, %v1249
    %v1304 = vpack.c.bf16 %v1252, %v1251
    %v1305 = vpack.c.bf16 %v1254, %v1253
    %v1306 = vpack.c.bf16 %v1256, %v1255
    %v1307 = vpack.c.bf16 %v1258, %v1257
    %v1308 = vpack.c.bf16 %v1260, %v1259
    %v1309 = vpack.c.bf16 %v1262, %v1261
    %v1310 = vpack.c.bf16 %v1264, %v1263
    %v1311 = vpack.c.bf16 %v1266, %v1265
    %v1312 = vpack.c.bf16 %v1268, %v1267
    %v1313 = vpack.c.bf16 %v1270, %v1269
    %v1314 = vpack.c.bf16 %v1272, %v1271
    %v1315 = vpack.c.bf16 %v1274, %v1273
    %v1316 = vpack.c.bf16 %v1276, %v1275
    %v1317 = vpack.c.bf16 %v1278, %v1277
    %v1318 = vpack.c.bf16 %v1280, %v1279
    %v1319 = vpack.c.bf16 %v1282, %v1281
    %v1320 = vpack.c.bf16 %v1284, %v1283
    %v1321 = vpack.c.bf16 %v1286, %v1285
    %v1322 = vpack.c.bf16 %v1288, %v1287
    %v1323 = vpack.c.bf16 %v1290, %v1289
    %v1324 = vpack.c.bf16 %v1292, %v1291
    %1325 = vst [vmem:[#allocation4 + $0x18] sm:$0xff] %v1293
    %1326 = vst [vmem:[#allocation4 + $0x60] sm:$0xff] %v1294
    %1327 = vst [vmem:[#allocation4 + $0xa8] sm:$0xff] %v1295
    %1328 = vst [vmem:[#allocation4 + $0xf0] sm:$0xff] %v1296
    %1329 = vst [vmem:[#allocation4 + $0x138] sm:$0xff] %v1297
    %1330 = vst [vmem:[#allocation4 + $0x180] sm:$0xff] %v1298
    %1331 = vst [vmem:[#allocation4 + $0x1c8] sm:$0xff] %v1299
    %1332 = vst [vmem:[#allocation4 + $0x210] sm:$0xff] %v1300
    %1333 = vst [vmem:[#allocation4 + $0x258] sm:$0xff] %v1301
    %1334 = vst [vmem:[#allocation4 + $0x2a0] sm:$0xff] %v1302
    %1335 = vst [vmem:[#allocation4 + $0x2e8] sm:$0xff] %v1303
    %1336 = vst [vmem:[#allocation4 + $0x330] sm:$0xff] %v1304
    %1337 = vst [vmem:[#allocation4 + $0x378] sm:$0xff] %v1305
    %1338 = vst [vmem:[#allocation4 + $0x3c0] sm:$0xff] %v1306
    %1339 = vst [vmem:[#allocation4 + $0x408] sm:$0xff] %v1307
    %1340 = vst [vmem:[#allocation4 + $0x450] sm:$0xff] %v1308
    %1341 = vst [vmem:[#allocation4 + $0x498] sm:$0xff] %v1309
    %1342 = vst [vmem:[#allocation4 + $0x4e0] sm:$0xff] %v1310
    %1343 = vst [vmem:[#allocation4 + $0x528] sm:$0xff] %v1311
    %1344 = vst [vmem:[#allocation4 + $0x570] sm:$0xff] %v1312
    %1345 = vst [vmem:[#allocation4 + $0x5b8] sm:$0xff] %v1313
    %1346 = vst [vmem:[#allocation4 + $0x600] sm:$0xff] %v1314
    %1347 = vst [vmem:[#allocation4 + $0x648] sm:$0xff] %v1315
    %1348 = vst [vmem:[#allocation4 + $0x690] sm:$0xff] %v1316
    %1349 = vst [vmem:[#allocation4 + $0x6d8] sm:$0xff] %v1317
    %1350 = vst [vmem:[#allocation4 + $0x720] sm:$0xff] %v1318
    %1351 = vst [vmem:[#allocation4 + $0x768] sm:$0xff] %v1319
    %1352 = vst [vmem:[#allocation4 + $0x7b0] sm:$0xff] %v1320
    %1353 = vst [vmem:[#allocation4 + $0x7f8] sm:$0xff] %v1321
    %1354 = vst [vmem:[#allocation4 + $0x840] sm:$0xff] %v1322
    %1355 = vst [vmem:[#allocation4 + $0x888] sm:$0xff] %v1323
    %1356 = vst [vmem:[#allocation4 + $0x8d0] sm:$0xff] %v1324
    %v1357 = vld [vmem:[%s780 + $0x1] sm:$0xff]
    %v1358 = vld [vmem:[%s780 + $0x9] sm:$0xff]
    %v1359 = vld [vmem:[%s780 + $0x19] sm:$0xff]
    %v1360 = vld [vmem:[%s780 + $0x21] sm:$0xff]
    %v1361 = vld [vmem:[%s780 + $0x31] sm:$0xff]
    %v1362 = vld [vmem:[%s780 + $0x39] sm:$0xff]
    %v1363 = vld [vmem:[%s780 + $0x49] sm:$0xff]
    %v1364 = vld [vmem:[%s780 + $0x51] sm:$0xff]
    %v1365 = vld [vmem:[%s780 + $0x61] sm:$0xff]
    %v1366 = vld [vmem:[%s780 + $0x69] sm:$0xff]
    %v1367 = vld [vmem:[%s780 + $0x79] sm:$0xff]
    %v1368 = vld [vmem:[%s780 + $0x81] sm:$0xff]
    %v1369 = vld [vmem:[%s780 + $0x91] sm:$0xff]
    %v1370 = vld [vmem:[%s780 + $0x99] sm:$0xff]
    %v1371 = vld [vmem:[%s780 + $0xa9] sm:$0xff]
    %v1372 = vld [vmem:[%s780 + $0xb1] sm:$0xff]
    %v1373 = vld [vmem:[%s780 + $0xc1] sm:$0xff]
    %v1374 = vld [vmem:[%s780 + $0xc9] sm:$0xff]
    %v1375 = vld [vmem:[%s780 + $0xd9] sm:$0xff]
    %v1376 = vld [vmem:[%s780 + $0xe1] sm:$0xff]
    %v1377 = vld [vmem:[%s780 + $0xf1] sm:$0xff]
    %v1378 = vld [vmem:[%s780 + $0xf9] sm:$0xff]
    %v1379 = vld [vmem:[%s780 + $0x109] sm:$0xff]
    %v1380 = vld [vmem:[%s780 + $0x111] sm:$0xff]
    %v1381 = vld [vmem:[%s780 + $0x121] sm:$0xff]
    %v1382 = vld [vmem:[%s780 + $0x129] sm:$0xff]
    %v1383 = vld [vmem:[%s780 + $0x139] sm:$0xff]
    %v1384 = vld [vmem:[%s780 + $0x141] sm:$0xff]
    %v1385 = vld [vmem:[%s780 + $0x151] sm:$0xff]
    %v1386 = vld [vmem:[%s780 + $0x159] sm:$0xff]
    %v1387 = vld [vmem:[%s780 + $0x169] sm:$0xff]
    %v1388 = vld [vmem:[%s780 + $0x171] sm:$0xff]
    %v1389 = vld [vmem:[%s780 + $0x1b1] sm:$0xff]
    %v1390 = vld [vmem:[%s780 + $0x1b9] sm:$0xff]
    %v1391 = vld [vmem:[%s780 + $0x1c9] sm:$0xff]
    %v1392 = vld [vmem:[%s780 + $0x1d1] sm:$0xff]
    %v1393 = vld [vmem:[%s780 + $0x1e1] sm:$0xff]
    %v1394 = vld [vmem:[%s780 + $0x1e9] sm:$0xff]
    %v1395 = vld [vmem:[%s780 + $0x1f9] sm:$0xff]
    %v1396 = vld [vmem:[%s780 + $0x201] sm:$0xff]
    %v1397 = vld [vmem:[%s780 + $0x211] sm:$0xff]
    %v1398 = vld [vmem:[%s780 + $0x219] sm:$0xff]
    %v1399 = vld [vmem:[%s780 + $0x229] sm:$0xff]
    %v1400 = vld [vmem:[%s780 + $0x231] sm:$0xff]
    %v1401 = vld [vmem:[%s780 + $0x241] sm:$0xff]
    %v1402 = vld [vmem:[%s780 + $0x249] sm:$0xff]
    %v1403 = vld [vmem:[%s780 + $0x259] sm:$0xff]
    %v1404 = vld [vmem:[%s780 + $0x261] sm:$0xff]
    %v1405 = vld [vmem:[%s780 + $0x271] sm:$0xff]
    %v1406 = vld [vmem:[%s780 + $0x279] sm:$0xff]
    %v1407 = vld [vmem:[%s780 + $0x289] sm:$0xff]
    %v1408 = vld [vmem:[%s780 + $0x291] sm:$0xff]
    %v1409 = vld [vmem:[%s780 + $0x2a1] sm:$0xff]
    %v1410 = vld [vmem:[%s780 + $0x2a9] sm:$0xff]
    %v1411 = vld [vmem:[%s780 + $0x2b9] sm:$0xff]
    %v1412 = vld [vmem:[%s780 + $0x2c1] sm:$0xff]
    %v1413 = vld [vmem:[%s780 + $0x2d1] sm:$0xff]
    %v1414 = vld [vmem:[%s780 + $0x2d9] sm:$0xff]
    %v1415 = vld [vmem:[%s780 + $0x2e9] sm:$0xff]
    %v1416 = vld [vmem:[%s780 + $0x2f1] sm:$0xff]
    %v1417 = vld [vmem:[%s780 + $0x301] sm:$0xff]
    %v1418 = vld [vmem:[%s780 + $0x309] sm:$0xff]
    %v1419 = vld [vmem:[%s780 + $0x319] sm:$0xff]
    %v1420 = vld [vmem:[%s780 + $0x321] sm:$0xff]
    %v1421 = vpack.c.bf16 %v1358, %v1357
    %v1422 = vpack.c.bf16 %v1360, %v1359
    %v1423 = vpack.c.bf16 %v1362, %v1361
    %v1424 = vpack.c.bf16 %v1364, %v1363
    %v1425 = vpack.c.bf16 %v1366, %v1365
    %v1426 = vpack.c.bf16 %v1368, %v1367
    %v1427 = vpack.c.bf16 %v1370, %v1369
    %v1428 = vpack.c.bf16 %v1372, %v1371
    %v1429 = vpack.c.bf16 %v1374, %v1373
    %v1430 = vpack.c.bf16 %v1376, %v1375
    %v1431 = vpack.c.bf16 %v1378, %v1377
    %v1432 = vpack.c.bf16 %v1380, %v1379
    %v1433 = vpack.c.bf16 %v1382, %v1381
    %v1434 = vpack.c.bf16 %v1384, %v1383
    %v1435 = vpack.c.bf16 %v1386, %v1385
    %v1436 = vpack.c.bf16 %v1388, %v1387
    %v1437 = vpack.c.bf16 %v1390, %v1389
    %v1438 = vpack.c.bf16 %v1392, %v1391
    %v1439 = vpack.c.bf16 %v1394, %v1393
    %v1440 = vpack.c.bf16 %v1396, %v1395
    %v1441 = vpack.c.bf16 %v1398, %v1397
    %v1442 = vpack.c.bf16 %v1400, %v1399
    %v1443 = vpack.c.bf16 %v1402, %v1401
    %v1444 = vpack.c.bf16 %v1404, %v1403
    %v1445 = vpack.c.bf16 %v1406, %v1405
    %v1446 = vpack.c.bf16 %v1408, %v1407
    %v1447 = vpack.c.bf16 %v1410, %v1409
    %v1448 = vpack.c.bf16 %v1412, %v1411
    %v1449 = vpack.c.bf16 %v1414, %v1413
    %v1450 = vpack.c.bf16 %v1416, %v1415
    %v1451 = vpack.c.bf16 %v1418, %v1417
    %v1452 = vpack.c.bf16 %v1420, %v1419
    %1453 = vst [vmem:[#allocation4 + $0x20] sm:$0xff] %v1421
    %1454 = vst [vmem:[#allocation4 + $0x68] sm:$0xff] %v1422
    %1455 = vst [vmem:[#allocation4 + $0xb0] sm:$0xff] %v1423
    %1456 = vst [vmem:[#allocation4 + $0xf8] sm:$0xff] %v1424
    %1457 = vst [vmem:[#allocation4 + $0x140] sm:$0xff] %v1425
    %1458 = vst [vmem:[#allocation4 + $0x188] sm:$0xff] %v1426
    %1459 = vst [vmem:[#allocation4 + $0x1d0] sm:$0xff] %v1427
    %1460 = vst [vmem:[#allocation4 + $0x218] sm:$0xff] %v1428
    %1461 = vst [vmem:[#allocation4 + $0x260] sm:$0xff] %v1429
    %1462 = vst [vmem:[#allocation4 + $0x2a8] sm:$0xff] %v1430
    %1463 = vst [vmem:[#allocation4 + $0x2f0] sm:$0xff] %v1431
    %1464 = vst [vmem:[#allocation4 + $0x338] sm:$0xff] %v1432
    %1465 = vst [vmem:[#allocation4 + $0x380] sm:$0xff] %v1433
    %1466 = vst [vmem:[#allocation4 + $0x3c8] sm:$0xff] %v1434
    %1467 = vst [vmem:[#allocation4 + $0x410] sm:$0xff] %v1435
    %1468 = vst [vmem:[#allocation4 + $0x458] sm:$0xff] %v1436
    %1469 = vst [vmem:[#allocation4 + $0x4a0] sm:$0xff] %v1437
    %1470 = vst [vmem:[#allocation4 + $0x4e8] sm:$0xff] %v1438
    %1471 = vst [vmem:[#allocation4 + $0x530] sm:$0xff] %v1439
    %1472 = vst [vmem:[#allocation4 + $0x578] sm:$0xff] %v1440
    %1473 = vst [vmem:[#allocation4 + $0x5c0] sm:$0xff] %v1441
    %1474 = vst [vmem:[#allocation4 + $0x608] sm:$0xff] %v1442
    %1475 = vst [vmem:[#allocation4 + $0x650] sm:$0xff] %v1443
    %1476 = vst [vmem:[#allocation4 + $0x698] sm:$0xff] %v1444
    %1477 = vst [vmem:[#allocation4 + $0x6e0] sm:$0xff] %v1445
    %1478 = vst [vmem:[#allocation4 + $0x728] sm:$0xff] %v1446
    %1479 = vst [vmem:[#allocation4 + $0x770] sm:$0xff] %v1447
    %1480 = vst [vmem:[#allocation4 + $0x7b8] sm:$0xff] %v1448
    %1481 = vst [vmem:[#allocation4 + $0x800] sm:$0xff] %v1449
    %1482 = vst [vmem:[#allocation4 + $0x848] sm:$0xff] %v1450
    %1483 = vst [vmem:[#allocation4 + $0x890] sm:$0xff] %v1451
    %1484 = vst [vmem:[#allocation4 + $0x8d8] sm:$0xff] %v1452
    %v1485 = vld [vmem:[%s780 + $0x2] sm:$0xff]
    %v1486 = vld [vmem:[%s780 + $0xa] sm:$0xff]
    %v1487 = vld [vmem:[%s780 + $0x1a] sm:$0xff]
    %v1488 = vld [vmem:[%s780 + $0x22] sm:$0xff]
    %v1489 = vld [vmem:[%s780 + $0x32] sm:$0xff]
    %v1490 = vld [vmem:[%s780 + $0x3a] sm:$0xff]
    %v1491 = vld [vmem:[%s780 + $0x4a] sm:$0xff]
    %v1492 = vld [vmem:[%s780 + $0x52] sm:$0xff]
    %v1493 = vld [vmem:[%s780 + $0x62] sm:$0xff]
    %v1494 = vld [vmem:[%s780 + $0x6a] sm:$0xff]
    %v1495 = vld [vmem:[%s780 + $0x7a] sm:$0xff]
    %v1496 = vld [vmem:[%s780 + $0x82] sm:$0xff]
    %v1497 = vld [vmem:[%s780 + $0x92] sm:$0xff]
    %v1498 = vld [vmem:[%s780 + $0x9a] sm:$0xff]
    %v1499 = vld [vmem:[%s780 + $0xaa] sm:$0xff]
    %v1500 = vld [vmem:[%s780 + $0xb2] sm:$0xff]
    %v1501 = vld [vmem:[%s780 + $0xc2] sm:$0xff]
    %v1502 = vld [vmem:[%s780 + $0xca] sm:$0xff]
    %v1503 = vld [vmem:[%s780 + $0xda] sm:$0xff]
    %v1504 = vld [vmem:[%s780 + $0xe2] sm:$0xff]
    %v1505 = vld [vmem:[%s780 + $0xf2] sm:$0xff]
    %v1506 = vld [vmem:[%s780 + $0xfa] sm:$0xff]
    %v1507 = vld [vmem:[%s780 + $0x10a] sm:$0xff]
    %v1508 = vld [vmem:[%s780 + $0x112] sm:$0xff]
    %v1509 = vld [vmem:[%s780 + $0x122] sm:$0xff]
    %v1510 = vld [vmem:[%s780 + $0x12a] sm:$0xff]
    %v1511 = vld [vmem:[%s780 + $0x13a] sm:$0xff]
    %v1512 = vld [vmem:[%s780 + $0x142] sm:$0xff]
    %v1513 = vld [vmem:[%s780 + $0x152] sm:$0xff]
    %v1514 = vld [vmem:[%s780 + $0x15a] sm:$0xff]
    %v1515 = vld [vmem:[%s780 + $0x16a] sm:$0xff]
    %v1516 = vld [vmem:[%s780 + $0x172] sm:$0xff]
    %v1517 = vld [vmem:[%s780 + $0x1b2] sm:$0xff]
    %v1518 = vld [vmem:[%s780 + $0x1ba] sm:$0xff]
    %v1519 = vld [vmem:[%s780 + $0x1ca] sm:$0xff]
    %v1520 = vld [vmem:[%s780 + $0x1d2] sm:$0xff]
    %v1521 = vld [vmem:[%s780 + $0x1e2] sm:$0xff]
    %v1522 = vld [vmem:[%s780 + $0x1ea] sm:$0xff]
    %v1523 = vld [vmem:[%s780 + $0x1fa] sm:$0xff]
    %v1524 = vld [vmem:[%s780 + $0x202] sm:$0xff]
    %v1525 = vld [vmem:[%s780 + $0x212] sm:$0xff]
    %v1526 = vld [vmem:[%s780 + $0x21a] sm:$0xff]
    %v1527 = vld [vmem:[%s780 + $0x22a] sm:$0xff]
    %v1528 = vld [vmem:[%s780 + $0x232] sm:$0xff]
    %v1529 = vld [vmem:[%s780 + $0x242] sm:$0xff]
    %v1530 = vld [vmem:[%s780 + $0x24a] sm:$0xff]
    %v1531 = vld [vmem:[%s780 + $0x25a] sm:$0xff]
    %v1532 = vld [vmem:[%s780 + $0x262] sm:$0xff]
    %v1533 = vld [vmem:[%s780 + $0x272] sm:$0xff]
    %v1534 = vld [vmem:[%s780 + $0x27a] sm:$0xff]
    %v1535 = vld [vmem:[%s780 + $0x28a] sm:$0xff]
    %v1536 = vld [vmem:[%s780 + $0x292] sm:$0xff]
    %v1537 = vld [vmem:[%s780 + $0x2a2] sm:$0xff]
    %v1538 = vld [vmem:[%s780 + $0x2aa] sm:$0xff]
    %v1539 = vld [vmem:[%s780 + $0x2ba] sm:$0xff]
    %v1540 = vld [vmem:[%s780 + $0x2c2] sm:$0xff]
    %v1541 = vld [vmem:[%s780 + $0x2d2] sm:$0xff]
    %v1542 = vld [vmem:[%s780 + $0x2da] sm:$0xff]
    %v1543 = vld [vmem:[%s780 + $0x2ea] sm:$0xff]
    %v1544 = vld [vmem:[%s780 + $0x2f2] sm:$0xff]
    %v1545 = vld [vmem:[%s780 + $0x302] sm:$0xff]
    %v1546 = vld [vmem:[%s780 + $0x30a] sm:$0xff]
    %v1547 = vld [vmem:[%s780 + $0x31a] sm:$0xff]
    %v1548 = vld [vmem:[%s780 + $0x322] sm:$0xff]
    %v1549 = vpack.c.bf16 %v1486, %v1485
    %v1550 = vpack.c.bf16 %v1488, %v1487
    %v1551 = vpack.c.bf16 %v1490, %v1489
    %v1552 = vpack.c.bf16 %v1492, %v1491
    %v1553 = vpack.c.bf16 %v1494, %v1493
    %v1554 = vpack.c.bf16 %v1496, %v1495
    %v1555 = vpack.c.bf16 %v1498, %v1497
    %v1556 = vpack.c.bf16 %v1500, %v1499
    %v1557 = vpack.c.bf16 %v1502, %v1501
    %v1558 = vpack.c.bf16 %v1504, %v1503
    %v1559 = vpack.c.bf16 %v1506, %v1505
    %v1560 = vpack.c.bf16 %v1508, %v1507
    %v1561 = vpack.c.bf16 %v1510, %v1509
    %v1562 = vpack.c.bf16 %v1512, %v1511
    %v1563 = vpack.c.bf16 %v1514, %v1513
    %v1564 = vpack.c.bf16 %v1516, %v1515
    %v1565 = vpack.c.bf16 %v1518, %v1517
    %v1566 = vpack.c.bf16 %v1520, %v1519
    %v1567 = vpack.c.bf16 %v1522, %v1521
    %v1568 = vpack.c.bf16 %v1524, %v1523
    %v1569 = vpack.c.bf16 %v1526, %v1525
    %v1570 = vpack.c.bf16 %v1528, %v1527
    %v1571 = vpack.c.bf16 %v1530, %v1529
    %v1572 = vpack.c.bf16 %v1532, %v1531
    %v1573 = vpack.c.bf16 %v1534, %v1533
    %v1574 = vpack.c.bf16 %v1536, %v1535
    %v1575 = vpack.c.bf16 %v1538, %v1537
    %v1576 = vpack.c.bf16 %v1540, %v1539
    %v1577 = vpack.c.bf16 %v1542, %v1541
    %v1578 = vpack.c.bf16 %v1544, %v1543
    %v1579 = vpack.c.bf16 %v1546, %v1545
    %v1580 = vpack.c.bf16 %v1548, %v1547
    %1581 = vst [vmem:[#allocation4 + $0x28] sm:$0xff] %v1549
    %1582 = vst [vmem:[#allocation4 + $0x70] sm:$0xff] %v1550
    %1583 = vst [vmem:[#allocation4 + $0xb8] sm:$0xff] %v1551
    %1584 = vst [vmem:[#allocation4 + $0x100] sm:$0xff] %v1552
    %1585 = vst [vmem:[#allocation4 + $0x148] sm:$0xff] %v1553
    %1586 = vst [vmem:[#allocation4 + $0x190] sm:$0xff] %v1554
    %1587 = vst [vmem:[#allocation4 + $0x1d8] sm:$0xff] %v1555
    %1588 = vst [vmem:[#allocation4 + $0x220] sm:$0xff] %v1556
    %1589 = vst [vmem:[#allocation4 + $0x268] sm:$0xff] %v1557
    %1590 = vst [vmem:[#allocation4 + $0x2b0] sm:$0xff] %v1558
    %1591 = vst [vmem:[#allocation4 + $0x2f8] sm:$0xff] %v1559
    %1592 = vst [vmem:[#allocation4 + $0x340] sm:$0xff] %v1560
    %1593 = vst [vmem:[#allocation4 + $0x388] sm:$0xff] %v1561
    %1594 = vst [vmem:[#allocation4 + $0x3d0] sm:$0xff] %v1562
    %1595 = vst [vmem:[#allocation4 + $0x418] sm:$0xff] %v1563
    %1596 = vst [vmem:[#allocation4 + $0x460] sm:$0xff] %v1564
    %1597 = vst [vmem:[#allocation4 + $0x4a8] sm:$0xff] %v1565
    %1598 = vst [vmem:[#allocation4 + $0x4f0] sm:$0xff] %v1566
    %1599 = vst [vmem:[#allocation4 + $0x538] sm:$0xff] %v1567
    %1600 = vst [vmem:[#allocation4 + $0x580] sm:$0xff] %v1568
    %1601 = vst [vmem:[#allocation4 + $0x5c8] sm:$0xff] %v1569
    %1602 = vst [vmem:[#allocation4 + $0x610] sm:$0xff] %v1570
    %1603 = vst [vmem:[#allocation4 + $0x658] sm:$0xff] %v1571
    %1604 = vst [vmem:[#allocation4 + $0x6a0] sm:$0xff] %v1572
    %1605 = vst [vmem:[#allocation4 + $0x6e8] sm:$0xff] %v1573
    %1606 = vst [vmem:[#allocation4 + $0x730] sm:$0xff] %v1574
    %1607 = vst [vmem:[#allocation4 + $0x778] sm:$0xff] %v1575
    %1608 = vst [vmem:[#allocation4 + $0x7c0] sm:$0xff] %v1576
    %1609 = vst [vmem:[#allocation4 + $0x808] sm:$0xff] %v1577
    %1610 = vst [vmem:[#allocation4 + $0x850] sm:$0xff] %v1578
    %1611 = vst [vmem:[#allocation4 + $0x898] sm:$0xff] %v1579
    %1612 = vst [vmem:[#allocation4 + $0x8e0] sm:$0xff] %v1580
    %s1613 = scalar_lea.vmem [#allocation2], 48
    %v1614 = vld [vmem:[%s1613] sm:$0xff]
    %v1615 = vld [vmem:[%s1613 + $0x8] sm:$0xff]
    %v1616 = vld [vmem:[%s1613 + $0x18] sm:$0xff]
    %v1617 = vld [vmem:[%s1613 + $0x20] sm:$0xff]
    %v1618 = vld [vmem:[%s1613 + $0x30] sm:$0xff]
    %v1619 = vld [vmem:[%s1613 + $0x38] sm:$0xff]
    %v1620 = vld [vmem:[%s1613 + $0x48] sm:$0xff]
    %v1621 = vld [vmem:[%s1613 + $0x50] sm:$0xff]
    %v1622 = vld [vmem:[%s1613 + $0x60] sm:$0xff]
    %v1623 = vld [vmem:[%s1613 + $0x68] sm:$0xff]
    %v1624 = vld [vmem:[%s1613 + $0x78] sm:$0xff]
    %v1625 = vld [vmem:[%s1613 + $0x80] sm:$0xff]
    %v1626 = vld [vmem:[%s1613 + $0x90] sm:$0xff]
    %v1627 = vld [vmem:[%s1613 + $0x98] sm:$0xff]
    %v1628 = vld [vmem:[%s1613 + $0xa8] sm:$0xff]
    %v1629 = vld [vmem:[%s1613 + $0xb0] sm:$0xff]
    %v1630 = vld [vmem:[%s1613 + $0xc0] sm:$0xff]
    %v1631 = vld [vmem:[%s1613 + $0xc8] sm:$0xff]
    %v1632 = vld [vmem:[%s1613 + $0xd8] sm:$0xff]
    %v1633 = vld [vmem:[%s1613 + $0xe0] sm:$0xff]
    %v1634 = vld [vmem:[%s1613 + $0xf0] sm:$0xff]
    %v1635 = vld [vmem:[%s1613 + $0xf8] sm:$0xff]
    %v1636 = vld [vmem:[%s1613 + $0x108] sm:$0xff]
    %v1637 = vld [vmem:[%s1613 + $0x110] sm:$0xff]
    %v1638 = vld [vmem:[%s1613 + $0x120] sm:$0xff]
    %v1639 = vld [vmem:[%s1613 + $0x128] sm:$0xff]
    %v1640 = vld [vmem:[%s1613 + $0x138] sm:$0xff]
    %v1641 = vld [vmem:[%s1613 + $0x140] sm:$0xff]
    %v1642 = vld [vmem:[%s1613 + $0x150] sm:$0xff]
    %v1643 = vld [vmem:[%s1613 + $0x158] sm:$0xff]
    %v1644 = vld [vmem:[%s1613 + $0x168] sm:$0xff]
    %v1645 = vld [vmem:[%s1613 + $0x170] sm:$0xff]
    %v1646 = vld [vmem:[%s1613 + $0x1b0] sm:$0xff]
    %v1647 = vld [vmem:[%s1613 + $0x1b8] sm:$0xff]
    %v1648 = vld [vmem:[%s1613 + $0x1c8] sm:$0xff]
    %v1649 = vld [vmem:[%s1613 + $0x1d0] sm:$0xff]
    %v1650 = vld [vmem:[%s1613 + $0x1e0] sm:$0xff]
    %v1651 = vld [vmem:[%s1613 + $0x1e8] sm:$0xff]
    %v1652 = vld [vmem:[%s1613 + $0x1f8] sm:$0xff]
    %v1653 = vld [vmem:[%s1613 + $0x200] sm:$0xff]
    %v1654 = vld [vmem:[%s1613 + $0x210] sm:$0xff]
    %v1655 = vld [vmem:[%s1613 + $0x218] sm:$0xff]
    %v1656 = vld [vmem:[%s1613 + $0x228] sm:$0xff]
    %v1657 = vld [vmem:[%s1613 + $0x230] sm:$0xff]
    %v1658 = vld [vmem:[%s1613 + $0x240] sm:$0xff]
    %v1659 = vld [vmem:[%s1613 + $0x248] sm:$0xff]
    %v1660 = vld [vmem:[%s1613 + $0x258] sm:$0xff]
    %v1661 = vld [vmem:[%s1613 + $0x260] sm:$0xff]
    %v1662 = vld [vmem:[%s1613 + $0x270] sm:$0xff]
    %v1663 = vld [vmem:[%s1613 + $0x278] sm:$0xff]
    %v1664 = vld [vmem:[%s1613 + $0x288] sm:$0xff]
    %v1665 = vld [vmem:[%s1613 + $0x290] sm:$0xff]
    %v1666 = vld [vmem:[%s1613 + $0x2a0] sm:$0xff]
    %v1667 = vld [vmem:[%s1613 + $0x2a8] sm:$0xff]
    %v1668 = vld [vmem:[%s1613 + $0x2b8] sm:$0xff]
    %v1669 = vld [vmem:[%s1613 + $0x2c0] sm:$0xff]
    %v1670 = vld [vmem:[%s1613 + $0x2d0] sm:$0xff]
    %v1671 = vld [vmem:[%s1613 + $0x2d8] sm:$0xff]
    %v1672 = vld [vmem:[%s1613 + $0x2e8] sm:$0xff]
    %v1673 = vld [vmem:[%s1613 + $0x2f0] sm:$0xff]
    %v1674 = vld [vmem:[%s1613 + $0x300] sm:$0xff]
    %v1675 = vld [vmem:[%s1613 + $0x308] sm:$0xff]
    %v1676 = vld [vmem:[%s1613 + $0x318] sm:$0xff]
    %v1677 = vld [vmem:[%s1613 + $0x320] sm:$0xff]
    %v1678 = vpack.c.bf16 %v1615, %v1614
    %v1679 = vpack.c.bf16 %v1617, %v1616
    %v1680 = vpack.c.bf16 %v1619, %v1618
    %v1681 = vpack.c.bf16 %v1621, %v1620
    %v1682 = vpack.c.bf16 %v1623, %v1622
    %v1683 = vpack.c.bf16 %v1625, %v1624
    %v1684 = vpack.c.bf16 %v1627, %v1626
    %v1685 = vpack.c.bf16 %v1629, %v1628
    %v1686 = vpack.c.bf16 %v1631, %v1630
    %v1687 = vpack.c.bf16 %v1633, %v1632
    %v1688 = vpack.c.bf16 %v1635, %v1634
    %v1689 = vpack.c.bf16 %v1637, %v1636
    %v1690 = vpack.c.bf16 %v1639, %v1638
    %v1691 = vpack.c.bf16 %v1641, %v1640
    %v1692 = vpack.c.bf16 %v1643, %v1642
    %v1693 = vpack.c.bf16 %v1645, %v1644
    %v1694 = vpack.c.bf16 %v1647, %v1646
    %v1695 = vpack.c.bf16 %v1649, %v1648
    %v1696 = vpack.c.bf16 %v1651, %v1650
    %v1697 = vpack.c.bf16 %v1653, %v1652
    %v1698 = vpack.c.bf16 %v1655, %v1654
    %v1699 = vpack.c.bf16 %v1657, %v1656
    %v1700 = vpack.c.bf16 %v1659, %v1658
    %v1701 = vpack.c.bf16 %v1661, %v1660
    %v1702 = vpack.c.bf16 %v1663, %v1662
    %v1703 = vpack.c.bf16 %v1665, %v1664
    %v1704 = vpack.c.bf16 %v1667, %v1666
    %v1705 = vpack.c.bf16 %v1669, %v1668
    %v1706 = vpack.c.bf16 %v1671, %v1670
    %v1707 = vpack.c.bf16 %v1673, %v1672
    %v1708 = vpack.c.bf16 %v1675, %v1674
    %v1709 = vpack.c.bf16 %v1677, %v1676
    %1710 = vst [vmem:[#allocation4 + $0x30] sm:$0xff] %v1678
    %1711 = vst [vmem:[#allocation4 + $0x78] sm:$0xff] %v1679
    %1712 = vst [vmem:[#allocation4 + $0xc0] sm:$0xff] %v1680
    %1713 = vst [vmem:[#allocation4 + $0x108] sm:$0xff] %v1681
    %1714 = vst [vmem:[#allocation4 + $0x150] sm:$0xff] %v1682
    %1715 = vst [vmem:[#allocation4 + $0x198] sm:$0xff] %v1683
    %1716 = vst [vmem:[#allocation4 + $0x1e0] sm:$0xff] %v1684
    %1717 = vst [vmem:[#allocation4 + $0x228] sm:$0xff] %v1685
    %1718 = vst [vmem:[#allocation4 + $0x270] sm:$0xff] %v1686
    %1719 = vst [vmem:[#allocation4 + $0x2b8] sm:$0xff] %v1687
    %1720 = vst [vmem:[#allocation4 + $0x300] sm:$0xff] %v1688
    %1721 = vst [vmem:[#allocation4 + $0x348] sm:$0xff] %v1689
    %1722 = vst [vmem:[#allocation4 + $0x390] sm:$0xff] %v1690
    %1723 = vst [vmem:[#allocation4 + $0x3d8] sm:$0xff] %v1691
    %1724 = vst [vmem:[#allocation4 + $0x420] sm:$0xff] %v1692
    %1725 = vst [vmem:[#allocation4 + $0x468] sm:$0xff] %v1693
    %1726 = vst [vmem:[#allocation4 + $0x4b0] sm:$0xff] %v1694
    %1727 = vst [vmem:[#allocation4 + $0x4f8] sm:$0xff] %v1695
    %1728 = vst [vmem:[#allocation4 + $0x540] sm:$0xff] %v1696
    %1729 = vst [vmem:[#allocation4 + $0x588] sm:$0xff] %v1697
    %1730 = vst [vmem:[#allocation4 + $0x5d0] sm:$0xff] %v1698
    %1731 = vst [vmem:[#allocation4 + $0x618] sm:$0xff] %v1699
    %1732 = vst [vmem:[#allocation4 + $0x660] sm:$0xff] %v1700
    %1733 = vst [vmem:[#allocation4 + $0x6a8] sm:$0xff] %v1701
    %1734 = vst [vmem:[#allocation4 + $0x6f0] sm:$0xff] %v1702
    %1735 = vst [vmem:[#allocation4 + $0x738] sm:$0xff] %v1703
    %1736 = vst [vmem:[#allocation4 + $0x780] sm:$0xff] %v1704
    %1737 = vst [vmem:[#allocation4 + $0x7c8] sm:$0xff] %v1705
    %1738 = vst [vmem:[#allocation4 + $0x810] sm:$0xff] %v1706
    %1739 = vst [vmem:[#allocation4 + $0x858] sm:$0xff] %v1707
    %1740 = vst [vmem:[#allocation4 + $0x8a0] sm:$0xff] %v1708
    %1741 = vst [vmem:[#allocation4 + $0x8e8] sm:$0xff] %v1709
    %v1742 = vld [vmem:[%s1613 + $0x1] sm:$0xff]
    %v1743 = vld [vmem:[%s1613 + $0x9] sm:$0xff]
    %v1744 = vld [vmem:[%s1613 + $0x19] sm:$0xff]
    %v1745 = vld [vmem:[%s1613 + $0x21] sm:$0xff]
    %v1746 = vld [vmem:[%s1613 + $0x31] sm:$0xff]
    %v1747 = vld [vmem:[%s1613 + $0x39] sm:$0xff]
    %v1748 = vld [vmem:[%s1613 + $0x49] sm:$0xff]
    %v1749 = vld [vmem:[%s1613 + $0x51] sm:$0xff]
    %v1750 = vld [vmem:[%s1613 + $0x61] sm:$0xff]
    %v1751 = vld [vmem:[%s1613 + $0x69] sm:$0xff]
    %v1752 = vld [vmem:[%s1613 + $0x79] sm:$0xff]
    %v1753 = vld [vmem:[%s1613 + $0x81] sm:$0xff]
    %v1754 = vld [vmem:[%s1613 + $0x91] sm:$0xff]
    %v1755 = vld [vmem:[%s1613 + $0x99] sm:$0xff]
    %v1756 = vld [vmem:[%s1613 + $0xa9] sm:$0xff]
    %v1757 = vld [vmem:[%s1613 + $0xb1] sm:$0xff]
    %v1758 = vld [vmem:[%s1613 + $0xc1] sm:$0xff]
    %v1759 = vld [vmem:[%s1613 + $0xc9] sm:$0xff]
    %v1760 = vld [vmem:[%s1613 + $0xd9] sm:$0xff]
    %v1761 = vld [vmem:[%s1613 + $0xe1] sm:$0xff]
    %v1762 = vld [vmem:[%s1613 + $0xf1] sm:$0xff]
    %v1763 = vld [vmem:[%s1613 + $0xf9] sm:$0xff]
    %v1764 = vld [vmem:[%s1613 + $0x109] sm:$0xff]
    %v1765 = vld [vmem:[%s1613 + $0x111] sm:$0xff]
    %v1766 = vld [vmem:[%s1613 + $0x121] sm:$0xff]
    %v1767 = vld [vmem:[%s1613 + $0x129] sm:$0xff]
    %v1768 = vld [vmem:[%s1613 + $0x139] sm:$0xff]
    %v1769 = vld [vmem:[%s1613 + $0x141] sm:$0xff]
    %v1770 = vld [vmem:[%s1613 + $0x151] sm:$0xff]
    %v1771 = vld [vmem:[%s1613 + $0x159] sm:$0xff]
    %v1772 = vld [vmem:[%s1613 + $0x169] sm:$0xff]
    %v1773 = vld [vmem:[%s1613 + $0x171] sm:$0xff]
    %v1774 = vld [vmem:[%s1613 + $0x1b1] sm:$0xff]
    %v1775 = vld [vmem:[%s1613 + $0x1b9] sm:$0xff]
    %v1776 = vld [vmem:[%s1613 + $0x1c9] sm:$0xff]
    %v1777 = vld [vmem:[%s1613 + $0x1d1] sm:$0xff]
    %v1778 = vld [vmem:[%s1613 + $0x1e1] sm:$0xff]
    %v1779 = vld [vmem:[%s1613 + $0x1e9] sm:$0xff]
    %v1780 = vld [vmem:[%s1613 + $0x1f9] sm:$0xff]
    %v1781 = vld [vmem:[%s1613 + $0x201] sm:$0xff]
    %v1782 = vld [vmem:[%s1613 + $0x211] sm:$0xff]
    %v1783 = vld [vmem:[%s1613 + $0x219] sm:$0xff]
    %v1784 = vld [vmem:[%s1613 + $0x229] sm:$0xff]
    %v1785 = vld [vmem:[%s1613 + $0x231] sm:$0xff]
    %v1786 = vld [vmem:[%s1613 + $0x241] sm:$0xff]
    %v1787 = vld [vmem:[%s1613 + $0x249] sm:$0xff]
    %v1788 = vld [vmem:[%s1613 + $0x259] sm:$0xff]
    %v1789 = vld [vmem:[%s1613 + $0x261] sm:$0xff]
    %v1790 = vld [vmem:[%s1613 + $0x271] sm:$0xff]
    %v1791 = vld [vmem:[%s1613 + $0x279] sm:$0xff]
    %v1792 = vld [vmem:[%s1613 + $0x289] sm:$0xff]
    %v1793 = vld [vmem:[%s1613 + $0x291] sm:$0xff]
    %v1794 = vld [vmem:[%s1613 + $0x2a1] sm:$0xff]
    %v1795 = vld [vmem:[%s1613 + $0x2a9] sm:$0xff]
    %v1796 = vld [vmem:[%s1613 + $0x2b9] sm:$0xff]
    %v1797 = vld [vmem:[%s1613 + $0x2c1] sm:$0xff]
    %v1798 = vld [vmem:[%s1613 + $0x2d1] sm:$0xff]
    %v1799 = vld [vmem:[%s1613 + $0x2d9] sm:$0xff]
    %v1800 = vld [vmem:[%s1613 + $0x2e9] sm:$0xff]
    %v1801 = vld [vmem:[%s1613 + $0x2f1] sm:$0xff]
    %v1802 = vld [vmem:[%s1613 + $0x301] sm:$0xff]
    %v1803 = vld [vmem:[%s1613 + $0x309] sm:$0xff]
    %v1804 = vld [vmem:[%s1613 + $0x319] sm:$0xff]
    %v1805 = vld [vmem:[%s1613 + $0x321] sm:$0xff]
    %v1806 = vpack.c.bf16 %v1743, %v1742
    %v1807 = vpack.c.bf16 %v1745, %v1744
    %v1808 = vpack.c.bf16 %v1747, %v1746
    %v1809 = vpack.c.bf16 %v1749, %v1748
    %v1810 = vpack.c.bf16 %v1751, %v1750
    %v1811 = vpack.c.bf16 %v1753, %v1752
    %v1812 = vpack.c.bf16 %v1755, %v1754
    %v1813 = vpack.c.bf16 %v1757, %v1756
    %v1814 = vpack.c.bf16 %v1759, %v1758
    %v1815 = vpack.c.bf16 %v1761, %v1760
    %v1816 = vpack.c.bf16 %v1763, %v1762
    %v1817 = vpack.c.bf16 %v1765, %v1764
    %v1818 = vpack.c.bf16 %v1767, %v1766
    %v1819 = vpack.c.bf16 %v1769, %v1768
    %v1820 = vpack.c.bf16 %v1771, %v1770
    %v1821 = vpack.c.bf16 %v1773, %v1772
    %v1822 = vpack.c.bf16 %v1775, %v1774
    %v1823 = vpack.c.bf16 %v1777, %v1776
    %v1824 = vpack.c.bf16 %v1779, %v1778
    %v1825 = vpack.c.bf16 %v1781, %v1780
    %v1826 = vpack.c.bf16 %v1783, %v1782
    %v1827 = vpack.c.bf16 %v1785, %v1784
    %v1828 = vpack.c.bf16 %v1787, %v1786
    %v1829 = vpack.c.bf16 %v1789, %v1788
    %v1830 = vpack.c.bf16 %v1791, %v1790
    %v1831 = vpack.c.bf16 %v1793, %v1792
    %v1832 = vpack.c.bf16 %v1795, %v1794
    %v1833 = vpack.c.bf16 %v1797, %v1796
    %v1834 = vpack.c.bf16 %v1799, %v1798
    %v1835 = vpack.c.bf16 %v1801, %v1800
    %v1836 = vpack.c.bf16 %v1803, %v1802
    %v1837 = vpack.c.bf16 %v1805, %v1804
    %1838 = vst [vmem:[#allocation4 + $0x38] sm:$0xff] %v1806
    %1839 = vst [vmem:[#allocation4 + $0x80] sm:$0xff] %v1807
    %1840 = vst [vmem:[#allocation4 + $0xc8] sm:$0xff] %v1808
    %1841 = vst [vmem:[#allocation4 + $0x110] sm:$0xff] %v1809
    %1842 = vst [vmem:[#allocation4 + $0x158] sm:$0xff] %v1810
    %1843 = vst [vmem:[#allocation4 + $0x1a0] sm:$0xff] %v1811
    %1844 = vst [vmem:[#allocation4 + $0x1e8] sm:$0xff] %v1812
    %1845 = vst [vmem:[#allocation4 + $0x230] sm:$0xff] %v1813
    %1846 = vst [vmem:[#allocation4 + $0x278] sm:$0xff] %v1814
    %1847 = vst [vmem:[#allocation4 + $0x2c0] sm:$0xff] %v1815
    %1848 = vst [vmem:[#allocation4 + $0x308] sm:$0xff] %v1816
    %1849 = vst [vmem:[#allocation4 + $0x350] sm:$0xff] %v1817
    %1850 = vst [vmem:[#allocation4 + $0x398] sm:$0xff] %v1818
    %1851 = vst [vmem:[#allocation4 + $0x3e0] sm:$0xff] %v1819
    %1852 = vst [vmem:[#allocation4 + $0x428] sm:$0xff] %v1820
    %1853 = vst [vmem:[#allocation4 + $0x470] sm:$0xff] %v1821
    %1854 = vst [vmem:[#allocation4 + $0x4b8] sm:$0xff] %v1822
    %1855 = vst [vmem:[#allocation4 + $0x500] sm:$0xff] %v1823
    %1856 = vst [vmem:[#allocation4 + $0x548] sm:$0xff] %v1824
    %1857 = vst [vmem:[#allocation4 + $0x590] sm:$0xff] %v1825
    %1858 = vst [vmem:[#allocation4 + $0x5d8] sm:$0xff] %v1826
    %1859 = vst [vmem:[#allocation4 + $0x620] sm:$0xff] %v1827
    %1860 = vst [vmem:[#allocation4 + $0x668] sm:$0xff] %v1828
    %1861 = vst [vmem:[#allocation4 + $0x6b0] sm:$0xff] %v1829
    %1862 = vst [vmem:[#allocation4 + $0x6f8] sm:$0xff] %v1830
    %1863 = vst [vmem:[#allocation4 + $0x740] sm:$0xff] %v1831
    %1864 = vst [vmem:[#allocation4 + $0x788] sm:$0xff] %v1832
    %1865 = vst [vmem:[#allocation4 + $0x7d0] sm:$0xff] %v1833
    %1866 = vst [vmem:[#allocation4 + $0x818] sm:$0xff] %v1834
    %1867 = vst [vmem:[#allocation4 + $0x860] sm:$0xff] %v1835
    %1868 = vst [vmem:[#allocation4 + $0x8a8] sm:$0xff] %v1836
    %1869 = vst [vmem:[#allocation4 + $0x8f0] sm:$0xff] %v1837
    %v1870 = vld [vmem:[%s1613 + $0x2] sm:$0xff]
    %v1871 = vld [vmem:[%s1613 + $0xa] sm:$0xff]
    %v1872 = vld [vmem:[%s1613 + $0x1a] sm:$0xff]
    %v1873 = vld [vmem:[%s1613 + $0x22] sm:$0xff]
    %v1874 = vld [vmem:[%s1613 + $0x32] sm:$0xff]
    %v1875 = vld [vmem:[%s1613 + $0x3a] sm:$0xff]
    %v1876 = vld [vmem:[%s1613 + $0x4a] sm:$0xff]
    %v1877 = vld [vmem:[%s1613 + $0x52] sm:$0xff]
    %v1878 = vld [vmem:[%s1613 + $0x62] sm:$0xff]
    %v1879 = vld [vmem:[%s1613 + $0x6a] sm:$0xff]
    %v1880 = vld [vmem:[%s1613 + $0x7a] sm:$0xff]
    %v1881 = vld [vmem:[%s1613 + $0x82] sm:$0xff]
    %v1882 = vld [vmem:[%s1613 + $0x92] sm:$0xff]
    %v1883 = vld [vmem:[%s1613 + $0x9a] sm:$0xff]
    %v1884 = vld [vmem:[%s1613 + $0xaa] sm:$0xff]
    %v1885 = vld [vmem:[%s1613 + $0xb2] sm:$0xff]
    %v1886 = vld [vmem:[%s1613 + $0xc2] sm:$0xff]
    %v1887 = vld [vmem:[%s1613 + $0xca] sm:$0xff]
    %v1888 = vld [vmem:[%s1613 + $0xda] sm:$0xff]
    %v1889 = vld [vmem:[%s1613 + $0xe2] sm:$0xff]
    %v1890 = vld [vmem:[%s1613 + $0xf2] sm:$0xff]
    %v1891 = vld [vmem:[%s1613 + $0xfa] sm:$0xff]
    %v1892 = vld [vmem:[%s1613 + $0x10a] sm:$0xff]
    %v1893 = vld [vmem:[%s1613 + $0x112] sm:$0xff]
    %v1894 = vld [vmem:[%s1613 + $0x122] sm:$0xff]
    %v1895 = vld [vmem:[%s1613 + $0x12a] sm:$0xff]
    %v1896 = vld [vmem:[%s1613 + $0x13a] sm:$0xff]
    %v1897 = vld [vmem:[%s1613 + $0x142] sm:$0xff]
    %v1898 = vld [vmem:[%s1613 + $0x152] sm:$0xff]
    %v1899 = vld [vmem:[%s1613 + $0x15a] sm:$0xff]
    %v1900 = vld [vmem:[%s1613 + $0x16a] sm:$0xff]
    %v1901 = vld [vmem:[%s1613 + $0x172] sm:$0xff]
    %v1902 = vld [vmem:[%s1613 + $0x1b2] sm:$0xff]
    %v1903 = vld [vmem:[%s1613 + $0x1ba] sm:$0xff]
    %v1904 = vld [vmem:[%s1613 + $0x1ca] sm:$0xff]
    %v1905 = vld [vmem:[%s1613 + $0x1d2] sm:$0xff]
    %v1906 = vld [vmem:[%s1613 + $0x1e2] sm:$0xff]
    %v1907 = vld [vmem:[%s1613 + $0x1ea] sm:$0xff]
    %v1908 = vld [vmem:[%s1613 + $0x1fa] sm:$0xff]
    %v1909 = vld [vmem:[%s1613 + $0x202] sm:$0xff]
    %v1910 = vld [vmem:[%s1613 + $0x212] sm:$0xff]
    %v1911 = vld [vmem:[%s1613 + $0x21a] sm:$0xff]
    %v1912 = vld [vmem:[%s1613 + $0x22a] sm:$0xff]
    %v1913 = vld [vmem:[%s1613 + $0x232] sm:$0xff]
    %v1914 = vld [vmem:[%s1613 + $0x242] sm:$0xff]
    %v1915 = vld [vmem:[%s1613 + $0x24a] sm:$0xff]
    %v1916 = vld [vmem:[%s1613 + $0x25a] sm:$0xff]
    %v1917 = vld [vmem:[%s1613 + $0x262] sm:$0xff]
    %v1918 = vld [vmem:[%s1613 + $0x272] sm:$0xff]
    %v1919 = vld [vmem:[%s1613 + $0x27a] sm:$0xff]
    %v1920 = vld [vmem:[%s1613 + $0x28a] sm:$0xff]
    %v1921 = vld [vmem:[%s1613 + $0x292] sm:$0xff]
    %v1922 = vld [vmem:[%s1613 + $0x2a2] sm:$0xff]
    %v1923 = vld [vmem:[%s1613 + $0x2aa] sm:$0xff]
    %v1924 = vld [vmem:[%s1613 + $0x2ba] sm:$0xff]
    %v1925 = vld [vmem:[%s1613 + $0x2c2] sm:$0xff]
    %v1926 = vld [vmem:[%s1613 + $0x2d2] sm:$0xff]
    %v1927 = vld [vmem:[%s1613 + $0x2da] sm:$0xff]
    %v1928 = vld [vmem:[%s1613 + $0x2ea] sm:$0xff]
    %v1929 = vld [vmem:[%s1613 + $0x2f2] sm:$0xff]
    %v1930 = vld [vmem:[%s1613 + $0x302] sm:$0xff]
    %v1931 = vld [vmem:[%s1613 + $0x30a] sm:$0xff]
    %v1932 = vld [vmem:[%s1613 + $0x31a] sm:$0xff]
    %v1933 = vld [vmem:[%s1613 + $0x322] sm:$0xff]
    %v1934 = vpack.c.bf16 %v1871, %v1870
    %v1935 = vpack.c.bf16 %v1873, %v1872
    %v1936 = vpack.c.bf16 %v1875, %v1874
    %v1937 = vpack.c.bf16 %v1877, %v1876
    %v1938 = vpack.c.bf16 %v1879, %v1878
    %v1939 = vpack.c.bf16 %v1881, %v1880
    %v1940 = vpack.c.bf16 %v1883, %v1882
    %v1941 = vpack.c.bf16 %v1885, %v1884
    %v1942 = vpack.c.bf16 %v1887, %v1886
    %v1943 = vpack.c.bf16 %v1889, %v1888
    %v1944 = vpack.c.bf16 %v1891, %v1890
    %v1945 = vpack.c.bf16 %v1893, %v1892
    %v1946 = vpack.c.bf16 %v1895, %v1894
    %v1947 = vpack.c.bf16 %v1897, %v1896
    %v1948 = vpack.c.bf16 %v1899, %v1898
    %v1949 = vpack.c.bf16 %v1901, %v1900
    %v1950 = vpack.c.bf16 %v1903, %v1902
    %v1951 = vpack.c.bf16 %v1905, %v1904
    %v1952 = vpack.c.bf16 %v1907, %v1906
    %v1953 = vpack.c.bf16 %v1909, %v1908
    %v1954 = vpack.c.bf16 %v1911, %v1910
    %v1955 = vpack.c.bf16 %v1913, %v1912
    %v1956 = vpack.c.bf16 %v1915, %v1914
    %v1957 = vpack.c.bf16 %v1917, %v1916
    %v1958 = vpack.c.bf16 %v1919, %v1918
    %v1959 = vpack.c.bf16 %v1921, %v1920
    %v1960 = vpack.c.bf16 %v1923, %v1922
    %v1961 = vpack.c.bf16 %v1925, %v1924
    %v1962 = vpack.c.bf16 %v1927, %v1926
    %v1963 = vpack.c.bf16 %v1929, %v1928
    %v1964 = vpack.c.bf16 %v1931, %v1930
    %v1965 = vpack.c.bf16 %v1933, %v1932
    %1966 = vst [vmem:[#allocation4 + $0x40] sm:$0xff] %v1934
    %1967 = vst [vmem:[#allocation4 + $0x88] sm:$0xff] %v1935
    %1968 = vst [vmem:[#allocation4 + $0xd0] sm:$0xff] %v1936
    %1969 = vst [vmem:[#allocation4 + $0x118] sm:$0xff] %v1937
    %1970 = vst [vmem:[#allocation4 + $0x160] sm:$0xff] %v1938
    %1971 = vst [vmem:[#allocation4 + $0x1a8] sm:$0xff] %v1939
    %1972 = vst [vmem:[#allocation4 + $0x1f0] sm:$0xff] %v1940
    %1973 = vst [vmem:[#allocation4 + $0x238] sm:$0xff] %v1941
    %1974 = vst [vmem:[#allocation4 + $0x280] sm:$0xff] %v1942
    %1975 = vst [vmem:[#allocation4 + $0x2c8] sm:$0xff] %v1943
    %1976 = vst [vmem:[#allocation4 + $0x310] sm:$0xff] %v1944
    %1977 = vst [vmem:[#allocation4 + $0x358] sm:$0xff] %v1945
    %1978 = vst [vmem:[#allocation4 + $0x3a0] sm:$0xff] %v1946
    %1979 = vst [vmem:[#allocation4 + $0x3e8] sm:$0xff] %v1947
    %1980 = vst [vmem:[#allocation4 + $0x430] sm:$0xff] %v1948
    %1981 = vst [vmem:[#allocation4 + $0x478] sm:$0xff] %v1949
    %1982 = vst [vmem:[#allocation4 + $0x4c0] sm:$0xff] %v1950
    %1983 = vst [vmem:[#allocation4 + $0x508] sm:$0xff] %v1951
    %1984 = vst [vmem:[#allocation4 + $0x550] sm:$0xff] %v1952
    %1985 = vst [vmem:[#allocation4 + $0x598] sm:$0xff] %v1953
    %1986 = vst [vmem:[#allocation4 + $0x5e0] sm:$0xff] %v1954
    %1987 = vst [vmem:[#allocation4 + $0x628] sm:$0xff] %v1955
    %1988 = vst [vmem:[#allocation4 + $0x670] sm:$0xff] %v1956
    %1989 = vst [vmem:[#allocation4 + $0x6b8] sm:$0xff] %v1957
    %1990 = vst [vmem:[#allocation4 + $0x700] sm:$0xff] %v1958
    %1991 = vst [vmem:[#allocation4 + $0x748] sm:$0xff] %v1959
    %1992 = vst [vmem:[#allocation4 + $0x790] sm:$0xff] %v1960
    %1993 = vst [vmem:[#allocation4 + $0x7d8] sm:$0xff] %v1961
    %1994 = vst [vmem:[#allocation4 + $0x820] sm:$0xff] %v1962
    %1995 = vst [vmem:[#allocation4 + $0x868] sm:$0xff] %v1963
    %1996 = vst [vmem:[#allocation4 + $0x8b0] sm:$0xff] %v1964
    %1997 = vst [vmem:[#allocation4 + $0x8f8] sm:$0xff] %v1965
    %v1998 = vld [vmem:[#allocation4] sm:$0xff]
    %v1999 = vld [vmem:[#allocation4 + $0x8] sm:$0xff]
    %v2000 = vld [vmem:[#allocation4 + $0x10] sm:$0xff]
    %v2001 = vld [vmem:[#allocation4 + $0x18] sm:$0xff]
    %v2002 = vld [vmem:[#allocation4 + $0x20] sm:$0xff]
    %v2003 = vld [vmem:[#allocation4 + $0x28] sm:$0xff]
    %v2004 = vld [vmem:[#allocation4 + $0x30] sm:$0xff]
    %v2005 = vld [vmem:[#allocation4 + $0x38] sm:$0xff]
    %v2006 = vld [vmem:[#allocation4 + $0x40] sm:$0xff]
    %v2007 = vld [vmem:[#allocation4 + $0x48] sm:$0xff]
    %v2008 = vld [vmem:[#allocation4 + $0x50] sm:$0xff]
    %v2009 = vld [vmem:[#allocation4 + $0x58] sm:$0xff]
    %v2010 = vld [vmem:[#allocation4 + $0x60] sm:$0xff]
    %v2011 = vld [vmem:[#allocation4 + $0x68] sm:$0xff]
    %v2012 = vld [vmem:[#allocation4 + $0x70] sm:$0xff]
    %v2013 = vld [vmem:[#allocation4 + $0x78] sm:$0xff]
    %v2014 = vld [vmem:[#allocation4 + $0x80] sm:$0xff]
    %v2015 = vld [vmem:[#allocation4 + $0x88] sm:$0xff]
    %v2016 = vld [vmem:[#allocation4 + $0x90] sm:$0xff]
    %v2017 = vld [vmem:[#allocation4 + $0x98] sm:$0xff]
    %v2018 = vld [vmem:[#allocation4 + $0xa0] sm:$0xff]
    %v2019 = vld [vmem:[#allocation4 + $0xa8] sm:$0xff]
    %v2020 = vld [vmem:[#allocation4 + $0xb0] sm:$0xff]
    %v2021 = vld [vmem:[#allocation4 + $0xb8] sm:$0xff]
    %v2022 = vld [vmem:[#allocation4 + $0xc0] sm:$0xff]
    %v2023 = vld [vmem:[#allocation4 + $0xc8] sm:$0xff]
    %v2024 = vld [vmem:[#allocation4 + $0xd0] sm:$0xff]
    %v2025 = vld [vmem:[#allocation4 + $0xd8] sm:$0xff]
    %v2026 = vld [vmem:[#allocation4 + $0xe0] sm:$0xff]
    %v2027 = vld [vmem:[#allocation4 + $0xe8] sm:$0xff]
    %v2028 = vld [vmem:[#allocation4 + $0xf0] sm:$0xff]
    %v2029 = vld [vmem:[#allocation4 + $0xf8] sm:$0xff]
    %v2030 = vld [vmem:[#allocation4 + $0x100] sm:$0xff]
    %v2031 = vld [vmem:[#allocation4 + $0x108] sm:$0xff]
    %v2032 = vld [vmem:[#allocation4 + $0x110] sm:$0xff]
    %v2033 = vld [vmem:[#allocation4 + $0x118] sm:$0xff]
    %v2034 = vld [vmem:[#allocation4 + $0x120] sm:$0xff]
    %v2035 = vld [vmem:[#allocation4 + $0x128] sm:$0xff]
    %v2036 = vld [vmem:[#allocation4 + $0x130] sm:$0xff]
    %v2037 = vld [vmem:[#allocation4 + $0x138] sm:$0xff]
    %v2038 = vld [vmem:[#allocation4 + $0x140] sm:$0xff]
    %v2039 = vld [vmem:[#allocation4 + $0x148] sm:$0xff]
    %v2040 = vld [vmem:[#allocation4 + $0x150] sm:$0xff]
    %v2041 = vld [vmem:[#allocation4 + $0x158] sm:$0xff]
    %v2042 = vld [vmem:[#allocation4 + $0x160] sm:$0xff]
    %v2043 = vld [vmem:[#allocation4 + $0x168] sm:$0xff]
    %v2044 = vld [vmem:[#allocation4 + $0x170] sm:$0xff]
    %v2045 = vld [vmem:[#allocation4 + $0x178] sm:$0xff]
    %v2046 = vld [vmem:[#allocation4 + $0x180] sm:$0xff]
    %v2047 = vld [vmem:[#allocation4 + $0x188] sm:$0xff]
    %v2048 = vld [vmem:[#allocation4 + $0x190] sm:$0xff]
    %v2049 = vld [vmem:[#allocation4 + $0x198] sm:$0xff]
    %v2050 = vld [vmem:[#allocation4 + $0x1a0] sm:$0xff]
    %v2051 = vld [vmem:[#allocation4 + $0x1a8] sm:$0xff]
    %v2052 = vld [vmem:[#allocation4 + $0x1b0] sm:$0xff]
    %v2053 = vld [vmem:[#allocation4 + $0x1b8] sm:$0xff]
    %v2054 = vld [vmem:[#allocation4 + $0x1c0] sm:$0xff]
    %v2055 = vld [vmem:[#allocation4 + $0x1c8] sm:$0xff]
    %v2056 = vld [vmem:[#allocation4 + $0x1d0] sm:$0xff]
    %v2057 = vld [vmem:[#allocation4 + $0x1d8] sm:$0xff]
    %v2058 = vld [vmem:[#allocation4 + $0x1e0] sm:$0xff]
    %v2059 = vld [vmem:[#allocation4 + $0x1e8] sm:$0xff]
    %v2060 = vld [vmem:[#allocation4 + $0x1f0] sm:$0xff]
    %v2061 = vld [vmem:[#allocation4 + $0x1f8] sm:$0xff]
    %v2062 = vld [vmem:[#allocation4 + $0x200] sm:$0xff]
    %v2063 = vld [vmem:[#allocation4 + $0x208] sm:$0xff]
    %v2064 = vld [vmem:[#allocation4 + $0x210] sm:$0xff]
    %v2065 = vld [vmem:[#allocation4 + $0x218] sm:$0xff]
    %v2066 = vld [vmem:[#allocation4 + $0x220] sm:$0xff]
    %v2067 = vld [vmem:[#allocation4 + $0x228] sm:$0xff]
    %v2068 = vld [vmem:[#allocation4 + $0x230] sm:$0xff]
    %v2069 = vld [vmem:[#allocation4 + $0x238] sm:$0xff]
    %v2070 = vld [vmem:[#allocation4 + $0x240] sm:$0xff]
    %v2071 = vld [vmem:[#allocation4 + $0x248] sm:$0xff]
    %v2072 = vld [vmem:[#allocation4 + $0x250] sm:$0xff]
    %v2073 = vld [vmem:[#allocation4 + $0x258] sm:$0xff]
    %v2074 = vld [vmem:[#allocation4 + $0x260] sm:$0xff]
    %v2075 = vld [vmem:[#allocation4 + $0x268] sm:$0xff]
    %v2076 = vld [vmem:[#allocation4 + $0x270] sm:$0xff]
    %v2077 = vld [vmem:[#allocation4 + $0x278] sm:$0xff]
    %v2078 = vld [vmem:[#allocation4 + $0x280] sm:$0xff]
    %v2079 = vld [vmem:[#allocation4 + $0x288] sm:$0xff]
    %v2080 = vld [vmem:[#allocation4 + $0x290] sm:$0xff]
    %v2081 = vld [vmem:[#allocation4 + $0x298] sm:$0xff]
    %v2082 = vld [vmem:[#allocation4 + $0x2a0] sm:$0xff]
    %v2083 = vld [vmem:[#allocation4 + $0x2a8] sm:$0xff]
    %v2084 = vld [vmem:[#allocation4 + $0x2b0] sm:$0xff]
    %v2085 = vld [vmem:[#allocation4 + $0x2b8] sm:$0xff]
    %v2086 = vld [vmem:[#allocation4 + $0x2c0] sm:$0xff]
    %v2087 = vld [vmem:[#allocation4 + $0x2c8] sm:$0xff]
    %v2088 = vld [vmem:[#allocation4 + $0x2d0] sm:$0xff]
    %v2089 = vld [vmem:[#allocation4 + $0x2d8] sm:$0xff]
    %v2090 = vld [vmem:[#allocation4 + $0x2e0] sm:$0xff]
    %v2091 = vld [vmem:[#allocation4 + $0x2e8] sm:$0xff]
    %v2092 = vld [vmem:[#allocation4 + $0x2f0] sm:$0xff]
    %v2093 = vld [vmem:[#allocation4 + $0x2f8] sm:$0xff]
    %v2094 = vld [vmem:[#allocation4 + $0x300] sm:$0xff]
    %v2095 = vld [vmem:[#allocation4 + $0x308] sm:$0xff]
    %v2096 = vld [vmem:[#allocation4 + $0x310] sm:$0xff]
    %v2097 = vld [vmem:[#allocation4 + $0x318] sm:$0xff]
    %v2098 = vld [vmem:[#allocation4 + $0x320] sm:$0xff]
    %v2099 = vld [vmem:[#allocation4 + $0x328] sm:$0xff]
    %v2100 = vld [vmem:[#allocation4 + $0x330] sm:$0xff]
    %v2101 = vld [vmem:[#allocation4 + $0x338] sm:$0xff]
    %v2102 = vld [vmem:[#allocation4 + $0x340] sm:$0xff]
    %v2103 = vld [vmem:[#allocation4 + $0x348] sm:$0xff]
    %v2104 = vld [vmem:[#allocation4 + $0x350] sm:$0xff]
    %v2105 = vld [vmem:[#allocation4 + $0x358] sm:$0xff]
    %v2106 = vld [vmem:[#allocation4 + $0x360] sm:$0xff]
    %v2107 = vld [vmem:[#allocation4 + $0x368] sm:$0xff]
    %v2108 = vld [vmem:[#allocation4 + $0x370] sm:$0xff]
    %v2109 = vld [vmem:[#allocation4 + $0x378] sm:$0xff]
    %v2110 = vld [vmem:[#allocation4 + $0x380] sm:$0xff]
    %v2111 = vld [vmem:[#allocation4 + $0x388] sm:$0xff]
    %v2112 = vld [vmem:[#allocation4 + $0x390] sm:$0xff]
    %v2113 = vld [vmem:[#allocation4 + $0x398] sm:$0xff]
    %v2114 = vld [vmem:[#allocation4 + $0x3a0] sm:$0xff]
    %v2115 = vld [vmem:[#allocation4 + $0x3a8] sm:$0xff]
    %v2116 = vld [vmem:[#allocation4 + $0x3b0] sm:$0xff]
    %v2117 = vld [vmem:[#allocation4 + $0x3b8] sm:$0xff]
    %v2118 = vld [vmem:[#allocation4 + $0x3c0] sm:$0xff]
    %v2119 = vld [vmem:[#allocation4 + $0x3c8] sm:$0xff]
    %v2120 = vld [vmem:[#allocation4 + $0x3d0] sm:$0xff]
    %v2121 = vld [vmem:[#allocation4 + $0x3d8] sm:$0xff]
    %v2122 = vld [vmem:[#allocation4 + $0x3e0] sm:$0xff]
    %v2123 = vld [vmem:[#allocation4 + $0x3e8] sm:$0xff]
    %v2124 = vld [vmem:[#allocation4 + $0x3f0] sm:$0xff]
    %v2125 = vld [vmem:[#allocation4 + $0x3f8] sm:$0xff]
    %v2126 = vld [vmem:[#allocation4 + $0x400] sm:$0xff]
    %v2127 = vld [vmem:[#allocation4 + $0x408] sm:$0xff]
    %v2128 = vld [vmem:[#allocation4 + $0x410] sm:$0xff]
    %v2129 = vld [vmem:[#allocation4 + $0x418] sm:$0xff]
    %v2130 = vld [vmem:[#allocation4 + $0x420] sm:$0xff]
    %v2131 = vld [vmem:[#allocation4 + $0x428] sm:$0xff]
    %v2132 = vld [vmem:[#allocation4 + $0x430] sm:$0xff]
    %v2133 = vld [vmem:[#allocation4 + $0x438] sm:$0xff]
    %v2134 = vld [vmem:[#allocation4 + $0x440] sm:$0xff]
    %v2135 = vld [vmem:[#allocation4 + $0x448] sm:$0xff]
    %v2136 = vld [vmem:[#allocation4 + $0x450] sm:$0xff]
    %v2137 = vld [vmem:[#allocation4 + $0x458] sm:$0xff]
    %v2138 = vld [vmem:[#allocation4 + $0x460] sm:$0xff]
    %v2139 = vld [vmem:[#allocation4 + $0x468] sm:$0xff]
    %v2140 = vld [vmem:[#allocation4 + $0x470] sm:$0xff]
    %v2141 = vld [vmem:[#allocation4 + $0x478] sm:$0xff]
    %v2142 = vld [vmem:[#allocation4 + $0x480] sm:$0xff]
    %v2143 = vld [vmem:[#allocation4 + $0x488] sm:$0xff]
    %v2144 = vld [vmem:[#allocation4 + $0x490] sm:$0xff]
    %v2145 = vld [vmem:[#allocation4 + $0x498] sm:$0xff]
    %v2146 = vld [vmem:[#allocation4 + $0x4a0] sm:$0xff]
    %v2147 = vld [vmem:[#allocation4 + $0x4a8] sm:$0xff]
    %v2148 = vld [vmem:[#allocation4 + $0x4b0] sm:$0xff]
    %v2149 = vld [vmem:[#allocation4 + $0x4b8] sm:$0xff]
    %v2150 = vld [vmem:[#allocation4 + $0x4c0] sm:$0xff]
    %v2151 = vld [vmem:[#allocation4 + $0x4c8] sm:$0xff]
    %v2152 = vld [vmem:[#allocation4 + $0x4d0] sm:$0xff]
    %v2153 = vld [vmem:[#allocation4 + $0x4d8] sm:$0xff]
    %v2154 = vld [vmem:[#allocation4 + $0x4e0] sm:$0xff]
    %v2155 = vld [vmem:[#allocation4 + $0x4e8] sm:$0xff]
    %v2156 = vld [vmem:[#allocation4 + $0x4f0] sm:$0xff]
    %v2157 = vld [vmem:[#allocation4 + $0x4f8] sm:$0xff]
    %v2158 = vld [vmem:[#allocation4 + $0x500] sm:$0xff]
    %v2159 = vld [vmem:[#allocation4 + $0x508] sm:$0xff]
    %v2160 = vld [vmem:[#allocation4 + $0x510] sm:$0xff]
    %v2161 = vld [vmem:[#allocation4 + $0x518] sm:$0xff]
    %v2162 = vld [vmem:[#allocation4 + $0x520] sm:$0xff]
    %v2163 = vld [vmem:[#allocation4 + $0x528] sm:$0xff]
    %v2164 = vld [vmem:[#allocation4 + $0x530] sm:$0xff]
    %v2165 = vld [vmem:[#allocation4 + $0x538] sm:$0xff]
    %v2166 = vld [vmem:[#allocation4 + $0x540] sm:$0xff]
    %v2167 = vld [vmem:[#allocation4 + $0x548] sm:$0xff]
    %v2168 = vld [vmem:[#allocation4 + $0x550] sm:$0xff]
    %v2169 = vld [vmem:[#allocation4 + $0x558] sm:$0xff]
    %v2170 = vld [vmem:[#allocation4 + $0x560] sm:$0xff]
    %v2171 = vld [vmem:[#allocation4 + $0x568] sm:$0xff]
    %v2172 = vld [vmem:[#allocation4 + $0x570] sm:$0xff]
    %v2173 = vld [vmem:[#allocation4 + $0x578] sm:$0xff]
    %v2174 = vld [vmem:[#allocation4 + $0x580] sm:$0xff]
    %v2175 = vld [vmem:[#allocation4 + $0x588] sm:$0xff]
    %v2176 = vld [vmem:[#allocation4 + $0x590] sm:$0xff]
    %v2177 = vld [vmem:[#allocation4 + $0x598] sm:$0xff]
    %v2178 = vld [vmem:[#allocation4 + $0x5a0] sm:$0xff]
    %v2179 = vld [vmem:[#allocation4 + $0x5a8] sm:$0xff]
    %v2180 = vld [vmem:[#allocation4 + $0x5b0] sm:$0xff]
    %v2181 = vld [vmem:[#allocation4 + $0x5b8] sm:$0xff]
    %v2182 = vld [vmem:[#allocation4 + $0x5c0] sm:$0xff]
    %v2183 = vld [vmem:[#allocation4 + $0x5c8] sm:$0xff]
    %v2184 = vld [vmem:[#allocation4 + $0x5d0] sm:$0xff]
    %v2185 = vld [vmem:[#allocation4 + $0x5d8] sm:$0xff]
    %v2186 = vld [vmem:[#allocation4 + $0x5e0] sm:$0xff]
    %v2187 = vld [vmem:[#allocation4 + $0x5e8] sm:$0xff]
    %v2188 = vld [vmem:[#allocation4 + $0x5f0] sm:$0xff]
    %v2189 = vld [vmem:[#allocation4 + $0x5f8] sm:$0xff]
    %v2190 = vld [vmem:[#allocation4 + $0x600] sm:$0xff]
    %v2191 = vld [vmem:[#allocation4 + $0x608] sm:$0xff]
    %v2192 = vld [vmem:[#allocation4 + $0x610] sm:$0xff]
    %v2193 = vld [vmem:[#allocation4 + $0x618] sm:$0xff]
    %v2194 = vld [vmem:[#allocation4 + $0x620] sm:$0xff]
    %v2195 = vld [vmem:[#allocation4 + $0x628] sm:$0xff]
    %v2196 = vld [vmem:[#allocation4 + $0x630] sm:$0xff]
    %v2197 = vld [vmem:[#allocation4 + $0x638] sm:$0xff]
    %v2198 = vld [vmem:[#allocation4 + $0x640] sm:$0xff]
    %v2199 = vld [vmem:[#allocation4 + $0x648] sm:$0xff]
    %v2200 = vld [vmem:[#allocation4 + $0x650] sm:$0xff]
    %v2201 = vld [vmem:[#allocation4 + $0x658] sm:$0xff]
    %v2202 = vld [vmem:[#allocation4 + $0x660] sm:$0xff]
    %v2203 = vld [vmem:[#allocation4 + $0x668] sm:$0xff]
    %v2204 = vld [vmem:[#allocation4 + $0x670] sm:$0xff]
    %v2205 = vld [vmem:[#allocation4 + $0x678] sm:$0xff]
    %v2206 = vld [vmem:[#allocation4 + $0x680] sm:$0xff]
    %v2207 = vld [vmem:[#allocation4 + $0x688] sm:$0xff]
    %v2208 = vld [vmem:[#allocation4 + $0x690] sm:$0xff]
    %v2209 = vld [vmem:[#allocation4 + $0x698] sm:$0xff]
    %v2210 = vld [vmem:[#allocation4 + $0x6a0] sm:$0xff]
    %v2211 = vld [vmem:[#allocation4 + $0x6a8] sm:$0xff]
    %v2212 = vld [vmem:[#allocation4 + $0x6b0] sm:$0xff]
    %v2213 = vld [vmem:[#allocation4 + $0x6b8] sm:$0xff]
    %v2214 = vld [vmem:[#allocation4 + $0x6c0] sm:$0xff]
    %v2215 = vld [vmem:[#allocation4 + $0x6c8] sm:$0xff]
    %v2216 = vld [vmem:[#allocation4 + $0x6d0] sm:$0xff]
    %v2217 = vld [vmem:[#allocation4 + $0x6d8] sm:$0xff]
    %v2218 = vld [vmem:[#allocation4 + $0x6e0] sm:$0xff]
    %v2219 = vld [vmem:[#allocation4 + $0x6e8] sm:$0xff]
    %v2220 = vld [vmem:[#allocation4 + $0x6f0] sm:$0xff]
    %v2221 = vld [vmem:[#allocation4 + $0x6f8] sm:$0xff]
    %v2222 = vld [vmem:[#allocation4 + $0x700] sm:$0xff]
    %v2223 = vld [vmem:[#allocation4 + $0x708] sm:$0xff]
    %v2224 = vld [vmem:[#allocation4 + $0x710] sm:$0xff]
    %v2225 = vld [vmem:[#allocation4 + $0x718] sm:$0xff]
    %v2226 = vld [vmem:[#allocation4 + $0x720] sm:$0xff]
    %v2227 = vld [vmem:[#allocation4 + $0x728] sm:$0xff]
    %v2228 = vld [vmem:[#allocation4 + $0x730] sm:$0xff]
    %v2229 = vld [vmem:[#allocation4 + $0x738] sm:$0xff]
    %v2230 = vld [vmem:[#allocation4 + $0x740] sm:$0xff]
    %v2231 = vld [vmem:[#allocation4 + $0x748] sm:$0xff]
    %v2232 = vld [vmem:[#allocation4 + $0x750] sm:$0xff]
    %v2233 = vld [vmem:[#allocation4 + $0x758] sm:$0xff]
    %v2234 = vld [vmem:[#allocation4 + $0x760] sm:$0xff]
    %v2235 = vld [vmem:[#allocation4 + $0x768] sm:$0xff]
    %v2236 = vld [vmem:[#allocation4 + $0x770] sm:$0xff]
    %v2237 = vld [vmem:[#allocation4 + $0x778] sm:$0xff]
    %v2238 = vld [vmem:[#allocation4 + $0x780] sm:$0xff]
    %v2239 = vld [vmem:[#allocation4 + $0x788] sm:$0xff]
    %v2240 = vld [vmem:[#allocation4 + $0x790] sm:$0xff]
    %v2241 = vld [vmem:[#allocation4 + $0x798] sm:$0xff]
    %v2242 = vld [vmem:[#allocation4 + $0x7a0] sm:$0xff]
    %v2243 = vld [vmem:[#allocation4 + $0x7a8] sm:$0xff]
    %v2244 = vld [vmem:[#allocation4 + $0x7b0] sm:$0xff]
    %v2245 = vld [vmem:[#allocation4 + $0x7b8] sm:$0xff]
    %v2246 = vld [vmem:[#allocation4 + $0x7c0] sm:$0xff]
    %v2247 = vld [vmem:[#allocation4 + $0x7c8] sm:$0xff]
    %v2248 = vld [vmem:[#allocation4 + $0x7d0] sm:$0xff]
    %v2249 = vld [vmem:[#allocation4 + $0x7d8] sm:$0xff]
    %v2250 = vld [vmem:[#allocation4 + $0x7e0] sm:$0xff]
    %v2251 = vld [vmem:[#allocation4 + $0x7e8] sm:$0xff]
    %v2252 = vld [vmem:[#allocation4 + $0x7f0] sm:$0xff]
    %v2253 = vld [vmem:[#allocation4 + $0x7f8] sm:$0xff]
    %v2254 = vld [vmem:[#allocation4 + $0x800] sm:$0xff]
    %v2255 = vld [vmem:[#allocation4 + $0x808] sm:$0xff]
    %v2256 = vld [vmem:[#allocation4 + $0x810] sm:$0xff]
    %v2257 = vld [vmem:[#allocation4 + $0x818] sm:$0xff]
    %v2258 = vld [vmem:[#allocation4 + $0x820] sm:$0xff]
    %v2259 = vld [vmem:[#allocation4 + $0x828] sm:$0xff]
    %v2260 = vld [vmem:[#allocation4 + $0x830] sm:$0xff]
    %v2261 = vld [vmem:[#allocation4 + $0x838] sm:$0xff]
    %v2262 = vld [vmem:[#allocation4 + $0x840] sm:$0xff]
    %v2263 = vld [vmem:[#allocation4 + $0x848] sm:$0xff]
    %v2264 = vld [vmem:[#allocation4 + $0x850] sm:$0xff]
    %v2265 = vld [vmem:[#allocation4 + $0x858] sm:$0xff]
    %v2266 = vld [vmem:[#allocation4 + $0x860] sm:$0xff]
    %v2267 = vld [vmem:[#allocation4 + $0x868] sm:$0xff]
    %v2268 = vld [vmem:[#allocation4 + $0x870] sm:$0xff]
    %v2269 = vld [vmem:[#allocation4 + $0x878] sm:$0xff]
    %v2270 = vld [vmem:[#allocation4 + $0x880] sm:$0xff]
    %v2271 = vld [vmem:[#allocation4 + $0x888] sm:$0xff]
    %v2272 = vld [vmem:[#allocation4 + $0x890] sm:$0xff]
    %v2273 = vld [vmem:[#allocation4 + $0x898] sm:$0xff]
    %v2274 = vld [vmem:[#allocation4 + $0x8a0] sm:$0xff]
    %v2275 = vld [vmem:[#allocation4 + $0x8a8] sm:$0xff]
    %v2276 = vld [vmem:[#allocation4 + $0x8b0] sm:$0xff]
    %v2277 = vld [vmem:[#allocation4 + $0x8b8] sm:$0xff]
    %v2278 = vld [vmem:[#allocation4 + $0x8c0] sm:$0xff]
    %v2279 = vld [vmem:[#allocation4 + $0x8c8] sm:$0xff]
    %v2280 = vld [vmem:[#allocation4 + $0x8d0] sm:$0xff]
    %v2281 = vld [vmem:[#allocation4 + $0x8d8] sm:$0xff]
    %v2282 = vld [vmem:[#allocation4 + $0x8e0] sm:$0xff]
    %v2283 = vld [vmem:[#allocation4 + $0x8e8] sm:$0xff]
    %v2284 = vld [vmem:[#allocation4 + $0x8f0] sm:$0xff]
    %v2285 = vld [vmem:[#allocation4 + $0x8f8] sm:$0xff]
    %v2286 = vld [vmem:[#allocation11] sm:$0xf]
    %v2287 = vld [vmem:[#allocation11 + $0x4] sm:$0xf]
    %v2288 = vld [vmem:[#allocation11 + $0x8] sm:$0xf]
    %v2289 = vld [vmem:[#allocation11 + $0xc] sm:$0xf]
    %v2290 = vld [vmem:[#allocation11 + $0x10] sm:$0xf]
    %v2291 = vld [vmem:[#allocation11 + $0x14] sm:$0xf]
    %v2292 = vld [vmem:[#allocation11 + $0x18] sm:$0xf]
    %v2293 = vld [vmem:[#allocation11 + $0x1c] sm:$0xf]
    %v2294 = vld [vmem:[#allocation11 + $0x20] sm:$0xf]
    %v2295 = vld [vmem:[#allocation11 + $0x24] sm:$0xf]
    %v2296 = vld [vmem:[#allocation11 + $0x28] sm:$0xf]
    %v2297 = vld [vmem:[#allocation11 + $0x2c] sm:$0xf]
    %v2298 = vld [vmem:[#allocation11 + $0x30] sm:$0xf]
    %v2299 = vld [vmem:[#allocation11 + $0x34] sm:$0xf]
    %v2300 = vld [vmem:[#allocation11 + $0x38] sm:$0xf]
    %v2301 = vld [vmem:[#allocation11 + $0x3c] sm:$0xf]
    %v2302 = vld [vmem:[#allocation11 + $0x40] sm:$0xf]
    %v2303 = vld [vmem:[#allocation11 + $0x44] sm:$0xf]
    %v2304 = vld [vmem:[#allocation11 + $0x48] sm:$0xf]
    %v2305 = vld [vmem:[#allocation11 + $0x4c] sm:$0xf]
    %v2306 = vld [vmem:[#allocation11 + $0x50] sm:$0xf]
    %v2307 = vld [vmem:[#allocation11 + $0x54] sm:$0xf]
    %v2308 = vld [vmem:[#allocation11 + $0x58] sm:$0xf]
    %v2309 = vld [vmem:[#allocation11 + $0x5c] sm:$0xf]
    %v2310 = vld [vmem:[#allocation11 + $0x60] sm:$0xf]
    %v2311 = vld [vmem:[#allocation11 + $0x64] sm:$0xf]
    %v2312 = vld [vmem:[#allocation11 + $0x68] sm:$0xf]
    %v2313 = vld [vmem:[#allocation11 + $0x6c] sm:$0xf]
    %v2314 = vld [vmem:[#allocation11 + $0x70] sm:$0xf]
    %v2315 = vld [vmem:[#allocation11 + $0x74] sm:$0xf]
    %v2316 = vld [vmem:[#allocation11 + $0x78] sm:$0xf]
    %v2317 = vld [vmem:[#allocation11 + $0x7c] sm:$0xf]
    %v2318 = vld [vmem:[#allocation11 + $0x80] sm:$0xf]
    %v2319 = vld [vmem:[#allocation11 + $0x84] sm:$0xf]
    %v2320 = vld [vmem:[#allocation11 + $0x88] sm:$0xf]
    %v2321 = vld [vmem:[#allocation11 + $0x8c] sm:$0xf]
    %v2322 = vld [vmem:[#allocation11 + $0x90] sm:$0xf]
    %v2323 = vld [vmem:[#allocation11 + $0x94] sm:$0xf]
    %v2324 = vld [vmem:[#allocation11 + $0x98] sm:$0xf]
    %v2325 = vld [vmem:[#allocation11 + $0x9c] sm:$0xf]
    %v2326 = vld [vmem:[#allocation11 + $0xa0] sm:$0xf]
    %v2327 = vld [vmem:[#allocation11 + $0xa4] sm:$0xf]
    %v2328 = vld [vmem:[#allocation11 + $0xa8] sm:$0xf]
    %v2329 = vld [vmem:[#allocation11 + $0xac] sm:$0xf]
    %v2330 = vld [vmem:[#allocation11 + $0xb0] sm:$0xf]
    %v2331 = vld [vmem:[#allocation11 + $0xb4] sm:$0xf]
    %v2332 = vld [vmem:[#allocation11 + $0xb8] sm:$0xf]
    %v2333 = vld [vmem:[#allocation11 + $0xbc] sm:$0xf]
    %v2334 = vld [vmem:[#allocation11 + $0xc0] sm:$0xf]
    %v2335 = vld [vmem:[#allocation11 + $0xc4] sm:$0xf]
    %v2336 = vld [vmem:[#allocation11 + $0xc8] sm:$0xf]
    %v2337 = vld [vmem:[#allocation11 + $0xcc] sm:$0xf]
    %v2338 = vld [vmem:[#allocation11 + $0xd0] sm:$0xf]
    %v2339 = vld [vmem:[#allocation11 + $0xd4] sm:$0xf]
    %v2340 = vld [vmem:[#allocation11 + $0xd8] sm:$0xf]
    %v2341 = vld [vmem:[#allocation11 + $0xdc] sm:$0xf]
    %v2342 = vld [vmem:[#allocation11 + $0xe0] sm:$0xf]
    %v2343 = vld [vmem:[#allocation11 + $0xe4] sm:$0xf]
    %v2344 = vld [vmem:[#allocation11 + $0xe8] sm:$0xf]
    %v2345 = vld [vmem:[#allocation11 + $0xec] sm:$0xf]
    %v2346 = vld [vmem:[#allocation11 + $0xf0] sm:$0xf]
    %v2347 = vld [vmem:[#allocation11 + $0xf4] sm:$0xf]
    %v2348 = vld [vmem:[#allocation11 + $0xf8] sm:$0xf]
    %v2349 = vld [vmem:[#allocation11 + $0xfc] sm:$0xf]
    %v2350 = vld [vmem:[#allocation11 + $0x100] sm:$0xf]
    %v2351 = vld [vmem:[#allocation11 + $0x104] sm:$0xf]
    %v2352 = vld [vmem:[#allocation11 + $0x108] sm:$0xf]
    %v2353 = vld [vmem:[#allocation11 + $0x10c] sm:$0xf]
    %v2354 = vld [vmem:[#allocation11 + $0x110] sm:$0xf]
    %v2355 = vld [vmem:[#allocation11 + $0x114] sm:$0xf]
    %v2356 = vld [vmem:[#allocation11 + $0x118] sm:$0xf]
    %v2357 = vld [vmem:[#allocation11 + $0x11c] sm:$0xf]
    %v2358 = vld [vmem:[#allocation11 + $0x120] sm:$0xf]
    %v2359 = vld [vmem:[#allocation11 + $0x124] sm:$0xf]
    %v2360 = vld [vmem:[#allocation11 + $0x128] sm:$0xf]
    %v2361 = vld [vmem:[#allocation11 + $0x12c] sm:$0xf]
    %v2362 = vld [vmem:[#allocation11 + $0x130] sm:$0xf]
    %v2363 = vld [vmem:[#allocation11 + $0x134] sm:$0xf]
    %v2364 = vld [vmem:[#allocation11 + $0x138] sm:$0xf]
    %v2365 = vld [vmem:[#allocation11 + $0x13c] sm:$0xf]
    %v2366 = vld [vmem:[#allocation11 + $0x140] sm:$0xf]
    %v2367 = vld [vmem:[#allocation11 + $0x144] sm:$0xf]
    %v2368 = vld [vmem:[#allocation11 + $0x148] sm:$0xf]
    %v2369 = vld [vmem:[#allocation11 + $0x14c] sm:$0xf]
    %v2370 = vld [vmem:[#allocation11 + $0x150] sm:$0xf]
    %v2371 = vld [vmem:[#allocation11 + $0x154] sm:$0xf]
    %v2372 = vld [vmem:[#allocation11 + $0x158] sm:$0xf]
    %v2373 = vld [vmem:[#allocation11 + $0x15c] sm:$0xf]
    %v2374 = vld [vmem:[#allocation11 + $0x160] sm:$0xf]
    %v2375 = vld [vmem:[#allocation11 + $0x164] sm:$0xf]
    %v2376 = vld [vmem:[#allocation11 + $0x168] sm:$0xf]
    %v2377 = vld [vmem:[#allocation11 + $0x16c] sm:$0xf]
    %v2378 = vld [vmem:[#allocation11 + $0x170] sm:$0xf]
    %v2379 = vld [vmem:[#allocation11 + $0x174] sm:$0xf]
    %v2380 = vld [vmem:[#allocation11 + $0x178] sm:$0xf]
    %v2381 = vld [vmem:[#allocation11 + $0x17c] sm:$0xf]
    %v2382 = vld [vmem:[#allocation11 + $0x180] sm:$0xf]
    %v2383 = vld [vmem:[#allocation11 + $0x184] sm:$0xf]
    %v2384 = vld [vmem:[#allocation11 + $0x188] sm:$0xf]
    %v2385 = vld [vmem:[#allocation11 + $0x18c] sm:$0xf]
    %v2386 = vld [vmem:[#allocation11 + $0x190] sm:$0xf]
    %v2387 = vld [vmem:[#allocation11 + $0x194] sm:$0xf]
    %v2388 = vld [vmem:[#allocation11 + $0x198] sm:$0xf]
    %v2389 = vld [vmem:[#allocation11 + $0x19c] sm:$0xf]
    %v2390 = vld [vmem:[#allocation11 + $0x1a0] sm:$0xf]
    %v2391 = vld [vmem:[#allocation11 + $0x1a4] sm:$0xf]
    %v2392 = vld [vmem:[#allocation11 + $0x1a8] sm:$0xf]
    %v2393 = vld [vmem:[#allocation11 + $0x1ac] sm:$0xf]
    %v2394 = vld [vmem:[#allocation11 + $0x1b0] sm:$0xf]
    %v2395 = vld [vmem:[#allocation11 + $0x1b4] sm:$0xf]
    %v2396 = vld [vmem:[#allocation11 + $0x1b8] sm:$0xf]
    %v2397 = vld [vmem:[#allocation11 + $0x1bc] sm:$0xf]
    %v2398 = vld [vmem:[#allocation11 + $0x1c0] sm:$0xf]
    %v2399 = vld [vmem:[#allocation11 + $0x1c4] sm:$0xf]
    %v2400 = vld [vmem:[#allocation11 + $0x1c8] sm:$0xf]
    %v2401 = vld [vmem:[#allocation11 + $0x1cc] sm:$0xf]
    %v2402 = vld [vmem:[#allocation11 + $0x1d0] sm:$0xf]
    %v2403 = vld [vmem:[#allocation11 + $0x1d4] sm:$0xf]
    %v2404 = vld [vmem:[#allocation11 + $0x1d8] sm:$0xf]
    %v2405 = vld [vmem:[#allocation11 + $0x1dc] sm:$0xf]
    %v2406 = vld [vmem:[#allocation11 + $0x1e0] sm:$0xf]
    %v2407 = vld [vmem:[#allocation11 + $0x1e4] sm:$0xf]
    %v2408 = vld [vmem:[#allocation11 + $0x1e8] sm:$0xf]
    %v2409 = vld [vmem:[#allocation11 + $0x1ec] sm:$0xf]
    %v2410 = vld [vmem:[#allocation11 + $0x1f0] sm:$0xf]
    %v2411 = vld [vmem:[#allocation11 + $0x1f4] sm:$0xf]
    %v2412 = vld [vmem:[#allocation11 + $0x1f8] sm:$0xf]
    %v2413 = vld [vmem:[#allocation11 + $0x1fc] sm:$0xf]
    %v2414 = vld [vmem:[#allocation11 + $0x200] sm:$0xf]
    %v2415 = vld [vmem:[#allocation11 + $0x204] sm:$0xf]
    %v2416 = vld [vmem:[#allocation11 + $0x208] sm:$0xf]
    %v2417 = vld [vmem:[#allocation11 + $0x20c] sm:$0xf]
    %v2418 = vld [vmem:[#allocation11 + $0x210] sm:$0xf]
    %v2419 = vld [vmem:[#allocation11 + $0x214] sm:$0xf]
    %v2420 = vld [vmem:[#allocation11 + $0x218] sm:$0xf]
    %v2421 = vld [vmem:[#allocation11 + $0x21c] sm:$0xf]
    %v2422 = vld [vmem:[#allocation11 + $0x220] sm:$0xf]
    %v2423 = vld [vmem:[#allocation11 + $0x224] sm:$0xf]
    %v2424 = vld [vmem:[#allocation11 + $0x228] sm:$0xf]
    %v2425 = vld [vmem:[#allocation11 + $0x22c] sm:$0xf]
    %v2426 = vld [vmem:[#allocation11 + $0x230] sm:$0xf]
    %v2427 = vld [vmem:[#allocation11 + $0x234] sm:$0xf]
    %v2428 = vld [vmem:[#allocation11 + $0x238] sm:$0xf]
    %v2429 = vld [vmem:[#allocation11 + $0x23c] sm:$0xf]
    %v2574 = vunpack.c.l.b16 %v2286
    %v2575 = vunpack.c.l.b16 %v2287
    %v2576 = vunpack.c.l.b16 %v2288
    %v2577 = vunpack.c.l.b16 %v2289
    %v2578 = vunpack.c.l.b16 %v2290
    %v2579 = vunpack.c.l.b16 %v2291
    %v2580 = vunpack.c.l.b16 %v2292
    %v2581 = vunpack.c.l.b16 %v2293
    %v2582 = vunpack.c.l.b16 %v2294
    %v2583 = vunpack.c.l.b16 %v2295
    %v2584 = vunpack.c.l.b16 %v2296
    %v2585 = vunpack.c.l.b16 %v2297
    %v2586 = vunpack.c.l.b16 %v2298
    %v2587 = vunpack.c.l.b16 %v2299
    %v2588 = vunpack.c.l.b16 %v2300
    %v2589 = vunpack.c.l.b16 %v2301
    %v2590 = vunpack.c.l.b16 %v2302
    %v2591 = vunpack.c.l.b16 %v2303
    %v2592 = vunpack.c.l.b16 %v2304
    %v2593 = vunpack.c.l.b16 %v2305
    %v2594 = vunpack.c.l.b16 %v2306
    %v2595 = vunpack.c.l.b16 %v2307
    %v2596 = vunpack.c.l.b16 %v2308
    %v2597 = vunpack.c.l.b16 %v2309
    %v2598 = vunpack.c.l.b16 %v2310
    %v2599 = vunpack.c.l.b16 %v2311
    %v2600 = vunpack.c.l.b16 %v2312
    %v2601 = vunpack.c.l.b16 %v2313
    %v2602 = vunpack.c.l.b16 %v2314
    %v2603 = vunpack.c.l.b16 %v2315
    %v2604 = vunpack.c.l.b16 %v2316
    %v2605 = vunpack.c.l.b16 %v2317
    %v2606 = vunpack.c.l.b16 %v2318
    %v2607 = vunpack.c.l.b16 %v2319
    %v2608 = vunpack.c.l.b16 %v2320
    %v2609 = vunpack.c.l.b16 %v2321
    %v2610 = vunpack.c.l.b16 %v2322
    %v2611 = vunpack.c.l.b16 %v2323
    %v2612 = vunpack.c.l.b16 %v2324
    %v2613 = vunpack.c.l.b16 %v2325
    %v2614 = vunpack.c.l.b16 %v2326
    %v2615 = vunpack.c.l.b16 %v2327
    %v2616 = vunpack.c.l.b16 %v2328
    %v2617 = vunpack.c.l.b16 %v2329
    %v2618 = vunpack.c.l.b16 %v2330
    %v2619 = vunpack.c.l.b16 %v2331
    %v2620 = vunpack.c.l.b16 %v2332
    %v2621 = vunpack.c.l.b16 %v2333
    %v2622 = vunpack.c.l.b16 %v2334
    %v2623 = vunpack.c.l.b16 %v2335
    %v2624 = vunpack.c.l.b16 %v2336
    %v2625 = vunpack.c.l.b16 %v2337
    %v2626 = vunpack.c.l.b16 %v2338
    %v2627 = vunpack.c.l.b16 %v2339
    %v2628 = vunpack.c.l.b16 %v2340
    %v2629 = vunpack.c.l.b16 %v2341
    %v2630 = vunpack.c.l.b16 %v2342
    %v2631 = vunpack.c.l.b16 %v2343
    %v2632 = vunpack.c.l.b16 %v2344
    %v2633 = vunpack.c.l.b16 %v2345
    %v2634 = vunpack.c.l.b16 %v2346
    %v2635 = vunpack.c.l.b16 %v2347
    %v2636 = vunpack.c.l.b16 %v2348
    %v2637 = vunpack.c.l.b16 %v2349
    %v2638 = vunpack.c.l.b16 %v2350
    %v2639 = vunpack.c.l.b16 %v2351
    %v2640 = vunpack.c.l.b16 %v2352
    %v2641 = vunpack.c.l.b16 %v2353
    %v2642 = vunpack.c.l.b16 %v2354
    %v2643 = vunpack.c.l.b16 %v2355
    %v2644 = vunpack.c.l.b16 %v2356
    %v2645 = vunpack.c.l.b16 %v2357
    %v2646 = vunpack.c.l.b16 %v2358
    %v2647 = vunpack.c.l.b16 %v2359
    %v2648 = vunpack.c.l.b16 %v2360
    %v2649 = vunpack.c.l.b16 %v2361
    %v2650 = vunpack.c.l.b16 %v2362
    %v2651 = vunpack.c.l.b16 %v2363
    %v2652 = vunpack.c.l.b16 %v2364
    %v2653 = vunpack.c.l.b16 %v2365
    %v2654 = vunpack.c.l.b16 %v2366
    %v2655 = vunpack.c.l.b16 %v2367
    %v2656 = vunpack.c.l.b16 %v2368
    %v2657 = vunpack.c.l.b16 %v2369
    %v2658 = vunpack.c.l.b16 %v2370
    %v2659 = vunpack.c.l.b16 %v2371
    %v2660 = vunpack.c.l.b16 %v2372
    %v2661 = vunpack.c.l.b16 %v2373
    %v2662 = vunpack.c.l.b16 %v2374
    %v2663 = vunpack.c.l.b16 %v2375
    %v2664 = vunpack.c.l.b16 %v2376
    %v2665 = vunpack.c.l.b16 %v2377
    %v2666 = vunpack.c.l.b16 %v2378
    %v2667 = vunpack.c.l.b16 %v2379
    %v2668 = vunpack.c.l.b16 %v2380
    %v2669 = vunpack.c.l.b16 %v2381
    %v2670 = vunpack.c.l.b16 %v2382
    %v2671 = vunpack.c.l.b16 %v2383
    %v2672 = vunpack.c.l.b16 %v2384
    %v2673 = vunpack.c.l.b16 %v2385
    %v2674 = vunpack.c.l.b16 %v2386
    %v2675 = vunpack.c.l.b16 %v2387
    %v2676 = vunpack.c.l.b16 %v2388
    %v2677 = vunpack.c.l.b16 %v2389
    %v2678 = vunpack.c.l.b16 %v2390
    %v2679 = vunpack.c.l.b16 %v2391
    %v2680 = vunpack.c.l.b16 %v2392
    %v2681 = vunpack.c.l.b16 %v2393
    %v2682 = vunpack.c.l.b16 %v2394
    %v2683 = vunpack.c.l.b16 %v2395
    %v2684 = vunpack.c.l.b16 %v2396
    %v2685 = vunpack.c.l.b16 %v2397
    %v2686 = vunpack.c.l.b16 %v2398
    %v2687 = vunpack.c.l.b16 %v2399
    %v2688 = vunpack.c.l.b16 %v2400
    %v2689 = vunpack.c.l.b16 %v2401
    %v2690 = vunpack.c.l.b16 %v2402
    %v2691 = vunpack.c.l.b16 %v2403
    %v2692 = vunpack.c.l.b16 %v2404
    %v2693 = vunpack.c.l.b16 %v2405
    %v2694 = vunpack.c.l.b16 %v2406
    %v2695 = vunpack.c.l.b16 %v2407
    %v2696 = vunpack.c.l.b16 %v2408
    %v2697 = vunpack.c.l.b16 %v2409
    %v2698 = vunpack.c.l.b16 %v2410
    %v2699 = vunpack.c.l.b16 %v2411
    %v2700 = vunpack.c.l.b16 %v2412
    %v2701 = vunpack.c.l.b16 %v2413
    %v2702 = vunpack.c.l.b16 %v2414
    %v2703 = vunpack.c.l.b16 %v2415
    %v2704 = vunpack.c.l.b16 %v2416
    %v2705 = vunpack.c.l.b16 %v2417
    %v2706 = vunpack.c.l.b16 %v2418
    %v2707 = vunpack.c.l.b16 %v2419
    %v2708 = vunpack.c.l.b16 %v2420
    %v2709 = vunpack.c.l.b16 %v2421
    %v2710 = vunpack.c.l.b16 %v2422
    %v2711 = vunpack.c.l.b16 %v2423
    %v2712 = vunpack.c.l.b16 %v2424
    %v2713 = vunpack.c.l.b16 %v2425
    %v2714 = vunpack.c.l.b16 %v2426
    %v2715 = vunpack.c.l.b16 %v2427
    %v2716 = vunpack.c.l.b16 %v2428
    %v2717 = vunpack.c.l.b16 %v2429
    %v2718 = vpack.c.b16 %v2575, %v2574
    %v2719 = vpack.c.b16 %v2577, %v2576
    %v2720 = vpack.c.b16 %v2579, %v2578
    %v2721 = vpack.c.b16 %v2581, %v2580
    %v2722 = vpack.c.b16 %v2583, %v2582
    %v2723 = vpack.c.b16 %v2585, %v2584
    %v2724 = vpack.c.b16 %v2587, %v2586
    %v2725 = vpack.c.b16 %v2589, %v2588
    %v2726 = vpack.c.b16 %v2591, %v2590
    %v2727 = vpack.c.b16 %v2593, %v2592
    %v2728 = vpack.c.b16 %v2595, %v2594
    %v2729 = vpack.c.b16 %v2597, %v2596
    %v2730 = vpack.c.b16 %v2599, %v2598
    %v2731 = vpack.c.b16 %v2601, %v2600
    %v2732 = vpack.c.b16 %v2603, %v2602
    %v2733 = vpack.c.b16 %v2605, %v2604
    %v2734 = vpack.c.b16 %v2607, %v2606
    %v2735 = vpack.c.b16 %v2609, %v2608
    %v2736 = vpack.c.b16 %v2611, %v2610
    %v2737 = vpack.c.b16 %v2613, %v2612
    %v2738 = vpack.c.b16 %v2615, %v2614
    %v2739 = vpack.c.b16 %v2617, %v2616
    %v2740 = vpack.c.b16 %v2619, %v2618
    %v2741 = vpack.c.b16 %v2621, %v2620
    %v2742 = vpack.c.b16 %v2623, %v2622
    %v2743 = vpack.c.b16 %v2625, %v2624
    %v2744 = vpack.c.b16 %v2627, %v2626
    %v2745 = vpack.c.b16 %v2629, %v2628
    %v2746 = vpack.c.b16 %v2631, %v2630
    %v2747 = vpack.c.b16 %v2633, %v2632
    %v2748 = vpack.c.b16 %v2635, %v2634
    %v2749 = vpack.c.b16 %v2637, %v2636
    %v2750 = vpack.c.b16 %v2639, %v2638
    %v2751 = vpack.c.b16 %v2641, %v2640
    %v2752 = vpack.c.b16 %v2643, %v2642
    %v2753 = vpack.c.b16 %v2645, %v2644
    %v2754 = vpack.c.b16 %v2647, %v2646
    %v2755 = vpack.c.b16 %v2649, %v2648
    %v2756 = vpack.c.b16 %v2651, %v2650
    %v2757 = vpack.c.b16 %v2653, %v2652
    %v2758 = vpack.c.b16 %v2655, %v2654
    %v2759 = vpack.c.b16 %v2657, %v2656
    %v2760 = vpack.c.b16 %v2659, %v2658
    %v2761 = vpack.c.b16 %v2661, %v2660
    %v2762 = vpack.c.b16 %v2663, %v2662
    %v2763 = vpack.c.b16 %v2665, %v2664
    %v2764 = vpack.c.b16 %v2667, %v2666
    %v2765 = vpack.c.b16 %v2669, %v2668
    %v2766 = vpack.c.b16 %v2671, %v2670
    %v2767 = vpack.c.b16 %v2673, %v2672
    %v2768 = vpack.c.b16 %v2675, %v2674
    %v2769 = vpack.c.b16 %v2677, %v2676
    %v2770 = vpack.c.b16 %v2679, %v2678
    %v2771 = vpack.c.b16 %v2681, %v2680
    %v2772 = vpack.c.b16 %v2683, %v2682
    %v2773 = vpack.c.b16 %v2685, %v2684
    %v2774 = vpack.c.b16 %v2687, %v2686
    %v2775 = vpack.c.b16 %v2689, %v2688
    %v2776 = vpack.c.b16 %v2691, %v2690
    %v2777 = vpack.c.b16 %v2693, %v2692
    %v2778 = vpack.c.b16 %v2695, %v2694
    %v2779 = vpack.c.b16 %v2697, %v2696
    %v2780 = vpack.c.b16 %v2699, %v2698
    %v2781 = vpack.c.b16 %v2701, %v2700
    %v2782 = vpack.c.b16 %v2703, %v2702
    %v2783 = vpack.c.b16 %v2705, %v2704
    %v2784 = vpack.c.b16 %v2707, %v2706
    %v2785 = vpack.c.b16 %v2709, %v2708
    %v2786 = vpack.c.b16 %v2711, %v2710
    %v2787 = vpack.c.b16 %v2713, %v2712
    %v2788 = vpack.c.b16 %v2715, %v2714
    %v2789 = vpack.c.b16 %v2717, %v2716
    %2862 = vmatprep.subr.bf16.mxu0 0
    %2863 = vmatpush1.bf16.msra.mxu0 %v2718
    %2864 = vmatprep.subr.bf16.mxu0 0
    %2865 = vmatpush1.bf16.msra.mxu0 %v2719
    %2866 = vmatprep.subr.bf16.mxu0 0
    %2867 = vmatpush1.bf16.msra.mxu0 %v2720
    %2868 = vmatprep.subr.bf16.mxu0 0
    %2869 = vmatpush1.bf16.msra.mxu0 %v2721
    %2870 = vmatprep.subr.bf16.mxu0 0
    %2871 = vmatpush1.bf16.msra.mxu0 %v2722
    %2872 = vmatprep.subr.bf16.mxu0 0
    %2873 = vmatpush1.bf16.msra.mxu0 %v2723
    %2874 = vmatprep.subr.bf16.mxu0 0
    %2875 = vmatpush1.bf16.msra.mxu0 %v2724
    %2876 = vmatprep.subr.bf16.mxu0 0
    %2877 = vmatpush1.bf16.msra.mxu0 %v2725
    %2878 = vmatprep.subr.bf16.mxu0 0
    %2879 = vmatpush1.bf16.msra.mxu0 %v2726
    %2880 = vmatprep.subr.bf16.mxu0 0
    %2881 = vmatpush1.bf16.msra.mxu0 %v2727
    %2882 = vmatprep.subr.bf16.mxu0 0
    %2883 = vmatpush1.bf16.msra.mxu0 %v2728
    %2884 = vmatprep.subr.bf16.mxu0 0
    %2885 = vmatpush1.bf16.msra.mxu0 %v2729
    %2886 = vmatprep.subr.bf16.mxu0 0
    %2887 = vmatpush1.bf16.msra.mxu0 %v2730
    %2888 = vmatprep.subr.bf16.mxu0 0
    %2889 = vmatpush1.bf16.msra.mxu0 %v2731
    %2890 = vmatprep.subr.bf16.mxu0 0
    %2891 = vmatpush1.bf16.msra.mxu0 %v2732
    %2892 = vmatprep.subr.bf16.mxu0 0
    %2893 = vmatpush1.bf16.msra.mxu0 %v2733
    %2894 = vmatprep.mubr.bf16.mxu0 %v1999
    %2895 = vmatmul.mubr.bf16.gmra.mrb[0].mxu0 %v1998
    %v2896 = vpop.f32.mrb[0].mxu0
    %v2897 = vadd.f32 0.0, %v2896
    %v2898 = vpop.f32.mrb[0].mxu0
    %v2899 = vpop.f32.mrb[0].mxu0
    %v2900 = vadd.f32 0.0, %v2899
    %v2901 = vpop.f32.mrb[0].mxu0
    %2902 = vmatprep.mubr.bf16.mxu0 %v2008
    %2903 = vmatmul.mubr.bf16.gmra.mrb[0].mxu0 %v2007
    %v2904 = vpop.f32.mrb[0].mxu0
    %v2905 = vadd.f32 0.0, %v2904
    %v2906 = vpop.f32.mrb[0].mxu0
    %v2907 = vpop.f32.mrb[0].mxu0
    %v2908 = vadd.f32 0.0, %v2907
    %v2909 = vpop.f32.mrb[0].mxu0
    %2910 = vmatprep.mubr.bf16.mxu0 %v2017
    %2911 = vmatmul.mubr.bf16.gmra.mrb[0].mxu0 %v2016
    %v2912 = vpop.f32.mrb[0].mxu0
    %v2913 = vadd.f32 0.0, %v2912
    %v2914 = vpop.f32.mrb[0].mxu0
    %v2915 = vpop.f32.mrb[0].mxu0
    %v2916 = vadd.f32 0.0, %v2915
    %v2917 = vpop.f32.mrb[0].mxu0
    %2918 = vmatprep.mubr.bf16.mxu0 %v2026
    %2919 = vmatmul.mubr.bf16.gmra.mrb[0].mxu0 %v2025
    %v2920 = vpop.f32.mrb[0].mxu0
    %v2921 = vadd.f32 0.0, %v2920
    %v2922 = vpop.f32.mrb[0].mxu0
    %v2923 = vpop.f32.mrb[0].mxu0
    %v2924 = vadd.f32 0.0, %v2923
    %v2925 = vpop.f32.mrb[0].mxu0
    %2926 = vmatprep.mubr.bf16.mxu0 %v2035
    %2927 = vmatmul.mubr.bf16.gmra.mrb[0].mxu0 %v2034
    %v2928 = vpop.f32.mrb[0].mxu0
    %v2929 = vadd.f32 0.0, %v2928
    %v2930 = vpop.f32.mrb[0].mxu0
    %v2931 = vpop.f32.mrb[0].mxu0
    %v2932 = vadd.f32 0.0, %v2931
    %v2933 = vpop.f32.mrb[0].mxu0
    %2934 = vmatprep.mubr.bf16.mxu0 %v2044
    %2935 = vmatmul.mubr.bf16.gmra.mrb[0].mxu0 %v2043
    %v2936 = vpop.f32.mrb[0].mxu0
    %v2937 = vadd.f32 0.0, %v2936
    %v2938 = vpop.f32.mrb[0].mxu0
    %v2939 = vpop.f32.mrb[0].mxu0
    %v2940 = vadd.f32 0.0, %v2939
    %v2941 = vpop.f32.mrb[0].mxu0
    %2942 = vmatprep.mubr.bf16.mxu0 %v2053
    %2943 = vmatmul.mubr.bf16.gmra.mrb[0].mxu0 %v2052
    %v2944 = vpop.f32.mrb[0].mxu0
    %v2945 = vadd.f32 0.0, %v2944
    %v2946 = vpop.f32.mrb[0].mxu0
    %v2947 = vpop.f32.mrb[0].mxu0
    %v2948 = vadd.f32 0.0, %v2947
    %v2949 = vpop.f32.mrb[0].mxu0
    %2950 = vmatprep.mubr.bf16.mxu0 %v2062
    %2951 = vmatmul.mubr.bf16.gmra.mrb[0].mxu0 %v2061
    %v2952 = vpop.f32.mrb[0].mxu0
    %v2953 = vadd.f32 0.0, %v2952
    %v2954 = vpop.f32.mrb[0].mxu0
    %v2955 = vpop.f32.mrb[0].mxu0
    %v2956 = vadd.f32 0.0, %v2955
    %v2957 = vpop.f32.mrb[0].mxu0
    %2958 = vmatprep.mubr.bf16.mxu0 %v2071
    %2959 = vmatmul.mubr.bf16.gmra.mrb[0].mxu0 %v2070
    %v2960 = vpop.f32.mrb[0].mxu0
    %v2961 = vadd.f32 0.0, %v2960
    %v2962 = vpop.f32.mrb[0].mxu0
    %v2963 = vpop.f32.mrb[0].mxu0
    %v2964 = vadd.f32 0.0, %v2963
    %v2965 = vpop.f32.mrb[0].mxu0
    %2966 = vmatprep.mubr.bf16.mxu0 %v2080
    %2967 = vmatmul.mubr.bf16.gmra.mrb[0].mxu0 %v2079
    %v2968 = vpop.f32.mrb[0].mxu0
    %v2969 = vadd.f32 0.0, %v2968
    %v2970 = vpop.f32.mrb[0].mxu0
    %v2971 = vpop.f32.mrb[0].mxu0
    %v2972 = vadd.f32 0.0, %v2971
    %v2973 = vpop.f32.mrb[0].mxu0
    %2974 = vmatprep.mubr.bf16.mxu0 %v2089
    %2975 = vmatmul.mubr.bf16.gmra.mrb[0].mxu0 %v2088
    %v2976 = vpop.f32.mrb[0].mxu0
    %v2977 = vadd.f32 0.0, %v2976
    %v2978 = vpop.f32.mrb[0].mxu0
    %v2979 = vpop.f32.mrb[0].mxu0
    %v2980 = vadd.f32 0.0, %v2979
    %v2981 = vpop.f32.mrb[0].mxu0
    %2982 = vmatprep.mubr.bf16.mxu0 %v2098
    %2983 = vmatmul.mubr.bf16.gmra.mrb[0].mxu0 %v2097
    %v2984 = vpop.f32.mrb[0].mxu0
    %v2985 = vadd.f32 0.0, %v2984
    %v2986 = vpop.f32.mrb[0].mxu0
    %v2987 = vpop.f32.mrb[0].mxu0
    %v2988 = vadd.f32 0.0, %v2987
    %v2989 = vpop.f32.mrb[0].mxu0
    %2990 = vmatprep.mubr.bf16.mxu0 %v2107
    %2991 = vmatmul.mubr.bf16.gmra.mrb[0].mxu0 %v2106
    %v2992 = vpop.f32.mrb[0].mxu0
    %v2993 = vadd.f32 0.0, %v2992
    %v2994 = vpop.f32.mrb[0].mxu0
    %v2995 = vpop.f32.mrb[0].mxu0
    %v2996 = vadd.f32 0.0, %v2995
    %v2997 = vpop.f32.mrb[0].mxu0
    %2998 = vmatprep.mubr.bf16.mxu0 %v2116
    %2999 = vmatmul.mubr.bf16.gmra.mrb[0].mxu0 %v2115
    %v3000 = vpop.f32.mrb[0].mxu0
    %v3001 = vadd.f32 0.0, %v3000
    %v3002 = vpop.f32.mrb[0].mxu0
    %v3003 = vpop.f32.mrb[0].mxu0
    %v3004 = vadd.f32 0.0, %v3003
    %v3005 = vpop.f32.mrb[0].mxu0
    %3006 = vmatprep.mubr.bf16.mxu0 %v2125
    %3007 = vmatmul.mubr.bf16.gmra.mrb[0].mxu0 %v2124
    %v3008 = vpop.f32.mrb[0].mxu0
    %v3009 = vadd.f32 0.0, %v3008
    %v3010 = vpop.f32.mrb[0].mxu0
    %v3011 = vpop.f32.mrb[0].mxu0
    %v3012 = vadd.f32 0.0, %v3011
    %v3013 = vpop.f32.mrb[0].mxu0
    %3014 = vmatprep.mubr.bf16.mxu0 %v2134
    %3015 = vmatmul.mubr.bf16.gmra.mrb[0].mxu0 %v2133
    %v3016 = vpop.f32.mrb[0].mxu0
    %v3017 = vadd.f32 0.0, %v3016
    %v3018 = vpop.f32.mrb[0].mxu0
    %v3019 = vpop.f32.mrb[0].mxu0
    %v3020 = vadd.f32 0.0, %v3019
    %v3021 = vpop.f32.mrb[0].mxu0
    %3022 = vmatprep.mubr.bf16.mxu0 %v2143
    %3023 = vmatmul.mubr.bf16.gmra.mrb[0].mxu0 %v2142
    %v3024 = vpop.f32.mrb[0].mxu0
    %v3025 = vadd.f32 0.0, %v3024
    %v3026 = vpop.f32.mrb[0].mxu0
    %v3027 = vpop.f32.mrb[0].mxu0
    %v3028 = vadd.f32 0.0, %v3027
    %v3029 = vpop.f32.mrb[0].mxu0
    %3030 = vmatprep.mubr.bf16.mxu0 %v2152
    %3031 = vmatmul.mubr.bf16.gmra.mrb[0].mxu0 %v2151
    %v3032 = vpop.f32.mrb[0].mxu0
    %v3033 = vadd.f32 0.0, %v3032
    %v3034 = vpop.f32.mrb[0].mxu0
    %v3035 = vpop.f32.mrb[0].mxu0
    %v3036 = vadd.f32 0.0, %v3035
    %v3037 = vpop.f32.mrb[0].mxu0
    %3038 = vmatprep.mubr.bf16.mxu0 %v2161
    %3039 = vmatmul.mubr.bf16.gmra.mrb[0].mxu0 %v2160
    %v3040 = vpop.f32.mrb[0].mxu0
    %v3041 = vadd.f32 0.0, %v3040
    %v3042 = vpop.f32.mrb[0].mxu0
    %v3043 = vpop.f32.mrb[0].mxu0
    %v3044 = vadd.f32 0.0, %v3043
    %v3045 = vpop.f32.mrb[0].mxu0
    %3046 = vmatprep.mubr.bf16.mxu0 %v2170
    %3047 = vmatmul.mubr.bf16.gmra.mrb[0].mxu0 %v2169
    %v3048 = vpop.f32.mrb[0].mxu0
    %v3049 = vadd.f32 0.0, %v3048
    %v3050 = vpop.f32.mrb[0].mxu0
    %v3051 = vpop.f32.mrb[0].mxu0
    %v3052 = vadd.f32 0.0, %v3051
    %v3053 = vpop.f32.mrb[0].mxu0
    %3054 = vmatprep.mubr.bf16.mxu0 %v2179
    %3055 = vmatmul.mubr.bf16.gmra.mrb[0].mxu0 %v2178
    %v3056 = vpop.f32.mrb[0].mxu0
    %v3057 = vadd.f32 0.0, %v3056
    %v3058 = vpop.f32.mrb[0].mxu0
    %v3059 = vpop.f32.mrb[0].mxu0
    %v3060 = vadd.f32 0.0, %v3059
    %v3061 = vpop.f32.mrb[0].mxu0
    %3062 = vmatprep.mubr.bf16.mxu0 %v2188
    %3063 = vmatmul.mubr.bf16.gmra.mrb[0].mxu0 %v2187
    %v3064 = vpop.f32.mrb[0].mxu0
    %v3065 = vadd.f32 0.0, %v3064
    %v3066 = vpop.f32.mrb[0].mxu0
    %v3067 = vpop.f32.mrb[0].mxu0
    %v3068 = vadd.f32 0.0, %v3067
    %v3069 = vpop.f32.mrb[0].mxu0
    %3070 = vmatprep.mubr.bf16.mxu0 %v2197
    %3071 = vmatmul.mubr.bf16.gmra.mrb[0].mxu0 %v2196
    %v3072 = vpop.f32.mrb[0].mxu0
    %v3073 = vadd.f32 0.0, %v3072
    %v3074 = vpop.f32.mrb[0].mxu0
    %v3075 = vpop.f32.mrb[0].mxu0
    %v3076 = vadd.f32 0.0, %v3075
    %v3077 = vpop.f32.mrb[0].mxu0
    %3078 = vmatprep.mubr.bf16.mxu0 %v2206
    %3079 = vmatmul.mubr.bf16.gmra.mrb[0].mxu0 %v2205
    %v3080 = vpop.f32.mrb[0].mxu0
    %v3081 = vadd.f32 0.0, %v3080
    %v3082 = vpop.f32.mrb[0].mxu0
    %v3083 = vpop.f32.mrb[0].mxu0
    %v3084 = vadd.f32 0.0, %v3083
    %v3085 = vpop.f32.mrb[0].mxu0
    %3086 = vmatprep.mubr.bf16.mxu0 %v2215
    %3087 = vmatmul.mubr.bf16.gmra.mrb[0].mxu0 %v2214
    %v3088 = vpop.f32.mrb[0].mxu0
    %v3089 = vadd.f32 0.0, %v3088
    %v3090 = vpop.f32.mrb[0].mxu0
    %v3091 = vpop.f32.mrb[0].mxu0
    %v3092 = vadd.f32 0.0, %v3091
    %v3093 = vpop.f32.mrb[0].mxu0
    %3094 = vmatprep.mubr.bf16.mxu0 %v2224
    %3095 = vmatmul.mubr.bf16.gmra.mrb[0].mxu0 %v2223
    %v3096 = vpop.f32.mrb[0].mxu0
    %v3097 = vadd.f32 0.0, %v3096
    %v3098 = vpop.f32.mrb[0].mxu0
    %v3099 = vpop.f32.mrb[0].mxu0
    %v3100 = vadd.f32 0.0, %v3099
    %v3101 = vpop.f32.mrb[0].mxu0
    %3102 = vmatprep.mubr.bf16.mxu0 %v2233
    %3103 = vmatmul.mubr.bf16.gmra.mrb[0].mxu0 %v2232
    %v3104 = vpop.f32.mrb[0].mxu0
    %v3105 = vadd.f32 0.0, %v3104
    %v3106 = vpop.f32.mrb[0].mxu0
    %v3107 = vpop.f32.mrb[0].mxu0
    %v3108 = vadd.f32 0.0, %v3107
    %v3109 = vpop.f32.mrb[0].mxu0
    %3110 = vmatprep.mubr.bf16.mxu0 %v2242
    %3111 = vmatmul.mubr.bf16.gmra.mrb[0].mxu0 %v2241
    %v3112 = vpop.f32.mrb[0].mxu0
    %v3113 = vadd.f32 0.0, %v3112
    %v3114 = vpop.f32.mrb[0].mxu0
    %v3115 = vpop.f32.mrb[0].mxu0
    %v3116 = vadd.f32 0.0, %v3115
    %v3117 = vpop.f32.mrb[0].mxu0
    %3118 = vmatprep.mubr.bf16.mxu0 %v2251
    %3119 = vmatmul.mubr.bf16.gmra.mrb[0].mxu0 %v2250
    %v3120 = vpop.f32.mrb[0].mxu0
    %v3121 = vadd.f32 0.0, %v3120
    %v3122 = vpop.f32.mrb[0].mxu0
    %v3123 = vpop.f32.mrb[0].mxu0
    %v3124 = vadd.f32 0.0, %v3123
    %v3125 = vpop.f32.mrb[0].mxu0
    %3126 = vmatprep.mubr.bf16.mxu0 %v2260
    %3127 = vmatmul.mubr.bf16.gmra.mrb[0].mxu0 %v2259
    %v3128 = vpop.f32.mrb[0].mxu0
    %v3129 = vadd.f32 0.0, %v3128
    %v3130 = vpop.f32.mrb[0].mxu0
    %v3131 = vpop.f32.mrb[0].mxu0
    %v3132 = vadd.f32 0.0, %v3131
    %v3133 = vpop.f32.mrb[0].mxu0
    %3134 = vmatprep.mubr.bf16.mxu0 %v2269
    %3135 = vmatmul.mubr.bf16.gmra.mrb[0].mxu0 %v2268
    %v3136 = vpop.f32.mrb[0].mxu0
    %v3137 = vadd.f32 0.0, %v3136
    %v3138 = vpop.f32.mrb[0].mxu0
    %v3139 = vpop.f32.mrb[0].mxu0
    %v3140 = vadd.f32 0.0, %v3139
    %v3141 = vpop.f32.mrb[0].mxu0
    %3142 = vmatprep.mubr.bf16.mxu0 %v2278
    %3143 = vmatmul.mubr.bf16.gmra.mrb[0].mxu0 %v2277
    %v3144 = vpop.f32.mrb[0].mxu0
    %v3145 = vadd.f32 0.0, %v3144
    %v3146 = vpop.f32.mrb[0].mxu0
    %v3147 = vpop.f32.mrb[0].mxu0
    %v3148 = vadd.f32 0.0, %v3147
    %v3149 = vpop.f32.mrb[0].mxu0
    %3150 = vdwg.mxu0
    %3151 = vmatprep.subr.bf16.mxu0 0
    %3152 = vmatpush1.bf16.msra.mxu0 %v2734
    %3153 = vmatprep.subr.bf16.mxu0 0
    %3154 = vmatpush1.bf16.msra.mxu0 %v2735
    %3155 = vmatprep.subr.bf16.mxu0 0
    %3156 = vmatpush1.bf16.msra.mxu0 %v2736
    %3157 = vmatprep.subr.bf16.mxu0 0
    %3158 = vmatpush1.bf16.msra.mxu0 %v2737
    %3159 = vmatprep.subr.bf16.mxu0 0
    %3160 = vmatpush1.bf16.msra.mxu0 %v2738
    %3161 = vmatprep.subr.bf16.mxu0 0
    %3162 = vmatpush1.bf16.msra.mxu0 %v2739
    %3163 = vmatprep.subr.bf16.mxu0 0
    %3164 = vmatpush1.bf16.msra.mxu0 %v2740
    %3165 = vmatprep.subr.bf16.mxu0 0
    %3166 = vmatpush1.bf16.msra.mxu0 %v2741
    %3167 = vmatprep.subr.bf16.mxu0 0
    %3168 = vmatpush1.bf16.msra.mxu0 %v2742
    %3169 = vmatprep.subr.bf16.mxu0 0
    %3170 = vmatpush1.bf16.msra.mxu0 %v2743
    %3171 = vmatprep.subr.bf16.mxu0 0
    %3172 = vmatpush1.bf16.msra.mxu0 %v2744
    %3173 = vmatprep.subr.bf16.mxu0 0
    %3174 = vmatpush1.bf16.msra.mxu0 %v2745
    %3175 = vmatprep.subr.bf16.mxu0 0
    %3176 = vmatpush1.bf16.msra.mxu0 %v2746
    %3177 = vmatprep.subr.bf16.mxu0 0
    %3178 = vmatpush1.bf16.msra.mxu0 %v2747
    %3179 = vmatprep.subr.bf16.mxu0 0
    %3180 = vmatpush1.bf16.msra.mxu0 %v2748
    %3181 = vmatprep.subr.bf16.mxu0 0
    %3182 = vmatpush1.bf16.msra.mxu0 %v2749
    %3183 = vmatprep.mubr.bf16.mxu0 %v2001
    %3184 = vmatmul.mubr.bf16.gmra.mrb[0].mxu0 %v2000
    %v3185 = vpop.f32.mrb[0].mxu0
    %v3186 = vadd.f32 %v2897, %v3185
    %v3187 = vpop.f32.mrb[0].mxu0
    %v3188 = vpop.f32.mrb[0].mxu0
    %v3189 = vadd.f32 %v2900, %v3188
    %v3190 = vpop.f32.mrb[0].mxu0
    %3191 = vmatprep.mubr.bf16.mxu0 %v2010
    %3192 = vmatmul.mubr.bf16.gmra.mrb[0].mxu0 %v2009
    %v3193 = vpop.f32.mrb[0].mxu0
    %v3194 = vadd.f32 %v2905, %v3193
    %v3195 = vpop.f32.mrb[0].mxu0
    %v3196 = vpop.f32.mrb[0].mxu0
    %v3197 = vadd.f32 %v2908, %v3196
    %v3198 = vpop.f32.mrb[0].mxu0
    %3199 = vmatprep.mubr.bf16.mxu0 %v2019
    %3200 = vmatmul.mubr.bf16.gmra.mrb[0].mxu0 %v2018
    %v3201 = vpop.f32.mrb[0].mxu0
    %v3202 = vadd.f32 %v2913, %v3201
    %v3203 = vpop.f32.mrb[0].mxu0
    %v3204 = vpop.f32.mrb[0].mxu0
    %v3205 = vadd.f32 %v2916, %v3204
    %v3206 = vpop.f32.mrb[0].mxu0
    %3207 = vmatprep.mubr.bf16.mxu0 %v2028
    %3208 = vmatmul.mubr.bf16.gmra.mrb[0].mxu0 %v2027
    %v3209 = vpop.f32.mrb[0].mxu0
    %v3210 = vadd.f32 %v2921, %v3209
    %v3211 = vpop.f32.mrb[0].mxu0
    %v3212 = vpop.f32.mrb[0].mxu0
    %v3213 = vadd.f32 %v2924, %v3212
    %v3214 = vpop.f32.mrb[0].mxu0
    %3215 = vmatprep.mubr.bf16.mxu0 %v2037
    %3216 = vmatmul.mubr.bf16.gmra.mrb[0].mxu0 %v2036
    %v3217 = vpop.f32.mrb[0].mxu0
    %v3218 = vadd.f32 %v2929, %v3217
    %v3219 = vpop.f32.mrb[0].mxu0
    %v3220 = vpop.f32.mrb[0].mxu0
    %v3221 = vadd.f32 %v2932, %v3220
    %v3222 = vpop.f32.mrb[0].mxu0
    %3223 = vmatprep.mubr.bf16.mxu0 %v2046
    %3224 = vmatmul.mubr.bf16.gmra.mrb[0].mxu0 %v2045
    %v3225 = vpop.f32.mrb[0].mxu0
    %v3226 = vadd.f32 %v2937, %v3225
    %v3227 = vpop.f32.mrb[0].mxu0
    %v3228 = vpop.f32.mrb[0].mxu0
    %v3229 = vadd.f32 %v2940, %v3228
    %v3230 = vpop.f32.mrb[0].mxu0
    %3231 = vmatprep.mubr.bf16.mxu0 %v2055
    %3232 = vmatmul.mubr.bf16.gmra.mrb[0].mxu0 %v2054
    %v3233 = vpop.f32.mrb[0].mxu0
    %v3234 = vadd.f32 %v2945, %v3233
    %v3235 = vpop.f32.mrb[0].mxu0
    %v3236 = vpop.f32.mrb[0].mxu0
    %v3237 = vadd.f32 %v2948, %v3236
    %v3238 = vpop.f32.mrb[0].mxu0
    %3239 = vmatprep.mubr.bf16.mxu0 %v2064
    %3240 = vmatmul.mubr.bf16.gmra.mrb[0].mxu0 %v2063
    %v3241 = vpop.f32.mrb[0].mxu0
    %v3242 = vadd.f32 %v2953, %v3241
    %v3243 = vpop.f32.mrb[0].mxu0
    %v3244 = vpop.f32.mrb[0].mxu0
    %v3245 = vadd.f32 %v2956, %v3244
    %v3246 = vpop.f32.mrb[0].mxu0
    %3247 = vmatprep.mubr.bf16.mxu0 %v2073
    %3248 = vmatmul.mubr.bf16.gmra.mrb[0].mxu0 %v2072
    %v3249 = vpop.f32.mrb[0].mxu0
    %v3250 = vadd.f32 %v2961, %v3249
    %v3251 = vpop.f32.mrb[0].mxu0
    %v3252 = vpop.f32.mrb[0].mxu0
    %v3253 = vadd.f32 %v2964, %v3252
    %v3254 = vpop.f32.mrb[0].mxu0
    %3255 = vmatprep.mubr.bf16.mxu0 %v2082
    %3256 = vmatmul.mubr.bf16.gmra.mrb[0].mxu0 %v2081
    %v3257 = vpop.f32.mrb[0].mxu0
    %v3258 = vadd.f32 %v2969, %v3257
    %v3259 = vpop.f32.mrb[0].mxu0
    %v3260 = vpop.f32.mrb[0].mxu0
    %v3261 = vadd.f32 %v2972, %v3260
    %v3262 = vpop.f32.mrb[0].mxu0
    %3263 = vmatprep.mubr.bf16.mxu0 %v2091
    %3264 = vmatmul.mubr.bf16.gmra.mrb[0].mxu0 %v2090
    %v3265 = vpop.f32.mrb[0].mxu0
    %v3266 = vadd.f32 %v2977, %v3265
    %v3267 = vpop.f32.mrb[0].mxu0
    %v3268 = vpop.f32.mrb[0].mxu0
    %v3269 = vadd.f32 %v2980, %v3268
    %v3270 = vpop.f32.mrb[0].mxu0
    %3271 = vmatprep.mubr.bf16.mxu0 %v2100
    %3272 = vmatmul.mubr.bf16.gmra.mrb[0].mxu0 %v2099
    %v3273 = vpop.f32.mrb[0].mxu0
    %v3274 = vadd.f32 %v2985, %v3273
    %v3275 = vpop.f32.mrb[0].mxu0
    %v3276 = vpop.f32.mrb[0].mxu0
    %v3277 = vadd.f32 %v2988, %v3276
    %v3278 = vpop.f32.mrb[0].mxu0
    %3279 = vmatprep.mubr.bf16.mxu0 %v2109
    %3280 = vmatmul.mubr.bf16.gmra.mrb[0].mxu0 %v2108
    %v3281 = vpop.f32.mrb[0].mxu0
    %v3282 = vadd.f32 %v2993, %v3281
    %v3283 = vpop.f32.mrb[0].mxu0
    %v3284 = vpop.f32.mrb[0].mxu0
    %v3285 = vadd.f32 %v2996, %v3284
    %v3286 = vpop.f32.mrb[0].mxu0
    %3287 = vmatprep.mubr.bf16.mxu0 %v2118
    %3288 = vmatmul.mubr.bf16.gmra.mrb[0].mxu0 %v2117
    %v3289 = vpop.f32.mrb[0].mxu0
    %v3290 = vadd.f32 %v3001, %v3289
    %v3291 = vpop.f32.mrb[0].mxu0
    %v3292 = vpop.f32.mrb[0].mxu0
    %v3293 = vadd.f32 %v3004, %v3292
    %v3294 = vpop.f32.mrb[0].mxu0
    %3295 = vmatprep.mubr.bf16.mxu0 %v2127
    %3296 = vmatmul.mubr.bf16.gmra.mrb[0].mxu0 %v2126
    %v3297 = vpop.f32.mrb[0].mxu0
    %v3298 = vadd.f32 %v3009, %v3297
    %v3299 = vpop.f32.mrb[0].mxu0
    %v3300 = vpop.f32.mrb[0].mxu0
    %v3301 = vadd.f32 %v3012, %v3300
    %v3302 = vpop.f32.mrb[0].mxu0
    %3303 = vmatprep.mubr.bf16.mxu0 %v2136
    %3304 = vmatmul.mubr.bf16.gmra.mrb[0].mxu0 %v2135
    %v3305 = vpop.f32.mrb[0].mxu0
    %v3306 = vadd.f32 %v3017, %v3305
    %v3307 = vpop.f32.mrb[0].mxu0
    %v3308 = vpop.f32.mrb[0].mxu0
    %v3309 = vadd.f32 %v3020, %v3308
    %v3310 = vpop.f32.mrb[0].mxu0
    %3311 = vmatprep.mubr.bf16.mxu0 %v2145
    %3312 = vmatmul.mubr.bf16.gmra.mrb[0].mxu0 %v2144
    %v3313 = vpop.f32.mrb[0].mxu0
    %v3314 = vadd.f32 %v3025, %v3313
    %v3315 = vpop.f32.mrb[0].mxu0
    %v3316 = vpop.f32.mrb[0].mxu0
    %v3317 = vadd.f32 %v3028, %v3316
    %v3318 = vpop.f32.mrb[0].mxu0
    %3319 = vmatprep.mubr.bf16.mxu0 %v2154
    %3320 = vmatmul.mubr.bf16.gmra.mrb[0].mxu0 %v2153
    %v3321 = vpop.f32.mrb[0].mxu0
    %v3322 = vadd.f32 %v3033, %v3321
    %v3323 = vpop.f32.mrb[0].mxu0
    %v3324 = vpop.f32.mrb[0].mxu0
    %v3325 = vadd.f32 %v3036, %v3324
    %v3326 = vpop.f32.mrb[0].mxu0
    %3327 = vmatprep.mubr.bf16.mxu0 %v2163
    %3328 = vmatmul.mubr.bf16.gmra.mrb[0].mxu0 %v2162
    %v3329 = vpop.f32.mrb[0].mxu0
    %v3330 = vadd.f32 %v3041, %v3329
    %v3331 = vpop.f32.mrb[0].mxu0
    %v3332 = vpop.f32.mrb[0].mxu0
    %v3333 = vadd.f32 %v3044, %v3332
    %v3334 = vpop.f32.mrb[0].mxu0
    %3335 = vmatprep.mubr.bf16.mxu0 %v2172
    %3336 = vmatmul.mubr.bf16.gmra.mrb[0].mxu0 %v2171
    %v3337 = vpop.f32.mrb[0].mxu0
    %v3338 = vadd.f32 %v3049, %v3337
    %v3339 = vpop.f32.mrb[0].mxu0
    %v3340 = vpop.f32.mrb[0].mxu0
    %v3341 = vadd.f32 %v3052, %v3340
    %v3342 = vpop.f32.mrb[0].mxu0
    %3343 = vmatprep.mubr.bf16.mxu0 %v2181
    %3344 = vmatmul.mubr.bf16.gmra.mrb[0].mxu0 %v2180
    %v3345 = vpop.f32.mrb[0].mxu0
    %v3346 = vadd.f32 %v3057, %v3345
    %v3347 = vpop.f32.mrb[0].mxu0
    %v3348 = vpop.f32.mrb[0].mxu0
    %v3349 = vadd.f32 %v3060, %v3348
    %v3350 = vpop.f32.mrb[0].mxu0
    %3351 = vmatprep.mubr.bf16.mxu0 %v2190
    %3352 = vmatmul.mubr.bf16.gmra.mrb[0].mxu0 %v2189
    %v3353 = vpop.f32.mrb[0].mxu0
    %v3354 = vadd.f32 %v3065, %v3353
    %v3355 = vpop.f32.mrb[0].mxu0
    %v3356 = vpop.f32.mrb[0].mxu0
    %v3357 = vadd.f32 %v3068, %v3356
    %v3358 = vpop.f32.mrb[0].mxu0
    %3359 = vmatprep.mubr.bf16.mxu0 %v2199
    %3360 = vmatmul.mubr.bf16.gmra.mrb[0].mxu0 %v2198
    %v3361 = vpop.f32.mrb[0].mxu0
    %v3362 = vadd.f32 %v3073, %v3361
    %v3363 = vpop.f32.mrb[0].mxu0
    %v3364 = vpop.f32.mrb[0].mxu0
    %v3365 = vadd.f32 %v3076, %v3364
    %v3366 = vpop.f32.mrb[0].mxu0
    %3367 = vmatprep.mubr.bf16.mxu0 %v2208
    %3368 = vmatmul.mubr.bf16.gmra.mrb[0].mxu0 %v2207
    %v3369 = vpop.f32.mrb[0].mxu0
    %v3370 = vadd.f32 %v3081, %v3369
    %v3371 = vpop.f32.mrb[0].mxu0
    %v3372 = vpop.f32.mrb[0].mxu0
    %v3373 = vadd.f32 %v3084, %v3372
    %v3374 = vpop.f32.mrb[0].mxu0
    %3375 = vmatprep.mubr.bf16.mxu0 %v2217
    %3376 = vmatmul.mubr.bf16.gmra.mrb[0].mxu0 %v2216
    %v3377 = vpop.f32.mrb[0].mxu0
    %v3378 = vadd.f32 %v3089, %v3377
    %v3379 = vpop.f32.mrb[0].mxu0
    %v3380 = vpop.f32.mrb[0].mxu0
    %v3381 = vadd.f32 %v3092, %v3380
    %v3382 = vpop.f32.mrb[0].mxu0
    %3383 = vmatprep.mubr.bf16.mxu0 %v2226
    %3384 = vmatmul.mubr.bf16.gmra.mrb[0].mxu0 %v2225
    %v3385 = vpop.f32.mrb[0].mxu0
    %v3386 = vadd.f32 %v3097, %v3385
    %v3387 = vpop.f32.mrb[0].mxu0
    %v3388 = vpop.f32.mrb[0].mxu0
    %v3389 = vadd.f32 %v3100, %v3388
    %v3390 = vpop.f32.mrb[0].mxu0
    %3391 = vmatprep.mubr.bf16.mxu0 %v2235
    %3392 = vmatmul.mubr.bf16.gmra.mrb[0].mxu0 %v2234
    %v3393 = vpop.f32.mrb[0].mxu0
    %v3394 = vadd.f32 %v3105, %v3393
    %v3395 = vpop.f32.mrb[0].mxu0
    %v3396 = vpop.f32.mrb[0].mxu0
    %v3397 = vadd.f32 %v3108, %v3396
    %v3398 = vpop.f32.mrb[0].mxu0
    %3399 = vmatprep.mubr.bf16.mxu0 %v2244
    %3400 = vmatmul.mubr.bf16.gmra.mrb[0].mxu0 %v2243
    %v3401 = vpop.f32.mrb[0].mxu0
    %v3402 = vadd.f32 %v3113, %v3401
    %v3403 = vpop.f32.mrb[0].mxu0
    %v3404 = vpop.f32.mrb[0].mxu0
    %v3405 = vadd.f32 %v3116, %v3404
    %v3406 = vpop.f32.mrb[0].mxu0
    %3407 = vmatprep.mubr.bf16.mxu0 %v2253
    %3408 = vmatmul.mubr.bf16.gmra.mrb[0].mxu0 %v2252
    %v3409 = vpop.f32.mrb[0].mxu0
    %v3410 = vadd.f32 %v3121, %v3409
    %v3411 = vpop.f32.mrb[0].mxu0
    %v3412 = vpop.f32.mrb[0].mxu0
    %v3413 = vadd.f32 %v3124, %v3412
    %v3414 = vpop.f32.mrb[0].mxu0
    %3415 = vmatprep.mubr.bf16.mxu0 %v2262
    %3416 = vmatmul.mubr.bf16.gmra.mrb[0].mxu0 %v2261
    %v3417 = vpop.f32.mrb[0].mxu0
    %v3418 = vadd.f32 %v3129, %v3417
    %v3419 = vpop.f32.mrb[0].mxu0
    %v3420 = vpop.f32.mrb[0].mxu0
    %v3421 = vadd.f32 %v3132, %v3420
    %v3422 = vpop.f32.mrb[0].mxu0
    %3423 = vmatprep.mubr.bf16.mxu0 %v2271
    %3424 = vmatmul.mubr.bf16.gmra.mrb[0].mxu0 %v2270
    %v3425 = vpop.f32.mrb[0].mxu0
    %v3426 = vadd.f32 %v3137, %v3425
    %v3427 = vpop.f32.mrb[0].mxu0
    %v3428 = vpop.f32.mrb[0].mxu0
    %v3429 = vadd.f32 %v3140, %v3428
    %v3430 = vpop.f32.mrb[0].mxu0
    %3431 = vmatprep.mubr.bf16.mxu0 %v2280
    %3432 = vmatmul.mubr.bf16.gmra.mrb[0].mxu0 %v2279
    %v3433 = vpop.f32.mrb[0].mxu0
    %v3434 = vadd.f32 %v3145, %v3433
    %v3435 = vpop.f32.mrb[0].mxu0
    %v3436 = vpop.f32.mrb[0].mxu0
    %v3437 = vadd.f32 %v3148, %v3436
    %v3438 = vpop.f32.mrb[0].mxu0
    %3439 = vdwg.mxu0
    %3440 = vmatprep.subr.bf16.mxu0 0
    %3441 = vmatpush1.bf16.msra.mxu0 %v2750
    %3442 = vmatprep.subr.bf16.mxu0 0
    %3443 = vmatpush1.bf16.msra.mxu0 %v2751
    %3444 = vmatprep.subr.bf16.mxu0 0
    %3445 = vmatpush1.bf16.msra.mxu0 %v2752
    %3446 = vmatprep.subr.bf16.mxu0 0
    %3447 = vmatpush1.bf16.msra.mxu0 %v2753
    %3448 = vmatprep.subr.bf16.mxu0 0
    %3449 = vmatpush1.bf16.msra.mxu0 %v2754
    %3450 = vmatprep.subr.bf16.mxu0 0
    %3451 = vmatpush1.bf16.msra.mxu0 %v2755
    %3452 = vmatprep.subr.bf16.mxu0 0
    %3453 = vmatpush1.bf16.msra.mxu0 %v2756
    %3454 = vmatprep.subr.bf16.mxu0 0
    %3455 = vmatpush1.bf16.msra.mxu0 %v2757
    %3456 = vmatprep.subr.bf16.mxu0 0
    %3457 = vmatpush1.bf16.msra.mxu0 %v2758
    %3458 = vmatprep.subr.bf16.mxu0 0
    %3459 = vmatpush1.bf16.msra.mxu0 %v2759
    %3460 = vmatprep.subr.bf16.mxu0 0
    %3461 = vmatpush1.bf16.msra.mxu0 %v2760
    %3462 = vmatprep.subr.bf16.mxu0 0
    %3463 = vmatpush1.bf16.msra.mxu0 %v2761
    %3464 = vmatprep.subr.bf16.mxu0 0
    %3465 = vmatpush1.bf16.msra.mxu0 %v2762
    %3466 = vmatprep.subr.bf16.mxu0 0
    %3467 = vmatpush1.bf16.msra.mxu0 %v2763
    %3468 = vmatprep.subr.bf16.mxu0 0
    %3469 = vmatpush1.bf16.msra.mxu0 %v2764
    %3470 = vmatprep.subr.bf16.mxu0 0
    %3471 = vmatpush1.bf16.msra.mxu0 %v2765
    %3472 = vmatprep.mubr.bf16.mxu0 %v2003
    %3473 = vmatmul.mubr.bf16.gmra.mrb[0].mxu0 %v2002
    %v3474 = vpop.f32.mrb[0].mxu0
    %v3475 = vadd.f32 %v3186, %v3474
    %v3476 = vpop.f32.mrb[0].mxu0
    %v3477 = vpop.f32.mrb[0].mxu0
    %v3478 = vadd.f32 %v3189, %v3477
    %v3479 = vpop.f32.mrb[0].mxu0
    %3480 = vmatprep.mubr.bf16.mxu0 %v2012
    %3481 = vmatmul.mubr.bf16.gmra.mrb[0].mxu0 %v2011
    %v3482 = vpop.f32.mrb[0].mxu0
    %v3483 = vadd.f32 %v3194, %v3482
    %v3484 = vpop.f32.mrb[0].mxu0
    %v3485 = vpop.f32.mrb[0].mxu0
    %v3486 = vadd.f32 %v3197, %v3485
    %v3487 = vpop.f32.mrb[0].mxu0
    %3488 = vmatprep.mubr.bf16.mxu0 %v2021
    %3489 = vmatmul.mubr.bf16.gmra.mrb[0].mxu0 %v2020
    %v3490 = vpop.f32.mrb[0].mxu0
    %v3491 = vadd.f32 %v3202, %v3490
    %v3492 = vpop.f32.mrb[0].mxu0
    %v3493 = vpop.f32.mrb[0].mxu0
    %v3494 = vadd.f32 %v3205, %v3493
    %v3495 = vpop.f32.mrb[0].mxu0
    %3496 = vmatprep.mubr.bf16.mxu0 %v2030
    %3497 = vmatmul.mubr.bf16.gmra.mrb[0].mxu0 %v2029
    %v3498 = vpop.f32.mrb[0].mxu0
    %v3499 = vadd.f32 %v3210, %v3498
    %v3500 = vpop.f32.mrb[0].mxu0
    %v3501 = vpop.f32.mrb[0].mxu0
    %v3502 = vadd.f32 %v3213, %v3501
    %v3503 = vpop.f32.mrb[0].mxu0
    %3504 = vmatprep.mubr.bf16.mxu0 %v2039
    %3505 = vmatmul.mubr.bf16.gmra.mrb[0].mxu0 %v2038
    %v3506 = vpop.f32.mrb[0].mxu0
    %v3507 = vadd.f32 %v3218, %v3506
    %v3508 = vpop.f32.mrb[0].mxu0
    %v3509 = vpop.f32.mrb[0].mxu0
    %v3510 = vadd.f32 %v3221, %v3509
    %v3511 = vpop.f32.mrb[0].mxu0
    %3512 = vmatprep.mubr.bf16.mxu0 %v2048
    %3513 = vmatmul.mubr.bf16.gmra.mrb[0].mxu0 %v2047
    %v3514 = vpop.f32.mrb[0].mxu0
    %v3515 = vadd.f32 %v3226, %v3514
    %v3516 = vpop.f32.mrb[0].mxu0
    %v3517 = vpop.f32.mrb[0].mxu0
    %v3518 = vadd.f32 %v3229, %v3517
    %v3519 = vpop.f32.mrb[0].mxu0
    %3520 = vmatprep.mubr.bf16.mxu0 %v2057
    %3521 = vmatmul.mubr.bf16.gmra.mrb[0].mxu0 %v2056
    %v3522 = vpop.f32.mrb[0].mxu0
    %v3523 = vadd.f32 %v3234, %v3522
    %v3524 = vpop.f32.mrb[0].mxu0
    %v3525 = vpop.f32.mrb[0].mxu0
    %v3526 = vadd.f32 %v3237, %v3525
    %v3527 = vpop.f32.mrb[0].mxu0
    %3528 = vmatprep.mubr.bf16.mxu0 %v2066
    %3529 = vmatmul.mubr.bf16.gmra.mrb[0].mxu0 %v2065
    %v3530 = vpop.f32.mrb[0].mxu0
    %v3531 = vadd.f32 %v3242, %v3530
    %v3532 = vpop.f32.mrb[0].mxu0
    %v3533 = vpop.f32.mrb[0].mxu0
    %v3534 = vadd.f32 %v3245, %v3533
    %v3535 = vpop.f32.mrb[0].mxu0
    %3536 = vmatprep.mubr.bf16.mxu0 %v2075
    %3537 = vmatmul.mubr.bf16.gmra.mrb[0].mxu0 %v2074
    %v3538 = vpop.f32.mrb[0].mxu0
    %v3539 = vadd.f32 %v3250, %v3538
    %v3540 = vpop.f32.mrb[0].mxu0
    %v3541 = vpop.f32.mrb[0].mxu0
    %v3542 = vadd.f32 %v3253, %v3541
    %v3543 = vpop.f32.mrb[0].mxu0
    %3544 = vmatprep.mubr.bf16.mxu0 %v2084
    %3545 = vmatmul.mubr.bf16.gmra.mrb[0].mxu0 %v2083
    %v3546 = vpop.f32.mrb[0].mxu0
    %v3547 = vadd.f32 %v3258, %v3546
    %v3548 = vpop.f32.mrb[0].mxu0
    %v3549 = vpop.f32.mrb[0].mxu0
    %v3550 = vadd.f32 %v3261, %v3549
    %v3551 = vpop.f32.mrb[0].mxu0
    %3552 = vmatprep.mubr.bf16.mxu0 %v2093
    %3553 = vmatmul.mubr.bf16.gmra.mrb[0].mxu0 %v2092
    %v3554 = vpop.f32.mrb[0].mxu0
    %v3555 = vadd.f32 %v3266, %v3554
    %v3556 = vpop.f32.mrb[0].mxu0
    %v3557 = vpop.f32.mrb[0].mxu0
    %v3558 = vadd.f32 %v3269, %v3557
    %v3559 = vpop.f32.mrb[0].mxu0
    %3560 = vmatprep.mubr.bf16.mxu0 %v2102
    %3561 = vmatmul.mubr.bf16.gmra.mrb[0].mxu0 %v2101
    %v3562 = vpop.f32.mrb[0].mxu0
    %v3563 = vadd.f32 %v3274, %v3562
    %v3564 = vpop.f32.mrb[0].mxu0
    %v3565 = vpop.f32.mrb[0].mxu0
    %v3566 = vadd.f32 %v3277, %v3565
    %v3567 = vpop.f32.mrb[0].mxu0
    %3568 = vmatprep.mubr.bf16.mxu0 %v2111
    %3569 = vmatmul.mubr.bf16.gmra.mrb[0].mxu0 %v2110
    %v3570 = vpop.f32.mrb[0].mxu0
    %v3571 = vadd.f32 %v3282, %v3570
    %v3572 = vpop.f32.mrb[0].mxu0
    %v3573 = vpop.f32.mrb[0].mxu0
    %v3574 = vadd.f32 %v3285, %v3573
    %v3575 = vpop.f32.mrb[0].mxu0
    %3576 = vmatprep.mubr.bf16.mxu0 %v2120
    %3577 = vmatmul.mubr.bf16.gmra.mrb[0].mxu0 %v2119
    %v3578 = vpop.f32.mrb[0].mxu0
    %v3579 = vadd.f32 %v3290, %v3578
    %v3580 = vpop.f32.mrb[0].mxu0
    %v3581 = vpop.f32.mrb[0].mxu0
    %v3582 = vadd.f32 %v3293, %v3581
    %v3583 = vpop.f32.mrb[0].mxu0
    %3584 = vmatprep.mubr.bf16.mxu0 %v2129
    %3585 = vmatmul.mubr.bf16.gmra.mrb[0].mxu0 %v2128
    %v3586 = vpop.f32.mrb[0].mxu0
    %v3587 = vadd.f32 %v3298, %v3586
    %v3588 = vpop.f32.mrb[0].mxu0
    %v3589 = vpop.f32.mrb[0].mxu0
    %v3590 = vadd.f32 %v3301, %v3589
    %v3591 = vpop.f32.mrb[0].mxu0
    %3592 = vmatprep.mubr.bf16.mxu0 %v2138
    %3593 = vmatmul.mubr.bf16.gmra.mrb[0].mxu0 %v2137
    %v3594 = vpop.f32.mrb[0].mxu0
    %v3595 = vadd.f32 %v3306, %v3594
    %v3596 = vpop.f32.mrb[0].mxu0
    %v3597 = vpop.f32.mrb[0].mxu0
    %v3598 = vadd.f32 %v3309, %v3597
    %v3599 = vpop.f32.mrb[0].mxu0
    %3600 = vmatprep.mubr.bf16.mxu0 %v2147
    %3601 = vmatmul.mubr.bf16.gmra.mrb[0].mxu0 %v2146
    %v3602 = vpop.f32.mrb[0].mxu0
    %v3603 = vadd.f32 %v3314, %v3602
    %v3604 = vpop.f32.mrb[0].mxu0
    %v3605 = vpop.f32.mrb[0].mxu0
    %v3606 = vadd.f32 %v3317, %v3605
    %v3607 = vpop.f32.mrb[0].mxu0
    %3608 = vmatprep.mubr.bf16.mxu0 %v2156
    %3609 = vmatmul.mubr.bf16.gmra.mrb[0].mxu0 %v2155
    %v3610 = vpop.f32.mrb[0].mxu0
    %v3611 = vadd.f32 %v3322, %v3610
    %v3612 = vpop.f32.mrb[0].mxu0
    %v3613 = vpop.f32.mrb[0].mxu0
    %v3614 = vadd.f32 %v3325, %v3613
    %v3615 = vpop.f32.mrb[0].mxu0
    %3616 = vmatprep.mubr.bf16.mxu0 %v2165
    %3617 = vmatmul.mubr.bf16.gmra.mrb[0].mxu0 %v2164
    %v3618 = vpop.f32.mrb[0].mxu0
    %v3619 = vadd.f32 %v3330, %v3618
    %v3620 = vpop.f32.mrb[0].mxu0
    %v3621 = vpop.f32.mrb[0].mxu0
    %v3622 = vadd.f32 %v3333, %v3621
    %v3623 = vpop.f32.mrb[0].mxu0
    %3624 = vmatprep.mubr.bf16.mxu0 %v2174
    %3625 = vmatmul.mubr.bf16.gmra.mrb[0].mxu0 %v2173
    %v3626 = vpop.f32.mrb[0].mxu0
    %v3627 = vadd.f32 %v3338, %v3626
    %v3628 = vpop.f32.mrb[0].mxu0
    %v3629 = vpop.f32.mrb[0].mxu0
    %v3630 = vadd.f32 %v3341, %v3629
    %v3631 = vpop.f32.mrb[0].mxu0
    %3632 = vmatprep.mubr.bf16.mxu0 %v2183
    %3633 = vmatmul.mubr.bf16.gmra.mrb[0].mxu0 %v2182
    %v3634 = vpop.f32.mrb[0].mxu0
    %v3635 = vadd.f32 %v3346, %v3634
    %v3636 = vpop.f32.mrb[0].mxu0
    %v3637 = vpop.f32.mrb[0].mxu0
    %v3638 = vadd.f32 %v3349, %v3637
    %v3639 = vpop.f32.mrb[0].mxu0
    %3640 = vmatprep.mubr.bf16.mxu0 %v2192
    %3641 = vmatmul.mubr.bf16.gmra.mrb[0].mxu0 %v2191
    %v3642 = vpop.f32.mrb[0].mxu0
    %v3643 = vadd.f32 %v3354, %v3642
    %v3644 = vpop.f32.mrb[0].mxu0
    %v3645 = vpop.f32.mrb[0].mxu0
    %v3646 = vadd.f32 %v3357, %v3645
    %v3647 = vpop.f32.mrb[0].mxu0
    %3648 = vmatprep.mubr.bf16.mxu0 %v2201
    %3649 = vmatmul.mubr.bf16.gmra.mrb[0].mxu0 %v2200
    %v3650 = vpop.f32.mrb[0].mxu0
    %v3651 = vadd.f32 %v3362, %v3650
    %v3652 = vpop.f32.mrb[0].mxu0
    %v3653 = vpop.f32.mrb[0].mxu0
    %v3654 = vadd.f32 %v3365, %v3653
    %v3655 = vpop.f32.mrb[0].mxu0
    %3656 = vmatprep.mubr.bf16.mxu0 %v2210
    %3657 = vmatmul.mubr.bf16.gmra.mrb[0].mxu0 %v2209
    %v3658 = vpop.f32.mrb[0].mxu0
    %v3659 = vadd.f32 %v3370, %v3658
    %v3660 = vpop.f32.mrb[0].mxu0
    %v3661 = vpop.f32.mrb[0].mxu0
    %v3662 = vadd.f32 %v3373, %v3661
    %v3663 = vpop.f32.mrb[0].mxu0
    %3664 = vmatprep.mubr.bf16.mxu0 %v2219
    %3665 = vmatmul.mubr.bf16.gmra.mrb[0].mxu0 %v2218
    %v3666 = vpop.f32.mrb[0].mxu0
    %v3667 = vadd.f32 %v3378, %v3666
    %v3668 = vpop.f32.mrb[0].mxu0
    %v3669 = vpop.f32.mrb[0].mxu0
    %v3670 = vadd.f32 %v3381, %v3669
    %v3671 = vpop.f32.mrb[0].mxu0
    %3672 = vmatprep.mubr.bf16.mxu0 %v2228
    %3673 = vmatmul.mubr.bf16.gmra.mrb[0].mxu0 %v2227
    %v3674 = vpop.f32.mrb[0].mxu0
    %v3675 = vadd.f32 %v3386, %v3674
    %v3676 = vpop.f32.mrb[0].mxu0
    %v3677 = vpop.f32.mrb[0].mxu0
    %v3678 = vadd.f32 %v3389, %v3677
    %v3679 = vpop.f32.mrb[0].mxu0
    %3680 = vmatprep.mubr.bf16.mxu0 %v2237
    %3681 = vmatmul.mubr.bf16.gmra.mrb[0].mxu0 %v2236
    %v3682 = vpop.f32.mrb[0].mxu0
    %v3683 = vadd.f32 %v3394, %v3682
    %v3684 = vpop.f32.mrb[0].mxu0
    %v3685 = vpop.f32.mrb[0].mxu0
    %v3686 = vadd.f32 %v3397, %v3685
    %v3687 = vpop.f32.mrb[0].mxu0
    %3688 = vmatprep.mubr.bf16.mxu0 %v2246
    %3689 = vmatmul.mubr.bf16.gmra.mrb[0].mxu0 %v2245
    %v3690 = vpop.f32.mrb[0].mxu0
    %v3691 = vadd.f32 %v3402, %v3690
    %v3692 = vpop.f32.mrb[0].mxu0
    %v3693 = vpop.f32.mrb[0].mxu0
    %v3694 = vadd.f32 %v3405, %v3693
    %v3695 = vpop.f32.mrb[0].mxu0
    %3696 = vmatprep.mubr.bf16.mxu0 %v2255
    %3697 = vmatmul.mubr.bf16.gmra.mrb[0].mxu0 %v2254
    %v3698 = vpop.f32.mrb[0].mxu0
    %v3699 = vadd.f32 %v3410, %v3698
    %v3700 = vpop.f32.mrb[0].mxu0
    %v3701 = vpop.f32.mrb[0].mxu0
    %v3702 = vadd.f32 %v3413, %v3701
    %v3703 = vpop.f32.mrb[0].mxu0
    %3704 = vmatprep.mubr.bf16.mxu0 %v2264
    %3705 = vmatmul.mubr.bf16.gmra.mrb[0].mxu0 %v2263
    %v3706 = vpop.f32.mrb[0].mxu0
    %v3707 = vadd.f32 %v3418, %v3706
    %v3708 = vpop.f32.mrb[0].mxu0
    %v3709 = vpop.f32.mrb[0].mxu0
    %v3710 = vadd.f32 %v3421, %v3709
    %v3711 = vpop.f32.mrb[0].mxu0
    %3712 = vmatprep.mubr.bf16.mxu0 %v2273
    %3713 = vmatmul.mubr.bf16.gmra.mrb[0].mxu0 %v2272
    %v3714 = vpop.f32.mrb[0].mxu0
    %v3715 = vadd.f32 %v3426, %v3714
    %v3716 = vpop.f32.mrb[0].mxu0
    %v3717 = vpop.f32.mrb[0].mxu0
    %v3718 = vadd.f32 %v3429, %v3717
    %v3719 = vpop.f32.mrb[0].mxu0
    %3720 = vmatprep.mubr.bf16.mxu0 %v2282
    %3721 = vmatmul.mubr.bf16.gmra.mrb[0].mxu0 %v2281
    %v3722 = vpop.f32.mrb[0].mxu0
    %v3723 = vadd.f32 %v3434, %v3722
    %v3724 = vpop.f32.mrb[0].mxu0
    %v3725 = vpop.f32.mrb[0].mxu0
    %v3726 = vadd.f32 %v3437, %v3725
    %v3727 = vpop.f32.mrb[0].mxu0
    %3728 = vdwg.mxu0
    %3729 = vmatprep.subr.bf16.mxu0 0
    %3730 = vmatpush1.bf16.msra.mxu0 %v2766
    %3731 = vmatprep.subr.bf16.mxu0 0
    %3732 = vmatpush1.bf16.msra.mxu0 %v2767
    %3733 = vmatprep.subr.bf16.mxu0 0
    %3734 = vmatpush1.bf16.msra.mxu0 %v2768
    %3735 = vmatprep.subr.bf16.mxu0 0
    %3736 = vmatpush1.bf16.msra.mxu0 %v2769
    %3737 = vmatprep.subr.bf16.mxu0 0
    %3738 = vmatpush1.bf16.msra.mxu0 %v2770
    %3739 = vmatprep.subr.bf16.mxu0 0
    %3740 = vmatpush1.bf16.msra.mxu0 %v2771
    %3741 = vmatprep.subr.bf16.mxu0 0
    %3742 = vmatpush1.bf16.msra.mxu0 %v2772
    %3743 = vmatprep.subr.bf16.mxu0 0
    %3744 = vmatpush1.bf16.msra.mxu0 %v2773
    %3745 = vmatprep.subr.bf16.mxu0 0
    %3746 = vmatpush1.bf16.msra.mxu0 %v2774
    %3747 = vmatprep.subr.bf16.mxu0 0
    %3748 = vmatpush1.bf16.msra.mxu0 %v2775
    %3749 = vmatprep.subr.bf16.mxu0 0
    %3750 = vmatpush1.bf16.msra.mxu0 %v2776
    %3751 = vmatprep.subr.bf16.mxu0 0
    %3752 = vmatpush1.bf16.msra.mxu0 %v2777
    %3753 = vmatprep.subr.bf16.mxu0 0
    %3754 = vmatpush1.bf16.msra.mxu0 %v2778
    %3755 = vmatprep.subr.bf16.mxu0 0
    %3756 = vmatpush1.bf16.msra.mxu0 %v2779
    %3757 = vmatprep.subr.bf16.mxu0 0
    %3758 = vmatpush1.bf16.msra.mxu0 %v2780
    %3759 = vmatprep.subr.bf16.mxu0 0
    %3760 = vmatpush1.bf16.msra.mxu0 %v2781
    %3761 = vmatprep.mubr.bf16.mxu0 %v2005
    %3762 = vmatmul.mubr.bf16.gmra.mrb[0].mxu0 %v2004
    %v3763 = vpop.f32.mrb[0].mxu0
    %v3764 = vadd.f32 %v3475, %v3763
    %v3765 = vpop.f32.mrb[0].mxu0
    %v3766 = vpop.f32.mrb[0].mxu0
    %v3767 = vadd.f32 %v3478, %v3766
    %v3768 = vpop.f32.mrb[0].mxu0
    %3769 = vmatprep.mubr.bf16.mxu0 %v2014
    %3770 = vmatmul.mubr.bf16.gmra.mrb[0].mxu0 %v2013
    %v3771 = vpop.f32.mrb[0].mxu0
    %v3772 = vadd.f32 %v3483, %v3771
    %v3773 = vpop.f32.mrb[0].mxu0
    %v3774 = vpop.f32.mrb[0].mxu0
    %v3775 = vadd.f32 %v3486, %v3774
    %v3776 = vpop.f32.mrb[0].mxu0
    %3777 = vmatprep.mubr.bf16.mxu0 %v2023
    %3778 = vmatmul.mubr.bf16.gmra.mrb[0].mxu0 %v2022
    %v3779 = vpop.f32.mrb[0].mxu0
    %v3780 = vadd.f32 %v3491, %v3779
    %v3781 = vpop.f32.mrb[0].mxu0
    %v3782 = vpop.f32.mrb[0].mxu0
    %v3783 = vadd.f32 %v3494, %v3782
    %v3784 = vpop.f32.mrb[0].mxu0
    %3785 = vmatprep.mubr.bf16.mxu0 %v2032
    %3786 = vmatmul.mubr.bf16.gmra.mrb[0].mxu0 %v2031
    %v3787 = vpop.f32.mrb[0].mxu0
    %v3788 = vadd.f32 %v3499, %v3787
    %v3789 = vpop.f32.mrb[0].mxu0
    %v3790 = vpop.f32.mrb[0].mxu0
    %v3791 = vadd.f32 %v3502, %v3790
    %v3792 = vpop.f32.mrb[0].mxu0
    %3793 = vmatprep.mubr.bf16.mxu0 %v2041
    %3794 = vmatmul.mubr.bf16.gmra.mrb[0].mxu0 %v2040
    %v3795 = vpop.f32.mrb[0].mxu0
    %v3796 = vadd.f32 %v3507, %v3795
    %v3797 = vpop.f32.mrb[0].mxu0
    %v3798 = vpop.f32.mrb[0].mxu0
    %v3799 = vadd.f32 %v3510, %v3798
    %v3800 = vpop.f32.mrb[0].mxu0
    %3801 = vmatprep.mubr.bf16.mxu0 %v2050
    %3802 = vmatmul.mubr.bf16.gmra.mrb[0].mxu0 %v2049
    %v3803 = vpop.f32.mrb[0].mxu0
    %v3804 = vadd.f32 %v3515, %v3803
    %v3805 = vpop.f32.mrb[0].mxu0
    %v3806 = vpop.f32.mrb[0].mxu0
    %v3807 = vadd.f32 %v3518, %v3806
    %v3808 = vpop.f32.mrb[0].mxu0
    %3809 = vmatprep.mubr.bf16.mxu0 %v2059
    %3810 = vmatmul.mubr.bf16.gmra.mrb[0].mxu0 %v2058
    %v3811 = vpop.f32.mrb[0].mxu0
    %v3812 = vadd.f32 %v3523, %v3811
    %v3813 = vpop.f32.mrb[0].mxu0
    %v3814 = vpop.f32.mrb[0].mxu0
    %v3815 = vadd.f32 %v3526, %v3814
    %v3816 = vpop.f32.mrb[0].mxu0
    %3817 = vmatprep.mubr.bf16.mxu0 %v2068
    %3818 = vmatmul.mubr.bf16.gmra.mrb[0].mxu0 %v2067
    %v3819 = vpop.f32.mrb[0].mxu0
    %v3820 = vadd.f32 %v3531, %v3819
    %v3821 = vpop.f32.mrb[0].mxu0
    %v3822 = vpop.f32.mrb[0].mxu0
    %v3823 = vadd.f32 %v3534, %v3822
    %v3824 = vpop.f32.mrb[0].mxu0
    %3825 = vmatprep.mubr.bf16.mxu0 %v2077
    %3826 = vmatmul.mubr.bf16.gmra.mrb[0].mxu0 %v2076
    %v3827 = vpop.f32.mrb[0].mxu0
    %v3828 = vadd.f32 %v3539, %v3827
    %v3829 = vpop.f32.mrb[0].mxu0
    %v3830 = vpop.f32.mrb[0].mxu0
    %v3831 = vadd.f32 %v3542, %v3830
    %v3832 = vpop.f32.mrb[0].mxu0
    %3833 = vmatprep.mubr.bf16.mxu0 %v2086
    %3834 = vmatmul.mubr.bf16.gmra.mrb[0].mxu0 %v2085
    %v3835 = vpop.f32.mrb[0].mxu0
    %v3836 = vadd.f32 %v3547, %v3835
    %v3837 = vpop.f32.mrb[0].mxu0
    %v3838 = vpop.f32.mrb[0].mxu0
    %v3839 = vadd.f32 %v3550, %v3838
    %v3840 = vpop.f32.mrb[0].mxu0
    %3841 = vmatprep.mubr.bf16.mxu0 %v2095
    %3842 = vmatmul.mubr.bf16.gmra.mrb[0].mxu0 %v2094
    %v3843 = vpop.f32.mrb[0].mxu0
    %v3844 = vadd.f32 %v3555, %v3843
    %v3845 = vpop.f32.mrb[0].mxu0
    %v3846 = vpop.f32.mrb[0].mxu0
    %v3847 = vadd.f32 %v3558, %v3846
    %v3848 = vpop.f32.mrb[0].mxu0
    %3849 = vmatprep.mubr.bf16.mxu0 %v2104
    %3850 = vmatmul.mubr.bf16.gmra.mrb[0].mxu0 %v2103
    %v3851 = vpop.f32.mrb[0].mxu0
    %v3852 = vadd.f32 %v3563, %v3851
    %v3853 = vpop.f32.mrb[0].mxu0
    %v3854 = vpop.f32.mrb[0].mxu0
    %v3855 = vadd.f32 %v3566, %v3854
    %v3856 = vpop.f32.mrb[0].mxu0
    %3857 = vmatprep.mubr.bf16.mxu0 %v2113
    %3858 = vmatmul.mubr.bf16.gmra.mrb[0].mxu0 %v2112
    %v3859 = vpop.f32.mrb[0].mxu0
    %v3860 = vadd.f32 %v3571, %v3859
    %v3861 = vpop.f32.mrb[0].mxu0
    %v3862 = vpop.f32.mrb[0].mxu0
    %v3863 = vadd.f32 %v3574, %v3862
    %v3864 = vpop.f32.mrb[0].mxu0
    %3865 = vmatprep.mubr.bf16.mxu0 %v2122
    %3866 = vmatmul.mubr.bf16.gmra.mrb[0].mxu0 %v2121
    %v3867 = vpop.f32.mrb[0].mxu0
    %v3868 = vadd.f32 %v3579, %v3867
    %v3869 = vpop.f32.mrb[0].mxu0
    %v3870 = vpop.f32.mrb[0].mxu0
    %v3871 = vadd.f32 %v3582, %v3870
    %v3872 = vpop.f32.mrb[0].mxu0
    %3873 = vmatprep.mubr.bf16.mxu0 %v2131
    %3874 = vmatmul.mubr.bf16.gmra.mrb[0].mxu0 %v2130
    %v3875 = vpop.f32.mrb[0].mxu0
    %v3876 = vadd.f32 %v3587, %v3875
    %v3877 = vpop.f32.mrb[0].mxu0
    %v3878 = vpop.f32.mrb[0].mxu0
    %v3879 = vadd.f32 %v3590, %v3878
    %v3880 = vpop.f32.mrb[0].mxu0
    %3881 = vmatprep.mubr.bf16.mxu0 %v2140
    %3882 = vmatmul.mubr.bf16.gmra.mrb[0].mxu0 %v2139
    %v3883 = vpop.f32.mrb[0].mxu0
    %v3884 = vadd.f32 %v3595, %v3883
    %v3885 = vpop.f32.mrb[0].mxu0
    %v3886 = vpop.f32.mrb[0].mxu0
    %v3887 = vadd.f32 %v3598, %v3886
    %v3888 = vpop.f32.mrb[0].mxu0
    %3889 = vmatprep.mubr.bf16.mxu0 %v2149
    %3890 = vmatmul.mubr.bf16.gmra.mrb[0].mxu0 %v2148
    %v3891 = vpop.f32.mrb[0].mxu0
    %v3892 = vadd.f32 %v3603, %v3891
    %v3893 = vpop.f32.mrb[0].mxu0
    %v3894 = vpop.f32.mrb[0].mxu0
    %v3895 = vadd.f32 %v3606, %v3894
    %v3896 = vpop.f32.mrb[0].mxu0
    %3897 = vmatprep.mubr.bf16.mxu0 %v2158
    %3898 = vmatmul.mubr.bf16.gmra.mrb[0].mxu0 %v2157
    %v3899 = vpop.f32.mrb[0].mxu0
    %v3900 = vadd.f32 %v3611, %v3899
    %v3901 = vpop.f32.mrb[0].mxu0
    %v3902 = vpop.f32.mrb[0].mxu0
    %v3903 = vadd.f32 %v3614, %v3902
    %v3904 = vpop.f32.mrb[0].mxu0
    %3905 = vmatprep.mubr.bf16.mxu0 %v2167
    %3906 = vmatmul.mubr.bf16.gmra.mrb[0].mxu0 %v2166
    %v3907 = vpop.f32.mrb[0].mxu0
    %v3908 = vadd.f32 %v3619, %v3907
    %v3909 = vpop.f32.mrb[0].mxu0
    %v3910 = vpop.f32.mrb[0].mxu0
    %v3911 = vadd.f32 %v3622, %v3910
    %v3912 = vpop.f32.mrb[0].mxu0
    %3913 = vmatprep.mubr.bf16.mxu0 %v2176
    %3914 = vmatmul.mubr.bf16.gmra.mrb[0].mxu0 %v2175
    %v3915 = vpop.f32.mrb[0].mxu0
    %v3916 = vadd.f32 %v3627, %v3915
    %v3917 = vpop.f32.mrb[0].mxu0
    %v3918 = vpop.f32.mrb[0].mxu0
    %v3919 = vadd.f32 %v3630, %v3918
    %v3920 = vpop.f32.mrb[0].mxu0
    %3921 = vmatprep.mubr.bf16.mxu0 %v2185
    %3922 = vmatmul.mubr.bf16.gmra.mrb[0].mxu0 %v2184
    %v3923 = vpop.f32.mrb[0].mxu0
    %v3924 = vadd.f32 %v3635, %v3923
    %v3925 = vpop.f32.mrb[0].mxu0
    %v3926 = vpop.f32.mrb[0].mxu0
    %v3927 = vadd.f32 %v3638, %v3926
    %v3928 = vpop.f32.mrb[0].mxu0
    %3929 = vmatprep.mubr.bf16.mxu0 %v2194
    %3930 = vmatmul.mubr.bf16.gmra.mrb[0].mxu0 %v2193
    %v3931 = vpop.f32.mrb[0].mxu0
    %v3932 = vadd.f32 %v3643, %v3931
    %v3933 = vpop.f32.mrb[0].mxu0
    %v3934 = vpop.f32.mrb[0].mxu0
    %v3935 = vadd.f32 %v3646, %v3934
    %v3936 = vpop.f32.mrb[0].mxu0
    %3937 = vmatprep.mubr.bf16.mxu0 %v2203
    %3938 = vmatmul.mubr.bf16.gmra.mrb[0].mxu0 %v2202
    %v3939 = vpop.f32.mrb[0].mxu0
    %v3940 = vadd.f32 %v3651, %v3939
    %v3941 = vpop.f32.mrb[0].mxu0
    %v3942 = vpop.f32.mrb[0].mxu0
    %v3943 = vadd.f32 %v3654, %v3942
    %v3944 = vpop.f32.mrb[0].mxu0
    %3945 = vmatprep.mubr.bf16.mxu0 %v2212
    %3946 = vmatmul.mubr.bf16.gmra.mrb[0].mxu0 %v2211
    %v3947 = vpop.f32.mrb[0].mxu0
    %v3948 = vadd.f32 %v3659, %v3947
    %v3949 = vpop.f32.mrb[0].mxu0
    %v3950 = vpop.f32.mrb[0].mxu0
    %v3951 = vadd.f32 %v3662, %v3950
    %v3952 = vpop.f32.mrb[0].mxu0
    %3953 = vmatprep.mubr.bf16.mxu0 %v2221
    %3954 = vmatmul.mubr.bf16.gmra.mrb[0].mxu0 %v2220
    %v3955 = vpop.f32.mrb[0].mxu0
    %v3956 = vadd.f32 %v3667, %v3955
    %v3957 = vpop.f32.mrb[0].mxu0
    %v3958 = vpop.f32.mrb[0].mxu0
    %v3959 = vadd.f32 %v3670, %v3958
    %v3960 = vpop.f32.mrb[0].mxu0
    %3961 = vmatprep.mubr.bf16.mxu0 %v2230
    %3962 = vmatmul.mubr.bf16.gmra.mrb[0].mxu0 %v2229
    %v3963 = vpop.f32.mrb[0].mxu0
    %v3964 = vadd.f32 %v3675, %v3963
    %v3965 = vpop.f32.mrb[0].mxu0
    %v3966 = vpop.f32.mrb[0].mxu0
    %v3967 = vadd.f32 %v3678, %v3966
    %v3968 = vpop.f32.mrb[0].mxu0
    %3969 = vmatprep.mubr.bf16.mxu0 %v2239
    %3970 = vmatmul.mubr.bf16.gmra.mrb[0].mxu0 %v2238
    %v3971 = vpop.f32.mrb[0].mxu0
    %v3972 = vadd.f32 %v3683, %v3971
    %v3973 = vpop.f32.mrb[0].mxu0
    %v3974 = vpop.f32.mrb[0].mxu0
    %v3975 = vadd.f32 %v3686, %v3974
    %v3976 = vpop.f32.mrb[0].mxu0
    %3977 = vmatprep.mubr.bf16.mxu0 %v2248
    %3978 = vmatmul.mubr.bf16.gmra.mrb[0].mxu0 %v2247
    %v3979 = vpop.f32.mrb[0].mxu0
    %v3980 = vadd.f32 %v3691, %v3979
    %v3981 = vpop.f32.mrb[0].mxu0
    %v3982 = vpop.f32.mrb[0].mxu0
    %v3983 = vadd.f32 %v3694, %v3982
    %v3984 = vpop.f32.mrb[0].mxu0
    %3985 = vmatprep.mubr.bf16.mxu0 %v2257
    %3986 = vmatmul.mubr.bf16.gmra.mrb[0].mxu0 %v2256
    %v3987 = vpop.f32.mrb[0].mxu0
    %v3988 = vadd.f32 %v3699, %v3987
    %v3989 = vpop.f32.mrb[0].mxu0
    %v3990 = vpop.f32.mrb[0].mxu0
    %v3991 = vadd.f32 %v3702, %v3990
    %v3992 = vpop.f32.mrb[0].mxu0
    %3993 = vmatprep.mubr.bf16.mxu0 %v2266
    %3994 = vmatmul.mubr.bf16.gmra.mrb[0].mxu0 %v2265
    %v3995 = vpop.f32.mrb[0].mxu0
    %v3996 = vadd.f32 %v3707, %v3995
    %v3997 = vpop.f32.mrb[0].mxu0
    %v3998 = vpop.f32.mrb[0].mxu0
    %v3999 = vadd.f32 %v3710, %v3998
    %v4000 = vpop.f32.mrb[0].mxu0
    %4001 = vmatprep.mubr.bf16.mxu0 %v2275
    %4002 = vmatmul.mubr.bf16.gmra.mrb[0].mxu0 %v2274
    %v4003 = vpop.f32.mrb[0].mxu0
    %v4004 = vadd.f32 %v3715, %v4003
    %v4005 = vpop.f32.mrb[0].mxu0
    %v4006 = vpop.f32.mrb[0].mxu0
    %v4007 = vadd.f32 %v3718, %v4006
    %v4008 = vpop.f32.mrb[0].mxu0
    %4009 = vmatprep.mubr.bf16.mxu0 %v2284
    %4010 = vmatmul.mubr.bf16.gmra.mrb[0].mxu0 %v2283
    %v4011 = vpop.f32.mrb[0].mxu0
    %v4012 = vadd.f32 %v3723, %v4011
    %v4013 = vpop.f32.mrb[0].mxu0
    %v4014 = vpop.f32.mrb[0].mxu0
    %v4015 = vadd.f32 %v3726, %v4014
    %v4016 = vpop.f32.mrb[0].mxu0
    %4017 = vdwg.mxu0
    %4018 = vmatprep.subr.bf16.mxu0 0
    %4019 = vmatpush1.bf16.msra.mxu0 %v2782
    %4020 = vmatprep.subr.bf16.mxu0 0
    %4021 = vmatpush1.bf16.msra.mxu0 %v2783
    %4022 = vmatprep.subr.bf16.mxu0 0
    %4023 = vmatpush1.bf16.msra.mxu0 %v2784
    %4024 = vmatprep.subr.bf16.mxu0 0
    %4025 = vmatpush1.bf16.msra.mxu0 %v2785
    %4026 = vmatprep.subr.bf16.mxu0 0
    %4027 = vmatpush1.bf16.msra.mxu0 %v2786
    %4028 = vmatprep.subr.bf16.mxu0 0
    %4029 = vmatpush1.bf16.msra.mxu0 %v2787
    %4030 = vmatprep.subr.bf16.mxu0 0
    %4031 = vmatpush1.bf16.msra.mxu0 %v2788
    %4032 = vmatprep.subr.bf16.mxu0 0
    %4033 = vmatpush1.bf16.msra.mxu0 %v2789
    %4034 = vmatprep.subr.bf16.mxu0 0
    %4035 = vmatpush1.bf16.msra.mxu0 0
    %4036 = vmatprep.subr.bf16.mxu0 0
    %4037 = vmatpush1.bf16.msra.mxu0 0
    %4038 = vmatprep.subr.bf16.mxu0 0
    %4039 = vmatpush1.bf16.msra.mxu0 0
    %4040 = vmatprep.subr.bf16.mxu0 0
    %4041 = vmatpush1.bf16.msra.mxu0 0
    %4042 = vmatprep.subr.bf16.mxu0 0
    %4043 = vmatpush1.bf16.msra.mxu0 0
    %4044 = vmatprep.subr.bf16.mxu0 0
    %4045 = vmatpush1.bf16.msra.mxu0 0
    %4046 = vmatprep.subr.bf16.mxu0 0
    %4047 = vmatpush1.bf16.msra.mxu0 0
    %4048 = vmatprep.subr.bf16.mxu0 0
    %4049 = vmatpush1.bf16.msra.mxu0 0
    %4050 = vmatprep.mubr.bf16.mxu0 0
    %4051 = vmatmul.mubr.bf16.gmra.mrb[0].mxu0 %v2006
    %v4052 = vpop.f32.mrb[0].mxu0
    %v4053 = vadd.f32 %v3764, %v4052
    %v4054 = vpop.f32.mrb[0].mxu0
    %v4055 = vpop.f32.mrb[0].mxu0
    %v4056 = vadd.f32 %v3767, %v4055
    %v4057 = vpop.f32.mrb[0].mxu0
    %4058 = vmatprep.mubr.bf16.mxu0 0
    %4059 = vmatmul.mubr.bf16.gmra.mrb[0].mxu0 %v2015
    %v4060 = vpop.f32.mrb[0].mxu0
    %v4061 = vadd.f32 %v3772, %v4060
    %v4062 = vpop.f32.mrb[0].mxu0
    %v4063 = vpop.f32.mrb[0].mxu0
    %v4064 = vadd.f32 %v3775, %v4063
    %v4065 = vpop.f32.mrb[0].mxu0
    %4066 = vmatprep.mubr.bf16.mxu0 0
    %4067 = vmatmul.mubr.bf16.gmra.mrb[0].mxu0 %v2024
    %v4068 = vpop.f32.mrb[0].mxu0
    %v4069 = vadd.f32 %v3780, %v4068
    %v4070 = vpop.f32.mrb[0].mxu0
    %v4071 = vpop.f32.mrb[0].mxu0
    %v4072 = vadd.f32 %v3783, %v4071
    %v4073 = vpop.f32.mrb[0].mxu0
    %4074 = vmatprep.mubr.bf16.mxu0 0
    %4075 = vmatmul.mubr.bf16.gmra.mrb[0].mxu0 %v2033
    %v4076 = vpop.f32.mrb[0].mxu0
    %v4077 = vadd.f32 %v3788, %v4076
    %v4078 = vpop.f32.mrb[0].mxu0
    %v4079 = vpop.f32.mrb[0].mxu0
    %v4080 = vadd.f32 %v3791, %v4079
    %v4081 = vpop.f32.mrb[0].mxu0
    %4082 = vmatprep.mubr.bf16.mxu0 0
    %4083 = vmatmul.mubr.bf16.gmra.mrb[0].mxu0 %v2042
    %v4084 = vpop.f32.mrb[0].mxu0
    %v4085 = vadd.f32 %v3796, %v4084
    %v4086 = vpop.f32.mrb[0].mxu0
    %v4087 = vpop.f32.mrb[0].mxu0
    %v4088 = vadd.f32 %v3799, %v4087
    %v4089 = vpop.f32.mrb[0].mxu0
    %4090 = vmatprep.mubr.bf16.mxu0 0
    %4091 = vmatmul.mubr.bf16.gmra.mrb[0].mxu0 %v2051
    %v4092 = vpop.f32.mrb[0].mxu0
    %v4093 = vadd.f32 %v3804, %v4092
    %v4094 = vpop.f32.mrb[0].mxu0
    %v4095 = vpop.f32.mrb[0].mxu0
    %v4096 = vadd.f32 %v3807, %v4095
    %v4097 = vpop.f32.mrb[0].mxu0
    %4098 = vmatprep.mubr.bf16.mxu0 0
    %4099 = vmatmul.mubr.bf16.gmra.mrb[0].mxu0 %v2060
    %v4100 = vpop.f32.mrb[0].mxu0
    %v4101 = vadd.f32 %v3812, %v4100
    %v4102 = vpop.f32.mrb[0].mxu0
    %v4103 = vpop.f32.mrb[0].mxu0
    %v4104 = vadd.f32 %v3815, %v4103
    %v4105 = vpop.f32.mrb[0].mxu0
    %4106 = vmatprep.mubr.bf16.mxu0 0
    %4107 = vmatmul.mubr.bf16.gmra.mrb[0].mxu0 %v2069
    %v4108 = vpop.f32.mrb[0].mxu0
    %v4109 = vadd.f32 %v3820, %v4108
    %v4110 = vpop.f32.mrb[0].mxu0
    %v4111 = vpop.f32.mrb[0].mxu0
    %v4112 = vadd.f32 %v3823, %v4111
    %v4113 = vpop.f32.mrb[0].mxu0
    %4114 = vmatprep.mubr.bf16.mxu0 0
    %4115 = vmatmul.mubr.bf16.gmra.mrb[0].mxu0 %v2078
    %v4116 = vpop.f32.mrb[0].mxu0
    %v4117 = vadd.f32 %v3828, %v4116
    %v4118 = vpop.f32.mrb[0].mxu0
    %v4119 = vpop.f32.mrb[0].mxu0
    %v4120 = vadd.f32 %v3831, %v4119
    %v4121 = vpop.f32.mrb[0].mxu0
    %4122 = vmatprep.mubr.bf16.mxu0 0
    %4123 = vmatmul.mubr.bf16.gmra.mrb[0].mxu0 %v2087
    %v4124 = vpop.f32.mrb[0].mxu0
    %v4125 = vadd.f32 %v3836, %v4124
    %v4126 = vpop.f32.mrb[0].mxu0
    %v4127 = vpop.f32.mrb[0].mxu0
    %v4128 = vadd.f32 %v3839, %v4127
    %v4129 = vpop.f32.mrb[0].mxu0
    %4130 = vmatprep.mubr.bf16.mxu0 0
    %4131 = vmatmul.mubr.bf16.gmra.mrb[0].mxu0 %v2096
    %v4132 = vpop.f32.mrb[0].mxu0
    %v4133 = vadd.f32 %v3844, %v4132
    %v4134 = vpop.f32.mrb[0].mxu0
    %v4135 = vpop.f32.mrb[0].mxu0
    %v4136 = vadd.f32 %v3847, %v4135
    %v4137 = vpop.f32.mrb[0].mxu0
    %4138 = vmatprep.mubr.bf16.mxu0 0
    %4139 = vmatmul.mubr.bf16.gmra.mrb[0].mxu0 %v2105
    %v4140 = vpop.f32.mrb[0].mxu0
    %v4141 = vadd.f32 %v3852, %v4140
    %v4142 = vpop.f32.mrb[0].mxu0
    %v4143 = vpop.f32.mrb[0].mxu0
    %v4144 = vadd.f32 %v3855, %v4143
    %v4145 = vpop.f32.mrb[0].mxu0
    %4146 = vmatprep.mubr.bf16.mxu0 0
    %4147 = vmatmul.mubr.bf16.gmra.mrb[0].mxu0 %v2114
    %v4148 = vpop.f32.mrb[0].mxu0
    %v4149 = vadd.f32 %v3860, %v4148
    %v4150 = vpop.f32.mrb[0].mxu0
    %v4151 = vpop.f32.mrb[0].mxu0
    %v4152 = vadd.f32 %v3863, %v4151
    %v4153 = vpop.f32.mrb[0].mxu0
    %4154 = vmatprep.mubr.bf16.mxu0 0
    %4155 = vmatmul.mubr.bf16.gmra.mrb[0].mxu0 %v2123
    %v4156 = vpop.f32.mrb[0].mxu0
    %v4157 = vadd.f32 %v3868, %v4156
    %v4158 = vpop.f32.mrb[0].mxu0
    %v4159 = vpop.f32.mrb[0].mxu0
    %v4160 = vadd.f32 %v3871, %v4159
    %v4161 = vpop.f32.mrb[0].mxu0
    %4162 = vmatprep.mubr.bf16.mxu0 0
    %4163 = vmatmul.mubr.bf16.gmra.mrb[0].mxu0 %v2132
    %v4164 = vpop.f32.mrb[0].mxu0
    %v4165 = vadd.f32 %v3876, %v4164
    %v4166 = vpop.f32.mrb[0].mxu0
    %v4167 = vpop.f32.mrb[0].mxu0
    %v4168 = vadd.f32 %v3879, %v4167
    %v4169 = vpop.f32.mrb[0].mxu0
    %4170 = vmatprep.mubr.bf16.mxu0 0
    %4171 = vmatmul.mubr.bf16.gmra.mrb[0].mxu0 %v2141
    %v4172 = vpop.f32.mrb[0].mxu0
    %v4173 = vadd.f32 %v3884, %v4172
    %v4174 = vpop.f32.mrb[0].mxu0
    %v4175 = vpop.f32.mrb[0].mxu0
    %v4176 = vadd.f32 %v3887, %v4175
    %v4177 = vpop.f32.mrb[0].mxu0
    %4178 = vmatprep.mubr.bf16.mxu0 0
    %4179 = vmatmul.mubr.bf16.gmra.mrb[0].mxu0 %v2150
    %v4180 = vpop.f32.mrb[0].mxu0
    %v4181 = vadd.f32 %v3892, %v4180
    %v4182 = vpop.f32.mrb[0].mxu0
    %v4183 = vpop.f32.mrb[0].mxu0
    %v4184 = vadd.f32 %v3895, %v4183
    %v4185 = vpop.f32.mrb[0].mxu0
    %4186 = vmatprep.mubr.bf16.mxu0 0
    %4187 = vmatmul.mubr.bf16.gmra.mrb[0].mxu0 %v2159
    %v4188 = vpop.f32.mrb[0].mxu0
    %v4189 = vadd.f32 %v3900, %v4188
    %v4190 = vpop.f32.mrb[0].mxu0
    %v4191 = vpop.f32.mrb[0].mxu0
    %v4192 = vadd.f32 %v3903, %v4191
    %v4193 = vpop.f32.mrb[0].mxu0
    %4194 = vmatprep.mubr.bf16.mxu0 0
    %4195 = vmatmul.mubr.bf16.gmra.mrb[0].mxu0 %v2168
    %v4196 = vpop.f32.mrb[0].mxu0
    %v4197 = vadd.f32 %v3908, %v4196
    %v4198 = vpop.f32.mrb[0].mxu0
    %v4199 = vpop.f32.mrb[0].mxu0
    %v4200 = vadd.f32 %v3911, %v4199
    %v4201 = vpop.f32.mrb[0].mxu0
    %4202 = vmatprep.mubr.bf16.mxu0 0
    %4203 = vmatmul.mubr.bf16.gmra.mrb[0].mxu0 %v2177
    %v4204 = vpop.f32.mrb[0].mxu0
    %v4205 = vadd.f32 %v3916, %v4204
    %v4206 = vpop.f32.mrb[0].mxu0
    %v4207 = vpop.f32.mrb[0].mxu0
    %v4208 = vadd.f32 %v3919, %v4207
    %v4209 = vpop.f32.mrb[0].mxu0
    %4210 = vmatprep.mubr.bf16.mxu0 0
    %4211 = vmatmul.mubr.bf16.gmra.mrb[0].mxu0 %v2186
    %v4212 = vpop.f32.mrb[0].mxu0
    %v4213 = vadd.f32 %v3924, %v4212
    %v4214 = vpop.f32.mrb[0].mxu0
    %v4215 = vpop.f32.mrb[0].mxu0
    %v4216 = vadd.f32 %v3927, %v4215
    %v4217 = vpop.f32.mrb[0].mxu0
    %4218 = vmatprep.mubr.bf16.mxu0 0
    %4219 = vmatmul.mubr.bf16.gmra.mrb[0].mxu0 %v2195
    %v4220 = vpop.f32.mrb[0].mxu0
    %v4221 = vadd.f32 %v3932, %v4220
    %v4222 = vpop.f32.mrb[0].mxu0
    %v4223 = vpop.f32.mrb[0].mxu0
    %v4224 = vadd.f32 %v3935, %v4223
    %v4225 = vpop.f32.mrb[0].mxu0
    %4226 = vmatprep.mubr.bf16.mxu0 0
    %4227 = vmatmul.mubr.bf16.gmra.mrb[0].mxu0 %v2204
    %v4228 = vpop.f32.mrb[0].mxu0
    %v4229 = vadd.f32 %v3940, %v4228
    %v4230 = vpop.f32.mrb[0].mxu0
    %v4231 = vpop.f32.mrb[0].mxu0
    %v4232 = vadd.f32 %v3943, %v4231
    %v4233 = vpop.f32.mrb[0].mxu0
    %4234 = vmatprep.mubr.bf16.mxu0 0
    %4235 = vmatmul.mubr.bf16.gmra.mrb[0].mxu0 %v2213
    %v4236 = vpop.f32.mrb[0].mxu0
    %v4237 = vadd.f32 %v3948, %v4236
    %v4238 = vpop.f32.mrb[0].mxu0
    %v4239 = vpop.f32.mrb[0].mxu0
    %v4240 = vadd.f32 %v3951, %v4239
    %v4241 = vpop.f32.mrb[0].mxu0
    %4242 = vmatprep.mubr.bf16.mxu0 0
    %4243 = vmatmul.mubr.bf16.gmra.mrb[0].mxu0 %v2222
    %v4244 = vpop.f32.mrb[0].mxu0
    %v4245 = vadd.f32 %v3956, %v4244
    %v4246 = vpop.f32.mrb[0].mxu0
    %v4247 = vpop.f32.mrb[0].mxu0
    %v4248 = vadd.f32 %v3959, %v4247
    %v4249 = vpop.f32.mrb[0].mxu0
    %4250 = vmatprep.mubr.bf16.mxu0 0
    %4251 = vmatmul.mubr.bf16.gmra.mrb[0].mxu0 %v2231
    %v4252 = vpop.f32.mrb[0].mxu0
    %v4253 = vadd.f32 %v3964, %v4252
    %v4254 = vpop.f32.mrb[0].mxu0
    %v4255 = vpop.f32.mrb[0].mxu0
    %v4256 = vadd.f32 %v3967, %v4255
    %v4257 = vpop.f32.mrb[0].mxu0
    %4258 = vmatprep.mubr.bf16.mxu0 0
    %4259 = vmatmul.mubr.bf16.gmra.mrb[0].mxu0 %v2240
    %v4260 = vpop.f32.mrb[0].mxu0
    %v4261 = vadd.f32 %v3972, %v4260
    %v4262 = vpop.f32.mrb[0].mxu0
    %v4263 = vpop.f32.mrb[0].mxu0
    %v4264 = vadd.f32 %v3975, %v4263
    %v4265 = vpop.f32.mrb[0].mxu0
    %4266 = vmatprep.mubr.bf16.mxu0 0
    %4267 = vmatmul.mubr.bf16.gmra.mrb[0].mxu0 %v2249
    %v4268 = vpop.f32.mrb[0].mxu0
    %v4269 = vadd.f32 %v3980, %v4268
    %v4270 = vpop.f32.mrb[0].mxu0
    %v4271 = vpop.f32.mrb[0].mxu0
    %v4272 = vadd.f32 %v3983, %v4271
    %v4273 = vpop.f32.mrb[0].mxu0
    %4274 = vmatprep.mubr.bf16.mxu0 0
    %4275 = vmatmul.mubr.bf16.gmra.mrb[0].mxu0 %v2258
    %v4276 = vpop.f32.mrb[0].mxu0
    %v4277 = vadd.f32 %v3988, %v4276
    %v4278 = vpop.f32.mrb[0].mxu0
    %v4279 = vpop.f32.mrb[0].mxu0
    %v4280 = vadd.f32 %v3991, %v4279
    %v4281 = vpop.f32.mrb[0].mxu0
    %4282 = vmatprep.mubr.bf16.mxu0 0
    %4283 = vmatmul.mubr.bf16.gmra.mrb[0].mxu0 %v2267
    %v4284 = vpop.f32.mrb[0].mxu0
    %v4285 = vadd.f32 %v3996, %v4284
    %v4286 = vpop.f32.mrb[0].mxu0
    %v4287 = vpop.f32.mrb[0].mxu0
    %v4288 = vadd.f32 %v3999, %v4287
    %v4289 = vpop.f32.mrb[0].mxu0
    %4290 = vmatprep.mubr.bf16.mxu0 0
    %4291 = vmatmul.mubr.bf16.gmra.mrb[0].mxu0 %v2276
    %v4292 = vpop.f32.mrb[0].mxu0
    %v4293 = vadd.f32 %v4004, %v4292
    %v4294 = vpop.f32.mrb[0].mxu0
    %v4295 = vpop.f32.mrb[0].mxu0
    %v4296 = vadd.f32 %v4007, %v4295
    %v4297 = vpop.f32.mrb[0].mxu0
    %4298 = vmatprep.mubr.bf16.mxu0 0
    %4299 = vmatmul.mubr.bf16.gmra.mrb[0].mxu0 %v2285
    %v4300 = vpop.f32.mrb[0].mxu0
    %v4301 = vadd.f32 %v4012, %v4300
    %v4302 = vpop.f32.mrb[0].mxu0
    %v4303 = vpop.f32.mrb[0].mxu0
    %v4304 = vadd.f32 %v4015, %v4303
    %v4305 = vpop.f32.mrb[0].mxu0
    %4306 = vdwg.mxu0
    %v4307 = vld [vmem:[%s4] sm:$0x1]
    %v4308 = vld [vmem:[%s5] sm:$0x1]
    %v4309 = vadd.f32 %v4053, %v4056
    %v4310 = vadd.f32 %v4309, %v4061
    %v4311 = vadd.f32 %v4310, %v4064
    %v4312 = vadd.f32 %v4311, %v4069
    %v4313 = vadd.f32 %v4312, %v4072
    %v4314 = vadd.f32 %v4313, %v4077
    %v4315 = vadd.f32 %v4314, %v4080
    %v4316 = vadd.f32 %v4315, %v4085
    %v4317 = vadd.f32 %v4316, %v4088
    %v4318 = vadd.f32 %v4317, %v4093
    %v4319 = vadd.f32 %v4318, %v4096
    %v4320 = vadd.f32 %v4319, %v4101
    %v4321 = vadd.f32 %v4320, %v4104
    %v4322 = vadd.f32 %v4321, %v4109
    %v4323 = vadd.f32 %v4322, %v4112
    %v4324 = vadd.f32 %v4323, %v4117
    %v4325 = vadd.f32 %v4324, %v4120
    %v4326 = vadd.f32 %v4325, %v4125
    %v4327 = vadd.f32 %v4326, %v4128
    %v4328 = vadd.f32 %v4327, %v4133
    %v4329 = vadd.f32 %v4328, %v4136
    %v4330 = vadd.f32 %v4329, %v4141
    %v4331 = vadd.f32 %v4330, %v4144
    %v4332 = vadd.f32 %v4331, %v4149
    %v4333 = vadd.f32 %v4332, %v4152
    %v4334 = vadd.f32 %v4333, %v4157
    %v4335 = vadd.f32 %v4334, %v4160
    %v4336 = vadd.f32 %v4335, %v4165
    %v4337 = vadd.f32 %v4336, %v4168
    %v4338 = vadd.f32 %v4337, %v4173
    %v4339 = vadd.f32 %v4338, %v4176
    %v4340 = vadd.f32 %v4339, %v4181
    %v4341 = vadd.f32 %v4340, %v4184
    %v4342 = vadd.f32 %v4341, %v4189
    %v4343 = vadd.f32 %v4342, %v4192
    %v4344 = vadd.f32 %v4343, %v4197
    %v4345 = vadd.f32 %v4344, %v4200
    %v4346 = vadd.f32 %v4345, %v4205
    %v4347 = vadd.f32 %v4346, %v4208
    %v4348 = vadd.f32 %v4347, %v4213
    %v4349 = vadd.f32 %v4348, %v4216
    %v4350 = vadd.f32 %v4349, %v4221
    %v4351 = vadd.f32 %v4350, %v4224
    %v4352 = vadd.f32 %v4351, %v4229
    %v4353 = vadd.f32 %v4352, %v4232
    %v4354 = vadd.f32 %v4353, %v4237
    %v4355 = vadd.f32 %v4354, %v4240
    %v4356 = vadd.f32 %v4355, %v4245
    %v4357 = vadd.f32 %v4356, %v4248
    %v4358 = vadd.f32 %v4357, %v4253
    %v4359 = vadd.f32 %v4358, %v4256
    %v4360 = vadd.f32 %v4359, %v4261
    %v4361 = vadd.f32 %v4360, %v4264
    %v4362 = vadd.f32 %v4361, %v4269
    %v4363 = vadd.f32 %v4362, %v4272
    %v4364 = vadd.f32 %v4363, %v4277
    %v4365 = vadd.f32 %v4364, %v4280
    %v4366 = vadd.f32 %v4365, %v4285
    %v4367 = vadd.f32 %v4366, %v4288
    %v4368 = vadd.f32 %v4367, %v4293
    %v4369 = vadd.f32 %v4368, %v4296
    %v4370 = vadd.f32 %v4369, %v4301
    %v4371 = vadd.f32 %v4370, %v4304
    %v4372 = vrot.slane %v4371, 4
    %v4373 = vadd.f32 %v4371, %v4372
    %v4374 = vrot.slane %v4373, 2
    %v4375 = vadd.f32 %v4373, %v4374
    %v4376 = vrot.slane %v4375, 1
    %v4377 = vadd.f32 %v4375, %v4376
    %v4378 = vrcp.pop 512.0
    %v4379 = vmul.f32 %v4377, %v4378
    %v4380 = vsub.f32 %v4053, %v4379
    %v4381 = vsub.f32 %v4056, %v4379
    %v4382 = vsub.f32 %v4061, %v4379
    %v4383 = vsub.f32 %v4064, %v4379
    %v4384 = vsub.f32 %v4069, %v4379
    %v4385 = vsub.f32 %v4072, %v4379
    %v4386 = vsub.f32 %v4077, %v4379
    %v4387 = vsub.f32 %v4080, %v4379
    %v4388 = vsub.f32 %v4085, %v4379
    %v4389 = vsub.f32 %v4088, %v4379
    %v4390 = vsub.f32 %v4093, %v4379
    %v4391 = vsub.f32 %v4096, %v4379
    %v4392 = vsub.f32 %v4101, %v4379
    %v4393 = vsub.f32 %v4104, %v4379
    %v4394 = vsub.f32 %v4109, %v4379
    %v4395 = vsub.f32 %v4112, %v4379
    %v4396 = vsub.f32 %v4117, %v4379
    %v4397 = vsub.f32 %v4120, %v4379
    %v4398 = vsub.f32 %v4125, %v4379
    %v4399 = vsub.f32 %v4128, %v4379
    %v4400 = vsub.f32 %v4133, %v4379
    %v4401 = vsub.f32 %v4136, %v4379
    %v4402 = vsub.f32 %v4141, %v4379
    %v4403 = vsub.f32 %v4144, %v4379
    %v4404 = vsub.f32 %v4149, %v4379
    %v4405 = vsub.f32 %v4152, %v4379
    %v4406 = vsub.f32 %v4157, %v4379
    %v4407 = vsub.f32 %v4160, %v4379
    %v4408 = vsub.f32 %v4165, %v4379
    %v4409 = vsub.f32 %v4168, %v4379
    %v4410 = vsub.f32 %v4173, %v4379
    %v4411 = vsub.f32 %v4176, %v4379
    %v4412 = vsub.f32 %v4181, %v4379
    %v4413 = vsub.f32 %v4184, %v4379
    %v4414 = vsub.f32 %v4189, %v4379
    %v4415 = vsub.f32 %v4192, %v4379
    %v4416 = vsub.f32 %v4197, %v4379
    %v4417 = vsub.f32 %v4200, %v4379
    %v4418 = vsub.f32 %v4205, %v4379
    %v4419 = vsub.f32 %v4208, %v4379
    %v4420 = vsub.f32 %v4213, %v4379
    %v4421 = vsub.f32 %v4216, %v4379
    %v4422 = vsub.f32 %v4221, %v4379
    %v4423 = vsub.f32 %v4224, %v4379
    %v4424 = vsub.f32 %v4229, %v4379
    %v4425 = vsub.f32 %v4232, %v4379
    %v4426 = vsub.f32 %v4237, %v4379
    %v4427 = vsub.f32 %v4240, %v4379
    %v4428 = vsub.f32 %v4245, %v4379
    %v4429 = vsub.f32 %v4248, %v4379
    %v4430 = vsub.f32 %v4253, %v4379
    %v4431 = vsub.f32 %v4256, %v4379
    %v4432 = vsub.f32 %v4261, %v4379
    %v4433 = vsub.f32 %v4264, %v4379
    %v4434 = vsub.f32 %v4269, %v4379
    %v4435 = vsub.f32 %v4272, %v4379
    %v4436 = vsub.f32 %v4277, %v4379
    %v4437 = vsub.f32 %v4280, %v4379
    %v4438 = vsub.f32 %v4285, %v4379
    %v4439 = vsub.f32 %v4288, %v4379
    %v4440 = vsub.f32 %v4293, %v4379
    %v4441 = vsub.f32 %v4296, %v4379
    %v4442 = vsub.f32 %v4301, %v4379
    %v4443 = vsub.f32 %v4304, %v4379
    %v4444 = vmul.f32 %v4380, %v4380
    %v4445 = vmul.f32 %v4381, %v4381
    %v4446 = vmul.f32 %v4382, %v4382
    %v4447 = vmul.f32 %v4383, %v4383
    %v4448 = vmul.f32 %v4384, %v4384
    %v4449 = vmul.f32 %v4385, %v4385
    %v4450 = vmul.f32 %v4386, %v4386
    %v4451 = vmul.f32 %v4387, %v4387
    %v4452 = vmul.f32 %v4388, %v4388
    %v4453 = vmul.f32 %v4389, %v4389
    %v4454 = vmul.f32 %v4390, %v4390
    %v4455 = vmul.f32 %v4391, %v4391
    %v4456 = vmul.f32 %v4392, %v4392
    %v4457 = vmul.f32 %v4393, %v4393
    %v4458 = vmul.f32 %v4394, %v4394
    %v4459 = vmul.f32 %v4395, %v4395
    %v4460 = vmul.f32 %v4396, %v4396
    %v4461 = vmul.f32 %v4397, %v4397
    %v4462 = vmul.f32 %v4398, %v4398
    %v4463 = vmul.f32 %v4399, %v4399
    %v4464 = vmul.f32 %v4400, %v4400
    %v4465 = vmul.f32 %v4401, %v4401
    %v4466 = vmul.f32 %v4402, %v4402
    %v4467 = vmul.f32 %v4403, %v4403
    %v4468 = vmul.f32 %v4404, %v4404
    %v4469 = vmul.f32 %v4405, %v4405
    %v4470 = vmul.f32 %v4406, %v4406
    %v4471 = vmul.f32 %v4407, %v4407
    %v4472 = vmul.f32 %v4408, %v4408
    %v4473 = vmul.f32 %v4409, %v4409
    %v4474 = vmul.f32 %v4410, %v4410
    %v4475 = vmul.f32 %v4411, %v4411
    %v4476 = vmul.f32 %v4412, %v4412
    %v4477 = vmul.f32 %v4413, %v4413
    %v4478 = vmul.f32 %v4414, %v4414
    %v4479 = vmul.f32 %v4415, %v4415
    %v4480 = vmul.f32 %v4416, %v4416
    %v4481 = vmul.f32 %v4417, %v4417
    %v4482 = vmul.f32 %v4418, %v4418
    %v4483 = vmul.f32 %v4419, %v4419
    %v4484 = vmul.f32 %v4420, %v4420
    %v4485 = vmul.f32 %v4421, %v4421
    %v4486 = vmul.f32 %v4422, %v4422
    %v4487 = vmul.f32 %v4423, %v4423
    %v4488 = vmul.f32 %v4424, %v4424
    %v4489 = vmul.f32 %v4425, %v4425
    %v4490 = vmul.f32 %v4426, %v4426
    %v4491 = vmul.f32 %v4427, %v4427
    %v4492 = vmul.f32 %v4428, %v4428
    %v4493 = vmul.f32 %v4429, %v4429
    %v4494 = vmul.f32 %v4430, %v4430
    %v4495 = vmul.f32 %v4431, %v4431
    %v4496 = vmul.f32 %v4432, %v4432
    %v4497 = vmul.f32 %v4433, %v4433
    %v4498 = vmul.f32 %v4434, %v4434
    %v4499 = vmul.f32 %v4435, %v4435
    %v4500 = vmul.f32 %v4436, %v4436
    %v4501 = vmul.f32 %v4437, %v4437
    %v4502 = vmul.f32 %v4438, %v4438
    %v4503 = vmul.f32 %v4439, %v4439
    %v4504 = vmul.f32 %v4440, %v4440
    %v4505 = vmul.f32 %v4441, %v4441
    %v4506 = vmul.f32 %v4442, %v4442
    %v4507 = vmul.f32 %v4443, %v4443
    %v4508 = vadd.f32 %v4444, %v4445
    %v4509 = vadd.f32 %v4508, %v4446
    %v4510 = vadd.f32 %v4509, %v4447
    %v4511 = vadd.f32 %v4510, %v4448
    %v4512 = vadd.f32 %v4511, %v4449
    %v4513 = vadd.f32 %v4512, %v4450
    %v4514 = vadd.f32 %v4513, %v4451
    %v4515 = vadd.f32 %v4514, %v4452
    %v4516 = vadd.f32 %v4515, %v4453
    %v4517 = vadd.f32 %v4516, %v4454
    %v4518 = vadd.f32 %v4517, %v4455
    %v4519 = vadd.f32 %v4518, %v4456
    %v4520 = vadd.f32 %v4519, %v4457
    %v4521 = vadd.f32 %v4520, %v4458
    %v4522 = vadd.f32 %v4521, %v4459
    %v4523 = vadd.f32 %v4522, %v4460
    %v4524 = vadd.f32 %v4523, %v4461
    %v4525 = vadd.f32 %v4524, %v4462
    %v4526 = vadd.f32 %v4525, %v4463
    %v4527 = vadd.f32 %v4526, %v4464
    %v4528 = vadd.f32 %v4527, %v4465
    %v4529 = vadd.f32 %v4528, %v4466
    %v4530 = vadd.f32 %v4529, %v4467
    %v4531 = vadd.f32 %v4530, %v4468
    %v4532 = vadd.f32 %v4531, %v4469
    %v4533 = vadd.f32 %v4532, %v4470
    %v4534 = vadd.f32 %v4533, %v4471
    %v4535 = vadd.f32 %v4534, %v4472
    %v4536 = vadd.f32 %v4535, %v4473
    %v4537 = vadd.f32 %v4536, %v4474
    %v4538 = vadd.f32 %v4537, %v4475
    %v4539 = vadd.f32 %v4538, %v4476
    %v4540 = vadd.f32 %v4539, %v4477
    %v4541 = vadd.f32 %v4540, %v4478
    %v4542 = vadd.f32 %v4541, %v4479
    %v4543 = vadd.f32 %v4542, %v4480
    %v4544 = vadd.f32 %v4543, %v4481
    %v4545 = vadd.f32 %v4544, %v4482
    %v4546 = vadd.f32 %v4545, %v4483
    %v4547 = vadd.f32 %v4546, %v4484
    %v4548 = vadd.f32 %v4547, %v4485
    %v4549 = vadd.f32 %v4548, %v4486
    %v4550 = vadd.f32 %v4549, %v4487
    %v4551 = vadd.f32 %v4550, %v4488
    %v4552 = vadd.f32 %v4551, %v4489
    %v4553 = vadd.f32 %v4552, %v4490
    %v4554 = vadd.f32 %v4553, %v4491
    %v4555 = vadd.f32 %v4554, %v4492
    %v4556 = vadd.f32 %v4555, %v4493
    %v4557 = vadd.f32 %v4556, %v4494
    %v4558 = vadd.f32 %v4557, %v4495
    %v4559 = vadd.f32 %v4558, %v4496
    %v4560 = vadd.f32 %v4559, %v4497
    %v4561 = vadd.f32 %v4560, %v4498
    %v4562 = vadd.f32 %v4561, %v4499
    %v4563 = vadd.f32 %v4562, %v4500
    %v4564 = vadd.f32 %v4563, %v4501
    %v4565 = vadd.f32 %v4564, %v4502
    %v4566 = vadd.f32 %v4565, %v4503
    %v4567 = vadd.f32 %v4566, %v4504
    %v4568 = vadd.f32 %v4567, %v4505
    %v4569 = vadd.f32 %v4568, %v4506
    %v4570 = vadd.f32 %v4569, %v4507
    %v4571 = vrot.slane %v4570, 4
    %v4572 = vadd.f32 %v4570, %v4571
    %v4573 = vrot.slane %v4572, 2
    %v4574 = vadd.f32 %v4572, %v4573
    %v4575 = vrot.slane %v4574, 1
    %v4576 = vadd.f32 %v4574, %v4575
    %v4577 = vmul.f32 %v4576, %v4378
    %v4578 = vadd.f32 %v4577, 1e-05
    %v4579 = vrsqrt.pop %v4578
    %v4580 = vmul.f32 %v4307, %v4579
    %v4582 = vlaneseq
    %v4583 = vshrl.u32 %v4582, 7
    %v4584 = vsub.s32 0, %v4583
    %v4585 = vrot.slane %v4580, %v4584
    %v4587 = vmul.f32 %v4380, %v4585
    %v4588 = vmul.f32 %v4381, %v4585
    %v4589 = vmul.f32 %v4382, %v4585
    %v4590 = vmul.f32 %v4383, %v4585
    %v4591 = vmul.f32 %v4384, %v4585
    %v4592 = vmul.f32 %v4385, %v4585
    %v4593 = vmul.f32 %v4386, %v4585
    %v4594 = vmul.f32 %v4387, %v4585
    %v4595 = vmul.f32 %v4388, %v4585
    %v4596 = vmul.f32 %v4389, %v4585
    %v4597 = vmul.f32 %v4390, %v4585
    %v4598 = vmul.f32 %v4391, %v4585
    %v4599 = vmul.f32 %v4392, %v4585
    %v4600 = vmul.f32 %v4393, %v4585
    %v4601 = vmul.f32 %v4394, %v4585
    %v4602 = vmul.f32 %v4395, %v4585
    %v4603 = vmul.f32 %v4396, %v4585
    %v4604 = vmul.f32 %v4397, %v4585
    %v4605 = vmul.f32 %v4398, %v4585
    %v4606 = vmul.f32 %v4399, %v4585
    %v4607 = vmul.f32 %v4400, %v4585
    %v4608 = vmul.f32 %v4401, %v4585
    %v4609 = vmul.f32 %v4402, %v4585
    %v4610 = vmul.f32 %v4403, %v4585
    %v4611 = vmul.f32 %v4404, %v4585
    %v4612 = vmul.f32 %v4405, %v4585
    %v4613 = vmul.f32 %v4406, %v4585
    %v4614 = vmul.f32 %v4407, %v4585
    %v4615 = vmul.f32 %v4408, %v4585
    %v4616 = vmul.f32 %v4409, %v4585
    %v4617 = vmul.f32 %v4410, %v4585
    %v4618 = vmul.f32 %v4411, %v4585
    %v4619 = vmul.f32 %v4412, %v4585
    %v4620 = vmul.f32 %v4413, %v4585
    %v4621 = vmul.f32 %v4414, %v4585
    %v4622 = vmul.f32 %v4415, %v4585
    %v4623 = vmul.f32 %v4416, %v4585
    %v4624 = vmul.f32 %v4417, %v4585
    %v4625 = vmul.f32 %v4418, %v4585
    %v4626 = vmul.f32 %v4419, %v4585
    %v4627 = vmul.f32 %v4420, %v4585
    %v4628 = vmul.f32 %v4421, %v4585
    %v4629 = vmul.f32 %v4422, %v4585
    %v4630 = vmul.f32 %v4423, %v4585
    %v4631 = vmul.f32 %v4424, %v4585
    %v4632 = vmul.f32 %v4425, %v4585
    %v4633 = vmul.f32 %v4426, %v4585
    %v4634 = vmul.f32 %v4427, %v4585
    %v4635 = vmul.f32 %v4428, %v4585
    %v4636 = vmul.f32 %v4429, %v4585
    %v4637 = vmul.f32 %v4430, %v4585
    %v4638 = vmul.f32 %v4431, %v4585
    %v4639 = vmul.f32 %v4432, %v4585
    %v4640 = vmul.f32 %v4433, %v4585
    %v4641 = vmul.f32 %v4434, %v4585
    %v4642 = vmul.f32 %v4435, %v4585
    %v4643 = vmul.f32 %v4436, %v4585
    %v4644 = vmul.f32 %v4437, %v4585
    %v4645 = vmul.f32 %v4438, %v4585
    %v4646 = vmul.f32 %v4439, %v4585
    %v4647 = vmul.f32 %v4440, %v4585
    %v4648 = vmul.f32 %v4441, %v4585
    %v4649 = vmul.f32 %v4442, %v4585
    %v4650 = vmul.f32 %v4443, %v4585
    %v4652 = vlaneseq
    %v4653 = vshrl.u32 %v4652, 7
    %v4654 = vsub.s32 0, %v4653
    %v4655 = vrot.slane %v4308, %v4654
    %v4657 = vadd.f32 %v4587, %v4655
    %v4658 = vadd.f32 %v4588, %v4655
    %v4659 = vadd.f32 %v4589, %v4655
    %v4660 = vadd.f32 %v4590, %v4655
    %v4661 = vadd.f32 %v4591, %v4655
    %v4662 = vadd.f32 %v4592, %v4655
    %v4663 = vadd.f32 %v4593, %v4655
    %v4664 = vadd.f32 %v4594, %v4655
    %v4665 = vadd.f32 %v4595, %v4655
    %v4666 = vadd.f32 %v4596, %v4655
    %v4667 = vadd.f32 %v4597, %v4655
    %v4668 = vadd.f32 %v4598, %v4655
    %v4669 = vadd.f32 %v4599, %v4655
    %v4670 = vadd.f32 %v4600, %v4655
    %v4671 = vadd.f32 %v4601, %v4655
    %v4672 = vadd.f32 %v4602, %v4655
    %v4673 = vadd.f32 %v4603, %v4655
    %v4674 = vadd.f32 %v4604, %v4655
    %v4675 = vadd.f32 %v4605, %v4655
    %v4676 = vadd.f32 %v4606, %v4655
    %v4677 = vadd.f32 %v4607, %v4655
    %v4678 = vadd.f32 %v4608, %v4655
    %v4679 = vadd.f32 %v4609, %v4655
    %v4680 = vadd.f32 %v4610, %v4655
    %v4681 = vadd.f32 %v4611, %v4655
    %v4682 = vadd.f32 %v4612, %v4655
    %v4683 = vadd.f32 %v4613, %v4655
    %v4684 = vadd.f32 %v4614, %v4655
    %v4685 = vadd.f32 %v4615, %v4655
    %v4686 = vadd.f32 %v4616, %v4655
    %v4687 = vadd.f32 %v4617, %v4655
    %v4688 = vadd.f32 %v4618, %v4655
    %v4689 = vadd.f32 %v4619, %v4655
    %v4690 = vadd.f32 %v4620, %v4655
    %v4691 = vadd.f32 %v4621, %v4655
    %v4692 = vadd.f32 %v4622, %v4655
    %v4693 = vadd.f32 %v4623, %v4655
    %v4694 = vadd.f32 %v4624, %v4655
    %v4695 = vadd.f32 %v4625, %v4655
    %v4696 = vadd.f32 %v4626, %v4655
    %v4697 = vadd.f32 %v4627, %v4655
    %v4698 = vadd.f32 %v4628, %v4655
    %v4699 = vadd.f32 %v4629, %v4655
    %v4700 = vadd.f32 %v4630, %v4655
    %v4701 = vadd.f32 %v4631, %v4655
    %v4702 = vadd.f32 %v4632, %v4655
    %v4703 = vadd.f32 %v4633, %v4655
    %v4704 = vadd.f32 %v4634, %v4655
    %v4705 = vadd.f32 %v4635, %v4655
    %v4706 = vadd.f32 %v4636, %v4655
    %v4707 = vadd.f32 %v4637, %v4655
    %v4708 = vadd.f32 %v4638, %v4655
    %v4709 = vadd.f32 %v4639, %v4655
    %v4710 = vadd.f32 %v4640, %v4655
    %v4711 = vadd.f32 %v4641, %v4655
    %v4712 = vadd.f32 %v4642, %v4655
    %v4713 = vadd.f32 %v4643, %v4655
    %v4714 = vadd.f32 %v4644, %v4655
    %v4715 = vadd.f32 %v4645, %v4655
    %v4716 = vadd.f32 %v4646, %v4655
    %v4717 = vadd.f32 %v4647, %v4655
    %v4718 = vadd.f32 %v4648, %v4655
    %v4719 = vadd.f32 %v4649, %v4655
    %v4720 = vadd.f32 %v4650, %v4655
    %v4721 = vmax.f32 %v4657, 0.0
    %v4722 = vmax.f32 %v4658, 0.0
    %v4723 = vmax.f32 %v4659, 0.0
    %v4724 = vmax.f32 %v4660, 0.0
    %v4725 = vmax.f32 %v4661, 0.0
    %v4726 = vmax.f32 %v4662, 0.0
    %v4727 = vmax.f32 %v4663, 0.0
    %v4728 = vmax.f32 %v4664, 0.0
    %v4729 = vmax.f32 %v4665, 0.0
    %v4730 = vmax.f32 %v4666, 0.0
    %v4731 = vmax.f32 %v4667, 0.0
    %v4732 = vmax.f32 %v4668, 0.0
    %v4733 = vmax.f32 %v4669, 0.0
    %v4734 = vmax.f32 %v4670, 0.0
    %v4735 = vmax.f32 %v4671, 0.0
    %v4736 = vmax.f32 %v4672, 0.0
    %v4737 = vmax.f32 %v4673, 0.0
    %v4738 = vmax.f32 %v4674, 0.0
    %v4739 = vmax.f32 %v4675, 0.0
    %v4740 = vmax.f32 %v4676, 0.0
    %v4741 = vmax.f32 %v4677, 0.0
    %v4742 = vmax.f32 %v4678, 0.0
    %v4743 = vmax.f32 %v4679, 0.0
    %v4744 = vmax.f32 %v4680, 0.0
    %v4745 = vmax.f32 %v4681, 0.0
    %v4746 = vmax.f32 %v4682, 0.0
    %v4747 = vmax.f32 %v4683, 0.0
    %v4748 = vmax.f32 %v4684, 0.0
    %v4749 = vmax.f32 %v4685, 0.0
    %v4750 = vmax.f32 %v4686, 0.0
    %v4751 = vmax.f32 %v4687, 0.0
    %v4752 = vmax.f32 %v4688, 0.0
    %v4753 = vmax.f32 %v4689, 0.0
    %v4754 = vmax.f32 %v4690, 0.0
    %v4755 = vmax.f32 %v4691, 0.0
    %v4756 = vmax.f32 %v4692, 0.0
    %v4757 = vmax.f32 %v4693, 0.0
    %v4758 = vmax.f32 %v4694, 0.0
    %v4759 = vmax.f32 %v4695, 0.0
    %v4760 = vmax.f32 %v4696, 0.0
    %v4761 = vmax.f32 %v4697, 0.0
    %v4762 = vmax.f32 %v4698, 0.0
    %v4763 = vmax.f32 %v4699, 0.0
    %v4764 = vmax.f32 %v4700, 0.0
    %v4765 = vmax.f32 %v4701, 0.0
    %v4766 = vmax.f32 %v4702, 0.0
    %v4767 = vmax.f32 %v4703, 0.0
    %v4768 = vmax.f32 %v4704, 0.0
    %v4769 = vmax.f32 %v4705, 0.0
    %v4770 = vmax.f32 %v4706, 0.0
    %v4771 = vmax.f32 %v4707, 0.0
    %v4772 = vmax.f32 %v4708, 0.0
    %v4773 = vmax.f32 %v4709, 0.0
    %v4774 = vmax.f32 %v4710, 0.0
    %v4775 = vmax.f32 %v4711, 0.0
    %v4776 = vmax.f32 %v4712, 0.0
    %v4777 = vmax.f32 %v4713, 0.0
    %v4778 = vmax.f32 %v4714, 0.0
    %v4779 = vmax.f32 %v4715, 0.0
    %v4780 = vmax.f32 %v4716, 0.0
    %v4781 = vmax.f32 %v4717, 0.0
    %v4782 = vmax.f32 %v4718, 0.0
    %v4783 = vmax.f32 %v4719, 0.0
    %v4784 = vmax.f32 %v4720, 0.0
    %4785 = vst [vmem:[#allocation3] sm:$0xff] 0.0
    %4786 = vst [vmem:[#allocation3 + $0x8] sm:$0xff] 0.0
    %4787 = vst [vmem:[#allocation3 + $0x10] sm:$0x3] 0.0
    %4788 = vst [vmem:[#allocation3 + $0x1b0] sm:$0xff] 0.0
    %4789 = vst [vmem:[#allocation3 + $0x1b8] sm:$0xff] 0.0
    %4790 = vst [vmem:[#allocation3 + $0x1c0] sm:$0x3] 0.0
    %s4791 = scalar_lea.vmem [#allocation3], 408
    %4792 = vst [vmem:[%s4791] sm:$0xff] 0.0
    %4793 = vst [vmem:[%s4791 + $0x8] sm:$0xff] 0.0
    %4794 = vst [vmem:[%s4791 + $0x10] sm:$0x3] 0.0
    %4795 = vst [vmem:[%s4791 + $0x1b0] sm:$0xff] 0.0
    %4796 = vst [vmem:[%s4791 + $0x1b8] sm:$0xff] 0.0
    %4797 = vst [vmem:[%s4791 + $0x1c0] sm:$0x3] 0.0
    %4798 = vst [vmem:[#allocation3] sm:$0x1] 0.0
    %4799 = vst [vmem:[#allocation3 + $0x18] sm:$0x1] 0.0
    %4800 = vst [vmem:[#allocation3 + $0x30] sm:$0x1] 0.0
    %4801 = vst [vmem:[#allocation3 + $0x48] sm:$0x1] 0.0
    %4802 = vst [vmem:[#allocation3 + $0x60] sm:$0x1] 0.0
    %4803 = vst [vmem:[#allocation3 + $0x78] sm:$0x1] 0.0
    %4804 = vst [vmem:[#allocation3 + $0x90] sm:$0x1] 0.0
    %4805 = vst [vmem:[#allocation3 + $0xa8] sm:$0x1] 0.0
    %4806 = vst [vmem:[#allocation3 + $0xc0] sm:$0x1] 0.0
    %4807 = vst [vmem:[#allocation3 + $0xd8] sm:$0x1] 0.0
    %4808 = vst [vmem:[#allocation3 + $0xf0] sm:$0x1] 0.0
    %4809 = vst [vmem:[#allocation3 + $0x108] sm:$0x1] 0.0
    %4810 = vst [vmem:[#allocation3 + $0x120] sm:$0x1] 0.0
    %4811 = vst [vmem:[#allocation3 + $0x138] sm:$0x1] 0.0
    %4812 = vst [vmem:[#allocation3 + $0x150] sm:$0x1] 0.0
    %4813 = vst [vmem:[#allocation3 + $0x168] sm:$0x1] 0.0
    %4814 = vst [vmem:[#allocation3 + $0x180] sm:$0x1] 0.0
    %4815 = vst [vmem:[#allocation3 + $0x198] sm:$0x1] 0.0
    %4816 = vst [vmem:[#allocation3 + $0x1b0] sm:$0x1] 0.0
    %4817 = vst [vmem:[#allocation3 + $0x1c8] sm:$0x1] 0.0
    %4818 = vst [vmem:[#allocation3 + $0x1e0] sm:$0x1] 0.0
    %4819 = vst [vmem:[#allocation3 + $0x1f8] sm:$0x1] 0.0
    %4820 = vst [vmem:[#allocation3 + $0x210] sm:$0x1] 0.0
    %4821 = vst [vmem:[#allocation3 + $0x228] sm:$0x1] 0.0
    %4822 = vst [vmem:[#allocation3 + $0x240] sm:$0x1] 0.0
    %4823 = vst [vmem:[#allocation3 + $0x258] sm:$0x1] 0.0
    %4824 = vst [vmem:[#allocation3 + $0x270] sm:$0x1] 0.0
    %4825 = vst [vmem:[#allocation3 + $0x288] sm:$0x1] 0.0
    %4826 = vst [vmem:[#allocation3 + $0x2a0] sm:$0x1] 0.0
    %4827 = vst [vmem:[#allocation3 + $0x2b8] sm:$0x1] 0.0
    %4828 = vst [vmem:[#allocation3 + $0x2d0] sm:$0x1] 0.0
    %4829 = vst [vmem:[#allocation3 + $0x2e8] sm:$0x1] 0.0
    %4830 = vst [vmem:[#allocation3 + $0x300] sm:$0x1] 0.0
    %4831 = vst [vmem:[#allocation3 + $0x318] sm:$0x1] 0.0
    %4832 = vst [vmem:[#allocation3 + $0x330] sm:$0x1] 0.0
    %4833 = vst [vmem:[#allocation3 + $0x348] sm:$0x1] 0.0
    %4834 = vst [vmem:[#allocation3 + $0x11] sm:$0x1] 0.0
    %4835 = vst [vmem:[#allocation3 + $0x29] sm:$0x1] 0.0
    %4836 = vst [vmem:[#allocation3 + $0x41] sm:$0x1] 0.0
    %4837 = vst [vmem:[#allocation3 + $0x59] sm:$0x1] 0.0
    %4838 = vst [vmem:[#allocation3 + $0x71] sm:$0x1] 0.0
    %4839 = vst [vmem:[#allocation3 + $0x89] sm:$0x1] 0.0
    %4840 = vst [vmem:[#allocation3 + $0xa1] sm:$0x1] 0.0
    %4841 = vst [vmem:[#allocation3 + $0xb9] sm:$0x1] 0.0
    %4842 = vst [vmem:[#allocation3 + $0xd1] sm:$0x1] 0.0
    %4843 = vst [vmem:[#allocation3 + $0xe9] sm:$0x1] 0.0
    %4844 = vst [vmem:[#allocation3 + $0x101] sm:$0x1] 0.0
    %4845 = vst [vmem:[#allocation3 + $0x119] sm:$0x1] 0.0
    %4846 = vst [vmem:[#allocation3 + $0x131] sm:$0x1] 0.0
    %4847 = vst [vmem:[#allocation3 + $0x149] sm:$0x1] 0.0
    %4848 = vst [vmem:[#allocation3 + $0x161] sm:$0x1] 0.0
    %4849 = vst [vmem:[#allocation3 + $0x179] sm:$0x1] 0.0
    %4850 = vst [vmem:[#allocation3 + $0x191] sm:$0x1] 0.0
    %4851 = vst [vmem:[#allocation3 + $0x1a9] sm:$0x1] 0.0
    %4852 = vst [vmem:[#allocation3 + $0x1c1] sm:$0x1] 0.0
    %4853 = vst [vmem:[#allocation3 + $0x1d9] sm:$0x1] 0.0
    %4854 = vst [vmem:[#allocation3 + $0x1f1] sm:$0x1] 0.0
    %4855 = vst [vmem:[#allocation3 + $0x209] sm:$0x1] 0.0
    %4856 = vst [vmem:[#allocation3 + $0x221] sm:$0x1] 0.0
    %4857 = vst [vmem:[#allocation3 + $0x239] sm:$0x1] 0.0
    %4858 = vst [vmem:[#allocation3 + $0x251] sm:$0x1] 0.0
    %4859 = vst [vmem:[#allocation3 + $0x269] sm:$0x1] 0.0
    %4860 = vst [vmem:[#allocation3 + $0x281] sm:$0x1] 0.0
    %4861 = vst [vmem:[#allocation3 + $0x299] sm:$0x1] 0.0
    %4862 = vst [vmem:[#allocation3 + $0x2b1] sm:$0x1] 0.0
    %4863 = vst [vmem:[#allocation3 + $0x2c9] sm:$0x1] 0.0
    %4864 = vst [vmem:[#allocation3 + $0x2e1] sm:$0x1] 0.0
    %4865 = vst [vmem:[#allocation3 + $0x2f9] sm:$0x1] 0.0
    %4866 = vst [vmem:[#allocation3 + $0x311] sm:$0x1] 0.0
    %4867 = vst [vmem:[#allocation3 + $0x329] sm:$0x1] 0.0
    %4868 = vst [vmem:[#allocation3 + $0x341] sm:$0x1] 0.0
    %4869 = vst [vmem:[#allocation3 + $0x359] sm:$0x1] 0.0
    %s4870 = scalar_lea.vmem [#allocation3], 24
    %4871 = vst [vmem:[%s4870 + $0x1] sm:$0xff] %v4721
    %4872 = vst [vmem:[%s4870 + $0x9] sm:$0xff] %v4722
    %4873 = vst [vmem:[%s4870 + $0x19] sm:$0xff] %v4723
    %4874 = vst [vmem:[%s4870 + $0x21] sm:$0xff] %v4724
    %4875 = vst [vmem:[%s4870 + $0x31] sm:$0xff] %v4725
    %4876 = vst [vmem:[%s4870 + $0x39] sm:$0xff] %v4726
    %4877 = vst [vmem:[%s4870 + $0x49] sm:$0xff] %v4727
    %4878 = vst [vmem:[%s4870 + $0x51] sm:$0xff] %v4728
    %4879 = vst [vmem:[%s4870 + $0x61] sm:$0xff] %v4729
    %4880 = vst [vmem:[%s4870 + $0x69] sm:$0xff] %v4730
    %4881 = vst [vmem:[%s4870 + $0x79] sm:$0xff] %v4731
    %4882 = vst [vmem:[%s4870 + $0x81] sm:$0xff] %v4732
    %4883 = vst [vmem:[%s4870 + $0x91] sm:$0xff] %v4733
    %4884 = vst [vmem:[%s4870 + $0x99] sm:$0xff] %v4734
    %4885 = vst [vmem:[%s4870 + $0xa9] sm:$0xff] %v4735
    %4886 = vst [vmem:[%s4870 + $0xb1] sm:$0xff] %v4736
    %4887 = vst [vmem:[%s4870 + $0xc1] sm:$0xff] %v4737
    %4888 = vst [vmem:[%s4870 + $0xc9] sm:$0xff] %v4738
    %4889 = vst [vmem:[%s4870 + $0xd9] sm:$0xff] %v4739
    %4890 = vst [vmem:[%s4870 + $0xe1] sm:$0xff] %v4740
    %4891 = vst [vmem:[%s4870 + $0xf1] sm:$0xff] %v4741
    %4892 = vst [vmem:[%s4870 + $0xf9] sm:$0xff] %v4742
    %4893 = vst [vmem:[%s4870 + $0x109] sm:$0xff] %v4743
    %4894 = vst [vmem:[%s4870 + $0x111] sm:$0xff] %v4744
    %4895 = vst [vmem:[%s4870 + $0x121] sm:$0xff] %v4745
    %4896 = vst [vmem:[%s4870 + $0x129] sm:$0xff] %v4746
    %4897 = vst [vmem:[%s4870 + $0x139] sm:$0xff] %v4747
    %4898 = vst [vmem:[%s4870 + $0x141] sm:$0xff] %v4748
    %4899 = vst [vmem:[%s4870 + $0x151] sm:$0xff] %v4749
    %4900 = vst [vmem:[%s4870 + $0x159] sm:$0xff] %v4750
    %4901 = vst [vmem:[%s4870 + $0x169] sm:$0xff] %v4751
    %4902 = vst [vmem:[%s4870 + $0x171] sm:$0xff] %v4752
    %4903 = vst [vmem:[%s4870 + $0x1b1] sm:$0xff] %v4753
    %4904 = vst [vmem:[%s4870 + $0x1b9] sm:$0xff] %v4754
    %4905 = vst [vmem:[%s4870 + $0x1c9] sm:$0xff] %v4755
    %4906 = vst [vmem:[%s4870 + $0x1d1] sm:$0xff] %v4756
    %4907 = vst [vmem:[%s4870 + $0x1e1] sm:$0xff] %v4757
    %4908 = vst [vmem:[%s4870 + $0x1e9] sm:$0xff] %v4758
    %4909 = vst [vmem:[%s4870 + $0x1f9] sm:$0xff] %v4759
    %4910 = vst [vmem:[%s4870 + $0x201] sm:$0xff] %v4760
    %4911 = vst [vmem:[%s4870 + $0x211] sm:$0xff] %v4761
    %4912 = vst [vmem:[%s4870 + $0x219] sm:$0xff] %v4762
    %4913 = vst [vmem:[%s4870 + $0x229] sm:$0xff] %v4763
    %4914 = vst [vmem:[%s4870 + $0x231] sm:$0xff] %v4764
    %4915 = vst [vmem:[%s4870 + $0x241] sm:$0xff] %v4765
    %4916 = vst [vmem:[%s4870 + $0x249] sm:$0xff] %v4766
    %4917 = vst [vmem:[%s4870 + $0x259] sm:$0xff] %v4767
    %4918 = vst [vmem:[%s4870 + $0x261] sm:$0xff] %v4768
    %4919 = vst [vmem:[%s4870 + $0x271] sm:$0xff] %v4769
    %4920 = vst [vmem:[%s4870 + $0x279] sm:$0xff] %v4770
    %4921 = vst [vmem:[%s4870 + $0x289] sm:$0xff] %v4771
    %4922 = vst [vmem:[%s4870 + $0x291] sm:$0xff] %v4772
    %4923 = vst [vmem:[%s4870 + $0x2a1] sm:$0xff] %v4773
    %4924 = vst [vmem:[%s4870 + $0x2a9] sm:$0xff] %v4774
    %4925 = vst [vmem:[%s4870 + $0x2b9] sm:$0xff] %v4775
    %4926 = vst [vmem:[%s4870 + $0x2c1] sm:$0xff] %v4776
    %4927 = vst [vmem:[%s4870 + $0x2d1] sm:$0xff] %v4777
    %4928 = vst [vmem:[%s4870 + $0x2d9] sm:$0xff] %v4778
    %4929 = vst [vmem:[%s4870 + $0x2e9] sm:$0xff] %v4779
    %4930 = vst [vmem:[%s4870 + $0x2f1] sm:$0xff] %v4780
    %4931 = vst [vmem:[%s4870 + $0x301] sm:$0xff] %v4781
    %4932 = vst [vmem:[%s4870 + $0x309] sm:$0xff] %v4782
    %4933 = vst [vmem:[%s4870 + $0x319] sm:$0xff] %v4783
    %4934 = vst [vmem:[%s4870 + $0x321] sm:$0xff] %v4784
    %v4935 = vld [vmem:[#allocation3] sm:$0xff]
    %v4936 = vld [vmem:[#allocation3 + $0x8] sm:$0xff]
    %v4937 = vld [vmem:[#allocation3 + $0x18] sm:$0xff]
    %v4938 = vld [vmem:[#allocation3 + $0x20] sm:$0xff]
    %v4939 = vld [vmem:[#allocation3 + $0x30] sm:$0xff]
    %v4940 = vld [vmem:[#allocation3 + $0x38] sm:$0xff]
    %v4941 = vld [vmem:[#allocation3 + $0x48] sm:$0xff]
    %v4942 = vld [vmem:[#allocation3 + $0x50] sm:$0xff]
    %v4943 = vld [vmem:[#allocation3 + $0x60] sm:$0xff]
    %v4944 = vld [vmem:[#allocation3 + $0x68] sm:$0xff]
    %v4945 = vld [vmem:[#allocation3 + $0x78] sm:$0xff]
    %v4946 = vld [vmem:[#allocation3 + $0x80] sm:$0xff]
    %v4947 = vld [vmem:[#allocation3 + $0x90] sm:$0xff]
    %v4948 = vld [vmem:[#allocation3 + $0x98] sm:$0xff]
    %v4949 = vld [vmem:[#allocation3 + $0xa8] sm:$0xff]
    %v4950 = vld [vmem:[#allocation3 + $0xb0] sm:$0xff]
    %v4951 = vld [vmem:[#allocation3 + $0xc0] sm:$0xff]
    %v4952 = vld [vmem:[#allocation3 + $0xc8] sm:$0xff]
    %v4953 = vld [vmem:[#allocation3 + $0xd8] sm:$0xff]
    %v4954 = vld [vmem:[#allocation3 + $0xe0] sm:$0xff]
    %v4955 = vld [vmem:[#allocation3 + $0xf0] sm:$0xff]
    %v4956 = vld [vmem:[#allocation3 + $0xf8] sm:$0xff]
    %v4957 = vld [vmem:[#allocation3 + $0x108] sm:$0xff]
    %v4958 = vld [vmem:[#allocation3 + $0x110] sm:$0xff]
    %v4959 = vld [vmem:[#allocation3 + $0x120] sm:$0xff]
    %v4960 = vld [vmem:[#allocation3 + $0x128] sm:$0xff]
    %v4961 = vld [vmem:[#allocation3 + $0x138] sm:$0xff]
    %v4962 = vld [vmem:[#allocation3 + $0x140] sm:$0xff]
    %v4963 = vld [vmem:[#allocation3 + $0x150] sm:$0xff]
    %v4964 = vld [vmem:[#allocation3 + $0x158] sm:$0xff]
    %v4965 = vld [vmem:[#allocation3 + $0x168] sm:$0xff]
    %v4966 = vld [vmem:[#allocation3 + $0x170] sm:$0xff]
    %v4967 = vld [vmem:[#allocation3 + $0x1b0] sm:$0xff]
    %v4968 = vld [vmem:[#allocation3 + $0x1b8] sm:$0xff]
    %v4969 = vld [vmem:[#allocation3 + $0x1c8] sm:$0xff]
    %v4970 = vld [vmem:[#allocation3 + $0x1d0] sm:$0xff]
    %v4971 = vld [vmem:[#allocation3 + $0x1e0] sm:$0xff]
    %v4972 = vld [vmem:[#allocation3 + $0x1e8] sm:$0xff]
    %v4973 = vld [vmem:[#allocation3 + $0x1f8] sm:$0xff]
    %v4974 = vld [vmem:[#allocation3 + $0x200] sm:$0xff]
    %v4975 = vld [vmem:[#allocation3 + $0x210] sm:$0xff]
    %v4976 = vld [vmem:[#allocation3 + $0x218] sm:$0xff]
    %v4977 = vld [vmem:[#allocation3 + $0x228] sm:$0xff]
    %v4978 = vld [vmem:[#allocation3 + $0x230] sm:$0xff]
    %v4979 = vld [vmem:[#allocation3 + $0x240] sm:$0xff]
    %v4980 = vld [vmem:[#allocation3 + $0x248] sm:$0xff]
    %v4981 = vld [vmem:[#allocation3 + $0x258] sm:$0xff]
    %v4982 = vld [vmem:[#allocation3 + $0x260] sm:$0xff]
    %v4983 = vld [vmem:[#allocation3 + $0x270] sm:$0xff]
    %v4984 = vld [vmem:[#allocation3 + $0x278] sm:$0xff]
    %v4985 = vld [vmem:[#allocation3 + $0x288] sm:$0xff]
    %v4986 = vld [vmem:[#allocation3 + $0x290] sm:$0xff]
    %v4987 = vld [vmem:[#allocation3 + $0x2a0] sm:$0xff]
    %v4988 = vld [vmem:[#allocation3 + $0x2a8] sm:$0xff]
    %v4989 = vld [vmem:[#allocation3 + $0x2b8] sm:$0xff]
    %v4990 = vld [vmem:[#allocation3 + $0x2c0] sm:$0xff]
    %v4991 = vld [vmem:[#allocation3 + $0x2d0] sm:$0xff]
    %v4992 = vld [vmem:[#allocation3 + $0x2d8] sm:$0xff]
    %v4993 = vld [vmem:[#allocation3 + $0x2e8] sm:$0xff]
    %v4994 = vld [vmem:[#allocation3 + $0x2f0] sm:$0xff]
    %v4995 = vld [vmem:[#allocation3 + $0x300] sm:$0xff]
    %v4996 = vld [vmem:[#allocation3 + $0x308] sm:$0xff]
    %v4997 = vld [vmem:[#allocation3 + $0x318] sm:$0xff]
    %v4998 = vld [vmem:[#allocation3 + $0x320] sm:$0xff]
    %v4999 = vpack.c.bf16 %v4936, %v4935
    %v5000 = vpack.c.bf16 %v4938, %v4937
    %v5001 = vpack.c.bf16 %v4940, %v4939
    %v5002 = vpack.c.bf16 %v4942, %v4941
    %v5003 = vpack.c.bf16 %v4944, %v4943
    %v5004 = vpack.c.bf16 %v4946, %v4945
    %v5005 = vpack.c.bf16 %v4948, %v4947
    %v5006 = vpack.c.bf16 %v4950, %v4949
    %v5007 = vpack.c.bf16 %v4952, %v4951
    %v5008 = vpack.c.bf16 %v4954, %v4953
    %v5009 = vpack.c.bf16 %v4956, %v4955
    %v5010 = vpack.c.bf16 %v4958, %v4957
    %v5011 = vpack.c.bf16 %v4960, %v4959
    %v5012 = vpack.c.bf16 %v4962, %v4961
    %v5013 = vpack.c.bf16 %v4964, %v4963
    %v5014 = vpack.c.bf16 %v4966, %v4965
    %v5015 = vpack.c.bf16 %v4968, %v4967
    %v5016 = vpack.c.bf16 %v4970, %v4969
    %v5017 = vpack.c.bf16 %v4972, %v4971
    %v5018 = vpack.c.bf16 %v4974, %v4973
    %v5019 = vpack.c.bf16 %v4976, %v4975
    %v5020 = vpack.c.bf16 %v4978, %v4977
    %v5021 = vpack.c.bf16 %v4980, %v4979
    %v5022 = vpack.c.bf16 %v4982, %v4981
    %v5023 = vpack.c.bf16 %v4984, %v4983
    %v5024 = vpack.c.bf16 %v4986, %v4985
    %v5025 = vpack.c.bf16 %v4988, %v4987
    %v5026 = vpack.c.bf16 %v4990, %v4989
    %v5027 = vpack.c.bf16 %v4992, %v4991
    %v5028 = vpack.c.bf16 %v4994, %v4993
    %v5029 = vpack.c.bf16 %v4996, %v4995
    %v5030 = vpack.c.bf16 %v4998, %v4997
    %5031 = vst [vmem:[#allocation4] sm:$0xff] %v4999
    %5032 = vst [vmem:[#allocation4 + $0x48] sm:$0xff] %v5000
    %5033 = vst [vmem:[#allocation4 + $0x90] sm:$0xff] %v5001
    %5034 = vst [vmem:[#allocation4 + $0xd8] sm:$0xff] %v5002
    %5035 = vst [vmem:[#allocation4 + $0x120] sm:$0xff] %v5003
    %5036 = vst [vmem:[#allocation4 + $0x168] sm:$0xff] %v5004
    %5037 = vst [vmem:[#allocation4 + $0x1b0] sm:$0xff] %v5005
    %5038 = vst [vmem:[#allocation4 + $0x1f8] sm:$0xff] %v5006
    %5039 = vst [vmem:[#allocation4 + $0x240] sm:$0xff] %v5007
    %5040 = vst [vmem:[#allocation4 + $0x288] sm:$0xff] %v5008
    %5041 = vst [vmem:[#allocation4 + $0x2d0] sm:$0xff] %v5009
    %5042 = vst [vmem:[#allocation4 + $0x318] sm:$0xff] %v5010
    %5043 = vst [vmem:[#allocation4 + $0x360] sm:$0xff] %v5011
    %5044 = vst [vmem:[#allocation4 + $0x3a8] sm:$0xff] %v5012
    %5045 = vst [vmem:[#allocation4 + $0x3f0] sm:$0xff] %v5013
    %5046 = vst [vmem:[#allocation4 + $0x438] sm:$0xff] %v5014
    %5047 = vst [vmem:[#allocation4 + $0x480] sm:$0xff] %v5015
    %5048 = vst [vmem:[#allocation4 + $0x4c8] sm:$0xff] %v5016
    %5049 = vst [vmem:[#allocation4 + $0x510] sm:$0xff] %v5017
    %5050 = vst [vmem:[#allocation4 + $0x558] sm:$0xff] %v5018
    %5051 = vst [vmem:[#allocation4 + $0x5a0] sm:$0xff] %v5019
    %5052 = vst [vmem:[#allocation4 + $0x5e8] sm:$0xff] %v5020
    %5053 = vst [vmem:[#allocation4 + $0x630] sm:$0xff] %v5021
    %5054 = vst [vmem:[#allocation4 + $0x678] sm:$0xff] %v5022
    %5055 = vst [vmem:[#allocation4 + $0x6c0] sm:$0xff] %v5023
    %5056 = vst [vmem:[#allocation4 + $0x708] sm:$0xff] %v5024
    %5057 = vst [vmem:[#allocation4 + $0x750] sm:$0xff] %v5025
    %5058 = vst [vmem:[#allocation4 + $0x798] sm:$0xff] %v5026
    %5059 = vst [vmem:[#allocation4 + $0x7e0] sm:$0xff] %v5027
    %5060 = vst [vmem:[#allocation4 + $0x828] sm:$0xff] %v5028
    %5061 = vst [vmem:[#allocation4 + $0x870] sm:$0xff] %v5029
    %5062 = vst [vmem:[#allocation4 + $0x8b8] sm:$0xff] %v5030
    %v5063 = vld [vmem:[#allocation3 + $0x1] sm:$0xff]
    %v5064 = vld [vmem:[#allocation3 + $0x9] sm:$0xff]
    %v5065 = vld [vmem:[#allocation3 + $0x19] sm:$0xff]
    %v5066 = vld [vmem:[#allocation3 + $0x21] sm:$0xff]
    %v5067 = vld [vmem:[#allocation3 + $0x31] sm:$0xff]
    %v5068 = vld [vmem:[#allocation3 + $0x39] sm:$0xff]
    %v5069 = vld [vmem:[#allocation3 + $0x49] sm:$0xff]
    %v5070 = vld [vmem:[#allocation3 + $0x51] sm:$0xff]
    %v5071 = vld [vmem:[#allocation3 + $0x61] sm:$0xff]
    %v5072 = vld [vmem:[#allocation3 + $0x69] sm:$0xff]
    %v5073 = vld [vmem:[#allocation3 + $0x79] sm:$0xff]
    %v5074 = vld [vmem:[#allocation3 + $0x81] sm:$0xff]
    %v5075 = vld [vmem:[#allocation3 + $0x91] sm:$0xff]
    %v5076 = vld [vmem:[#allocation3 + $0x99] sm:$0xff]
    %v5077 = vld [vmem:[#allocation3 + $0xa9] sm:$0xff]
    %v5078 = vld [vmem:[#allocation3 + $0xb1] sm:$0xff]
    %v5079 = vld [vmem:[#allocation3 + $0xc1] sm:$0xff]
    %v5080 = vld [vmem:[#allocation3 + $0xc9] sm:$0xff]
    %v5081 = vld [vmem:[#allocation3 + $0xd9] sm:$0xff]
    %v5082 = vld [vmem:[#allocation3 + $0xe1] sm:$0xff]
    %v5083 = vld [vmem:[#allocation3 + $0xf1] sm:$0xff]
    %v5084 = vld [vmem:[#allocation3 + $0xf9] sm:$0xff]
    %v5085 = vld [vmem:[#allocation3 + $0x109] sm:$0xff]
    %v5086 = vld [vmem:[#allocation3 + $0x111] sm:$0xff]
    %v5087 = vld [vmem:[#allocation3 + $0x121] sm:$0xff]
    %v5088 = vld [vmem:[#allocation3 + $0x129] sm:$0xff]
    %v5089 = vld [vmem:[#allocation3 + $0x139] sm:$0xff]
    %v5090 = vld [vmem:[#allocation3 + $0x141] sm:$0xff]
    %v5091 = vld [vmem:[#allocation3 + $0x151] sm:$0xff]
    %v5092 = vld [vmem:[#allocation3 + $0x159] sm:$0xff]
    %v5093 = vld [vmem:[#allocation3 + $0x169] sm:$0xff]
    %v5094 = vld [vmem:[#allocation3 + $0x171] sm:$0xff]
    %v5095 = vld [vmem:[#allocation3 + $0x1b1] sm:$0xff]
    %v5096 = vld [vmem:[#allocation3 + $0x1b9] sm:$0xff]
    %v5097 = vld [vmem:[#allocation3 + $0x1c9] sm:$0xff]
    %v5098 = vld [vmem:[#allocation3 + $0x1d1] sm:$0xff]
    %v5099 = vld [vmem:[#allocation3 + $0x1e1] sm:$0xff]
    %v5100 = vld [vmem:[#allocation3 + $0x1e9] sm:$0xff]
    %v5101 = vld [vmem:[#allocation3 + $0x1f9] sm:$0xff]
    %v5102 = vld [vmem:[#allocation3 + $0x201] sm:$0xff]
    %v5103 = vld [vmem:[#allocation3 + $0x211] sm:$0xff]
    %v5104 = vld [vmem:[#allocation3 + $0x219] sm:$0xff]
    %v5105 = vld [vmem:[#allocation3 + $0x229] sm:$0xff]
    %v5106 = vld [vmem:[#allocation3 + $0x231] sm:$0xff]
    %v5107 = vld [vmem:[#allocation3 + $0x241] sm:$0xff]
    %v5108 = vld [vmem:[#allocation3 + $0x249] sm:$0xff]
    %v5109 = vld [vmem:[#allocation3 + $0x259] sm:$0xff]
    %v5110 = vld [vmem:[#allocation3 + $0x261] sm:$0xff]
    %v5111 = vld [vmem:[#allocation3 + $0x271] sm:$0xff]
    %v5112 = vld [vmem:[#allocation3 + $0x279] sm:$0xff]
    %v5113 = vld [vmem:[#allocation3 + $0x289] sm:$0xff]
    %v5114 = vld [vmem:[#allocation3 + $0x291] sm:$0xff]
    %v5115 = vld [vmem:[#allocation3 + $0x2a1] sm:$0xff]
    %v5116 = vld [vmem:[#allocation3 + $0x2a9] sm:$0xff]
    %v5117 = vld [vmem:[#allocation3 + $0x2b9] sm:$0xff]
    %v5118 = vld [vmem:[#allocation3 + $0x2c1] sm:$0xff]
    %v5119 = vld [vmem:[#allocation3 + $0x2d1] sm:$0xff]
    %v5120 = vld [vmem:[#allocation3 + $0x2d9] sm:$0xff]
    %v5121 = vld [vmem:[#allocation3 + $0x2e9] sm:$0xff]
    %v5122 = vld [vmem:[#allocation3 + $0x2f1] sm:$0xff]
    %v5123 = vld [vmem:[#allocation3 + $0x301] sm:$0xff]
    %v5124 = vld [vmem:[#allocation3 + $0x309] sm:$0xff]
    %v5125 = vld [vmem:[#allocation3 + $0x319] sm:$0xff]
    %v5126 = vld [vmem:[#allocation3 + $0x321] sm:$0xff]
    %v5127 = vpack.c.bf16 %v5064, %v5063
    %v5128 = vpack.c.bf16 %v5066, %v5065
    %v5129 = vpack.c.bf16 %v5068, %v5067
    %v5130 = vpack.c.bf16 %v5070, %v5069
    %v5131 = vpack.c.bf16 %v5072, %v5071
    %v5132 = vpack.c.bf16 %v5074, %v5073
    %v5133 = vpack.c.bf16 %v5076, %v5075
    %v5134 = vpack.c.bf16 %v5078, %v5077
    %v5135 = vpack.c.bf16 %v5080, %v5079
    %v5136 = vpack.c.bf16 %v5082, %v5081
    %v5137 = vpack.c.bf16 %v5084, %v5083
    %v5138 = vpack.c.bf16 %v5086, %v5085
    %v5139 = vpack.c.bf16 %v5088, %v5087
    %v5140 = vpack.c.bf16 %v5090, %v5089
    %v5141 = vpack.c.bf16 %v5092, %v5091
    %v5142 = vpack.c.bf16 %v5094, %v5093
    %v5143 = vpack.c.bf16 %v5096, %v5095
    %v5144 = vpack.c.bf16 %v5098, %v5097
    %v5145 = vpack.c.bf16 %v5100, %v5099
    %v5146 = vpack.c.bf16 %v5102, %v5101
    %v5147 = vpack.c.bf16 %v5104, %v5103
    %v5148 = vpack.c.bf16 %v5106, %v5105
    %v5149 = vpack.c.bf16 %v5108, %v5107
    %v5150 = vpack.c.bf16 %v5110, %v5109
    %v5151 = vpack.c.bf16 %v5112, %v5111
    %v5152 = vpack.c.bf16 %v5114, %v5113
    %v5153 = vpack.c.bf16 %v5116, %v5115
    %v5154 = vpack.c.bf16 %v5118, %v5117
    %v5155 = vpack.c.bf16 %v5120, %v5119
    %v5156 = vpack.c.bf16 %v5122, %v5121
    %v5157 = vpack.c.bf16 %v5124, %v5123
    %v5158 = vpack.c.bf16 %v5126, %v5125
    %5159 = vst [vmem:[#allocation4 + $0x8] sm:$0xff] %v5127
    %5160 = vst [vmem:[#allocation4 + $0x50] sm:$0xff] %v5128
    %5161 = vst [vmem:[#allocation4 + $0x98] sm:$0xff] %v5129
    %5162 = vst [vmem:[#allocation4 + $0xe0] sm:$0xff] %v5130
    %5163 = vst [vmem:[#allocation4 + $0x128] sm:$0xff] %v5131
    %5164 = vst [vmem:[#allocation4 + $0x170] sm:$0xff] %v5132
    %5165 = vst [vmem:[#allocation4 + $0x1b8] sm:$0xff] %v5133
    %5166 = vst [vmem:[#allocation4 + $0x200] sm:$0xff] %v5134
    %5167 = vst [vmem:[#allocation4 + $0x248] sm:$0xff] %v5135
    %5168 = vst [vmem:[#allocation4 + $0x290] sm:$0xff] %v5136
    %5169 = vst [vmem:[#allocation4 + $0x2d8] sm:$0xff] %v5137
    %5170 = vst [vmem:[#allocation4 + $0x320] sm:$0xff] %v5138
    %5171 = vst [vmem:[#allocation4 + $0x368] sm:$0xff] %v5139
    %5172 = vst [vmem:[#allocation4 + $0x3b0] sm:$0xff] %v5140
    %5173 = vst [vmem:[#allocation4 + $0x3f8] sm:$0xff] %v5141
    %5174 = vst [vmem:[#allocation4 + $0x440] sm:$0xff] %v5142
    %5175 = vst [vmem:[#allocation4 + $0x488] sm:$0xff] %v5143
    %5176 = vst [vmem:[#allocation4 + $0x4d0] sm:$0xff] %v5144
    %5177 = vst [vmem:[#allocation4 + $0x518] sm:$0xff] %v5145
    %5178 = vst [vmem:[#allocation4 + $0x560] sm:$0xff] %v5146
    %5179 = vst [vmem:[#allocation4 + $0x5a8] sm:$0xff] %v5147
    %5180 = vst [vmem:[#allocation4 + $0x5f0] sm:$0xff] %v5148
    %5181 = vst [vmem:[#allocation4 + $0x638] sm:$0xff] %v5149
    %5182 = vst [vmem:[#allocation4 + $0x680] sm:$0xff] %v5150
    %5183 = vst [vmem:[#allocation4 + $0x6c8] sm:$0xff] %v5151
    %5184 = vst [vmem:[#allocation4 + $0x710] sm:$0xff] %v5152
    %5185 = vst [vmem:[#allocation4 + $0x758] sm:$0xff] %v5153
    %5186 = vst [vmem:[#allocation4 + $0x7a0] sm:$0xff] %v5154
    %5187 = vst [vmem:[#allocation4 + $0x7e8] sm:$0xff] %v5155
    %5188 = vst [vmem:[#allocation4 + $0x830] sm:$0xff] %v5156
    %5189 = vst [vmem:[#allocation4 + $0x878] sm:$0xff] %v5157
    %5190 = vst [vmem:[#allocation4 + $0x8c0] sm:$0xff] %v5158
    %v5191 = vld [vmem:[#allocation3 + $0x2] sm:$0xff]
    %v5192 = vld [vmem:[#allocation3 + $0xa] sm:$0xff]
    %v5193 = vld [vmem:[#allocation3 + $0x1a] sm:$0xff]
    %v5194 = vld [vmem:[#allocation3 + $0x22] sm:$0xff]
    %v5195 = vld [vmem:[#allocation3 + $0x32] sm:$0xff]
    %v5196 = vld [vmem:[#allocation3 + $0x3a] sm:$0xff]
    %v5197 = vld [vmem:[#allocation3 + $0x4a] sm:$0xff]
    %v5198 = vld [vmem:[#allocation3 + $0x52] sm:$0xff]
    %v5199 = vld [vmem:[#allocation3 + $0x62] sm:$0xff]
    %v5200 = vld [vmem:[#allocation3 + $0x6a] sm:$0xff]
    %v5201 = vld [vmem:[#allocation3 + $0x7a] sm:$0xff]
    %v5202 = vld [vmem:[#allocation3 + $0x82] sm:$0xff]
    %v5203 = vld [vmem:[#allocation3 + $0x92] sm:$0xff]
    %v5204 = vld [vmem:[#allocation3 + $0x9a] sm:$0xff]
    %v5205 = vld [vmem:[#allocation3 + $0xaa] sm:$0xff]
    %v5206 = vld [vmem:[#allocation3 + $0xb2] sm:$0xff]
    %v5207 = vld [vmem:[#allocation3 + $0xc2] sm:$0xff]
    %v5208 = vld [vmem:[#allocation3 + $0xca] sm:$0xff]
    %v5209 = vld [vmem:[#allocation3 + $0xda] sm:$0xff]
    %v5210 = vld [vmem:[#allocation3 + $0xe2] sm:$0xff]
    %v5211 = vld [vmem:[#allocation3 + $0xf2] sm:$0xff]
    %v5212 = vld [vmem:[#allocation3 + $0xfa] sm:$0xff]
    %v5213 = vld [vmem:[#allocation3 + $0x10a] sm:$0xff]
    %v5214 = vld [vmem:[#allocation3 + $0x112] sm:$0xff]
    %v5215 = vld [vmem:[#allocation3 + $0x122] sm:$0xff]
    %v5216 = vld [vmem:[#allocation3 + $0x12a] sm:$0xff]
    %v5217 = vld [vmem:[#allocation3 + $0x13a] sm:$0xff]
    %v5218 = vld [vmem:[#allocation3 + $0x142] sm:$0xff]
    %v5219 = vld [vmem:[#allocation3 + $0x152] sm:$0xff]
    %v5220 = vld [vmem:[#allocation3 + $0x15a] sm:$0xff]
    %v5221 = vld [vmem:[#allocation3 + $0x16a] sm:$0xff]
    %v5222 = vld [vmem:[#allocation3 + $0x172] sm:$0xff]
    %v5223 = vld [vmem:[#allocation3 + $0x1b2] sm:$0xff]
    %v5224 = vld [vmem:[#allocation3 + $0x1ba] sm:$0xff]
    %v5225 = vld [vmem:[#allocation3 + $0x1ca] sm:$0xff]
    %v5226 = vld [vmem:[#allocation3 + $0x1d2] sm:$0xff]
    %v5227 = vld [vmem:[#allocation3 + $0x1e2] sm:$0xff]
    %v5228 = vld [vmem:[#allocation3 + $0x1ea] sm:$0xff]
    %v5229 = vld [vmem:[#allocation3 + $0x1fa] sm:$0xff]
    %v5230 = vld [vmem:[#allocation3 + $0x202] sm:$0xff]
    %v5231 = vld [vmem:[#allocation3 + $0x212] sm:$0xff]
    %v5232 = vld [vmem:[#allocation3 + $0x21a] sm:$0xff]
    %v5233 = vld [vmem:[#allocation3 + $0x22a] sm:$0xff]
    %v5234 = vld [vmem:[#allocation3 + $0x232] sm:$0xff]
    %v5235 = vld [vmem:[#allocation3 + $0x242] sm:$0xff]
    %v5236 = vld [vmem:[#allocation3 + $0x24a] sm:$0xff]
    %v5237 = vld [vmem:[#allocation3 + $0x25a] sm:$0xff]
    %v5238 = vld [vmem:[#allocation3 + $0x262] sm:$0xff]
    %v5239 = vld [vmem:[#allocation3 + $0x272] sm:$0xff]
    %v5240 = vld [vmem:[#allocation3 + $0x27a] sm:$0xff]
    %v5241 = vld [vmem:[#allocation3 + $0x28a] sm:$0xff]
    %v5242 = vld [vmem:[#allocation3 + $0x292] sm:$0xff]
    %v5243 = vld [vmem:[#allocation3 + $0x2a2] sm:$0xff]
    %v5244 = vld [vmem:[#allocation3 + $0x2aa] sm:$0xff]
    %v5245 = vld [vmem:[#allocation3 + $0x2ba] sm:$0xff]
    %v5246 = vld [vmem:[#allocation3 + $0x2c2] sm:$0xff]
    %v5247 = vld [vmem:[#allocation3 + $0x2d2] sm:$0xff]
    %v5248 = vld [vmem:[#allocation3 + $0x2da] sm:$0xff]
    %v5249 = vld [vmem:[#allocation3 + $0x2ea] sm:$0xff]
    %v5250 = vld [vmem:[#allocation3 + $0x2f2] sm:$0xff]
    %v5251 = vld [vmem:[#allocation3 + $0x302] sm:$0xff]
    %v5252 = vld [vmem:[#allocation3 + $0x30a] sm:$0xff]
    %v5253 = vld [vmem:[#allocation3 + $0x31a] sm:$0xff]
    %v5254 = vld [vmem:[#allocation3 + $0x322] sm:$0xff]
    %v5255 = vpack.c.bf16 %v5192, %v5191
    %v5256 = vpack.c.bf16 %v5194, %v5193
    %v5257 = vpack.c.bf16 %v5196, %v5195
    %v5258 = vpack.c.bf16 %v5198, %v5197
    %v5259 = vpack.c.bf16 %v5200, %v5199
    %v5260 = vpack.c.bf16 %v5202, %v5201
    %v5261 = vpack.c.bf16 %v5204, %v5203
    %v5262 = vpack.c.bf16 %v5206, %v5205
    %v5263 = vpack.c.bf16 %v5208, %v5207
    %v5264 = vpack.c.bf16 %v5210, %v5209
    %v5265 = vpack.c.bf16 %v5212, %v5211
    %v5266 = vpack.c.bf16 %v5214, %v5213
    %v5267 = vpack.c.bf16 %v5216, %v5215
    %v5268 = vpack.c.bf16 %v5218, %v5217
    %v5269 = vpack.c.bf16 %v5220, %v5219
    %v5270 = vpack.c.bf16 %v5222, %v5221
    %v5271 = vpack.c.bf16 %v5224, %v5223
    %v5272 = vpack.c.bf16 %v5226, %v5225
    %v5273 = vpack.c.bf16 %v5228, %v5227
    %v5274 = vpack.c.bf16 %v5230, %v5229
    %v5275 = vpack.c.bf16 %v5232, %v5231
    %v5276 = vpack.c.bf16 %v5234, %v5233
    %v5277 = vpack.c.bf16 %v5236, %v5235
    %v5278 = vpack.c.bf16 %v5238, %v5237
    %v5279 = vpack.c.bf16 %v5240, %v5239
    %v5280 = vpack.c.bf16 %v5242, %v5241
    %v5281 = vpack.c.bf16 %v5244, %v5243
    %v5282 = vpack.c.bf16 %v5246, %v5245
    %v5283 = vpack.c.bf16 %v5248, %v5247
    %v5284 = vpack.c.bf16 %v5250, %v5249
    %v5285 = vpack.c.bf16 %v5252, %v5251
    %v5286 = vpack.c.bf16 %v5254, %v5253
    %5287 = vst [vmem:[#allocation4 + $0x10] sm:$0xff] %v5255
    %5288 = vst [vmem:[#allocation4 + $0x58] sm:$0xff] %v5256
    %5289 = vst [vmem:[#allocation4 + $0xa0] sm:$0xff] %v5257
    %5290 = vst [vmem:[#allocation4 + $0xe8] sm:$0xff] %v5258
    %5291 = vst [vmem:[#allocation4 + $0x130] sm:$0xff] %v5259
    %5292 = vst [vmem:[#allocation4 + $0x178] sm:$0xff] %v5260
    %5293 = vst [vmem:[#allocation4 + $0x1c0] sm:$0xff] %v5261
    %5294 = vst [vmem:[#allocation4 + $0x208] sm:$0xff] %v5262
    %5295 = vst [vmem:[#allocation4 + $0x250] sm:$0xff] %v5263
    %5296 = vst [vmem:[#allocation4 + $0x298] sm:$0xff] %v5264
    %5297 = vst [vmem:[#allocation4 + $0x2e0] sm:$0xff] %v5265
    %5298 = vst [vmem:[#allocation4 + $0x328] sm:$0xff] %v5266
    %5299 = vst [vmem:[#allocation4 + $0x370] sm:$0xff] %v5267
    %5300 = vst [vmem:[#allocation4 + $0x3b8] sm:$0xff] %v5268
    %5301 = vst [vmem:[#allocation4 + $0x400] sm:$0xff] %v5269
    %5302 = vst [vmem:[#allocation4 + $0x448] sm:$0xff] %v5270
    %5303 = vst [vmem:[#allocation4 + $0x490] sm:$0xff] %v5271
    %5304 = vst [vmem:[#allocation4 + $0x4d8] sm:$0xff] %v5272
    %5305 = vst [vmem:[#allocation4 + $0x520] sm:$0xff] %v5273
    %5306 = vst [vmem:[#allocation4 + $0x568] sm:$0xff] %v5274
    %5307 = vst [vmem:[#allocation4 + $0x5b0] sm:$0xff] %v5275
    %5308 = vst [vmem:[#allocation4 + $0x5f8] sm:$0xff] %v5276
    %5309 = vst [vmem:[#allocation4 + $0x640] sm:$0xff] %v5277
    %5310 = vst [vmem:[#allocation4 + $0x688] sm:$0xff] %v5278
    %5311 = vst [vmem:[#allocation4 + $0x6d0] sm:$0xff] %v5279
    %5312 = vst [vmem:[#allocation4 + $0x718] sm:$0xff] %v5280
    %5313 = vst [vmem:[#allocation4 + $0x760] sm:$0xff] %v5281
    %5314 = vst [vmem:[#allocation4 + $0x7a8] sm:$0xff] %v5282
    %5315 = vst [vmem:[#allocation4 + $0x7f0] sm:$0xff] %v5283
    %5316 = vst [vmem:[#allocation4 + $0x838] sm:$0xff] %v5284
    %5317 = vst [vmem:[#allocation4 + $0x880] sm:$0xff] %v5285
    %5318 = vst [vmem:[#allocation4 + $0x8c8] sm:$0xff] %v5286
    %v5319 = vld [vmem:[%s4870] sm:$0xff]
    %v5320 = vld [vmem:[%s4870 + $0x8] sm:$0xff]
    %v5321 = vld [vmem:[%s4870 + $0x18] sm:$0xff]
    %v5322 = vld [vmem:[%s4870 + $0x20] sm:$0xff]
    %v5323 = vld [vmem:[%s4870 + $0x30] sm:$0xff]
    %v5324 = vld [vmem:[%s4870 + $0x38] sm:$0xff]
    %v5325 = vld [vmem:[%s4870 + $0x48] sm:$0xff]
    %v5326 = vld [vmem:[%s4870 + $0x50] sm:$0xff]
    %v5327 = vld [vmem:[%s4870 + $0x60] sm:$0xff]
    %v5328 = vld [vmem:[%s4870 + $0x68] sm:$0xff]
    %v5329 = vld [vmem:[%s4870 + $0x78] sm:$0xff]
    %v5330 = vld [vmem:[%s4870 + $0x80] sm:$0xff]
    %v5331 = vld [vmem:[%s4870 + $0x90] sm:$0xff]
    %v5332 = vld [vmem:[%s4870 + $0x98] sm:$0xff]
    %v5333 = vld [vmem:[%s4870 + $0xa8] sm:$0xff]
    %v5334 = vld [vmem:[%s4870 + $0xb0] sm:$0xff]
    %v5335 = vld [vmem:[%s4870 + $0xc0] sm:$0xff]
    %v5336 = vld [vmem:[%s4870 + $0xc8] sm:$0xff]
    %v5337 = vld [vmem:[%s4870 + $0xd8] sm:$0xff]
    %v5338 = vld [vmem:[%s4870 + $0xe0] sm:$0xff]
    %v5339 = vld [vmem:[%s4870 + $0xf0] sm:$0xff]
    %v5340 = vld [vmem:[%s4870 + $0xf8] sm:$0xff]
    %v5341 = vld [vmem:[%s4870 + $0x108] sm:$0xff]
    %v5342 = vld [vmem:[%s4870 + $0x110] sm:$0xff]
    %v5343 = vld [vmem:[%s4870 + $0x120] sm:$0xff]
    %v5344 = vld [vmem:[%s4870 + $0x128] sm:$0xff]
    %v5345 = vld [vmem:[%s4870 + $0x138] sm:$0xff]
    %v5346 = vld [vmem:[%s4870 + $0x140] sm:$0xff]
    %v5347 = vld [vmem:[%s4870 + $0x150] sm:$0xff]
    %v5348 = vld [vmem:[%s4870 + $0x158] sm:$0xff]
    %v5349 = vld [vmem:[%s4870 + $0x168] sm:$0xff]
    %v5350 = vld [vmem:[%s4870 + $0x170] sm:$0xff]
    %v5351 = vld [vmem:[%s4870 + $0x1b0] sm:$0xff]
    %v5352 = vld [vmem:[%s4870 + $0x1b8] sm:$0xff]
    %v5353 = vld [vmem:[%s4870 + $0x1c8] sm:$0xff]
    %v5354 = vld [vmem:[%s4870 + $0x1d0] sm:$0xff]
    %v5355 = vld [vmem:[%s4870 + $0x1e0] sm:$0xff]
    %v5356 = vld [vmem:[%s4870 + $0x1e8] sm:$0xff]
    %v5357 = vld [vmem:[%s4870 + $0x1f8] sm:$0xff]
    %v5358 = vld [vmem:[%s4870 + $0x200] sm:$0xff]
    %v5359 = vld [vmem:[%s4870 + $0x210] sm:$0xff]
    %v5360 = vld [vmem:[%s4870 + $0x218] sm:$0xff]
    %v5361 = vld [vmem:[%s4870 + $0x228] sm:$0xff]
    %v5362 = vld [vmem:[%s4870 + $0x230] sm:$0xff]
    %v5363 = vld [vmem:[%s4870 + $0x240] sm:$0xff]
    %v5364 = vld [vmem:[%s4870 + $0x248] sm:$0xff]
    %v5365 = vld [vmem:[%s4870 + $0x258] sm:$0xff]
    %v5366 = vld [vmem:[%s4870 + $0x260] sm:$0xff]
    %v5367 = vld [vmem:[%s4870 + $0x270] sm:$0xff]
    %v5368 = vld [vmem:[%s4870 + $0x278] sm:$0xff]
    %v5369 = vld [vmem:[%s4870 + $0x288] sm:$0xff]
    %v5370 = vld [vmem:[%s4870 + $0x290] sm:$0xff]
    %v5371 = vld [vmem:[%s4870 + $0x2a0] sm:$0xff]
    %v5372 = vld [vmem:[%s4870 + $0x2a8] sm:$0xff]
    %v5373 = vld [vmem:[%s4870 + $0x2b8] sm:$0xff]
    %v5374 = vld [vmem:[%s4870 + $0x2c0] sm:$0xff]
    %v5375 = vld [vmem:[%s4870 + $0x2d0] sm:$0xff]
    %v5376 = vld [vmem:[%s4870 + $0x2d8] sm:$0xff]
    %v5377 = vld [vmem:[%s4870 + $0x2e8] sm:$0xff]
    %v5378 = vld [vmem:[%s4870 + $0x2f0] sm:$0xff]
    %v5379 = vld [vmem:[%s4870 + $0x300] sm:$0xff]
    %v5380 = vld [vmem:[%s4870 + $0x308] sm:$0xff]
    %v5381 = vld [vmem:[%s4870 + $0x318] sm:$0xff]
    %v5382 = vld [vmem:[%s4870 + $0x320] sm:$0xff]
    %v5383 = vpack.c.bf16 %v5320, %v5319
    %v5384 = vpack.c.bf16 %v5322, %v5321
    %v5385 = vpack.c.bf16 %v5324, %v5323
    %v5386 = vpack.c.bf16 %v5326, %v5325
    %v5387 = vpack.c.bf16 %v5328, %v5327
    %v5388 = vpack.c.bf16 %v5330, %v5329
    %v5389 = vpack.c.bf16 %v5332, %v5331
    %v5390 = vpack.c.bf16 %v5334, %v5333
    %v5391 = vpack.c.bf16 %v5336, %v5335
    %v5392 = vpack.c.bf16 %v5338, %v5337
    %v5393 = vpack.c.bf16 %v5340, %v5339
    %v5394 = vpack.c.bf16 %v5342, %v5341
    %v5395 = vpack.c.bf16 %v5344, %v5343
    %v5396 = vpack.c.bf16 %v5346, %v5345
    %v5397 = vpack.c.bf16 %v5348, %v5347
    %v5398 = vpack.c.bf16 %v5350, %v5349
    %v5399 = vpack.c.bf16 %v5352, %v5351
    %v5400 = vpack.c.bf16 %v5354, %v5353
    %v5401 = vpack.c.bf16 %v5356, %v5355
    %v5402 = vpack.c.bf16 %v5358, %v5357
    %v5403 = vpack.c.bf16 %v5360, %v5359
    %v5404 = vpack.c.bf16 %v5362, %v5361
    %v5405 = vpack.c.bf16 %v5364, %v5363
    %v5406 = vpack.c.bf16 %v5366, %v5365
    %v5407 = vpack.c.bf16 %v5368, %v5367
    %v5408 = vpack.c.bf16 %v5370, %v5369
    %v5409 = vpack.c.bf16 %v5372, %v5371
    %v5410 = vpack.c.bf16 %v5374, %v5373
    %v5411 = vpack.c.bf16 %v5376, %v5375
    %v5412 = vpack.c.bf16 %v5378, %v5377
    %v5413 = vpack.c.bf16 %v5380, %v5379
    %v5414 = vpack.c.bf16 %v5382, %v5381
    %5415 = vst [vmem:[#allocation4 + $0x18] sm:$0xff] %v5383
    %5416 = vst [vmem:[#allocation4 + $0x60] sm:$0xff] %v5384
    %5417 = vst [vmem:[#allocation4 + $0xa8] sm:$0xff] %v5385
    %5418 = vst [vmem:[#allocation4 + $0xf0] sm:$0xff] %v5386
    %5419 = vst [vmem:[#allocation4 + $0x138] sm:$0xff] %v5387
    %5420 = vst [vmem:[#allocation4 + $0x180] sm:$0xff] %v5388
    %5421 = vst [vmem:[#allocation4 + $0x1c8] sm:$0xff] %v5389
    %5422 = vst [vmem:[#allocation4 + $0x210] sm:$0xff] %v5390
    %5423 = vst [vmem:[#allocation4 + $0x258] sm:$0xff] %v5391
    %5424 = vst [vmem:[#allocation4 + $0x2a0] sm:$0xff] %v5392
    %5425 = vst [vmem:[#allocation4 + $0x2e8] sm:$0xff] %v5393
    %5426 = vst [vmem:[#allocation4 + $0x330] sm:$0xff] %v5394
    %5427 = vst [vmem:[#allocation4 + $0x378] sm:$0xff] %v5395
    %5428 = vst [vmem:[#allocation4 + $0x3c0] sm:$0xff] %v5396
    %5429 = vst [vmem:[#allocation4 + $0x408] sm:$0xff] %v5397
    %5430 = vst [vmem:[#allocation4 + $0x450] sm:$0xff] %v5398
    %5431 = vst [vmem:[#allocation4 + $0x498] sm:$0xff] %v5399
    %5432 = vst [vmem:[#allocation4 + $0x4e0] sm:$0xff] %v5400
    %5433 = vst [vmem:[#allocation4 + $0x528] sm:$0xff] %v5401
    %5434 = vst [vmem:[#allocation4 + $0x570] sm:$0xff] %v5402
    %5435 = vst [vmem:[#allocation4 + $0x5b8] sm:$0xff] %v5403
    %5436 = vst [vmem:[#allocation4 + $0x600] sm:$0xff] %v5404
    %5437 = vst [vmem:[#allocation4 + $0x648] sm:$0xff] %v5405
    %5438 = vst [vmem:[#allocation4 + $0x690] sm:$0xff] %v5406
    %5439 = vst [vmem:[#allocation4 + $0x6d8] sm:$0xff] %v5407
    %5440 = vst [vmem:[#allocation4 + $0x720] sm:$0xff] %v5408
    %5441 = vst [vmem:[#allocation4 + $0x768] sm:$0xff] %v5409
    %5442 = vst [vmem:[#allocation4 + $0x7b0] sm:$0xff] %v5410
    %5443 = vst [vmem:[#allocation4 + $0x7f8] sm:$0xff] %v5411
    %5444 = vst [vmem:[#allocation4 + $0x840] sm:$0xff] %v5412
    %5445 = vst [vmem:[#allocation4 + $0x888] sm:$0xff] %v5413
    %5446 = vst [vmem:[#allocation4 + $0x8d0] sm:$0xff] %v5414
    %v5447 = vld [vmem:[%s4870 + $0x1] sm:$0xff]
    %v5448 = vld [vmem:[%s4870 + $0x9] sm:$0xff]
    %v5449 = vld [vmem:[%s4870 + $0x19] sm:$0xff]
    %v5450 = vld [vmem:[%s4870 + $0x21] sm:$0xff]
    %v5451 = vld [vmem:[%s4870 + $0x31] sm:$0xff]
    %v5452 = vld [vmem:[%s4870 + $0x39] sm:$0xff]
    %v5453 = vld [vmem:[%s4870 + $0x49] sm:$0xff]
    %v5454 = vld [vmem:[%s4870 + $0x51] sm:$0xff]
    %v5455 = vld [vmem:[%s4870 + $0x61] sm:$0xff]
    %v5456 = vld [vmem:[%s4870 + $0x69] sm:$0xff]
    %v5457 = vld [vmem:[%s4870 + $0x79] sm:$0xff]
    %v5458 = vld [vmem:[%s4870 + $0x81] sm:$0xff]
    %v5459 = vld [vmem:[%s4870 + $0x91] sm:$0xff]
    %v5460 = vld [vmem:[%s4870 + $0x99] sm:$0xff]
    %v5461 = vld [vmem:[%s4870 + $0xa9] sm:$0xff]
    %v5462 = vld [vmem:[%s4870 + $0xb1] sm:$0xff]
    %v5463 = vld [vmem:[%s4870 + $0xc1] sm:$0xff]
    %v5464 = vld [vmem:[%s4870 + $0xc9] sm:$0xff]
    %v5465 = vld [vmem:[%s4870 + $0xd9] sm:$0xff]
    %v5466 = vld [vmem:[%s4870 + $0xe1] sm:$0xff]
    %v5467 = vld [vmem:[%s4870 + $0xf1] sm:$0xff]
    %v5468 = vld [vmem:[%s4870 + $0xf9] sm:$0xff]
    %v5469 = vld [vmem:[%s4870 + $0x109] sm:$0xff]
    %v5470 = vld [vmem:[%s4870 + $0x111] sm:$0xff]
    %v5471 = vld [vmem:[%s4870 + $0x121] sm:$0xff]
    %v5472 = vld [vmem:[%s4870 + $0x129] sm:$0xff]
    %v5473 = vld [vmem:[%s4870 + $0x139] sm:$0xff]
    %v5474 = vld [vmem:[%s4870 + $0x141] sm:$0xff]
    %v5475 = vld [vmem:[%s4870 + $0x151] sm:$0xff]
    %v5476 = vld [vmem:[%s4870 + $0x159] sm:$0xff]
    %v5477 = vld [vmem:[%s4870 + $0x169] sm:$0xff]
    %v5478 = vld [vmem:[%s4870 + $0x171] sm:$0xff]
    %v5479 = vld [vmem:[%s4870 + $0x1b1] sm:$0xff]
    %v5480 = vld [vmem:[%s4870 + $0x1b9] sm:$0xff]
    %v5481 = vld [vmem:[%s4870 + $0x1c9] sm:$0xff]
    %v5482 = vld [vmem:[%s4870 + $0x1d1] sm:$0xff]
    %v5483 = vld [vmem:[%s4870 + $0x1e1] sm:$0xff]
    %v5484 = vld [vmem:[%s4870 + $0x1e9] sm:$0xff]
    %v5485 = vld [vmem:[%s4870 + $0x1f9] sm:$0xff]
    %v5486 = vld [vmem:[%s4870 + $0x201] sm:$0xff]
    %v5487 = vld [vmem:[%s4870 + $0x211] sm:$0xff]
    %v5488 = vld [vmem:[%s4870 + $0x219] sm:$0xff]
    %v5489 = vld [vmem:[%s4870 + $0x229] sm:$0xff]
    %v5490 = vld [vmem:[%s4870 + $0x231] sm:$0xff]
    %v5491 = vld [vmem:[%s4870 + $0x241] sm:$0xff]
    %v5492 = vld [vmem:[%s4870 + $0x249] sm:$0xff]
    %v5493 = vld [vmem:[%s4870 + $0x259] sm:$0xff]
    %v5494 = vld [vmem:[%s4870 + $0x261] sm:$0xff]
    %v5495 = vld [vmem:[%s4870 + $0x271] sm:$0xff]
    %v5496 = vld [vmem:[%s4870 + $0x279] sm:$0xff]
    %v5497 = vld [vmem:[%s4870 + $0x289] sm:$0xff]
    %v5498 = vld [vmem:[%s4870 + $0x291] sm:$0xff]
    %v5499 = vld [vmem:[%s4870 + $0x2a1] sm:$0xff]
    %v5500 = vld [vmem:[%s4870 + $0x2a9] sm:$0xff]
    %v5501 = vld [vmem:[%s4870 + $0x2b9] sm:$0xff]
    %v5502 = vld [vmem:[%s4870 + $0x2c1] sm:$0xff]
    %v5503 = vld [vmem:[%s4870 + $0x2d1] sm:$0xff]
    %v5504 = vld [vmem:[%s4870 + $0x2d9] sm:$0xff]
    %v5505 = vld [vmem:[%s4870 + $0x2e9] sm:$0xff]
    %v5506 = vld [vmem:[%s4870 + $0x2f1] sm:$0xff]
    %v5507 = vld [vmem:[%s4870 + $0x301] sm:$0xff]
    %v5508 = vld [vmem:[%s4870 + $0x309] sm:$0xff]
    %v5509 = vld [vmem:[%s4870 + $0x319] sm:$0xff]
    %v5510 = vld [vmem:[%s4870 + $0x321] sm:$0xff]
    %v5511 = vpack.c.bf16 %v5448, %v5447
    %v5512 = vpack.c.bf16 %v5450, %v5449
    %v5513 = vpack.c.bf16 %v5452, %v5451
    %v5514 = vpack.c.bf16 %v5454, %v5453
    %v5515 = vpack.c.bf16 %v5456, %v5455
    %v5516 = vpack.c.bf16 %v5458, %v5457
    %v5517 = vpack.c.bf16 %v5460, %v5459
    %v5518 = vpack.c.bf16 %v5462, %v5461
    %v5519 = vpack.c.bf16 %v5464, %v5463
    %v5520 = vpack.c.bf16 %v5466, %v5465
    %v5521 = vpack.c.bf16 %v5468, %v5467
    %v5522 = vpack.c.bf16 %v5470, %v5469
    %v5523 = vpack.c.bf16 %v5472, %v5471
    %v5524 = vpack.c.bf16 %v5474, %v5473
    %v5525 = vpack.c.bf16 %v5476, %v5475
    %v5526 = vpack.c.bf16 %v5478, %v5477
    %v5527 = vpack.c.bf16 %v5480, %v5479
    %v5528 = vpack.c.bf16 %v5482, %v5481
    %v5529 = vpack.c.bf16 %v5484, %v5483
    %v5530 = vpack.c.bf16 %v5486, %v5485
    %v5531 = vpack.c.bf16 %v5488, %v5487
    %v5532 = vpack.c.bf16 %v5490, %v5489
    %v5533 = vpack.c.bf16 %v5492, %v5491
    %v5534 = vpack.c.bf16 %v5494, %v5493
    %v5535 = vpack.c.bf16 %v5496, %v5495
    %v5536 = vpack.c.bf16 %v5498, %v5497
    %v5537 = vpack.c.bf16 %v5500, %v5499
    %v5538 = vpack.c.bf16 %v5502, %v5501
    %v5539 = vpack.c.bf16 %v5504, %v5503
    %v5540 = vpack.c.bf16 %v5506, %v5505
    %v5541 = vpack.c.bf16 %v5508, %v5507
    %v5542 = vpack.c.bf16 %v5510, %v5509
    %5543 = vst [vmem:[#allocation4 + $0x20] sm:$0xff] %v5511
    %5544 = vst [vmem:[#allocation4 + $0x68] sm:$0xff] %v5512
    %5545 = vst [vmem:[#allocation4 + $0xb0] sm:$0xff] %v5513
    %5546 = vst [vmem:[#allocation4 + $0xf8] sm:$0xff] %v5514
    %5547 = vst [vmem:[#allocation4 + $0x140] sm:$0xff] %v5515
    %5548 = vst [vmem:[#allocation4 + $0x188] sm:$0xff] %v5516
    %5549 = vst [vmem:[#allocation4 + $0x1d0] sm:$0xff] %v5517
    %5550 = vst [vmem:[#allocation4 + $0x218] sm:$0xff] %v5518
    %5551 = vst [vmem:[#allocation4 + $0x260] sm:$0xff] %v5519
    %5552 = vst [vmem:[#allocation4 + $0x2a8] sm:$0xff] %v5520
    %5553 = vst [vmem:[#allocation4 + $0x2f0] sm:$0xff] %v5521
    %5554 = vst [vmem:[#allocation4 + $0x338] sm:$0xff] %v5522
    %5555 = vst [vmem:[#allocation4 + $0x380] sm:$0xff] %v5523
    %5556 = vst [vmem:[#allocation4 + $0x3c8] sm:$0xff] %v5524
    %5557 = vst [vmem:[#allocation4 + $0x410] sm:$0xff] %v5525
    %5558 = vst [vmem:[#allocation4 + $0x458] sm:$0xff] %v5526
    %5559 = vst [vmem:[#allocation4 + $0x4a0] sm:$0xff] %v5527
    %5560 = vst [vmem:[#allocation4 + $0x4e8] sm:$0xff] %v5528
    %5561 = vst [vmem:[#allocation4 + $0x530] sm:$0xff] %v5529
    %5562 = vst [vmem:[#allocation4 + $0x578] sm:$0xff] %v5530
    %5563 = vst [vmem:[#allocation4 + $0x5c0] sm:$0xff] %v5531
    %5564 = vst [vmem:[#allocation4 + $0x608] sm:$0xff] %v5532
    %5565 = vst [vmem:[#allocation4 + $0x650] sm:$0xff] %v5533
    %5566 = vst [vmem:[#allocation4 + $0x698] sm:$0xff] %v5534
    %5567 = vst [vmem:[#allocation4 + $0x6e0] sm:$0xff] %v5535
    %5568 = vst [vmem:[#allocation4 + $0x728] sm:$0xff] %v5536
    %5569 = vst [vmem:[#allocation4 + $0x770] sm:$0xff] %v5537
    %5570 = vst [vmem:[#allocation4 + $0x7b8] sm:$0xff] %v5538
    %5571 = vst [vmem:[#allocation4 + $0x800] sm:$0xff] %v5539
    %5572 = vst [vmem:[#allocation4 + $0x848] sm:$0xff] %v5540
    %5573 = vst [vmem:[#allocation4 + $0x890] sm:$0xff] %v5541
    %5574 = vst [vmem:[#allocation4 + $0x8d8] sm:$0xff] %v5542
    %v5575 = vld [vmem:[%s4870 + $0x2] sm:$0xff]
    %v5576 = vld [vmem:[%s4870 + $0xa] sm:$0xff]
    %v5577 = vld [vmem:[%s4870 + $0x1a] sm:$0xff]
    %v5578 = vld [vmem:[%s4870 + $0x22] sm:$0xff]
    %v5579 = vld [vmem:[%s4870 + $0x32] sm:$0xff]
    %v5580 = vld [vmem:[%s4870 + $0x3a] sm:$0xff]
    %v5581 = vld [vmem:[%s4870 + $0x4a] sm:$0xff]
    %v5582 = vld [vmem:[%s4870 + $0x52] sm:$0xff]
    %v5583 = vld [vmem:[%s4870 + $0x62] sm:$0xff]
    %v5584 = vld [vmem:[%s4870 + $0x6a] sm:$0xff]
    %v5585 = vld [vmem:[%s4870 + $0x7a] sm:$0xff]
    %v5586 = vld [vmem:[%s4870 + $0x82] sm:$0xff]
    %v5587 = vld [vmem:[%s4870 + $0x92] sm:$0xff]
    %v5588 = vld [vmem:[%s4870 + $0x9a] sm:$0xff]
    %v5589 = vld [vmem:[%s4870 + $0xaa] sm:$0xff]
    %v5590 = vld [vmem:[%s4870 + $0xb2] sm:$0xff]
    %v5591 = vld [vmem:[%s4870 + $0xc2] sm:$0xff]
    %v5592 = vld [vmem:[%s4870 + $0xca] sm:$0xff]
    %v5593 = vld [vmem:[%s4870 + $0xda] sm:$0xff]
    %v5594 = vld [vmem:[%s4870 + $0xe2] sm:$0xff]
    %v5595 = vld [vmem:[%s4870 + $0xf2] sm:$0xff]
    %v5596 = vld [vmem:[%s4870 + $0xfa] sm:$0xff]
    %v5597 = vld [vmem:[%s4870 + $0x10a] sm:$0xff]
    %v5598 = vld [vmem:[%s4870 + $0x112] sm:$0xff]
    %v5599 = vld [vmem:[%s4870 + $0x122] sm:$0xff]
    %v5600 = vld [vmem:[%s4870 + $0x12a] sm:$0xff]
    %v5601 = vld [vmem:[%s4870 + $0x13a] sm:$0xff]
    %v5602 = vld [vmem:[%s4870 + $0x142] sm:$0xff]
    %v5603 = vld [vmem:[%s4870 + $0x152] sm:$0xff]
    %v5604 = vld [vmem:[%s4870 + $0x15a] sm:$0xff]
    %v5605 = vld [vmem:[%s4870 + $0x16a] sm:$0xff]
    %v5606 = vld [vmem:[%s4870 + $0x172] sm:$0xff]
    %v5607 = vld [vmem:[%s4870 + $0x1b2] sm:$0xff]
    %v5608 = vld [vmem:[%s4870 + $0x1ba] sm:$0xff]
    %v5609 = vld [vmem:[%s4870 + $0x1ca] sm:$0xff]
    %v5610 = vld [vmem:[%s4870 + $0x1d2] sm:$0xff]
    %v5611 = vld [vmem:[%s4870 + $0x1e2] sm:$0xff]
    %v5612 = vld [vmem:[%s4870 + $0x1ea] sm:$0xff]
    %v5613 = vld [vmem:[%s4870 + $0x1fa] sm:$0xff]
    %v5614 = vld [vmem:[%s4870 + $0x202] sm:$0xff]
    %v5615 = vld [vmem:[%s4870 + $0x212] sm:$0xff]
    %v5616 = vld [vmem:[%s4870 + $0x21a] sm:$0xff]
    %v5617 = vld [vmem:[%s4870 + $0x22a] sm:$0xff]
    %v5618 = vld [vmem:[%s4870 + $0x232] sm:$0xff]
    %v5619 = vld [vmem:[%s4870 + $0x242] sm:$0xff]
    %v5620 = vld [vmem:[%s4870 + $0x24a] sm:$0xff]
    %v5621 = vld [vmem:[%s4870 + $0x25a] sm:$0xff]
    %v5622 = vld [vmem:[%s4870 + $0x262] sm:$0xff]
    %v5623 = vld [vmem:[%s4870 + $0x272] sm:$0xff]
    %v5624 = vld [vmem:[%s4870 + $0x27a] sm:$0xff]
    %v5625 = vld [vmem:[%s4870 + $0x28a] sm:$0xff]
    %v5626 = vld [vmem:[%s4870 + $0x292] sm:$0xff]
    %v5627 = vld [vmem:[%s4870 + $0x2a2] sm:$0xff]
    %v5628 = vld [vmem:[%s4870 + $0x2aa] sm:$0xff]
    %v5629 = vld [vmem:[%s4870 + $0x2ba] sm:$0xff]
    %v5630 = vld [vmem:[%s4870 + $0x2c2] sm:$0xff]
    %v5631 = vld [vmem:[%s4870 + $0x2d2] sm:$0xff]
    %v5632 = vld [vmem:[%s4870 + $0x2da] sm:$0xff]
    %v5633 = vld [vmem:[%s4870 + $0x2ea] sm:$0xff]
    %v5634 = vld [vmem:[%s4870 + $0x2f2] sm:$0xff]
    %v5635 = vld [vmem:[%s4870 + $0x302] sm:$0xff]
    %v5636 = vld [vmem:[%s4870 + $0x30a] sm:$0xff]
    %v5637 = vld [vmem:[%s4870 + $0x31a] sm:$0xff]
    %v5638 = vld [vmem:[%s4870 + $0x322] sm:$0xff]
    %v5639 = vpack.c.bf16 %v5576, %v5575
    %v5640 = vpack.c.bf16 %v5578, %v5577
    %v5641 = vpack.c.bf16 %v5580, %v5579
    %v5642 = vpack.c.bf16 %v5582, %v5581
    %v5643 = vpack.c.bf16 %v5584, %v5583
    %v5644 = vpack.c.bf16 %v5586, %v5585
    %v5645 = vpack.c.bf16 %v5588, %v5587
    %v5646 = vpack.c.bf16 %v5590, %v5589
    %v5647 = vpack.c.bf16 %v5592, %v5591
    %v5648 = vpack.c.bf16 %v5594, %v5593
    %v5649 = vpack.c.bf16 %v5596, %v5595
    %v5650 = vpack.c.bf16 %v5598, %v5597
    %v5651 = vpack.c.bf16 %v5600, %v5599
    %v5652 = vpack.c.bf16 %v5602, %v5601
    %v5653 = vpack.c.bf16 %v5604, %v5603
    %v5654 = vpack.c.bf16 %v5606, %v5605
    %v5655 = vpack.c.bf16 %v5608, %v5607
    %v5656 = vpack.c.bf16 %v5610, %v5609
    %v5657 = vpack.c.bf16 %v5612, %v5611
    %v5658 = vpack.c.bf16 %v5614, %v5613
    %v5659 = vpack.c.bf16 %v5616, %v5615
    %v5660 = vpack.c.bf16 %v5618, %v5617
    %v5661 = vpack.c.bf16 %v5620, %v5619
    %v5662 = vpack.c.bf16 %v5622, %v5621
    %v5663 = vpack.c.bf16 %v5624, %v5623
    %v5664 = vpack.c.bf16 %v5626, %v5625
    %v5665 = vpack.c.bf16 %v5628, %v5627
    %v5666 = vpack.c.bf16 %v5630, %v5629
    %v5667 = vpack.c.bf16 %v5632, %v5631
    %v5668 = vpack.c.bf16 %v5634, %v5633
    %v5669 = vpack.c.bf16 %v5636, %v5635
    %v5670 = vpack.c.bf16 %v5638, %v5637
    %5671 = vst [vmem:[#allocation4 + $0x28] sm:$0xff] %v5639
    %5672 = vst [vmem:[#allocation4 + $0x70] sm:$0xff] %v5640
    %5673 = vst [vmem:[#allocation4 + $0xb8] sm:$0xff] %v5641
    %5674 = vst [vmem:[#allocation4 + $0x100] sm:$0xff] %v5642
    %5675 = vst [vmem:[#allocation4 + $0x148] sm:$0xff] %v5643
    %5676 = vst [vmem:[#allocation4 + $0x190] sm:$0xff] %v5644
    %5677 = vst [vmem:[#allocation4 + $0x1d8] sm:$0xff] %v5645
    %5678 = vst [vmem:[#allocation4 + $0x220] sm:$0xff] %v5646
    %5679 = vst [vmem:[#allocation4 + $0x268] sm:$0xff] %v5647
    %5680 = vst [vmem:[#allocation4 + $0x2b0] sm:$0xff] %v5648
    %5681 = vst [vmem:[#allocation4 + $0x2f8] sm:$0xff] %v5649
    %5682 = vst [vmem:[#allocation4 + $0x340] sm:$0xff] %v5650
    %5683 = vst [vmem:[#allocation4 + $0x388] sm:$0xff] %v5651
    %5684 = vst [vmem:[#allocation4 + $0x3d0] sm:$0xff] %v5652
    %5685 = vst [vmem:[#allocation4 + $0x418] sm:$0xff] %v5653
    %5686 = vst [vmem:[#allocation4 + $0x460] sm:$0xff] %v5654
    %5687 = vst [vmem:[#allocation4 + $0x4a8] sm:$0xff] %v5655
    %5688 = vst [vmem:[#allocation4 + $0x4f0] sm:$0xff] %v5656
    %5689 = vst [vmem:[#allocation4 + $0x538] sm:$0xff] %v5657
    %5690 = vst [vmem:[#allocation4 + $0x580] sm:$0xff] %v5658
    %5691 = vst [vmem:[#allocation4 + $0x5c8] sm:$0xff] %v5659
    %5692 = vst [vmem:[#allocation4 + $0x610] sm:$0xff] %v5660
    %5693 = vst [vmem:[#allocation4 + $0x658] sm:$0xff] %v5661
    %5694 = vst [vmem:[#allocation4 + $0x6a0] sm:$0xff] %v5662
    %5695 = vst [vmem:[#allocation4 + $0x6e8] sm:$0xff] %v5663
    %5696 = vst [vmem:[#allocation4 + $0x730] sm:$0xff] %v5664
    %5697 = vst [vmem:[#allocation4 + $0x778] sm:$0xff] %v5665
    %5698 = vst [vmem:[#allocation4 + $0x7c0] sm:$0xff] %v5666
    %5699 = vst [vmem:[#allocation4 + $0x808] sm:$0xff] %v5667
    %5700 = vst [vmem:[#allocation4 + $0x850] sm:$0xff] %v5668
    %5701 = vst [vmem:[#allocation4 + $0x898] sm:$0xff] %v5669
    %5702 = vst [vmem:[#allocation4 + $0x8e0] sm:$0xff] %v5670
    %s5703 = scalar_lea.vmem [#allocation3], 48
    %v5704 = vld [vmem:[%s5703] sm:$0xff]
    %v5705 = vld [vmem:[%s5703 + $0x8] sm:$0xff]
    %v5706 = vld [vmem:[%s5703 + $0x18] sm:$0xff]
    %v5707 = vld [vmem:[%s5703 + $0x20] sm:$0xff]
    %v5708 = vld [vmem:[%s5703 + $0x30] sm:$0xff]
    %v5709 = vld [vmem:[%s5703 + $0x38] sm:$0xff]
    %v5710 = vld [vmem:[%s5703 + $0x48] sm:$0xff]
    %v5711 = vld [vmem:[%s5703 + $0x50] sm:$0xff]
    %v5712 = vld [vmem:[%s5703 + $0x60] sm:$0xff]
    %v5713 = vld [vmem:[%s5703 + $0x68] sm:$0xff]
    %v5714 = vld [vmem:[%s5703 + $0x78] sm:$0xff]
    %v5715 = vld [vmem:[%s5703 + $0x80] sm:$0xff]
    %v5716 = vld [vmem:[%s5703 + $0x90] sm:$0xff]
    %v5717 = vld [vmem:[%s5703 + $0x98] sm:$0xff]
    %v5718 = vld [vmem:[%s5703 + $0xa8] sm:$0xff]
    %v5719 = vld [vmem:[%s5703 + $0xb0] sm:$0xff]
    %v5720 = vld [vmem:[%s5703 + $0xc0] sm:$0xff]
    %v5721 = vld [vmem:[%s5703 + $0xc8] sm:$0xff]
    %v5722 = vld [vmem:[%s5703 + $0xd8] sm:$0xff]
    %v5723 = vld [vmem:[%s5703 + $0xe0] sm:$0xff]
    %v5724 = vld [vmem:[%s5703 + $0xf0] sm:$0xff]
    %v5725 = vld [vmem:[%s5703 + $0xf8] sm:$0xff]
    %v5726 = vld [vmem:[%s5703 + $0x108] sm:$0xff]
    %v5727 = vld [vmem:[%s5703 + $0x110] sm:$0xff]
    %v5728 = vld [vmem:[%s5703 + $0x120] sm:$0xff]
    %v5729 = vld [vmem:[%s5703 + $0x128] sm:$0xff]
    %v5730 = vld [vmem:[%s5703 + $0x138] sm:$0xff]
    %v5731 = vld [vmem:[%s5703 + $0x140] sm:$0xff]
    %v5732 = vld [vmem:[%s5703 + $0x150] sm:$0xff]
    %v5733 = vld [vmem:[%s5703 + $0x158] sm:$0xff]
    %v5734 = vld [vmem:[%s5703 + $0x168] sm:$0xff]
    %v5735 = vld [vmem:[%s5703 + $0x170] sm:$0xff]
    %v5736 = vld [vmem:[%s5703 + $0x1b0] sm:$0xff]
    %v5737 = vld [vmem:[%s5703 + $0x1b8] sm:$0xff]
    %v5738 = vld [vmem:[%s5703 + $0x1c8] sm:$0xff]
    %v5739 = vld [vmem:[%s5703 + $0x1d0] sm:$0xff]
    %v5740 = vld [vmem:[%s5703 + $0x1e0] sm:$0xff]
    %v5741 = vld [vmem:[%s5703 + $0x1e8] sm:$0xff]
    %v5742 = vld [vmem:[%s5703 + $0x1f8] sm:$0xff]
    %v5743 = vld [vmem:[%s5703 + $0x200] sm:$0xff]
    %v5744 = vld [vmem:[%s5703 + $0x210] sm:$0xff]
    %v5745 = vld [vmem:[%s5703 + $0x218] sm:$0xff]
    %v5746 = vld [vmem:[%s5703 + $0x228] sm:$0xff]
    %v5747 = vld [vmem:[%s5703 + $0x230] sm:$0xff]
    %v5748 = vld [vmem:[%s5703 + $0x240] sm:$0xff]
    %v5749 = vld [vmem:[%s5703 + $0x248] sm:$0xff]
    %v5750 = vld [vmem:[%s5703 + $0x258] sm:$0xff]
    %v5751 = vld [vmem:[%s5703 + $0x260] sm:$0xff]
    %v5752 = vld [vmem:[%s5703 + $0x270] sm:$0xff]
    %v5753 = vld [vmem:[%s5703 + $0x278] sm:$0xff]
    %v5754 = vld [vmem:[%s5703 + $0x288] sm:$0xff]
    %v5755 = vld [vmem:[%s5703 + $0x290] sm:$0xff]
    %v5756 = vld [vmem:[%s5703 + $0x2a0] sm:$0xff]
    %v5757 = vld [vmem:[%s5703 + $0x2a8] sm:$0xff]
    %v5758 = vld [vmem:[%s5703 + $0x2b8] sm:$0xff]
    %v5759 = vld [vmem:[%s5703 + $0x2c0] sm:$0xff]
    %v5760 = vld [vmem:[%s5703 + $0x2d0] sm:$0xff]
    %v5761 = vld [vmem:[%s5703 + $0x2d8] sm:$0xff]
    %v5762 = vld [vmem:[%s5703 + $0x2e8] sm:$0xff]
    %v5763 = vld [vmem:[%s5703 + $0x2f0] sm:$0xff]
    %v5764 = vld [vmem:[%s5703 + $0x300] sm:$0xff]
    %v5765 = vld [vmem:[%s5703 + $0x308] sm:$0xff]
    %v5766 = vld [vmem:[%s5703 + $0x318] sm:$0xff]
    %v5767 = vld [vmem:[%s5703 + $0x320] sm:$0xff]
    %v5768 = vpack.c.bf16 %v5705, %v5704
    %v5769 = vpack.c.bf16 %v5707, %v5706
    %v5770 = vpack.c.bf16 %v5709, %v5708
    %v5771 = vpack.c.bf16 %v5711, %v5710
    %v5772 = vpack.c.bf16 %v5713, %v5712
    %v5773 = vpack.c.bf16 %v5715, %v5714
    %v5774 = vpack.c.bf16 %v5717, %v5716
    %v5775 = vpack.c.bf16 %v5719, %v5718
    %v5776 = vpack.c.bf16 %v5721, %v5720
    %v5777 = vpack.c.bf16 %v5723, %v5722
    %v5778 = vpack.c.bf16 %v5725, %v5724
    %v5779 = vpack.c.bf16 %v5727, %v5726
    %v5780 = vpack.c.bf16 %v5729, %v5728
    %v5781 = vpack.c.bf16 %v5731, %v5730
    %v5782 = vpack.c.bf16 %v5733, %v5732
    %v5783 = vpack.c.bf16 %v5735, %v5734
    %v5784 = vpack.c.bf16 %v5737, %v5736
    %v5785 = vpack.c.bf16 %v5739, %v5738
    %v5786 = vpack.c.bf16 %v5741, %v5740
    %v5787 = vpack.c.bf16 %v5743, %v5742
    %v5788 = vpack.c.bf16 %v5745, %v5744
    %v5789 = vpack.c.bf16 %v5747, %v5746
    %v5790 = vpack.c.bf16 %v5749, %v5748
    %v5791 = vpack.c.bf16 %v5751, %v5750
    %v5792 = vpack.c.bf16 %v5753, %v5752
    %v5793 = vpack.c.bf16 %v5755, %v5754
    %v5794 = vpack.c.bf16 %v5757, %v5756
    %v5795 = vpack.c.bf16 %v5759, %v5758
    %v5796 = vpack.c.bf16 %v5761, %v5760
    %v5797 = vpack.c.bf16 %v5763, %v5762
    %v5798 = vpack.c.bf16 %v5765, %v5764
    %v5799 = vpack.c.bf16 %v5767, %v5766
    %5800 = vst [vmem:[#allocation4 + $0x30] sm:$0xff] %v5768
    %5801 = vst [vmem:[#allocation4 + $0x78] sm:$0xff] %v5769
    %5802 = vst [vmem:[#allocation4 + $0xc0] sm:$0xff] %v5770
    %5803 = vst [vmem:[#allocation4 + $0x108] sm:$0xff] %v5771
    %5804 = vst [vmem:[#allocation4 + $0x150] sm:$0xff] %v5772
    %5805 = vst [vmem:[#allocation4 + $0x198] sm:$0xff] %v5773
    %5806 = vst [vmem:[#allocation4 + $0x1e0] sm:$0xff] %v5774
    %5807 = vst [vmem:[#allocation4 + $0x228] sm:$0xff] %v5775
    %5808 = vst [vmem:[#allocation4 + $0x270] sm:$0xff] %v5776
    %5809 = vst [vmem:[#allocation4 + $0x2b8] sm:$0xff] %v5777
    %5810 = vst [vmem:[#allocation4 + $0x300] sm:$0xff] %v5778
    %5811 = vst [vmem:[#allocation4 + $0x348] sm:$0xff] %v5779
    %5812 = vst [vmem:[#allocation4 + $0x390] sm:$0xff] %v5780
    %5813 = vst [vmem:[#allocation4 + $0x3d8] sm:$0xff] %v5781
    %5814 = vst [vmem:[#allocation4 + $0x420] sm:$0xff] %v5782
    %5815 = vst [vmem:[#allocation4 + $0x468] sm:$0xff] %v5783
    %5816 = vst [vmem:[#allocation4 + $0x4b0] sm:$0xff] %v5784
    %5817 = vst [vmem:[#allocation4 + $0x4f8] sm:$0xff] %v5785
    %5818 = vst [vmem:[#allocation4 + $0x540] sm:$0xff] %v5786
    %5819 = vst [vmem:[#allocation4 + $0x588] sm:$0xff] %v5787
    %5820 = vst [vmem:[#allocation4 + $0x5d0] sm:$0xff] %v5788
    %5821 = vst [vmem:[#allocation4 + $0x618] sm:$0xff] %v5789
    %5822 = vst [vmem:[#allocation4 + $0x660] sm:$0xff] %v5790
    %5823 = vst [vmem:[#allocation4 + $0x6a8] sm:$0xff] %v5791
    %5824 = vst [vmem:[#allocation4 + $0x6f0] sm:$0xff] %v5792
    %5825 = vst [vmem:[#allocation4 + $0x738] sm:$0xff] %v5793
    %5826 = vst [vmem:[#allocation4 + $0x780] sm:$0xff] %v5794
    %5827 = vst [vmem:[#allocation4 + $0x7c8] sm:$0xff] %v5795
    %5828 = vst [vmem:[#allocation4 + $0x810] sm:$0xff] %v5796
    %5829 = vst [vmem:[#allocation4 + $0x858] sm:$0xff] %v5797
    %5830 = vst [vmem:[#allocation4 + $0x8a0] sm:$0xff] %v5798
    %5831 = vst [vmem:[#allocation4 + $0x8e8] sm:$0xff] %v5799
    %v5832 = vld [vmem:[%s5703 + $0x1] sm:$0xff]
    %v5833 = vld [vmem:[%s5703 + $0x9] sm:$0xff]
    %v5834 = vld [vmem:[%s5703 + $0x19] sm:$0xff]
    %v5835 = vld [vmem:[%s5703 + $0x21] sm:$0xff]
    %v5836 = vld [vmem:[%s5703 + $0x31] sm:$0xff]
    %v5837 = vld [vmem:[%s5703 + $0x39] sm:$0xff]
    %v5838 = vld [vmem:[%s5703 + $0x49] sm:$0xff]
    %v5839 = vld [vmem:[%s5703 + $0x51] sm:$0xff]
    %v5840 = vld [vmem:[%s5703 + $0x61] sm:$0xff]
    %v5841 = vld [vmem:[%s5703 + $0x69] sm:$0xff]
    %v5842 = vld [vmem:[%s5703 + $0x79] sm:$0xff]
    %v5843 = vld [vmem:[%s5703 + $0x81] sm:$0xff]
    %v5844 = vld [vmem:[%s5703 + $0x91] sm:$0xff]
    %v5845 = vld [vmem:[%s5703 + $0x99] sm:$0xff]
    %v5846 = vld [vmem:[%s5703 + $0xa9] sm:$0xff]
    %v5847 = vld [vmem:[%s5703 + $0xb1] sm:$0xff]
    %v5848 = vld [vmem:[%s5703 + $0xc1] sm:$0xff]
    %v5849 = vld [vmem:[%s5703 + $0xc9] sm:$0xff]
    %v5850 = vld [vmem:[%s5703 + $0xd9] sm:$0xff]
    %v5851 = vld [vmem:[%s5703 + $0xe1] sm:$0xff]
    %v5852 = vld [vmem:[%s5703 + $0xf1] sm:$0xff]
    %v5853 = vld [vmem:[%s5703 + $0xf9] sm:$0xff]
    %v5854 = vld [vmem:[%s5703 + $0x109] sm:$0xff]
    %v5855 = vld [vmem:[%s5703 + $0x111] sm:$0xff]
    %v5856 = vld [vmem:[%s5703 + $0x121] sm:$0xff]
    %v5857 = vld [vmem:[%s5703 + $0x129] sm:$0xff]
    %v5858 = vld [vmem:[%s5703 + $0x139] sm:$0xff]
    %v5859 = vld [vmem:[%s5703 + $0x141] sm:$0xff]
    %v5860 = vld [vmem:[%s5703 + $0x151] sm:$0xff]
    %v5861 = vld [vmem:[%s5703 + $0x159] sm:$0xff]
    %v5862 = vld [vmem:[%s5703 + $0x169] sm:$0xff]
    %v5863 = vld [vmem:[%s5703 + $0x171] sm:$0xff]
    %v5864 = vld [vmem:[%s5703 + $0x1b1] sm:$0xff]
    %v5865 = vld [vmem:[%s5703 + $0x1b9] sm:$0xff]
    %v5866 = vld [vmem:[%s5703 + $0x1c9] sm:$0xff]
    %v5867 = vld [vmem:[%s5703 + $0x1d1] sm:$0xff]
    %v5868 = vld [vmem:[%s5703 + $0x1e1] sm:$0xff]
    %v5869 = vld [vmem:[%s5703 + $0x1e9] sm:$0xff]
    %v5870 = vld [vmem:[%s5703 + $0x1f9] sm:$0xff]
    %v5871 = vld [vmem:[%s5703 + $0x201] sm:$0xff]
    %v5872 = vld [vmem:[%s5703 + $0x211] sm:$0xff]
    %v5873 = vld [vmem:[%s5703 + $0x219] sm:$0xff]
    %v5874 = vld [vmem:[%s5703 + $0x229] sm:$0xff]
    %v5875 = vld [vmem:[%s5703 + $0x231] sm:$0xff]
    %v5876 = vld [vmem:[%s5703 + $0x241] sm:$0xff]
    %v5877 = vld [vmem:[%s5703 + $0x249] sm:$0xff]
    %v5878 = vld [vmem:[%s5703 + $0x259] sm:$0xff]
    %v5879 = vld [vmem:[%s5703 + $0x261] sm:$0xff]
    %v5880 = vld [vmem:[%s5703 + $0x271] sm:$0xff]
    %v5881 = vld [vmem:[%s5703 + $0x279] sm:$0xff]
    %v5882 = vld [vmem:[%s5703 + $0x289] sm:$0xff]
    %v5883 = vld [vmem:[%s5703 + $0x291] sm:$0xff]
    %v5884 = vld [vmem:[%s5703 + $0x2a1] sm:$0xff]
    %v5885 = vld [vmem:[%s5703 + $0x2a9] sm:$0xff]
    %v5886 = vld [vmem:[%s5703 + $0x2b9] sm:$0xff]
    %v5887 = vld [vmem:[%s5703 + $0x2c1] sm:$0xff]
    %v5888 = vld [vmem:[%s5703 + $0x2d1] sm:$0xff]
    %v5889 = vld [vmem:[%s5703 + $0x2d9] sm:$0xff]
    %v5890 = vld [vmem:[%s5703 + $0x2e9] sm:$0xff]
    %v5891 = vld [vmem:[%s5703 + $0x2f1] sm:$0xff]
    %v5892 = vld [vmem:[%s5703 + $0x301] sm:$0xff]
    %v5893 = vld [vmem:[%s5703 + $0x309] sm:$0xff]
    %v5894 = vld [vmem:[%s5703 + $0x319] sm:$0xff]
    %v5895 = vld [vmem:[%s5703 + $0x321] sm:$0xff]
    %v5896 = vpack.c.bf16 %v5833, %v5832
    %v5897 = vpack.c.bf16 %v5835, %v5834
    %v5898 = vpack.c.bf16 %v5837, %v5836
    %v5899 = vpack.c.bf16 %v5839, %v5838
    %v5900 = vpack.c.bf16 %v5841, %v5840
    %v5901 = vpack.c.bf16 %v5843, %v5842
    %v5902 = vpack.c.bf16 %v5845, %v5844
    %v5903 = vpack.c.bf16 %v5847, %v5846
    %v5904 = vpack.c.bf16 %v5849, %v5848
    %v5905 = vpack.c.bf16 %v5851, %v5850
    %v5906 = vpack.c.bf16 %v5853, %v5852
    %v5907 = vpack.c.bf16 %v5855, %v5854
    %v5908 = vpack.c.bf16 %v5857, %v5856
    %v5909 = vpack.c.bf16 %v5859, %v5858
    %v5910 = vpack.c.bf16 %v5861, %v5860
    %v5911 = vpack.c.bf16 %v5863, %v5862
    %v5912 = vpack.c.bf16 %v5865, %v5864
    %v5913 = vpack.c.bf16 %v5867, %v5866
    %v5914 = vpack.c.bf16 %v5869, %v5868
    %v5915 = vpack.c.bf16 %v5871, %v5870
    %v5916 = vpack.c.bf16 %v5873, %v5872
    %v5917 = vpack.c.bf16 %v5875, %v5874
    %v5918 = vpack.c.bf16 %v5877, %v5876
    %v5919 = vpack.c.bf16 %v5879, %v5878
    %v5920 = vpack.c.bf16 %v5881, %v5880
    %v5921 = vpack.c.bf16 %v5883, %v5882
    %v5922 = vpack.c.bf16 %v5885, %v5884
    %v5923 = vpack.c.bf16 %v5887, %v5886
    %v5924 = vpack.c.bf16 %v5889, %v5888
    %v5925 = vpack.c.bf16 %v5891, %v5890
    %v5926 = vpack.c.bf16 %v5893, %v5892
    %v5927 = vpack.c.bf16 %v5895, %v5894
    %5928 = vst [vmem:[#allocation4 + $0x38] sm:$0xff] %v5896
    %5929 = vst [vmem:[#allocation4 + $0x80] sm:$0xff] %v5897
    %5930 = vst [vmem:[#allocation4 + $0xc8] sm:$0xff] %v5898
    %5931 = vst [vmem:[#allocation4 + $0x110] sm:$0xff] %v5899
    %5932 = vst [vmem:[#allocation4 + $0x158] sm:$0xff] %v5900
    %5933 = vst [vmem:[#allocation4 + $0x1a0] sm:$0xff] %v5901
    %5934 = vst [vmem:[#allocation4 + $0x1e8] sm:$0xff] %v5902
    %5935 = vst [vmem:[#allocation4 + $0x230] sm:$0xff] %v5903
    %5936 = vst [vmem:[#allocation4 + $0x278] sm:$0xff] %v5904
    %5937 = vst [vmem:[#allocation4 + $0x2c0] sm:$0xff] %v5905
    %5938 = vst [vmem:[#allocation4 + $0x308] sm:$0xff] %v5906
    %5939 = vst [vmem:[#allocation4 + $0x350] sm:$0xff] %v5907
    %5940 = vst [vmem:[#allocation4 + $0x398] sm:$0xff] %v5908
    %5941 = vst [vmem:[#allocation4 + $0x3e0] sm:$0xff] %v5909
    %5942 = vst [vmem:[#allocation4 + $0x428] sm:$0xff] %v5910
    %5943 = vst [vmem:[#allocation4 + $0x470] sm:$0xff] %v5911
    %5944 = vst [vmem:[#allocation4 + $0x4b8] sm:$0xff] %v5912
    %5945 = vst [vmem:[#allocation4 + $0x500] sm:$0xff] %v5913
    %5946 = vst [vmem:[#allocation4 + $0x548] sm:$0xff] %v5914
    %5947 = vst [vmem:[#allocation4 + $0x590] sm:$0xff] %v5915
    %5948 = vst [vmem:[#allocation4 + $0x5d8] sm:$0xff] %v5916
    %5949 = vst [vmem:[#allocation4 + $0x620] sm:$0xff] %v5917
    %5950 = vst [vmem:[#allocation4 + $0x668] sm:$0xff] %v5918
    %5951 = vst [vmem:[#allocation4 + $0x6b0] sm:$0xff] %v5919
    %5952 = vst [vmem:[#allocation4 + $0x6f8] sm:$0xff] %v5920
    %5953 = vst [vmem:[#allocation4 + $0x740] sm:$0xff] %v5921
    %5954 = vst [vmem:[#allocation4 + $0x788] sm:$0xff] %v5922
    %5955 = vst [vmem:[#allocation4 + $0x7d0] sm:$0xff] %v5923
    %5956 = vst [vmem:[#allocation4 + $0x818] sm:$0xff] %v5924
    %5957 = vst [vmem:[#allocation4 + $0x860] sm:$0xff] %v5925
    %5958 = vst [vmem:[#allocation4 + $0x8a8] sm:$0xff] %v5926
    %5959 = vst [vmem:[#allocation4 + $0x8f0] sm:$0xff] %v5927
    %v5960 = vld [vmem:[%s5703 + $0x2] sm:$0xff]
    %v5961 = vld [vmem:[%s5703 + $0xa] sm:$0xff]
    %v5962 = vld [vmem:[%s5703 + $0x1a] sm:$0xff]
    %v5963 = vld [vmem:[%s5703 + $0x22] sm:$0xff]
    %v5964 = vld [vmem:[%s5703 + $0x32] sm:$0xff]
    %v5965 = vld [vmem:[%s5703 + $0x3a] sm:$0xff]
    %v5966 = vld [vmem:[%s5703 + $0x4a] sm:$0xff]
    %v5967 = vld [vmem:[%s5703 + $0x52] sm:$0xff]
    %v5968 = vld [vmem:[%s5703 + $0x62] sm:$0xff]
    %v5969 = vld [vmem:[%s5703 + $0x6a] sm:$0xff]
    %v5970 = vld [vmem:[%s5703 + $0x7a] sm:$0xff]
    %v5971 = vld [vmem:[%s5703 + $0x82] sm:$0xff]
    %v5972 = vld [vmem:[%s5703 + $0x92] sm:$0xff]
    %v5973 = vld [vmem:[%s5703 + $0x9a] sm:$0xff]
    %v5974 = vld [vmem:[%s5703 + $0xaa] sm:$0xff]
    %v5975 = vld [vmem:[%s5703 + $0xb2] sm:$0xff]
    %v5976 = vld [vmem:[%s5703 + $0xc2] sm:$0xff]
    %v5977 = vld [vmem:[%s5703 + $0xca] sm:$0xff]
    %v5978 = vld [vmem:[%s5703 + $0xda] sm:$0xff]
    %v5979 = vld [vmem:[%s5703 + $0xe2] sm:$0xff]
    %v5980 = vld [vmem:[%s5703 + $0xf2] sm:$0xff]
    %v5981 = vld [vmem:[%s5703 + $0xfa] sm:$0xff]
    %v5982 = vld [vmem:[%s5703 + $0x10a] sm:$0xff]
    %v5983 = vld [vmem:[%s5703 + $0x112] sm:$0xff]
    %v5984 = vld [vmem:[%s5703 + $0x122] sm:$0xff]
    %v5985 = vld [vmem:[%s5703 + $0x12a] sm:$0xff]
    %v5986 = vld [vmem:[%s5703 + $0x13a] sm:$0xff]
    %v5987 = vld [vmem:[%s5703 + $0x142] sm:$0xff]
    %v5988 = vld [vmem:[%s5703 + $0x152] sm:$0xff]
    %v5989 = vld [vmem:[%s5703 + $0x15a] sm:$0xff]
    %v5990 = vld [vmem:[%s5703 + $0x16a] sm:$0xff]
    %v5991 = vld [vmem:[%s5703 + $0x172] sm:$0xff]
    %v5992 = vld [vmem:[%s5703 + $0x1b2] sm:$0xff]
    %v5993 = vld [vmem:[%s5703 + $0x1ba] sm:$0xff]
    %v5994 = vld [vmem:[%s5703 + $0x1ca] sm:$0xff]
    %v5995 = vld [vmem:[%s5703 + $0x1d2] sm:$0xff]
    %v5996 = vld [vmem:[%s5703 + $0x1e2] sm:$0xff]
    %v5997 = vld [vmem:[%s5703 + $0x1ea] sm:$0xff]
    %v5998 = vld [vmem:[%s5703 + $0x1fa] sm:$0xff]
    %v5999 = vld [vmem:[%s5703 + $0x202] sm:$0xff]
    %v6000 = vld [vmem:[%s5703 + $0x212] sm:$0xff]
    %v6001 = vld [vmem:[%s5703 + $0x21a] sm:$0xff]
    %v6002 = vld [vmem:[%s5703 + $0x22a] sm:$0xff]
    %v6003 = vld [vmem:[%s5703 + $0x232] sm:$0xff]
    %v6004 = vld [vmem:[%s5703 + $0x242] sm:$0xff]
    %v6005 = vld [vmem:[%s5703 + $0x24a] sm:$0xff]
    %v6006 = vld [vmem:[%s5703 + $0x25a] sm:$0xff]
    %v6007 = vld [vmem:[%s5703 + $0x262] sm:$0xff]
    %v6008 = vld [vmem:[%s5703 + $0x272] sm:$0xff]
    %v6009 = vld [vmem:[%s5703 + $0x27a] sm:$0xff]
    %v6010 = vld [vmem:[%s5703 + $0x28a] sm:$0xff]
    %v6011 = vld [vmem:[%s5703 + $0x292] sm:$0xff]
    %v6012 = vld [vmem:[%s5703 + $0x2a2] sm:$0xff]
    %v6013 = vld [vmem:[%s5703 + $0x2aa] sm:$0xff]
    %v6014 = vld [vmem:[%s5703 + $0x2ba] sm:$0xff]
    %v6015 = vld [vmem:[%s5703 + $0x2c2] sm:$0xff]
    %v6016 = vld [vmem:[%s5703 + $0x2d2] sm:$0xff]
    %v6017 = vld [vmem:[%s5703 + $0x2da] sm:$0xff]
    %v6018 = vld [vmem:[%s5703 + $0x2ea] sm:$0xff]
    %v6019 = vld [vmem:[%s5703 + $0x2f2] sm:$0xff]
    %v6020 = vld [vmem:[%s5703 + $0x302] sm:$0xff]
    %v6021 = vld [vmem:[%s5703 + $0x30a] sm:$0xff]
    %v6022 = vld [vmem:[%s5703 + $0x31a] sm:$0xff]
    %v6023 = vld [vmem:[%s5703 + $0x322] sm:$0xff]
    %v6024 = vpack.c.bf16 %v5961, %v5960
    %v6025 = vpack.c.bf16 %v5963, %v5962
    %v6026 = vpack.c.bf16 %v5965, %v5964
    %v6027 = vpack.c.bf16 %v5967, %v5966
    %v6028 = vpack.c.bf16 %v5969, %v5968
    %v6029 = vpack.c.bf16 %v5971, %v5970
    %v6030 = vpack.c.bf16 %v5973, %v5972
    %v6031 = vpack.c.bf16 %v5975, %v5974
    %v6032 = vpack.c.bf16 %v5977, %v5976
    %v6033 = vpack.c.bf16 %v5979, %v5978
    %v6034 = vpack.c.bf16 %v5981, %v5980
    %v6035 = vpack.c.bf16 %v5983, %v5982
    %v6036 = vpack.c.bf16 %v5985, %v5984
    %v6037 = vpack.c.bf16 %v5987, %v5986
    %v6038 = vpack.c.bf16 %v5989, %v5988
    %v6039 = vpack.c.bf16 %v5991, %v5990
    %v6040 = vpack.c.bf16 %v5993, %v5992
    %v6041 = vpack.c.bf16 %v5995, %v5994
    %v6042 = vpack.c.bf16 %v5997, %v5996
    %v6043 = vpack.c.bf16 %v5999, %v5998
    %v6044 = vpack.c.bf16 %v6001, %v6000
    %v6045 = vpack.c.bf16 %v6003, %v6002
    %v6046 = vpack.c.bf16 %v6005, %v6004
    %v6047 = vpack.c.bf16 %v6007, %v6006
    %v6048 = vpack.c.bf16 %v6009, %v6008
    %v6049 = vpack.c.bf16 %v6011, %v6010
    %v6050 = vpack.c.bf16 %v6013, %v6012
    %v6051 = vpack.c.bf16 %v6015, %v6014
    %v6052 = vpack.c.bf16 %v6017, %v6016
    %v6053 = vpack.c.bf16 %v6019, %v6018
    %v6054 = vpack.c.bf16 %v6021, %v6020
    %v6055 = vpack.c.bf16 %v6023, %v6022
    %6056 = vst [vmem:[#allocation4 + $0x40] sm:$0xff] %v6024
    %6057 = vst [vmem:[#allocation4 + $0x88] sm:$0xff] %v6025
    %6058 = vst [vmem:[#allocation4 + $0xd0] sm:$0xff] %v6026
    %6059 = vst [vmem:[#allocation4 + $0x118] sm:$0xff] %v6027
    %6060 = vst [vmem:[#allocation4 + $0x160] sm:$0xff] %v6028
    %6061 = vst [vmem:[#allocation4 + $0x1a8] sm:$0xff] %v6029
    %6062 = vst [vmem:[#allocation4 + $0x1f0] sm:$0xff] %v6030
    %6063 = vst [vmem:[#allocation4 + $0x238] sm:$0xff] %v6031
    %6064 = vst [vmem:[#allocation4 + $0x280] sm:$0xff] %v6032
    %6065 = vst [vmem:[#allocation4 + $0x2c8] sm:$0xff] %v6033
    %6066 = vst [vmem:[#allocation4 + $0x310] sm:$0xff] %v6034
    %6067 = vst [vmem:[#allocation4 + $0x358] sm:$0xff] %v6035
    %6068 = vst [vmem:[#allocation4 + $0x3a0] sm:$0xff] %v6036
    %6069 = vst [vmem:[#allocation4 + $0x3e8] sm:$0xff] %v6037
    %6070 = vst [vmem:[#allocation4 + $0x430] sm:$0xff] %v6038
    %6071 = vst [vmem:[#allocation4 + $0x478] sm:$0xff] %v6039
    %6072 = vst [vmem:[#allocation4 + $0x4c0] sm:$0xff] %v6040
    %6073 = vst [vmem:[#allocation4 + $0x508] sm:$0xff] %v6041
    %6074 = vst [vmem:[#allocation4 + $0x550] sm:$0xff] %v6042
    %6075 = vst [vmem:[#allocation4 + $0x598] sm:$0xff] %v6043
    %6076 = vst [vmem:[#allocation4 + $0x5e0] sm:$0xff] %v6044
    %6077 = vst [vmem:[#allocation4 + $0x628] sm:$0xff] %v6045
    %6078 = vst [vmem:[#allocation4 + $0x670] sm:$0xff] %v6046
    %6079 = vst [vmem:[#allocation4 + $0x6b8] sm:$0xff] %v6047
    %6080 = vst [vmem:[#allocation4 + $0x700] sm:$0xff] %v6048
    %6081 = vst [vmem:[#allocation4 + $0x748] sm:$0xff] %v6049
    %6082 = vst [vmem:[#allocation4 + $0x790] sm:$0xff] %v6050
    %6083 = vst [vmem:[#allocation4 + $0x7d8] sm:$0xff] %v6051
    %6084 = vst [vmem:[#allocation4 + $0x820] sm:$0xff] %v6052
    %6085 = vst [vmem:[#allocation4 + $0x868] sm:$0xff] %v6053
    %6086 = vst [vmem:[#allocation4 + $0x8b0] sm:$0xff] %v6054
    %6087 = vst [vmem:[#allocation4 + $0x8f8] sm:$0xff] %v6055
    %v6088 = vld [vmem:[#allocation4] sm:$0xff]
    %v6089 = vld [vmem:[#allocation4 + $0x8] sm:$0xff]
    %v6090 = vld [vmem:[#allocation4 + $0x10] sm:$0xff]
    %v6091 = vld [vmem:[#allocation4 + $0x18] sm:$0xff]
    %v6092 = vld [vmem:[#allocation4 + $0x20] sm:$0xff]
    %v6093 = vld [vmem:[#allocation4 + $0x28] sm:$0xff]
    %v6094 = vld [vmem:[#allocation4 + $0x30] sm:$0xff]
    %v6095 = vld [vmem:[#allocation4 + $0x38] sm:$0xff]
    %v6096 = vld [vmem:[#allocation4 + $0x40] sm:$0xff]
    %v6097 = vld [vmem:[#allocation4 + $0x48] sm:$0xff]
    %v6098 = vld [vmem:[#allocation4 + $0x50] sm:$0xff]
    %v6099 = vld [vmem:[#allocation4 + $0x58] sm:$0xff]
    %v6100 = vld [vmem:[#allocation4 + $0x60] sm:$0xff]
    %v6101 = vld [vmem:[#allocation4 + $0x68] sm:$0xff]
    %v6102 = vld [vmem:[#allocation4 + $0x70] sm:$0xff]
    %v6103 = vld [vmem:[#allocation4 + $0x78] sm:$0xff]
    %v6104 = vld [vmem:[#allocation4 + $0x80] sm:$0xff]
    %v6105 = vld [vmem:[#allocation4 + $0x88] sm:$0xff]
    %v6106 = vld [vmem:[#allocation4 + $0x90] sm:$0xff]
    %v6107 = vld [vmem:[#allocation4 + $0x98] sm:$0xff]
    %v6108 = vld [vmem:[#allocation4 + $0xa0] sm:$0xff]
    %v6109 = vld [vmem:[#allocation4 + $0xa8] sm:$0xff]
    %v6110 = vld [vmem:[#allocation4 + $0xb0] sm:$0xff]
    %v6111 = vld [vmem:[#allocation4 + $0xb8] sm:$0xff]
    %v6112 = vld [vmem:[#allocation4 + $0xc0] sm:$0xff]
    %v6113 = vld [vmem:[#allocation4 + $0xc8] sm:$0xff]
    %v6114 = vld [vmem:[#allocation4 + $0xd0] sm:$0xff]
    %v6115 = vld [vmem:[#allocation4 + $0xd8] sm:$0xff]
    %v6116 = vld [vmem:[#allocation4 + $0xe0] sm:$0xff]
    %v6117 = vld [vmem:[#allocation4 + $0xe8] sm:$0xff]
    %v6118 = vld [vmem:[#allocation4 + $0xf0] sm:$0xff]
    %v6119 = vld [vmem:[#allocation4 + $0xf8] sm:$0xff]
    %v6120 = vld [vmem:[#allocation4 + $0x100] sm:$0xff]
    %v6121 = vld [vmem:[#allocation4 + $0x108] sm:$0xff]
    %v6122 = vld [vmem:[#allocation4 + $0x110] sm:$0xff]
    %v6123 = vld [vmem:[#allocation4 + $0x118] sm:$0xff]
    %v6124 = vld [vmem:[#allocation4 + $0x120] sm:$0xff]
    %v6125 = vld [vmem:[#allocation4 + $0x128] sm:$0xff]
    %v6126 = vld [vmem:[#allocation4 + $0x130] sm:$0xff]
    %v6127 = vld [vmem:[#allocation4 + $0x138] sm:$0xff]
    %v6128 = vld [vmem:[#allocation4 + $0x140] sm:$0xff]
    %v6129 = vld [vmem:[#allocation4 + $0x148] sm:$0xff]
    %v6130 = vld [vmem:[#allocation4 + $0x150] sm:$0xff]
    %v6131 = vld [vmem:[#allocation4 + $0x158] sm:$0xff]
    %v6132 = vld [vmem:[#allocation4 + $0x160] sm:$0xff]
    %v6133 = vld [vmem:[#allocation4 + $0x168] sm:$0xff]
    %v6134 = vld [vmem:[#allocation4 + $0x170] sm:$0xff]
    %v6135 = vld [vmem:[#allocation4 + $0x178] sm:$0xff]
    %v6136 = vld [vmem:[#allocation4 + $0x180] sm:$0xff]
    %v6137 = vld [vmem:[#allocation4 + $0x188] sm:$0xff]
    %v6138 = vld [vmem:[#allocation4 + $0x190] sm:$0xff]
    %v6139 = vld [vmem:[#allocation4 + $0x198] sm:$0xff]
    %v6140 = vld [vmem:[#allocation4 + $0x1a0] sm:$0xff]
    %v6141 = vld [vmem:[#allocation4 + $0x1a8] sm:$0xff]
    %v6142 = vld [vmem:[#allocation4 + $0x1b0] sm:$0xff]
    %v6143 = vld [vmem:[#allocation4 + $0x1b8] sm:$0xff]
    %v6144 = vld [vmem:[#allocation4 + $0x1c0] sm:$0xff]
    %v6145 = vld [vmem:[#allocation4 + $0x1c8] sm:$0xff]
    %v6146 = vld [vmem:[#allocation4 + $0x1d0] sm:$0xff]
    %v6147 = vld [vmem:[#allocation4 + $0x1d8] sm:$0xff]
    %v6148 = vld [vmem:[#allocation4 + $0x1e0] sm:$0xff]
    %v6149 = vld [vmem:[#allocation4 + $0x1e8] sm:$0xff]
    %v6150 = vld [vmem:[#allocation4 + $0x1f0] sm:$0xff]
    %v6151 = vld [vmem:[#allocation4 + $0x1f8] sm:$0xff]
    %v6152 = vld [vmem:[#allocation4 + $0x200] sm:$0xff]
    %v6153 = vld [vmem:[#allocation4 + $0x208] sm:$0xff]
    %v6154 = vld [vmem:[#allocation4 + $0x210] sm:$0xff]
    %v6155 = vld [vmem:[#allocation4 + $0x218] sm:$0xff]
    %v6156 = vld [vmem:[#allocation4 + $0x220] sm:$0xff]
    %v6157 = vld [vmem:[#allocation4 + $0x228] sm:$0xff]
    %v6158 = vld [vmem:[#allocation4 + $0x230] sm:$0xff]
    %v6159 = vld [vmem:[#allocation4 + $0x238] sm:$0xff]
    %v6160 = vld [vmem:[#allocation4 + $0x240] sm:$0xff]
    %v6161 = vld [vmem:[#allocation4 + $0x248] sm:$0xff]
    %v6162 = vld [vmem:[#allocation4 + $0x250] sm:$0xff]
    %v6163 = vld [vmem:[#allocation4 + $0x258] sm:$0xff]
    %v6164 = vld [vmem:[#allocation4 + $0x260] sm:$0xff]
    %v6165 = vld [vmem:[#allocation4 + $0x268] sm:$0xff]
    %v6166 = vld [vmem:[#allocation4 + $0x270] sm:$0xff]
    %v6167 = vld [vmem:[#allocation4 + $0x278] sm:$0xff]
    %v6168 = vld [vmem:[#allocation4 + $0x280] sm:$0xff]
    %v6169 = vld [vmem:[#allocation4 + $0x288] sm:$0xff]
    %v6170 = vld [vmem:[#allocation4 + $0x290] sm:$0xff]
    %v6171 = vld [vmem:[#allocation4 + $0x298] sm:$0xff]
    %v6172 = vld [vmem:[#allocation4 + $0x2a0] sm:$0xff]
    %v6173 = vld [vmem:[#allocation4 + $0x2a8] sm:$0xff]
    %v6174 = vld [vmem:[#allocation4 + $0x2b0] sm:$0xff]
    %v6175 = vld [vmem:[#allocation4 + $0x2b8] sm:$0xff]
    %v6176 = vld [vmem:[#allocation4 + $0x2c0] sm:$0xff]
    %v6177 = vld [vmem:[#allocation4 + $0x2c8] sm:$0xff]
    %v6178 = vld [vmem:[#allocation4 + $0x2d0] sm:$0xff]
    %v6179 = vld [vmem:[#allocation4 + $0x2d8] sm:$0xff]
    %v6180 = vld [vmem:[#allocation4 + $0x2e0] sm:$0xff]
    %v6181 = vld [vmem:[#allocation4 + $0x2e8] sm:$0xff]
    %v6182 = vld [vmem:[#allocation4 + $0x2f0] sm:$0xff]
    %v6183 = vld [vmem:[#allocation4 + $0x2f8] sm:$0xff]
    %v6184 = vld [vmem:[#allocation4 + $0x300] sm:$0xff]
    %v6185 = vld [vmem:[#allocation4 + $0x308] sm:$0xff]
    %v6186 = vld [vmem:[#allocation4 + $0x310] sm:$0xff]
    %v6187 = vld [vmem:[#allocation4 + $0x318] sm:$0xff]
    %v6188 = vld [vmem:[#allocation4 + $0x320] sm:$0xff]
    %v6189 = vld [vmem:[#allocation4 + $0x328] sm:$0xff]
    %v6190 = vld [vmem:[#allocation4 + $0x330] sm:$0xff]
    %v6191 = vld [vmem:[#allocation4 + $0x338] sm:$0xff]
    %v6192 = vld [vmem:[#allocation4 + $0x340] sm:$0xff]
    %v6193 = vld [vmem:[#allocation4 + $0x348] sm:$0xff]
    %v6194 = vld [vmem:[#allocation4 + $0x350] sm:$0xff]
    %v6195 = vld [vmem:[#allocation4 + $0x358] sm:$0xff]
    %v6196 = vld [vmem:[#allocation4 + $0x360] sm:$0xff]
    %v6197 = vld [vmem:[#allocation4 + $0x368] sm:$0xff]
    %v6198 = vld [vmem:[#allocation4 + $0x370] sm:$0xff]
    %v6199 = vld [vmem:[#allocation4 + $0x378] sm:$0xff]
    %v6200 = vld [vmem:[#allocation4 + $0x380] sm:$0xff]
    %v6201 = vld [vmem:[#allocation4 + $0x388] sm:$0xff]
    %v6202 = vld [vmem:[#allocation4 + $0x390] sm:$0xff]
    %v6203 = vld [vmem:[#allocation4 + $0x398] sm:$0xff]
    %v6204 = vld [vmem:[#allocation4 + $0x3a0] sm:$0xff]
    %v6205 = vld [vmem:[#allocation4 + $0x3a8] sm:$0xff]
    %v6206 = vld [vmem:[#allocation4 + $0x3b0] sm:$0xff]
    %v6207 = vld [vmem:[#allocation4 + $0x3b8] sm:$0xff]
    %v6208 = vld [vmem:[#allocation4 + $0x3c0] sm:$0xff]
    %v6209 = vld [vmem:[#allocation4 + $0x3c8] sm:$0xff]
    %v6210 = vld [vmem:[#allocation4 + $0x3d0] sm:$0xff]
    %v6211 = vld [vmem:[#allocation4 + $0x3d8] sm:$0xff]
    %v6212 = vld [vmem:[#allocation4 + $0x3e0] sm:$0xff]
    %v6213 = vld [vmem:[#allocation4 + $0x3e8] sm:$0xff]
    %v6214 = vld [vmem:[#allocation4 + $0x3f0] sm:$0xff]
    %v6215 = vld [vmem:[#allocation4 + $0x3f8] sm:$0xff]
    %v6216 = vld [vmem:[#allocation4 + $0x400] sm:$0xff]
    %v6217 = vld [vmem:[#allocation4 + $0x408] sm:$0xff]
    %v6218 = vld [vmem:[#allocation4 + $0x410] sm:$0xff]
    %v6219 = vld [vmem:[#allocation4 + $0x418] sm:$0xff]
    %v6220 = vld [vmem:[#allocation4 + $0x420] sm:$0xff]
    %v6221 = vld [vmem:[#allocation4 + $0x428] sm:$0xff]
    %v6222 = vld [vmem:[#allocation4 + $0x430] sm:$0xff]
    %v6223 = vld [vmem:[#allocation4 + $0x438] sm:$0xff]
    %v6224 = vld [vmem:[#allocation4 + $0x440] sm:$0xff]
    %v6225 = vld [vmem:[#allocation4 + $0x448] sm:$0xff]
    %v6226 = vld [vmem:[#allocation4 + $0x450] sm:$0xff]
    %v6227 = vld [vmem:[#allocation4 + $0x458] sm:$0xff]
    %v6228 = vld [vmem:[#allocation4 + $0x460] sm:$0xff]
    %v6229 = vld [vmem:[#allocation4 + $0x468] sm:$0xff]
    %v6230 = vld [vmem:[#allocation4 + $0x470] sm:$0xff]
    %v6231 = vld [vmem:[#allocation4 + $0x478] sm:$0xff]
    %v6232 = vld [vmem:[#allocation4 + $0x480] sm:$0xff]
    %v6233 = vld [vmem:[#allocation4 + $0x488] sm:$0xff]
    %v6234 = vld [vmem:[#allocation4 + $0x490] sm:$0xff]
    %v6235 = vld [vmem:[#allocation4 + $0x498] sm:$0xff]
    %v6236 = vld [vmem:[#allocation4 + $0x4a0] sm:$0xff]
    %v6237 = vld [vmem:[#allocation4 + $0x4a8] sm:$0xff]
    %v6238 = vld [vmem:[#allocation4 + $0x4b0] sm:$0xff]
    %v6239 = vld [vmem:[#allocation4 + $0x4b8] sm:$0xff]
    %v6240 = vld [vmem:[#allocation4 + $0x4c0] sm:$0xff]
    %v6241 = vld [vmem:[#allocation4 + $0x4c8] sm:$0xff]
    %v6242 = vld [vmem:[#allocation4 + $0x4d0] sm:$0xff]
    %v6243 = vld [vmem:[#allocation4 + $0x4d8] sm:$0xff]
    %v6244 = vld [vmem:[#allocation4 + $0x4e0] sm:$0xff]
    %v6245 = vld [vmem:[#allocation4 + $0x4e8] sm:$0xff]
    %v6246 = vld [vmem:[#allocation4 + $0x4f0] sm:$0xff]
    %v6247 = vld [vmem:[#allocation4 + $0x4f8] sm:$0xff]
    %v6248 = vld [vmem:[#allocation4 + $0x500] sm:$0xff]
    %v6249 = vld [vmem:[#allocation4 + $0x508] sm:$0xff]
    %v6250 = vld [vmem:[#allocation4 + $0x510] sm:$0xff]
    %v6251 = vld [vmem:[#allocation4 + $0x518] sm:$0xff]
    %v6252 = vld [vmem:[#allocation4 + $0x520] sm:$0xff]
    %v6253 = vld [vmem:[#allocation4 + $0x528] sm:$0xff]
    %v6254 = vld [vmem:[#allocation4 + $0x530] sm:$0xff]
    %v6255 = vld [vmem:[#allocation4 + $0x538] sm:$0xff]
    %v6256 = vld [vmem:[#allocation4 + $0x540] sm:$0xff]
    %v6257 = vld [vmem:[#allocation4 + $0x548] sm:$0xff]
    %v6258 = vld [vmem:[#allocation4 + $0x550] sm:$0xff]
    %v6259 = vld [vmem:[#allocation4 + $0x558] sm:$0xff]
    %v6260 = vld [vmem:[#allocation4 + $0x560] sm:$0xff]
    %v6261 = vld [vmem:[#allocation4 + $0x568] sm:$0xff]
    %v6262 = vld [vmem:[#allocation4 + $0x570] sm:$0xff]
    %v6263 = vld [vmem:[#allocation4 + $0x578] sm:$0xff]
    %v6264 = vld [vmem:[#allocation4 + $0x580] sm:$0xff]
    %v6265 = vld [vmem:[#allocation4 + $0x588] sm:$0xff]
    %v6266 = vld [vmem:[#allocation4 + $0x590] sm:$0xff]
    %v6267 = vld [vmem:[#allocation4 + $0x598] sm:$0xff]
    %v6268 = vld [vmem:[#allocation4 + $0x5a0] sm:$0xff]
    %v6269 = vld [vmem:[#allocation4 + $0x5a8] sm:$0xff]
    %v6270 = vld [vmem:[#allocation4 + $0x5b0] sm:$0xff]
    %v6271 = vld [vmem:[#allocation4 + $0x5b8] sm:$0xff]
    %v6272 = vld [vmem:[#allocation4 + $0x5c0] sm:$0xff]
    %v6273 = vld [vmem:[#allocation4 + $0x5c8] sm:$0xff]
    %v6274 = vld [vmem:[#allocation4 + $0x5d0] sm:$0xff]
    %v6275 = vld [vmem:[#allocation4 + $0x5d8] sm:$0xff]
    %v6276 = vld [vmem:[#allocation4 + $0x5e0] sm:$0xff]
    %v6277 = vld [vmem:[#allocation4 + $0x5e8] sm:$0xff]
    %v6278 = vld [vmem:[#allocation4 + $0x5f0] sm:$0xff]
    %v6279 = vld [vmem:[#allocation4 + $0x5f8] sm:$0xff]
    %v6280 = vld [vmem:[#allocation4 + $0x600] sm:$0xff]
    %v6281 = vld [vmem:[#allocation4 + $0x608] sm:$0xff]
    %v6282 = vld [vmem:[#allocation4 + $0x610] sm:$0xff]
    %v6283 = vld [vmem:[#allocation4 + $0x618] sm:$0xff]
    %v6284 = vld [vmem:[#allocation4 + $0x620] sm:$0xff]
    %v6285 = vld [vmem:[#allocation4 + $0x628] sm:$0xff]
    %v6286 = vld [vmem:[#allocation4 + $0x630] sm:$0xff]
    %v6287 = vld [vmem:[#allocation4 + $0x638] sm:$0xff]
    %v6288 = vld [vmem:[#allocation4 + $0x640] sm:$0xff]
    %v6289 = vld [vmem:[#allocation4 + $0x648] sm:$0xff]
    %v6290 = vld [vmem:[#allocation4 + $0x650] sm:$0xff]
    %v6291 = vld [vmem:[#allocation4 + $0x658] sm:$0xff]
    %v6292 = vld [vmem:[#allocation4 + $0x660] sm:$0xff]
    %v6293 = vld [vmem:[#allocation4 + $0x668] sm:$0xff]
    %v6294 = vld [vmem:[#allocation4 + $0x670] sm:$0xff]
    %v6295 = vld [vmem:[#allocation4 + $0x678] sm:$0xff]
    %v6296 = vld [vmem:[#allocation4 + $0x680] sm:$0xff]
    %v6297 = vld [vmem:[#allocation4 + $0x688] sm:$0xff]
    %v6298 = vld [vmem:[#allocation4 + $0x690] sm:$0xff]
    %v6299 = vld [vmem:[#allocation4 + $0x698] sm:$0xff]
    %v6300 = vld [vmem:[#allocation4 + $0x6a0] sm:$0xff]
    %v6301 = vld [vmem:[#allocation4 + $0x6a8] sm:$0xff]
    %v6302 = vld [vmem:[#allocation4 + $0x6b0] sm:$0xff]
    %v6303 = vld [vmem:[#allocation4 + $0x6b8] sm:$0xff]
    %v6304 = vld [vmem:[#allocation4 + $0x6c0] sm:$0xff]
    %v6305 = vld [vmem:[#allocation4 + $0x6c8] sm:$0xff]
    %v6306 = vld [vmem:[#allocation4 + $0x6d0] sm:$0xff]
    %v6307 = vld [vmem:[#allocation4 + $0x6d8] sm:$0xff]
    %v6308 = vld [vmem:[#allocation4 + $0x6e0] sm:$0xff]
    %v6309 = vld [vmem:[#allocation4 + $0x6e8] sm:$0xff]
    %v6310 = vld [vmem:[#allocation4 + $0x6f0] sm:$0xff]
    %v6311 = vld [vmem:[#allocation4 + $0x6f8] sm:$0xff]
    %v6312 = vld [vmem:[#allocation4 + $0x700] sm:$0xff]
    %v6313 = vld [vmem:[#allocation4 + $0x708] sm:$0xff]
    %v6314 = vld [vmem:[#allocation4 + $0x710] sm:$0xff]
    %v6315 = vld [vmem:[#allocation4 + $0x718] sm:$0xff]
    %v6316 = vld [vmem:[#allocation4 + $0x720] sm:$0xff]
    %v6317 = vld [vmem:[#allocation4 + $0x728] sm:$0xff]
    %v6318 = vld [vmem:[#allocation4 + $0x730] sm:$0xff]
    %v6319 = vld [vmem:[#allocation4 + $0x738] sm:$0xff]
    %v6320 = vld [vmem:[#allocation4 + $0x740] sm:$0xff]
    %v6321 = vld [vmem:[#allocation4 + $0x748] sm:$0xff]
    %v6322 = vld [vmem:[#allocation4 + $0x750] sm:$0xff]
    %v6323 = vld [vmem:[#allocation4 + $0x758] sm:$0xff]
    %v6324 = vld [vmem:[#allocation4 + $0x760] sm:$0xff]
    %v6325 = vld [vmem:[#allocation4 + $0x768] sm:$0xff]
    %v6326 = vld [vmem:[#allocation4 + $0x770] sm:$0xff]
    %v6327 = vld [vmem:[#allocation4 + $0x778] sm:$0xff]
    %v6328 = vld [vmem:[#allocation4 + $0x780] sm:$0xff]
    %v6329 = vld [vmem:[#allocation4 + $0x788] sm:$0xff]
    %v6330 = vld [vmem:[#allocation4 + $0x790] sm:$0xff]
    %v6331 = vld [vmem:[#allocation4 + $0x798] sm:$0xff]
    %v6332 = vld [vmem:[#allocation4 + $0x7a0] sm:$0xff]
    %v6333 = vld [vmem:[#allocation4 + $0x7a8] sm:$0xff]
    %v6334 = vld [vmem:[#allocation4 + $0x7b0] sm:$0xff]
    %v6335 = vld [vmem:[#allocation4 + $0x7b8] sm:$0xff]
    %v6336 = vld [vmem:[#allocation4 + $0x7c0] sm:$0xff]
    %v6337 = vld [vmem:[#allocation4 + $0x7c8] sm:$0xff]
    %v6338 = vld [vmem:[#allocation4 + $0x7d0] sm:$0xff]
    %v6339 = vld [vmem:[#allocation4 + $0x7d8] sm:$0xff]
    %v6340 = vld [vmem:[#allocation4 + $0x7e0] sm:$0xff]
    %v6341 = vld [vmem:[#allocation4 + $0x7e8] sm:$0xff]
    %v6342 = vld [vmem:[#allocation4 + $0x7f0] sm:$0xff]
    %v6343 = vld [vmem:[#allocation4 + $0x7f8] sm:$0xff]
    %v6344 = vld [vmem:[#allocation4 + $0x800] sm:$0xff]
    %v6345 = vld [vmem:[#allocation4 + $0x808] sm:$0xff]
    %v6346 = vld [vmem:[#allocation4 + $0x810] sm:$0xff]
    %v6347 = vld [vmem:[#allocation4 + $0x818] sm:$0xff]
    %v6348 = vld [vmem:[#allocation4 + $0x820] sm:$0xff]
    %v6349 = vld [vmem:[#allocation4 + $0x828] sm:$0xff]
    %v6350 = vld [vmem:[#allocation4 + $0x830] sm:$0xff]
    %v6351 = vld [vmem:[#allocation4 + $0x838] sm:$0xff]
    %v6352 = vld [vmem:[#allocation4 + $0x840] sm:$0xff]
    %v6353 = vld [vmem:[#allocation4 + $0x848] sm:$0xff]
    %v6354 = vld [vmem:[#allocation4 + $0x850] sm:$0xff]
    %v6355 = vld [vmem:[#allocation4 + $0x858] sm:$0xff]
    %v6356 = vld [vmem:[#allocation4 + $0x860] sm:$0xff]
    %v6357 = vld [vmem:[#allocation4 + $0x868] sm:$0xff]
    %v6358 = vld [vmem:[#allocation4 + $0x870] sm:$0xff]
    %v6359 = vld [vmem:[#allocation4 + $0x878] sm:$0xff]
    %v6360 = vld [vmem:[#allocation4 + $0x880] sm:$0xff]
    %v6361 = vld [vmem:[#allocation4 + $0x888] sm:$0xff]
    %v6362 = vld [vmem:[#allocation4 + $0x890] sm:$0xff]
    %v6363 = vld [vmem:[#allocation4 + $0x898] sm:$0xff]
    %v6364 = vld [vmem:[#allocation4 + $0x8a0] sm:$0xff]
    %v6365 = vld [vmem:[#allocation4 + $0x8a8] sm:$0xff]
    %v6366 = vld [vmem:[#allocation4 + $0x8b0] sm:$0xff]
    %v6367 = vld [vmem:[#allocation4 + $0x8b8] sm:$0xff]
    %v6368 = vld [vmem:[#allocation4 + $0x8c0] sm:$0xff]
    %v6369 = vld [vmem:[#allocation4 + $0x8c8] sm:$0xff]
    %v6370 = vld [vmem:[#allocation4 + $0x8d0] sm:$0xff]
    %v6371 = vld [vmem:[#allocation4 + $0x8d8] sm:$0xff]
    %v6372 = vld [vmem:[#allocation4 + $0x8e0] sm:$0xff]
    %v6373 = vld [vmem:[#allocation4 + $0x8e8] sm:$0xff]
    %v6374 = vld [vmem:[#allocation4 + $0x8f0] sm:$0xff]
    %v6375 = vld [vmem:[#allocation4 + $0x8f8] sm:$0xff]
    %v6376 = vld [vmem:[#allocation13] sm:$0xf]
    %v6377 = vld [vmem:[#allocation13 + $0x4] sm:$0xf]
    %v6378 = vld [vmem:[#allocation13 + $0x8] sm:$0xf]
    %v6379 = vld [vmem:[#allocation13 + $0xc] sm:$0xf]
    %v6380 = vld [vmem:[#allocation13 + $0x10] sm:$0xf]
    %v6381 = vld [vmem:[#allocation13 + $0x14] sm:$0xf]
    %v6382 = vld [vmem:[#allocation13 + $0x18] sm:$0xf]
    %v6383 = vld [vmem:[#allocation13 + $0x1c] sm:$0xf]
    %v6384 = vld [vmem:[#allocation13 + $0x20] sm:$0xf]
    %v6385 = vld [vmem:[#allocation13 + $0x24] sm:$0xf]
    %v6386 = vld [vmem:[#allocation13 + $0x28] sm:$0xf]
    %v6387 = vld [vmem:[#allocation13 + $0x2c] sm:$0xf]
    %v6388 = vld [vmem:[#allocation13 + $0x30] sm:$0xf]
    %v6389 = vld [vmem:[#allocation13 + $0x34] sm:$0xf]
    %v6390 = vld [vmem:[#allocation13 + $0x38] sm:$0xf]
    %v6391 = vld [vmem:[#allocation13 + $0x3c] sm:$0xf]
    %v6392 = vld [vmem:[#allocation13 + $0x40] sm:$0xf]
    %v6393 = vld [vmem:[#allocation13 + $0x44] sm:$0xf]
    %v6394 = vld [vmem:[#allocation13 + $0x48] sm:$0xf]
    %v6395 = vld [vmem:[#allocation13 + $0x4c] sm:$0xf]
    %v6396 = vld [vmem:[#allocation13 + $0x50] sm:$0xf]
    %v6397 = vld [vmem:[#allocation13 + $0x54] sm:$0xf]
    %v6398 = vld [vmem:[#allocation13 + $0x58] sm:$0xf]
    %v6399 = vld [vmem:[#allocation13 + $0x5c] sm:$0xf]
    %v6400 = vld [vmem:[#allocation13 + $0x60] sm:$0xf]
    %v6401 = vld [vmem:[#allocation13 + $0x64] sm:$0xf]
    %v6402 = vld [vmem:[#allocation13 + $0x68] sm:$0xf]
    %v6403 = vld [vmem:[#allocation13 + $0x6c] sm:$0xf]
    %v6404 = vld [vmem:[#allocation13 + $0x70] sm:$0xf]
    %v6405 = vld [vmem:[#allocation13 + $0x74] sm:$0xf]
    %v6406 = vld [vmem:[#allocation13 + $0x78] sm:$0xf]
    %v6407 = vld [vmem:[#allocation13 + $0x7c] sm:$0xf]
    %v6408 = vld [vmem:[#allocation13 + $0x80] sm:$0xf]
    %v6409 = vld [vmem:[#allocation13 + $0x84] sm:$0xf]
    %v6410 = vld [vmem:[#allocation13 + $0x88] sm:$0xf]
    %v6411 = vld [vmem:[#allocation13 + $0x8c] sm:$0xf]
    %v6412 = vld [vmem:[#allocation13 + $0x90] sm:$0xf]
    %v6413 = vld [vmem:[#allocation13 + $0x94] sm:$0xf]
    %v6414 = vld [vmem:[#allocation13 + $0x98] sm:$0xf]
    %v6415 = vld [vmem:[#allocation13 + $0x9c] sm:$0xf]
    %v6416 = vld [vmem:[#allocation13 + $0xa0] sm:$0xf]
    %v6417 = vld [vmem:[#allocation13 + $0xa4] sm:$0xf]
    %v6418 = vld [vmem:[#allocation13 + $0xa8] sm:$0xf]
    %v6419 = vld [vmem:[#allocation13 + $0xac] sm:$0xf]
    %v6420 = vld [vmem:[#allocation13 + $0xb0] sm:$0xf]
    %v6421 = vld [vmem:[#allocation13 + $0xb4] sm:$0xf]
    %v6422 = vld [vmem:[#allocation13 + $0xb8] sm:$0xf]
    %v6423 = vld [vmem:[#allocation13 + $0xbc] sm:$0xf]
    %v6424 = vld [vmem:[#allocation13 + $0xc0] sm:$0xf]
    %v6425 = vld [vmem:[#allocation13 + $0xc4] sm:$0xf]
    %v6426 = vld [vmem:[#allocation13 + $0xc8] sm:$0xf]
    %v6427 = vld [vmem:[#allocation13 + $0xcc] sm:$0xf]
    %v6428 = vld [vmem:[#allocation13 + $0xd0] sm:$0xf]
    %v6429 = vld [vmem:[#allocation13 + $0xd4] sm:$0xf]
    %v6430 = vld [vmem:[#allocation13 + $0xd8] sm:$0xf]
    %v6431 = vld [vmem:[#allocation13 + $0xdc] sm:$0xf]
    %v6432 = vld [vmem:[#allocation13 + $0xe0] sm:$0xf]
    %v6433 = vld [vmem:[#allocation13 + $0xe4] sm:$0xf]
    %v6434 = vld [vmem:[#allocation13 + $0xe8] sm:$0xf]
    %v6435 = vld [vmem:[#allocation13 + $0xec] sm:$0xf]
    %v6436 = vld [vmem:[#allocation13 + $0xf0] sm:$0xf]
    %v6437 = vld [vmem:[#allocation13 + $0xf4] sm:$0xf]
    %v6438 = vld [vmem:[#allocation13 + $0xf8] sm:$0xf]
    %v6439 = vld [vmem:[#allocation13 + $0xfc] sm:$0xf]
    %v6440 = vld [vmem:[#allocation13 + $0x100] sm:$0xf]
    %v6441 = vld [vmem:[#allocation13 + $0x104] sm:$0xf]
    %v6442 = vld [vmem:[#allocation13 + $0x108] sm:$0xf]
    %v6443 = vld [vmem:[#allocation13 + $0x10c] sm:$0xf]
    %v6444 = vld [vmem:[#allocation13 + $0x110] sm:$0xf]
    %v6445 = vld [vmem:[#allocation13 + $0x114] sm:$0xf]
    %v6446 = vld [vmem:[#allocation13 + $0x118] sm:$0xf]
    %v6447 = vld [vmem:[#allocation13 + $0x11c] sm:$0xf]
    %v6448 = vld [vmem:[#allocation13 + $0x120] sm:$0xf]
    %v6449 = vld [vmem:[#allocation13 + $0x124] sm:$0xf]
    %v6450 = vld [vmem:[#allocation13 + $0x128] sm:$0xf]
    %v6451 = vld [vmem:[#allocation13 + $0x12c] sm:$0xf]
    %v6452 = vld [vmem:[#allocation13 + $0x130] sm:$0xf]
    %v6453 = vld [vmem:[#allocation13 + $0x134] sm:$0xf]
    %v6454 = vld [vmem:[#allocation13 + $0x138] sm:$0xf]
    %v6455 = vld [vmem:[#allocation13 + $0x13c] sm:$0xf]
    %v6456 = vld [vmem:[#allocation13 + $0x140] sm:$0xf]
    %v6457 = vld [vmem:[#allocation13 + $0x144] sm:$0xf]
    %v6458 = vld [vmem:[#allocation13 + $0x148] sm:$0xf]
    %v6459 = vld [vmem:[#allocation13 + $0x14c] sm:$0xf]
    %v6460 = vld [vmem:[#allocation13 + $0x150] sm:$0xf]
    %v6461 = vld [vmem:[#allocation13 + $0x154] sm:$0xf]
    %v6462 = vld [vmem:[#allocation13 + $0x158] sm:$0xf]
    %v6463 = vld [vmem:[#allocation13 + $0x15c] sm:$0xf]
    %v6464 = vld [vmem:[#allocation13 + $0x160] sm:$0xf]
    %v6465 = vld [vmem:[#allocation13 + $0x164] sm:$0xf]
    %v6466 = vld [vmem:[#allocation13 + $0x168] sm:$0xf]
    %v6467 = vld [vmem:[#allocation13 + $0x16c] sm:$0xf]
    %v6468 = vld [vmem:[#allocation13 + $0x170] sm:$0xf]
    %v6469 = vld [vmem:[#allocation13 + $0x174] sm:$0xf]
    %v6470 = vld [vmem:[#allocation13 + $0x178] sm:$0xf]
    %v6471 = vld [vmem:[#allocation13 + $0x17c] sm:$0xf]
    %v6472 = vld [vmem:[#allocation13 + $0x180] sm:$0xf]
    %v6473 = vld [vmem:[#allocation13 + $0x184] sm:$0xf]
    %v6474 = vld [vmem:[#allocation13 + $0x188] sm:$0xf]
    %v6475 = vld [vmem:[#allocation13 + $0x18c] sm:$0xf]
    %v6476 = vld [vmem:[#allocation13 + $0x190] sm:$0xf]
    %v6477 = vld [vmem:[#allocation13 + $0x194] sm:$0xf]
    %v6478 = vld [vmem:[#allocation13 + $0x198] sm:$0xf]
    %v6479 = vld [vmem:[#allocation13 + $0x19c] sm:$0xf]
    %v6480 = vld [vmem:[#allocation13 + $0x1a0] sm:$0xf]
    %v6481 = vld [vmem:[#allocation13 + $0x1a4] sm:$0xf]
    %v6482 = vld [vmem:[#allocation13 + $0x1a8] sm:$0xf]
    %v6483 = vld [vmem:[#allocation13 + $0x1ac] sm:$0xf]
    %v6484 = vld [vmem:[#allocation13 + $0x1b0] sm:$0xf]
    %v6485 = vld [vmem:[#allocation13 + $0x1b4] sm:$0xf]
    %v6486 = vld [vmem:[#allocation13 + $0x1b8] sm:$0xf]
    %v6487 = vld [vmem:[#allocation13 + $0x1bc] sm:$0xf]
    %v6488 = vld [vmem:[#allocation13 + $0x1c0] sm:$0xf]
    %v6489 = vld [vmem:[#allocation13 + $0x1c4] sm:$0xf]
    %v6490 = vld [vmem:[#allocation13 + $0x1c8] sm:$0xf]
    %v6491 = vld [vmem:[#allocation13 + $0x1cc] sm:$0xf]
    %v6492 = vld [vmem:[#allocation13 + $0x1d0] sm:$0xf]
    %v6493 = vld [vmem:[#allocation13 + $0x1d4] sm:$0xf]
    %v6494 = vld [vmem:[#allocation13 + $0x1d8] sm:$0xf]
    %v6495 = vld [vmem:[#allocation13 + $0x1dc] sm:$0xf]
    %v6496 = vld [vmem:[#allocation13 + $0x1e0] sm:$0xf]
    %v6497 = vld [vmem:[#allocation13 + $0x1e4] sm:$0xf]
    %v6498 = vld [vmem:[#allocation13 + $0x1e8] sm:$0xf]
    %v6499 = vld [vmem:[#allocation13 + $0x1ec] sm:$0xf]
    %v6500 = vld [vmem:[#allocation13 + $0x1f0] sm:$0xf]
    %v6501 = vld [vmem:[#allocation13 + $0x1f4] sm:$0xf]
    %v6502 = vld [vmem:[#allocation13 + $0x1f8] sm:$0xf]
    %v6503 = vld [vmem:[#allocation13 + $0x1fc] sm:$0xf]
    %v6504 = vld [vmem:[#allocation13 + $0x200] sm:$0xf]
    %v6505 = vld [vmem:[#allocation13 + $0x204] sm:$0xf]
    %v6506 = vld [vmem:[#allocation13 + $0x208] sm:$0xf]
    %v6507 = vld [vmem:[#allocation13 + $0x20c] sm:$0xf]
    %v6508 = vld [vmem:[#allocation13 + $0x210] sm:$0xf]
    %v6509 = vld [vmem:[#allocation13 + $0x214] sm:$0xf]
    %v6510 = vld [vmem:[#allocation13 + $0x218] sm:$0xf]
    %v6511 = vld [vmem:[#allocation13 + $0x21c] sm:$0xf]
    %v6512 = vld [vmem:[#allocation13 + $0x220] sm:$0xf]
    %v6513 = vld [vmem:[#allocation13 + $0x224] sm:$0xf]
    %v6514 = vld [vmem:[#allocation13 + $0x228] sm:$0xf]
    %v6515 = vld [vmem:[#allocation13 + $0x22c] sm:$0xf]
    %v6516 = vld [vmem:[#allocation13 + $0x230] sm:$0xf]
    %v6517 = vld [vmem:[#allocation13 + $0x234] sm:$0xf]
    %v6518 = vld [vmem:[#allocation13 + $0x238] sm:$0xf]
    %v6519 = vld [vmem:[#allocation13 + $0x23c] sm:$0xf]
    %v6664 = vunpack.c.l.b16 %v6376
    %v6665 = vunpack.c.l.b16 %v6377
    %v6666 = vunpack.c.l.b16 %v6378
    %v6667 = vunpack.c.l.b16 %v6379
    %v6668 = vunpack.c.l.b16 %v6380
    %v6669 = vunpack.c.l.b16 %v6381
    %v6670 = vunpack.c.l.b16 %v6382
    %v6671 = vunpack.c.l.b16 %v6383
    %v6672 = vunpack.c.l.b16 %v6384
    %v6673 = vunpack.c.l.b16 %v6385
    %v6674 = vunpack.c.l.b16 %v6386
    %v6675 = vunpack.c.l.b16 %v6387
    %v6676 = vunpack.c.l.b16 %v6388
    %v6677 = vunpack.c.l.b16 %v6389
    %v6678 = vunpack.c.l.b16 %v6390
    %v6679 = vunpack.c.l.b16 %v6391
    %v6680 = vunpack.c.l.b16 %v6392
    %v6681 = vunpack.c.l.b16 %v6393
    %v6682 = vunpack.c.l.b16 %v6394
    %v6683 = vunpack.c.l.b16 %v6395
    %v6684 = vunpack.c.l.b16 %v6396
    %v6685 = vunpack.c.l.b16 %v6397
    %v6686 = vunpack.c.l.b16 %v6398
    %v6687 = vunpack.c.l.b16 %v6399
    %v6688 = vunpack.c.l.b16 %v6400
    %v6689 = vunpack.c.l.b16 %v6401
    %v6690 = vunpack.c.l.b16 %v6402
    %v6691 = vunpack.c.l.b16 %v6403
    %v6692 = vunpack.c.l.b16 %v6404
    %v6693 = vunpack.c.l.b16 %v6405
    %v6694 = vunpack.c.l.b16 %v6406
    %v6695 = vunpack.c.l.b16 %v6407
    %v6696 = vunpack.c.l.b16 %v6408
    %v6697 = vunpack.c.l.b16 %v6409
    %v6698 = vunpack.c.l.b16 %v6410
    %v6699 = vunpack.c.l.b16 %v6411
    %v6700 = vunpack.c.l.b16 %v6412
    %v6701 = vunpack.c.l.b16 %v6413
    %v6702 = vunpack.c.l.b16 %v6414
    %v6703 = vunpack.c.l.b16 %v6415
    %v6704 = vunpack.c.l.b16 %v6416
    %v6705 = vunpack.c.l.b16 %v6417
    %v6706 = vunpack.c.l.b16 %v6418
    %v6707 = vunpack.c.l.b16 %v6419
    %v6708 = vunpack.c.l.b16 %v6420
    %v6709 = vunpack.c.l.b16 %v6421
    %v6710 = vunpack.c.l.b16 %v6422
    %v6711 = vunpack.c.l.b16 %v6423
    %v6712 = vunpack.c.l.b16 %v6424
    %v6713 = vunpack.c.l.b16 %v6425
    %v6714 = vunpack.c.l.b16 %v6426
    %v6715 = vunpack.c.l.b16 %v6427
    %v6716 = vunpack.c.l.b16 %v6428
    %v6717 = vunpack.c.l.b16 %v6429
    %v6718 = vunpack.c.l.b16 %v6430
    %v6719 = vunpack.c.l.b16 %v6431
    %v6720 = vunpack.c.l.b16 %v6432
    %v6721 = vunpack.c.l.b16 %v6433
    %v6722 = vunpack.c.l.b16 %v6434
    %v6723 = vunpack.c.l.b16 %v6435
    %v6724 = vunpack.c.l.b16 %v6436
    %v6725 = vunpack.c.l.b16 %v6437
    %v6726 = vunpack.c.l.b16 %v6438
    %v6727 = vunpack.c.l.b16 %v6439
    %v6728 = vunpack.c.l.b16 %v6440
    %v6729 = vunpack.c.l.b16 %v6441
    %v6730 = vunpack.c.l.b16 %v6442
    %v6731 = vunpack.c.l.b16 %v6443
    %v6732 = vunpack.c.l.b16 %v6444
    %v6733 = vunpack.c.l.b16 %v6445
    %v6734 = vunpack.c.l.b16 %v6446
    %v6735 = vunpack.c.l.b16 %v6447
    %v6736 = vunpack.c.l.b16 %v6448
    %v6737 = vunpack.c.l.b16 %v6449
    %v6738 = vunpack.c.l.b16 %v6450
    %v6739 = vunpack.c.l.b16 %v6451
    %v6740 = vunpack.c.l.b16 %v6452
    %v6741 = vunpack.c.l.b16 %v6453
    %v6742 = vunpack.c.l.b16 %v6454
    %v6743 = vunpack.c.l.b16 %v6455
    %v6744 = vunpack.c.l.b16 %v6456
    %v6745 = vunpack.c.l.b16 %v6457
    %v6746 = vunpack.c.l.b16 %v6458
    %v6747 = vunpack.c.l.b16 %v6459
    %v6748 = vunpack.c.l.b16 %v6460
    %v6749 = vunpack.c.l.b16 %v6461
    %v6750 = vunpack.c.l.b16 %v6462
    %v6751 = vunpack.c.l.b16 %v6463
    %v6752 = vunpack.c.l.b16 %v6464
    %v6753 = vunpack.c.l.b16 %v6465
    %v6754 = vunpack.c.l.b16 %v6466
    %v6755 = vunpack.c.l.b16 %v6467
    %v6756 = vunpack.c.l.b16 %v6468
    %v6757 = vunpack.c.l.b16 %v6469
    %v6758 = vunpack.c.l.b16 %v6470
    %v6759 = vunpack.c.l.b16 %v6471
    %v6760 = vunpack.c.l.b16 %v6472
    %v6761 = vunpack.c.l.b16 %v6473
    %v6762 = vunpack.c.l.b16 %v6474
    %v6763 = vunpack.c.l.b16 %v6475
    %v6764 = vunpack.c.l.b16 %v6476
    %v6765 = vunpack.c.l.b16 %v6477
    %v6766 = vunpack.c.l.b16 %v6478
    %v6767 = vunpack.c.l.b16 %v6479
    %v6768 = vunpack.c.l.b16 %v6480
    %v6769 = vunpack.c.l.b16 %v6481
    %v6770 = vunpack.c.l.b16 %v6482
    %v6771 = vunpack.c.l.b16 %v6483
    %v6772 = vunpack.c.l.b16 %v6484
    %v6773 = vunpack.c.l.b16 %v6485
    %v6774 = vunpack.c.l.b16 %v6486
    %v6775 = vunpack.c.l.b16 %v6487
    %v6776 = vunpack.c.l.b16 %v6488
    %v6777 = vunpack.c.l.b16 %v6489
    %v6778 = vunpack.c.l.b16 %v6490
    %v6779 = vunpack.c.l.b16 %v6491
    %v6780 = vunpack.c.l.b16 %v6492
    %v6781 = vunpack.c.l.b16 %v6493
    %v6782 = vunpack.c.l.b16 %v6494
    %v6783 = vunpack.c.l.b16 %v6495
    %v6784 = vunpack.c.l.b16 %v6496
    %v6785 = vunpack.c.l.b16 %v6497
    %v6786 = vunpack.c.l.b16 %v6498
    %v6787 = vunpack.c.l.b16 %v6499
    %v6788 = vunpack.c.l.b16 %v6500
    %v6789 = vunpack.c.l.b16 %v6501
    %v6790 = vunpack.c.l.b16 %v6502
    %v6791 = vunpack.c.l.b16 %v6503
    %v6792 = vunpack.c.l.b16 %v6504
    %v6793 = vunpack.c.l.b16 %v6505
    %v6794 = vunpack.c.l.b16 %v6506
    %v6795 = vunpack.c.l.b16 %v6507
    %v6796 = vunpack.c.l.b16 %v6508
    %v6797 = vunpack.c.l.b16 %v6509
    %v6798 = vunpack.c.l.b16 %v6510
    %v6799 = vunpack.c.l.b16 %v6511
    %v6800 = vunpack.c.l.b16 %v6512
    %v6801 = vunpack.c.l.b16 %v6513
    %v6802 = vunpack.c.l.b16 %v6514
    %v6803 = vunpack.c.l.b16 %v6515
    %v6804 = vunpack.c.l.b16 %v6516
    %v6805 = vunpack.c.l.b16 %v6517
    %v6806 = vunpack.c.l.b16 %v6518
    %v6807 = vunpack.c.l.b16 %v6519
    %v6808 = vpack.c.b16 %v6665, %v6664
    %v6809 = vpack.c.b16 %v6667, %v6666
    %v6810 = vpack.c.b16 %v6669, %v6668
    %v6811 = vpack.c.b16 %v6671, %v6670
    %v6812 = vpack.c.b16 %v6673, %v6672
    %v6813 = vpack.c.b16 %v6675, %v6674
    %v6814 = vpack.c.b16 %v6677, %v6676
    %v6815 = vpack.c.b16 %v6679, %v6678
    %v6816 = vpack.c.b16 %v6681, %v6680
    %v6817 = vpack.c.b16 %v6683, %v6682
    %v6818 = vpack.c.b16 %v6685, %v6684
    %v6819 = vpack.c.b16 %v6687, %v6686
    %v6820 = vpack.c.b16 %v6689, %v6688
    %v6821 = vpack.c.b16 %v6691, %v6690
    %v6822 = vpack.c.b16 %v6693, %v6692
    %v6823 = vpack.c.b16 %v6695, %v6694
    %v6824 = vpack.c.b16 %v6697, %v6696
    %v6825 = vpack.c.b16 %v6699, %v6698
    %v6826 = vpack.c.b16 %v6701, %v6700
    %v6827 = vpack.c.b16 %v6703, %v6702
    %v6828 = vpack.c.b16 %v6705, %v6704
    %v6829 = vpack.c.b16 %v6707, %v6706
    %v6830 = vpack.c.b16 %v6709, %v6708
    %v6831 = vpack.c.b16 %v6711, %v6710
    %v6832 = vpack.c.b16 %v6713, %v6712
    %v6833 = vpack.c.b16 %v6715, %v6714
    %v6834 = vpack.c.b16 %v6717, %v6716
    %v6835 = vpack.c.b16 %v6719, %v6718
    %v6836 = vpack.c.b16 %v6721, %v6720
    %v6837 = vpack.c.b16 %v6723, %v6722
    %v6838 = vpack.c.b16 %v6725, %v6724
    %v6839 = vpack.c.b16 %v6727, %v6726
    %v6840 = vpack.c.b16 %v6729, %v6728
    %v6841 = vpack.c.b16 %v6731, %v6730
    %v6842 = vpack.c.b16 %v6733, %v6732
    %v6843 = vpack.c.b16 %v6735, %v6734
    %v6844 = vpack.c.b16 %v6737, %v6736
    %v6845 = vpack.c.b16 %v6739, %v6738
    %v6846 = vpack.c.b16 %v6741, %v6740
    %v6847 = vpack.c.b16 %v6743, %v6742
    %v6848 = vpack.c.b16 %v6745, %v6744
    %v6849 = vpack.c.b16 %v6747, %v6746
    %v6850 = vpack.c.b16 %v6749, %v6748
    %v6851 = vpack.c.b16 %v6751, %v6750
    %v6852 = vpack.c.b16 %v6753, %v6752
    %v6853 = vpack.c.b16 %v6755, %v6754
    %v6854 = vpack.c.b16 %v6757, %v6756
    %v6855 = vpack.c.b16 %v6759, %v6758
    %v6856 = vpack.c.b16 %v6761, %v6760
    %v6857 = vpack.c.b16 %v6763, %v6762
    %v6858 = vpack.c.b16 %v6765, %v6764
    %v6859 = vpack.c.b16 %v6767, %v6766
    %v6860 = vpack.c.b16 %v6769, %v6768
    %v6861 = vpack.c.b16 %v6771, %v6770
    %v6862 = vpack.c.b16 %v6773, %v6772
    %v6863 = vpack.c.b16 %v6775, %v6774
    %v6864 = vpack.c.b16 %v6777, %v6776
    %v6865 = vpack.c.b16 %v6779, %v6778
    %v6866 = vpack.c.b16 %v6781, %v6780
    %v6867 = vpack.c.b16 %v6783, %v6782
    %v6868 = vpack.c.b16 %v6785, %v6784
    %v6869 = vpack.c.b16 %v6787, %v6786
    %v6870 = vpack.c.b16 %v6789, %v6788
    %v6871 = vpack.c.b16 %v6791, %v6790
    %v6872 = vpack.c.b16 %v6793, %v6792
    %v6873 = vpack.c.b16 %v6795, %v6794
    %v6874 = vpack.c.b16 %v6797, %v6796
    %v6875 = vpack.c.b16 %v6799, %v6798
    %v6876 = vpack.c.b16 %v6801, %v6800
    %v6877 = vpack.c.b16 %v6803, %v6802
    %v6878 = vpack.c.b16 %v6805, %v6804
    %v6879 = vpack.c.b16 %v6807, %v6806
    %6952 = vmatprep.subr.bf16.mxu0 0
    %6953 = vmatpush1.bf16.msra.mxu0 %v6808
    %6954 = vmatprep.subr.bf16.mxu0 0
    %6955 = vmatpush1.bf16.msra.mxu0 %v6809
    %6956 = vmatprep.subr.bf16.mxu0 0
    %6957 = vmatpush1.bf16.msra.mxu0 %v6810
    %6958 = vmatprep.subr.bf16.mxu0 0
    %6959 = vmatpush1.bf16.msra.mxu0 %v6811
    %6960 = vmatprep.subr.bf16.mxu0 0
    %6961 = vmatpush1.bf16.msra.mxu0 %v6812
    %6962 = vmatprep.subr.bf16.mxu0 0
    %6963 = vmatpush1.bf16.msra.mxu0 %v6813
    %6964 = vmatprep.subr.bf16.mxu0 0
    %6965 = vmatpush1.bf16.msra.mxu0 %v6814
    %6966 = vmatprep.subr.bf16.mxu0 0
    %6967 = vmatpush1.bf16.msra.mxu0 %v6815
    %6968 = vmatprep.subr.bf16.mxu0 0
    %6969 = vmatpush1.bf16.msra.mxu0 %v6816
    %6970 = vmatprep.subr.bf16.mxu0 0
    %6971 = vmatpush1.bf16.msra.mxu0 %v6817
    %6972 = vmatprep.subr.bf16.mxu0 0
    %6973 = vmatpush1.bf16.msra.mxu0 %v6818
    %6974 = vmatprep.subr.bf16.mxu0 0
    %6975 = vmatpush1.bf16.msra.mxu0 %v6819
    %6976 = vmatprep.subr.bf16.mxu0 0
    %6977 = vmatpush1.bf16.msra.mxu0 %v6820
    %6978 = vmatprep.subr.bf16.mxu0 0
    %6979 = vmatpush1.bf16.msra.mxu0 %v6821
    %6980 = vmatprep.subr.bf16.mxu0 0
    %6981 = vmatpush1.bf16.msra.mxu0 %v6822
    %6982 = vmatprep.subr.bf16.mxu0 0
    %6983 = vmatpush1.bf16.msra.mxu0 %v6823
    %6984 = vmatprep.mubr.bf16.mxu0 %v6089
    %6985 = vmatmul.mubr.bf16.gmra.mrb[0].mxu0 %v6088
    %v6986 = vpop.f32.mrb[0].mxu0
    %v6987 = vadd.f32 0.0, %v6986
    %v6988 = vpop.f32.mrb[0].mxu0
    %v6989 = vpop.f32.mrb[0].mxu0
    %v6990 = vadd.f32 0.0, %v6989
    %v6991 = vpop.f32.mrb[0].mxu0
    %6992 = vmatprep.mubr.bf16.mxu0 %v6098
    %6993 = vmatmul.mubr.bf16.gmra.mrb[0].mxu0 %v6097
    %v6994 = vpop.f32.mrb[0].mxu0
    %v6995 = vadd.f32 0.0, %v6994
    %v6996 = vpop.f32.mrb[0].mxu0
    %v6997 = vpop.f32.mrb[0].mxu0
    %v6998 = vadd.f32 0.0, %v6997
    %v6999 = vpop.f32.mrb[0].mxu0
    %7000 = vmatprep.mubr.bf16.mxu0 %v6107
    %7001 = vmatmul.mubr.bf16.gmra.mrb[0].mxu0 %v6106
    %v7002 = vpop.f32.mrb[0].mxu0
    %v7003 = vadd.f32 0.0, %v7002
    %v7004 = vpop.f32.mrb[0].mxu0
    %v7005 = vpop.f32.mrb[0].mxu0
    %v7006 = vadd.f32 0.0, %v7005
    %v7007 = vpop.f32.mrb[0].mxu0
    %7008 = vmatprep.mubr.bf16.mxu0 %v6116
    %7009 = vmatmul.mubr.bf16.gmra.mrb[0].mxu0 %v6115
    %v7010 = vpop.f32.mrb[0].mxu0
    %v7011 = vadd.f32 0.0, %v7010
    %v7012 = vpop.f32.mrb[0].mxu0
    %v7013 = vpop.f32.mrb[0].mxu0
    %v7014 = vadd.f32 0.0, %v7013
    %v7015 = vpop.f32.mrb[0].mxu0
    %7016 = vmatprep.mubr.bf16.mxu0 %v6125
    %7017 = vmatmul.mubr.bf16.gmra.mrb[0].mxu0 %v6124
    %v7018 = vpop.f32.mrb[0].mxu0
    %v7019 = vadd.f32 0.0, %v7018
    %v7020 = vpop.f32.mrb[0].mxu0
    %v7021 = vpop.f32.mrb[0].mxu0
    %v7022 = vadd.f32 0.0, %v7021
    %v7023 = vpop.f32.mrb[0].mxu0
    %7024 = vmatprep.mubr.bf16.mxu0 %v6134
    %7025 = vmatmul.mubr.bf16.gmra.mrb[0].mxu0 %v6133
    %v7026 = vpop.f32.mrb[0].mxu0
    %v7027 = vadd.f32 0.0, %v7026
    %v7028 = vpop.f32.mrb[0].mxu0
    %v7029 = vpop.f32.mrb[0].mxu0
    %v7030 = vadd.f32 0.0, %v7029
    %v7031 = vpop.f32.mrb[0].mxu0
    %7032 = vmatprep.mubr.bf16.mxu0 %v6143
    %7033 = vmatmul.mubr.bf16.gmra.mrb[0].mxu0 %v6142
    %v7034 = vpop.f32.mrb[0].mxu0
    %v7035 = vadd.f32 0.0, %v7034
    %v7036 = vpop.f32.mrb[0].mxu0
    %v7037 = vpop.f32.mrb[0].mxu0
    %v7038 = vadd.f32 0.0, %v7037
    %v7039 = vpop.f32.mrb[0].mxu0
    %7040 = vmatprep.mubr.bf16.mxu0 %v6152
    %7041 = vmatmul.mubr.bf16.gmra.mrb[0].mxu0 %v6151
    %v7042 = vpop.f32.mrb[0].mxu0
    %v7043 = vadd.f32 0.0, %v7042
    %v7044 = vpop.f32.mrb[0].mxu0
    %v7045 = vpop.f32.mrb[0].mxu0
    %v7046 = vadd.f32 0.0, %v7045
    %v7047 = vpop.f32.mrb[0].mxu0
    %7048 = vmatprep.mubr.bf16.mxu0 %v6161
    %7049 = vmatmul.mubr.bf16.gmra.mrb[0].mxu0 %v6160
    %v7050 = vpop.f32.mrb[0].mxu0
    %v7051 = vadd.f32 0.0, %v7050
    %v7052 = vpop.f32.mrb[0].mxu0
    %v7053 = vpop.f32.mrb[0].mxu0
    %v7054 = vadd.f32 0.0, %v7053
    %v7055 = vpop.f32.mrb[0].mxu0
    %7056 = vmatprep.mubr.bf16.mxu0 %v6170
    %7057 = vmatmul.mubr.bf16.gmra.mrb[0].mxu0 %v6169
    %v7058 = vpop.f32.mrb[0].mxu0
    %v7059 = vadd.f32 0.0, %v7058
    %v7060 = vpop.f32.mrb[0].mxu0
    %v7061 = vpop.f32.mrb[0].mxu0
    %v7062 = vadd.f32 0.0, %v7061
    %v7063 = vpop.f32.mrb[0].mxu0
    %7064 = vmatprep.mubr.bf16.mxu0 %v6179
    %7065 = vmatmul.mubr.bf16.gmra.mrb[0].mxu0 %v6178
    %v7066 = vpop.f32.mrb[0].mxu0
    %v7067 = vadd.f32 0.0, %v7066
    %v7068 = vpop.f32.mrb[0].mxu0
    %v7069 = vpop.f32.mrb[0].mxu0
    %v7070 = vadd.f32 0.0, %v7069
    %v7071 = vpop.f32.mrb[0].mxu0
    %7072 = vmatprep.mubr.bf16.mxu0 %v6188
    %7073 = vmatmul.mubr.bf16.gmra.mrb[0].mxu0 %v6187
    %v7074 = vpop.f32.mrb[0].mxu0
    %v7075 = vadd.f32 0.0, %v7074
    %v7076 = vpop.f32.mrb[0].mxu0
    %v7077 = vpop.f32.mrb[0].mxu0
    %v7078 = vadd.f32 0.0, %v7077
    %v7079 = vpop.f32.mrb[0].mxu0
    %7080 = vmatprep.mubr.bf16.mxu0 %v6197
    %7081 = vmatmul.mubr.bf16.gmra.mrb[0].mxu0 %v6196
    %v7082 = vpop.f32.mrb[0].mxu0
    %v7083 = vadd.f32 0.0, %v7082
    %v7084 = vpop.f32.mrb[0].mxu0
    %v7085 = vpop.f32.mrb[0].mxu0
    %v7086 = vadd.f32 0.0, %v7085
    %v7087 = vpop.f32.mrb[0].mxu0
    %7088 = vmatprep.mubr.bf16.mxu0 %v6206
    %7089 = vmatmul.mubr.bf16.gmra.mrb[0].mxu0 %v6205
    %v7090 = vpop.f32.mrb[0].mxu0
    %v7091 = vadd.f32 0.0, %v7090
    %v7092 = vpop.f32.mrb[0].mxu0
    %v7093 = vpop.f32.mrb[0].mxu0
    %v7094 = vadd.f32 0.0, %v7093
    %v7095 = vpop.f32.mrb[0].mxu0
    %7096 = vmatprep.mubr.bf16.mxu0 %v6215
    %7097 = vmatmul.mubr.bf16.gmra.mrb[0].mxu0 %v6214
    %v7098 = vpop.f32.mrb[0].mxu0
    %v7099 = vadd.f32 0.0, %v7098
    %v7100 = vpop.f32.mrb[0].mxu0
    %v7101 = vpop.f32.mrb[0].mxu0
    %v7102 = vadd.f32 0.0, %v7101
    %v7103 = vpop.f32.mrb[0].mxu0
    %7104 = vmatprep.mubr.bf16.mxu0 %v6224
    %7105 = vmatmul.mubr.bf16.gmra.mrb[0].mxu0 %v6223
    %v7106 = vpop.f32.mrb[0].mxu0
    %v7107 = vadd.f32 0.0, %v7106
    %v7108 = vpop.f32.mrb[0].mxu0
    %v7109 = vpop.f32.mrb[0].mxu0
    %v7110 = vadd.f32 0.0, %v7109
    %v7111 = vpop.f32.mrb[0].mxu0
    %7112 = vmatprep.mubr.bf16.mxu0 %v6233
    %7113 = vmatmul.mubr.bf16.gmra.mrb[0].mxu0 %v6232
    %v7114 = vpop.f32.mrb[0].mxu0
    %v7115 = vadd.f32 0.0, %v7114
    %v7116 = vpop.f32.mrb[0].mxu0
    %v7117 = vpop.f32.mrb[0].mxu0
    %v7118 = vadd.f32 0.0, %v7117
    %v7119 = vpop.f32.mrb[0].mxu0
    %7120 = vmatprep.mubr.bf16.mxu0 %v6242
    %7121 = vmatmul.mubr.bf16.gmra.mrb[0].mxu0 %v6241
    %v7122 = vpop.f32.mrb[0].mxu0
    %v7123 = vadd.f32 0.0, %v7122
    %v7124 = vpop.f32.mrb[0].mxu0
    %v7125 = vpop.f32.mrb[0].mxu0
    %v7126 = vadd.f32 0.0, %v7125
    %v7127 = vpop.f32.mrb[0].mxu0
    %7128 = vmatprep.mubr.bf16.mxu0 %v6251
    %7129 = vmatmul.mubr.bf16.gmra.mrb[0].mxu0 %v6250
    %v7130 = vpop.f32.mrb[0].mxu0
    %v7131 = vadd.f32 0.0, %v7130
    %v7132 = vpop.f32.mrb[0].mxu0
    %v7133 = vpop.f32.mrb[0].mxu0
    %v7134 = vadd.f32 0.0, %v7133
    %v7135 = vpop.f32.mrb[0].mxu0
    %7136 = vmatprep.mubr.bf16.mxu0 %v6260
    %7137 = vmatmul.mubr.bf16.gmra.mrb[0].mxu0 %v6259
    %v7138 = vpop.f32.mrb[0].mxu0
    %v7139 = vadd.f32 0.0, %v7138
    %v7140 = vpop.f32.mrb[0].mxu0
    %v7141 = vpop.f32.mrb[0].mxu0
    %v7142 = vadd.f32 0.0, %v7141
    %v7143 = vpop.f32.mrb[0].mxu0
    %7144 = vmatprep.mubr.bf16.mxu0 %v6269
    %7145 = vmatmul.mubr.bf16.gmra.mrb[0].mxu0 %v6268
    %v7146 = vpop.f32.mrb[0].mxu0
    %v7147 = vadd.f32 0.0, %v7146
    %v7148 = vpop.f32.mrb[0].mxu0
    %v7149 = vpop.f32.mrb[0].mxu0
    %v7150 = vadd.f32 0.0, %v7149
    %v7151 = vpop.f32.mrb[0].mxu0
    %7152 = vmatprep.mubr.bf16.mxu0 %v6278
    %7153 = vmatmul.mubr.bf16.gmra.mrb[0].mxu0 %v6277
    %v7154 = vpop.f32.mrb[0].mxu0
    %v7155 = vadd.f32 0.0, %v7154
    %v7156 = vpop.f32.mrb[0].mxu0
    %v7157 = vpop.f32.mrb[0].mxu0
    %v7158 = vadd.f32 0.0, %v7157
    %v7159 = vpop.f32.mrb[0].mxu0
    %7160 = vmatprep.mubr.bf16.mxu0 %v6287
    %7161 = vmatmul.mubr.bf16.gmra.mrb[0].mxu0 %v6286
    %v7162 = vpop.f32.mrb[0].mxu0
    %v7163 = vadd.f32 0.0, %v7162
    %v7164 = vpop.f32.mrb[0].mxu0
    %v7165 = vpop.f32.mrb[0].mxu0
    %v7166 = vadd.f32 0.0, %v7165
    %v7167 = vpop.f32.mrb[0].mxu0
    %7168 = vmatprep.mubr.bf16.mxu0 %v6296
    %7169 = vmatmul.mubr.bf16.gmra.mrb[0].mxu0 %v6295
    %v7170 = vpop.f32.mrb[0].mxu0
    %v7171 = vadd.f32 0.0, %v7170
    %v7172 = vpop.f32.mrb[0].mxu0
    %v7173 = vpop.f32.mrb[0].mxu0
    %v7174 = vadd.f32 0.0, %v7173
    %v7175 = vpop.f32.mrb[0].mxu0
    %7176 = vmatprep.mubr.bf16.mxu0 %v6305
    %7177 = vmatmul.mubr.bf16.gmra.mrb[0].mxu0 %v6304
    %v7178 = vpop.f32.mrb[0].mxu0
    %v7179 = vadd.f32 0.0, %v7178
    %v7180 = vpop.f32.mrb[0].mxu0
    %v7181 = vpop.f32.mrb[0].mxu0
    %v7182 = vadd.f32 0.0, %v7181
    %v7183 = vpop.f32.mrb[0].mxu0
    %7184 = vmatprep.mubr.bf16.mxu0 %v6314
    %7185 = vmatmul.mubr.bf16.gmra.mrb[0].mxu0 %v6313
    %v7186 = vpop.f32.mrb[0].mxu0
    %v7187 = vadd.f32 0.0, %v7186
    %v7188 = vpop.f32.mrb[0].mxu0
    %v7189 = vpop.f32.mrb[0].mxu0
    %v7190 = vadd.f32 0.0, %v7189
    %v7191 = vpop.f32.mrb[0].mxu0
    %7192 = vmatprep.mubr.bf16.mxu0 %v6323
    %7193 = vmatmul.mubr.bf16.gmra.mrb[0].mxu0 %v6322
    %v7194 = vpop.f32.mrb[0].mxu0
    %v7195 = vadd.f32 0.0, %v7194
    %v7196 = vpop.f32.mrb[0].mxu0
    %v7197 = vpop.f32.mrb[0].mxu0
    %v7198 = vadd.f32 0.0, %v7197
    %v7199 = vpop.f32.mrb[0].mxu0
    %7200 = vmatprep.mubr.bf16.mxu0 %v6332
    %7201 = vmatmul.mubr.bf16.gmra.mrb[0].mxu0 %v6331
    %v7202 = vpop.f32.mrb[0].mxu0
    %v7203 = vadd.f32 0.0, %v7202
    %v7204 = vpop.f32.mrb[0].mxu0
    %v7205 = vpop.f32.mrb[0].mxu0
    %v7206 = vadd.f32 0.0, %v7205
    %v7207 = vpop.f32.mrb[0].mxu0
    %7208 = vmatprep.mubr.bf16.mxu0 %v6341
    %7209 = vmatmul.mubr.bf16.gmra.mrb[0].mxu0 %v6340
    %v7210 = vpop.f32.mrb[0].mxu0
    %v7211 = vadd.f32 0.0, %v7210
    %v7212 = vpop.f32.mrb[0].mxu0
    %v7213 = vpop.f32.mrb[0].mxu0
    %v7214 = vadd.f32 0.0, %v7213
    %v7215 = vpop.f32.mrb[0].mxu0
    %7216 = vmatprep.mubr.bf16.mxu0 %v6350
    %7217 = vmatmul.mubr.bf16.gmra.mrb[0].mxu0 %v6349
    %v7218 = vpop.f32.mrb[0].mxu0
    %v7219 = vadd.f32 0.0, %v7218
    %v7220 = vpop.f32.mrb[0].mxu0
    %v7221 = vpop.f32.mrb[0].mxu0
    %v7222 = vadd.f32 0.0, %v7221
    %v7223 = vpop.f32.mrb[0].mxu0
    %7224 = vmatprep.mubr.bf16.mxu0 %v6359
    %7225 = vmatmul.mubr.bf16.gmra.mrb[0].mxu0 %v6358
    %v7226 = vpop.f32.mrb[0].mxu0
    %v7227 = vadd.f32 0.0, %v7226
    %v7228 = vpop.f32.mrb[0].mxu0
    %v7229 = vpop.f32.mrb[0].mxu0
    %v7230 = vadd.f32 0.0, %v7229
    %v7231 = vpop.f32.mrb[0].mxu0
    %7232 = vmatprep.mubr.bf16.mxu0 %v6368
    %7233 = vmatmul.mubr.bf16.gmra.mrb[0].mxu0 %v6367
    %v7234 = vpop.f32.mrb[0].mxu0
    %v7235 = vadd.f32 0.0, %v7234
    %v7236 = vpop.f32.mrb[0].mxu0
    %v7237 = vpop.f32.mrb[0].mxu0
    %v7238 = vadd.f32 0.0, %v7237
    %v7239 = vpop.f32.mrb[0].mxu0
    %7240 = vdwg.mxu0
    %7241 = vmatprep.subr.bf16.mxu0 0
    %7242 = vmatpush1.bf16.msra.mxu0 %v6824
    %7243 = vmatprep.subr.bf16.mxu0 0
    %7244 = vmatpush1.bf16.msra.mxu0 %v6825
    %7245 = vmatprep.subr.bf16.mxu0 0
    %7246 = vmatpush1.bf16.msra.mxu0 %v6826
    %7247 = vmatprep.subr.bf16.mxu0 0
    %7248 = vmatpush1.bf16.msra.mxu0 %v6827
    %7249 = vmatprep.subr.bf16.mxu0 0
    %7250 = vmatpush1.bf16.msra.mxu0 %v6828
    %7251 = vmatprep.subr.bf16.mxu0 0
    %7252 = vmatpush1.bf16.msra.mxu0 %v6829
    %7253 = vmatprep.subr.bf16.mxu0 0
    %7254 = vmatpush1.bf16.msra.mxu0 %v6830
    %7255 = vmatprep.subr.bf16.mxu0 0
    %7256 = vmatpush1.bf16.msra.mxu0 %v6831
    %7257 = vmatprep.subr.bf16.mxu0 0
    %7258 = vmatpush1.bf16.msra.mxu0 %v6832
    %7259 = vmatprep.subr.bf16.mxu0 0
    %7260 = vmatpush1.bf16.msra.mxu0 %v6833
    %7261 = vmatprep.subr.bf16.mxu0 0
    %7262 = vmatpush1.bf16.msra.mxu0 %v6834
    %7263 = vmatprep.subr.bf16.mxu0 0
    %7264 = vmatpush1.bf16.msra.mxu0 %v6835
    %7265 = vmatprep.subr.bf16.mxu0 0
    %7266 = vmatpush1.bf16.msra.mxu0 %v6836
    %7267 = vmatprep.subr.bf16.mxu0 0
    %7268 = vmatpush1.bf16.msra.mxu0 %v6837
    %7269 = vmatprep.subr.bf16.mxu0 0
    %7270 = vmatpush1.bf16.msra.mxu0 %v6838
    %7271 = vmatprep.subr.bf16.mxu0 0
    %7272 = vmatpush1.bf16.msra.mxu0 %v6839
    %7273 = vmatprep.mubr.bf16.mxu0 %v6091
    %7274 = vmatmul.mubr.bf16.gmra.mrb[0].mxu0 %v6090
    %v7275 = vpop.f32.mrb[0].mxu0
    %v7276 = vadd.f32 %v6987, %v7275
    %v7277 = vpop.f32.mrb[0].mxu0
    %v7278 = vpop.f32.mrb[0].mxu0
    %v7279 = vadd.f32 %v6990, %v7278
    %v7280 = vpop.f32.mrb[0].mxu0
    %7281 = vmatprep.mubr.bf16.mxu0 %v6100
    %7282 = vmatmul.mubr.bf16.gmra.mrb[0].mxu0 %v6099
    %v7283 = vpop.f32.mrb[0].mxu0
    %v7284 = vadd.f32 %v6995, %v7283
    %v7285 = vpop.f32.mrb[0].mxu0
    %v7286 = vpop.f32.mrb[0].mxu0
    %v7287 = vadd.f32 %v6998, %v7286
    %v7288 = vpop.f32.mrb[0].mxu0
    %7289 = vmatprep.mubr.bf16.mxu0 %v6109
    %7290 = vmatmul.mubr.bf16.gmra.mrb[0].mxu0 %v6108
    %v7291 = vpop.f32.mrb[0].mxu0
    %v7292 = vadd.f32 %v7003, %v7291
    %v7293 = vpop.f32.mrb[0].mxu0
    %v7294 = vpop.f32.mrb[0].mxu0
    %v7295 = vadd.f32 %v7006, %v7294
    %v7296 = vpop.f32.mrb[0].mxu0
    %7297 = vmatprep.mubr.bf16.mxu0 %v6118
    %7298 = vmatmul.mubr.bf16.gmra.mrb[0].mxu0 %v6117
    %v7299 = vpop.f32.mrb[0].mxu0
    %v7300 = vadd.f32 %v7011, %v7299
    %v7301 = vpop.f32.mrb[0].mxu0
    %v7302 = vpop.f32.mrb[0].mxu0
    %v7303 = vadd.f32 %v7014, %v7302
    %v7304 = vpop.f32.mrb[0].mxu0
    %7305 = vmatprep.mubr.bf16.mxu0 %v6127
    %7306 = vmatmul.mubr.bf16.gmra.mrb[0].mxu0 %v6126
    %v7307 = vpop.f32.mrb[0].mxu0
    %v7308 = vadd.f32 %v7019, %v7307
    %v7309 = vpop.f32.mrb[0].mxu0
    %v7310 = vpop.f32.mrb[0].mxu0
    %v7311 = vadd.f32 %v7022, %v7310
    %v7312 = vpop.f32.mrb[0].mxu0
    %7313 = vmatprep.mubr.bf16.mxu0 %v6136
    %7314 = vmatmul.mubr.bf16.gmra.mrb[0].mxu0 %v6135
    %v7315 = vpop.f32.mrb[0].mxu0
    %v7316 = vadd.f32 %v7027, %v7315
    %v7317 = vpop.f32.mrb[0].mxu0
    %v7318 = vpop.f32.mrb[0].mxu0
    %v7319 = vadd.f32 %v7030, %v7318
    %v7320 = vpop.f32.mrb[0].mxu0
    %7321 = vmatprep.mubr.bf16.mxu0 %v6145
    %7322 = vmatmul.mubr.bf16.gmra.mrb[0].mxu0 %v6144
    %v7323 = vpop.f32.mrb[0].mxu0
    %v7324 = vadd.f32 %v7035, %v7323
    %v7325 = vpop.f32.mrb[0].mxu0
    %v7326 = vpop.f32.mrb[0].mxu0
    %v7327 = vadd.f32 %v7038, %v7326
    %v7328 = vpop.f32.mrb[0].mxu0
    %7329 = vmatprep.mubr.bf16.mxu0 %v6154
    %7330 = vmatmul.mubr.bf16.gmra.mrb[0].mxu0 %v6153
    %v7331 = vpop.f32.mrb[0].mxu0
    %v7332 = vadd.f32 %v7043, %v7331
    %v7333 = vpop.f32.mrb[0].mxu0
    %v7334 = vpop.f32.mrb[0].mxu0
    %v7335 = vadd.f32 %v7046, %v7334
    %v7336 = vpop.f32.mrb[0].mxu0
    %7337 = vmatprep.mubr.bf16.mxu0 %v6163
    %7338 = vmatmul.mubr.bf16.gmra.mrb[0].mxu0 %v6162
    %v7339 = vpop.f32.mrb[0].mxu0
    %v7340 = vadd.f32 %v7051, %v7339
    %v7341 = vpop.f32.mrb[0].mxu0
    %v7342 = vpop.f32.mrb[0].mxu0
    %v7343 = vadd.f32 %v7054, %v7342
    %v7344 = vpop.f32.mrb[0].mxu0
    %7345 = vmatprep.mubr.bf16.mxu0 %v6172
    %7346 = vmatmul.mubr.bf16.gmra.mrb[0].mxu0 %v6171
    %v7347 = vpop.f32.mrb[0].mxu0
    %v7348 = vadd.f32 %v7059, %v7347
    %v7349 = vpop.f32.mrb[0].mxu0
    %v7350 = vpop.f32.mrb[0].mxu0
    %v7351 = vadd.f32 %v7062, %v7350
    %v7352 = vpop.f32.mrb[0].mxu0
    %7353 = vmatprep.mubr.bf16.mxu0 %v6181
    %7354 = vmatmul.mubr.bf16.gmra.mrb[0].mxu0 %v6180
    %v7355 = vpop.f32.mrb[0].mxu0
    %v7356 = vadd.f32 %v7067, %v7355
    %v7357 = vpop.f32.mrb[0].mxu0
    %v7358 = vpop.f32.mrb[0].mxu0
    %v7359 = vadd.f32 %v7070, %v7358
    %v7360 = vpop.f32.mrb[0].mxu0
    %7361 = vmatprep.mubr.bf16.mxu0 %v6190
    %7362 = vmatmul.mubr.bf16.gmra.mrb[0].mxu0 %v6189
    %v7363 = vpop.f32.mrb[0].mxu0
    %v7364 = vadd.f32 %v7075, %v7363
    %v7365 = vpop.f32.mrb[0].mxu0
    %v7366 = vpop.f32.mrb[0].mxu0
    %v7367 = vadd.f32 %v7078, %v7366
    %v7368 = vpop.f32.mrb[0].mxu0
    %7369 = vmatprep.mubr.bf16.mxu0 %v6199
    %7370 = vmatmul.mubr.bf16.gmra.mrb[0].mxu0 %v6198
    %v7371 = vpop.f32.mrb[0].mxu0
    %v7372 = vadd.f32 %v7083, %v7371
    %v7373 = vpop.f32.mrb[0].mxu0
    %v7374 = vpop.f32.mrb[0].mxu0
    %v7375 = vadd.f32 %v7086, %v7374
    %v7376 = vpop.f32.mrb[0].mxu0
    %7377 = vmatprep.mubr.bf16.mxu0 %v6208
    %7378 = vmatmul.mubr.bf16.gmra.mrb[0].mxu0 %v6207
    %v7379 = vpop.f32.mrb[0].mxu0
    %v7380 = vadd.f32 %v7091, %v7379
    %v7381 = vpop.f32.mrb[0].mxu0
    %v7382 = vpop.f32.mrb[0].mxu0
    %v7383 = vadd.f32 %v7094, %v7382
    %v7384 = vpop.f32.mrb[0].mxu0
    %7385 = vmatprep.mubr.bf16.mxu0 %v6217
    %7386 = vmatmul.mubr.bf16.gmra.mrb[0].mxu0 %v6216
    %v7387 = vpop.f32.mrb[0].mxu0
    %v7388 = vadd.f32 %v7099, %v7387
    %v7389 = vpop.f32.mrb[0].mxu0
    %v7390 = vpop.f32.mrb[0].mxu0
    %v7391 = vadd.f32 %v7102, %v7390
    %v7392 = vpop.f32.mrb[0].mxu0
    %7393 = vmatprep.mubr.bf16.mxu0 %v6226
    %7394 = vmatmul.mubr.bf16.gmra.mrb[0].mxu0 %v6225
    %v7395 = vpop.f32.mrb[0].mxu0
    %v7396 = vadd.f32 %v7107, %v7395
    %v7397 = vpop.f32.mrb[0].mxu0
    %v7398 = vpop.f32.mrb[0].mxu0
    %v7399 = vadd.f32 %v7110, %v7398
    %v7400 = vpop.f32.mrb[0].mxu0
    %7401 = vmatprep.mubr.bf16.mxu0 %v6235
    %7402 = vmatmul.mubr.bf16.gmra.mrb[0].mxu0 %v6234
    %v7403 = vpop.f32.mrb[0].mxu0
    %v7404 = vadd.f32 %v7115, %v7403
    %v7405 = vpop.f32.mrb[0].mxu0
    %v7406 = vpop.f32.mrb[0].mxu0
    %v7407 = vadd.f32 %v7118, %v7406
    %v7408 = vpop.f32.mrb[0].mxu0
    %7409 = vmatprep.mubr.bf16.mxu0 %v6244
    %7410 = vmatmul.mubr.bf16.gmra.mrb[0].mxu0 %v6243
    %v7411 = vpop.f32.mrb[0].mxu0
    %v7412 = vadd.f32 %v7123, %v7411
    %v7413 = vpop.f32.mrb[0].mxu0
    %v7414 = vpop.f32.mrb[0].mxu0
    %v7415 = vadd.f32 %v7126, %v7414
    %v7416 = vpop.f32.mrb[0].mxu0
    %7417 = vmatprep.mubr.bf16.mxu0 %v6253
    %7418 = vmatmul.mubr.bf16.gmra.mrb[0].mxu0 %v6252
    %v7419 = vpop.f32.mrb[0].mxu0
    %v7420 = vadd.f32 %v7131, %v7419
    %v7421 = vpop.f32.mrb[0].mxu0
    %v7422 = vpop.f32.mrb[0].mxu0
    %v7423 = vadd.f32 %v7134, %v7422
    %v7424 = vpop.f32.mrb[0].mxu0
    %7425 = vmatprep.mubr.bf16.mxu0 %v6262
    %7426 = vmatmul.mubr.bf16.gmra.mrb[0].mxu0 %v6261
    %v7427 = vpop.f32.mrb[0].mxu0
    %v7428 = vadd.f32 %v7139, %v7427
    %v7429 = vpop.f32.mrb[0].mxu0
    %v7430 = vpop.f32.mrb[0].mxu0
    %v7431 = vadd.f32 %v7142, %v7430
    %v7432 = vpop.f32.mrb[0].mxu0
    %7433 = vmatprep.mubr.bf16.mxu0 %v6271
    %7434 = vmatmul.mubr.bf16.gmra.mrb[0].mxu0 %v6270
    %v7435 = vpop.f32.mrb[0].mxu0
    %v7436 = vadd.f32 %v7147, %v7435
    %v7437 = vpop.f32.mrb[0].mxu0
    %v7438 = vpop.f32.mrb[0].mxu0
    %v7439 = vadd.f32 %v7150, %v7438
    %v7440 = vpop.f32.mrb[0].mxu0
    %7441 = vmatprep.mubr.bf16.mxu0 %v6280
    %7442 = vmatmul.mubr.bf16.gmra.mrb[0].mxu0 %v6279
    %v7443 = vpop.f32.mrb[0].mxu0
    %v7444 = vadd.f32 %v7155, %v7443
    %v7445 = vpop.f32.mrb[0].mxu0
    %v7446 = vpop.f32.mrb[0].mxu0
    %v7447 = vadd.f32 %v7158, %v7446
    %v7448 = vpop.f32.mrb[0].mxu0
    %7449 = vmatprep.mubr.bf16.mxu0 %v6289
    %7450 = vmatmul.mubr.bf16.gmra.mrb[0].mxu0 %v6288
    %v7451 = vpop.f32.mrb[0].mxu0
    %v7452 = vadd.f32 %v7163, %v7451
    %v7453 = vpop.f32.mrb[0].mxu0
    %v7454 = vpop.f32.mrb[0].mxu0
    %v7455 = vadd.f32 %v7166, %v7454
    %v7456 = vpop.f32.mrb[0].mxu0
    %7457 = vmatprep.mubr.bf16.mxu0 %v6298
    %7458 = vmatmul.mubr.bf16.gmra.mrb[0].mxu0 %v6297
    %v7459 = vpop.f32.mrb[0].mxu0
    %v7460 = vadd.f32 %v7171, %v7459
    %v7461 = vpop.f32.mrb[0].mxu0
    %v7462 = vpop.f32.mrb[0].mxu0
    %v7463 = vadd.f32 %v7174, %v7462
    %v7464 = vpop.f32.mrb[0].mxu0
    %7465 = vmatprep.mubr.bf16.mxu0 %v6307
    %7466 = vmatmul.mubr.bf16.gmra.mrb[0].mxu0 %v6306
    %v7467 = vpop.f32.mrb[0].mxu0
    %v7468 = vadd.f32 %v7179, %v7467
    %v7469 = vpop.f32.mrb[0].mxu0
    %v7470 = vpop.f32.mrb[0].mxu0
    %v7471 = vadd.f32 %v7182, %v7470
    %v7472 = vpop.f32.mrb[0].mxu0
    %7473 = vmatprep.mubr.bf16.mxu0 %v6316
    %7474 = vmatmul.mubr.bf16.gmra.mrb[0].mxu0 %v6315
    %v7475 = vpop.f32.mrb[0].mxu0
    %v7476 = vadd.f32 %v7187, %v7475
    %v7477 = vpop.f32.mrb[0].mxu0
    %v7478 = vpop.f32.mrb[0].mxu0
    %v7479 = vadd.f32 %v7190, %v7478
    %v7480 = vpop.f32.mrb[0].mxu0
    %7481 = vmatprep.mubr.bf16.mxu0 %v6325
    %7482 = vmatmul.mubr.bf16.gmra.mrb[0].mxu0 %v6324
    %v7483 = vpop.f32.mrb[0].mxu0
    %v7484 = vadd.f32 %v7195, %v7483
    %v7485 = vpop.f32.mrb[0].mxu0
    %v7486 = vpop.f32.mrb[0].mxu0
    %v7487 = vadd.f32 %v7198, %v7486
    %v7488 = vpop.f32.mrb[0].mxu0
    %7489 = vmatprep.mubr.bf16.mxu0 %v6334
    %7490 = vmatmul.mubr.bf16.gmra.mrb[0].mxu0 %v6333
    %v7491 = vpop.f32.mrb[0].mxu0
    %v7492 = vadd.f32 %v7203, %v7491
    %v7493 = vpop.f32.mrb[0].mxu0
    %v7494 = vpop.f32.mrb[0].mxu0
    %v7495 = vadd.f32 %v7206, %v7494
    %v7496 = vpop.f32.mrb[0].mxu0
    %7497 = vmatprep.mubr.bf16.mxu0 %v6343
    %7498 = vmatmul.mubr.bf16.gmra.mrb[0].mxu0 %v6342
    %v7499 = vpop.f32.mrb[0].mxu0
    %v7500 = vadd.f32 %v7211, %v7499
    %v7501 = vpop.f32.mrb[0].mxu0
    %v7502 = vpop.f32.mrb[0].mxu0
    %v7503 = vadd.f32 %v7214, %v7502
    %v7504 = vpop.f32.mrb[0].mxu0
    %7505 = vmatprep.mubr.bf16.mxu0 %v6352
    %7506 = vmatmul.mubr.bf16.gmra.mrb[0].mxu0 %v6351
    %v7507 = vpop.f32.mrb[0].mxu0
    %v7508 = vadd.f32 %v7219, %v7507
    %v7509 = vpop.f32.mrb[0].mxu0
    %v7510 = vpop.f32.mrb[0].mxu0
    %v7511 = vadd.f32 %v7222, %v7510
    %v7512 = vpop.f32.mrb[0].mxu0
    %7513 = vmatprep.mubr.bf16.mxu0 %v6361
    %7514 = vmatmul.mubr.bf16.gmra.mrb[0].mxu0 %v6360
    %v7515 = vpop.f32.mrb[0].mxu0
    %v7516 = vadd.f32 %v7227, %v7515
    %v7517 = vpop.f32.mrb[0].mxu0
    %v7518 = vpop.f32.mrb[0].mxu0
    %v7519 = vadd.f32 %v7230, %v7518
    %v7520 = vpop.f32.mrb[0].mxu0
    %7521 = vmatprep.mubr.bf16.mxu0 %v6370
    %7522 = vmatmul.mubr.bf16.gmra.mrb[0].mxu0 %v6369
    %v7523 = vpop.f32.mrb[0].mxu0
    %v7524 = vadd.f32 %v7235, %v7523
    %v7525 = vpop.f32.mrb[0].mxu0
    %v7526 = vpop.f32.mrb[0].mxu0
    %v7527 = vadd.f32 %v7238, %v7526
    %v7528 = vpop.f32.mrb[0].mxu0
    %7529 = vdwg.mxu0
    %7530 = vmatprep.subr.bf16.mxu0 0
    %7531 = vmatpush1.bf16.msra.mxu0 %v6840
    %7532 = vmatprep.subr.bf16.mxu0 0
    %7533 = vmatpush1.bf16.msra.mxu0 %v6841
    %7534 = vmatprep.subr.bf16.mxu0 0
    %7535 = vmatpush1.bf16.msra.mxu0 %v6842
    %7536 = vmatprep.subr.bf16.mxu0 0
    %7537 = vmatpush1.bf16.msra.mxu0 %v6843
    %7538 = vmatprep.subr.bf16.mxu0 0
    %7539 = vmatpush1.bf16.msra.mxu0 %v6844
    %7540 = vmatprep.subr.bf16.mxu0 0
    %7541 = vmatpush1.bf16.msra.mxu0 %v6845
    %7542 = vmatprep.subr.bf16.mxu0 0
    %7543 = vmatpush1.bf16.msra.mxu0 %v6846
    %7544 = vmatprep.subr.bf16.mxu0 0
    %7545 = vmatpush1.bf16.msra.mxu0 %v6847
    %7546 = vmatprep.subr.bf16.mxu0 0
    %7547 = vmatpush1.bf16.msra.mxu0 %v6848
    %7548 = vmatprep.subr.bf16.mxu0 0
    %7549 = vmatpush1.bf16.msra.mxu0 %v6849
    %7550 = vmatprep.subr.bf16.mxu0 0
    %7551 = vmatpush1.bf16.msra.mxu0 %v6850
    %7552 = vmatprep.subr.bf16.mxu0 0
    %7553 = vmatpush1.bf16.msra.mxu0 %v6851
    %7554 = vmatprep.subr.bf16.mxu0 0
    %7555 = vmatpush1.bf16.msra.mxu0 %v6852
    %7556 = vmatprep.subr.bf16.mxu0 0
    %7557 = vmatpush1.bf16.msra.mxu0 %v6853
    %7558 = vmatprep.subr.bf16.mxu0 0
    %7559 = vmatpush1.bf16.msra.mxu0 %v6854
    %7560 = vmatprep.subr.bf16.mxu0 0
    %7561 = vmatpush1.bf16.msra.mxu0 %v6855
    %7562 = vmatprep.mubr.bf16.mxu0 %v6093
    %7563 = vmatmul.mubr.bf16.gmra.mrb[0].mxu0 %v6092
    %v7564 = vpop.f32.mrb[0].mxu0
    %v7565 = vadd.f32 %v7276, %v7564
    %v7566 = vpop.f32.mrb[0].mxu0
    %v7567 = vpop.f32.mrb[0].mxu0
    %v7568 = vadd.f32 %v7279, %v7567
    %v7569 = vpop.f32.mrb[0].mxu0
    %7570 = vmatprep.mubr.bf16.mxu0 %v6102
    %7571 = vmatmul.mubr.bf16.gmra.mrb[0].mxu0 %v6101
    %v7572 = vpop.f32.mrb[0].mxu0
    %v7573 = vadd.f32 %v7284, %v7572
    %v7574 = vpop.f32.mrb[0].mxu0
    %v7575 = vpop.f32.mrb[0].mxu0
    %v7576 = vadd.f32 %v7287, %v7575
    %v7577 = vpop.f32.mrb[0].mxu0
    %7578 = vmatprep.mubr.bf16.mxu0 %v6111
    %7579 = vmatmul.mubr.bf16.gmra.mrb[0].mxu0 %v6110
    %v7580 = vpop.f32.mrb[0].mxu0
    %v7581 = vadd.f32 %v7292, %v7580
    %v7582 = vpop.f32.mrb[0].mxu0
    %v7583 = vpop.f32.mrb[0].mxu0
    %v7584 = vadd.f32 %v7295, %v7583
    %v7585 = vpop.f32.mrb[0].mxu0
    %7586 = vmatprep.mubr.bf16.mxu0 %v6120
    %7587 = vmatmul.mubr.bf16.gmra.mrb[0].mxu0 %v6119
    %v7588 = vpop.f32.mrb[0].mxu0
    %v7589 = vadd.f32 %v7300, %v7588
    %v7590 = vpop.f32.mrb[0].mxu0
    %v7591 = vpop.f32.mrb[0].mxu0
    %v7592 = vadd.f32 %v7303, %v7591
    %v7593 = vpop.f32.mrb[0].mxu0
    %7594 = vmatprep.mubr.bf16.mxu0 %v6129
    %7595 = vmatmul.mubr.bf16.gmra.mrb[0].mxu0 %v6128
    %v7596 = vpop.f32.mrb[0].mxu0
    %v7597 = vadd.f32 %v7308, %v7596
    %v7598 = vpop.f32.mrb[0].mxu0
    %v7599 = vpop.f32.mrb[0].mxu0
    %v7600 = vadd.f32 %v7311, %v7599
    %v7601 = vpop.f32.mrb[0].mxu0
    %7602 = vmatprep.mubr.bf16.mxu0 %v6138
    %7603 = vmatmul.mubr.bf16.gmra.mrb[0].mxu0 %v6137
    %v7604 = vpop.f32.mrb[0].mxu0
    %v7605 = vadd.f32 %v7316, %v7604
    %v7606 = vpop.f32.mrb[0].mxu0
    %v7607 = vpop.f32.mrb[0].mxu0
    %v7608 = vadd.f32 %v7319, %v7607
    %v7609 = vpop.f32.mrb[0].mxu0
    %7610 = vmatprep.mubr.bf16.mxu0 %v6147
    %7611 = vmatmul.mubr.bf16.gmra.mrb[0].mxu0 %v6146
    %v7612 = vpop.f32.mrb[0].mxu0
    %v7613 = vadd.f32 %v7324, %v7612
    %v7614 = vpop.f32.mrb[0].mxu0
    %v7615 = vpop.f32.mrb[0].mxu0
    %v7616 = vadd.f32 %v7327, %v7615
    %v7617 = vpop.f32.mrb[0].mxu0
    %7618 = vmatprep.mubr.bf16.mxu0 %v6156
    %7619 = vmatmul.mubr.bf16.gmra.mrb[0].mxu0 %v6155
    %v7620 = vpop.f32.mrb[0].mxu0
    %v7621 = vadd.f32 %v7332, %v7620
    %v7622 = vpop.f32.mrb[0].mxu0
    %v7623 = vpop.f32.mrb[0].mxu0
    %v7624 = vadd.f32 %v7335, %v7623
    %v7625 = vpop.f32.mrb[0].mxu0
    %7626 = vmatprep.mubr.bf16.mxu0 %v6165
    %7627 = vmatmul.mubr.bf16.gmra.mrb[0].mxu0 %v6164
    %v7628 = vpop.f32.mrb[0].mxu0
    %v7629 = vadd.f32 %v7340, %v7628
    %v7630 = vpop.f32.mrb[0].mxu0
    %v7631 = vpop.f32.mrb[0].mxu0
    %v7632 = vadd.f32 %v7343, %v7631
    %v7633 = vpop.f32.mrb[0].mxu0
    %7634 = vmatprep.mubr.bf16.mxu0 %v6174
    %7635 = vmatmul.mubr.bf16.gmra.mrb[0].mxu0 %v6173
    %v7636 = vpop.f32.mrb[0].mxu0
    %v7637 = vadd.f32 %v7348, %v7636
    %v7638 = vpop.f32.mrb[0].mxu0
    %v7639 = vpop.f32.mrb[0].mxu0
    %v7640 = vadd.f32 %v7351, %v7639
    %v7641 = vpop.f32.mrb[0].mxu0
    %7642 = vmatprep.mubr.bf16.mxu0 %v6183
    %7643 = vmatmul.mubr.bf16.gmra.mrb[0].mxu0 %v6182
    %v7644 = vpop.f32.mrb[0].mxu0
    %v7645 = vadd.f32 %v7356, %v7644
    %v7646 = vpop.f32.mrb[0].mxu0
    %v7647 = vpop.f32.mrb[0].mxu0
    %v7648 = vadd.f32 %v7359, %v7647
    %v7649 = vpop.f32.mrb[0].mxu0
    %7650 = vmatprep.mubr.bf16.mxu0 %v6192
    %7651 = vmatmul.mubr.bf16.gmra.mrb[0].mxu0 %v6191
    %v7652 = vpop.f32.mrb[0].mxu0
    %v7653 = vadd.f32 %v7364, %v7652
    %v7654 = vpop.f32.mrb[0].mxu0
    %v7655 = vpop.f32.mrb[0].mxu0
    %v7656 = vadd.f32 %v7367, %v7655
    %v7657 = vpop.f32.mrb[0].mxu0
    %7658 = vmatprep.mubr.bf16.mxu0 %v6201
    %7659 = vmatmul.mubr.bf16.gmra.mrb[0].mxu0 %v6200
    %v7660 = vpop.f32.mrb[0].mxu0
    %v7661 = vadd.f32 %v7372, %v7660
    %v7662 = vpop.f32.mrb[0].mxu0
    %v7663 = vpop.f32.mrb[0].mxu0
    %v7664 = vadd.f32 %v7375, %v7663
    %v7665 = vpop.f32.mrb[0].mxu0
    %7666 = vmatprep.mubr.bf16.mxu0 %v6210
    %7667 = vmatmul.mubr.bf16.gmra.mrb[0].mxu0 %v6209
    %v7668 = vpop.f32.mrb[0].mxu0
    %v7669 = vadd.f32 %v7380, %v7668
    %v7670 = vpop.f32.mrb[0].mxu0
    %v7671 = vpop.f32.mrb[0].mxu0
    %v7672 = vadd.f32 %v7383, %v7671
    %v7673 = vpop.f32.mrb[0].mxu0
    %7674 = vmatprep.mubr.bf16.mxu0 %v6219
    %7675 = vmatmul.mubr.bf16.gmra.mrb[0].mxu0 %v6218
    %v7676 = vpop.f32.mrb[0].mxu0
    %v7677 = vadd.f32 %v7388, %v7676
    %v7678 = vpop.f32.mrb[0].mxu0
    %v7679 = vpop.f32.mrb[0].mxu0
    %v7680 = vadd.f32 %v7391, %v7679
    %v7681 = vpop.f32.mrb[0].mxu0
    %7682 = vmatprep.mubr.bf16.mxu0 %v6228
    %7683 = vmatmul.mubr.bf16.gmra.mrb[0].mxu0 %v6227
    %v7684 = vpop.f32.mrb[0].mxu0
    %v7685 = vadd.f32 %v7396, %v7684
    %v7686 = vpop.f32.mrb[0].mxu0
    %v7687 = vpop.f32.mrb[0].mxu0
    %v7688 = vadd.f32 %v7399, %v7687
    %v7689 = vpop.f32.mrb[0].mxu0
    %7690 = vmatprep.mubr.bf16.mxu0 %v6237
    %7691 = vmatmul.mubr.bf16.gmra.mrb[0].mxu0 %v6236
    %v7692 = vpop.f32.mrb[0].mxu0
    %v7693 = vadd.f32 %v7404, %v7692
    %v7694 = vpop.f32.mrb[0].mxu0
    %v7695 = vpop.f32.mrb[0].mxu0
    %v7696 = vadd.f32 %v7407, %v7695
    %v7697 = vpop.f32.mrb[0].mxu0
    %7698 = vmatprep.mubr.bf16.mxu0 %v6246
    %7699 = vmatmul.mubr.bf16.gmra.mrb[0].mxu0 %v6245
    %v7700 = vpop.f32.mrb[0].mxu0
    %v7701 = vadd.f32 %v7412, %v7700
    %v7702 = vpop.f32.mrb[0].mxu0
    %v7703 = vpop.f32.mrb[0].mxu0
    %v7704 = vadd.f32 %v7415, %v7703
    %v7705 = vpop.f32.mrb[0].mxu0
    %7706 = vmatprep.mubr.bf16.mxu0 %v6255
    %7707 = vmatmul.mubr.bf16.gmra.mrb[0].mxu0 %v6254
    %v7708 = vpop.f32.mrb[0].mxu0
    %v7709 = vadd.f32 %v7420, %v7708
    %v7710 = vpop.f32.mrb[0].mxu0
    %v7711 = vpop.f32.mrb[0].mxu0
    %v7712 = vadd.f32 %v7423, %v7711
    %v7713 = vpop.f32.mrb[0].mxu0
    %7714 = vmatprep.mubr.bf16.mxu0 %v6264
    %7715 = vmatmul.mubr.bf16.gmra.mrb[0].mxu0 %v6263
    %v7716 = vpop.f32.mrb[0].mxu0
    %v7717 = vadd.f32 %v7428, %v7716
    %v7718 = vpop.f32.mrb[0].mxu0
    %v7719 = vpop.f32.mrb[0].mxu0
    %v7720 = vadd.f32 %v7431, %v7719
    %v7721 = vpop.f32.mrb[0].mxu0
    %7722 = vmatprep.mubr.bf16.mxu0 %v6273
    %7723 = vmatmul.mubr.bf16.gmra.mrb[0].mxu0 %v6272
    %v7724 = vpop.f32.mrb[0].mxu0
    %v7725 = vadd.f32 %v7436, %v7724
    %v7726 = vpop.f32.mrb[0].mxu0
    %v7727 = vpop.f32.mrb[0].mxu0
    %v7728 = vadd.f32 %v7439, %v7727
    %v7729 = vpop.f32.mrb[0].mxu0
    %7730 = vmatprep.mubr.bf16.mxu0 %v6282
    %7731 = vmatmul.mubr.bf16.gmra.mrb[0].mxu0 %v6281
    %v7732 = vpop.f32.mrb[0].mxu0
    %v7733 = vadd.f32 %v7444, %v7732
    %v7734 = vpop.f32.mrb[0].mxu0
    %v7735 = vpop.f32.mrb[0].mxu0
    %v7736 = vadd.f32 %v7447, %v7735
    %v7737 = vpop.f32.mrb[0].mxu0
    %7738 = vmatprep.mubr.bf16.mxu0 %v6291
    %7739 = vmatmul.mubr.bf16.gmra.mrb[0].mxu0 %v6290
    %v7740 = vpop.f32.mrb[0].mxu0
    %v7741 = vadd.f32 %v7452, %v7740
    %v7742 = vpop.f32.mrb[0].mxu0
    %v7743 = vpop.f32.mrb[0].mxu0
    %v7744 = vadd.f32 %v7455, %v7743
    %v7745 = vpop.f32.mrb[0].mxu0
    %7746 = vmatprep.mubr.bf16.mxu0 %v6300
    %7747 = vmatmul.mubr.bf16.gmra.mrb[0].mxu0 %v6299
    %v7748 = vpop.f32.mrb[0].mxu0
    %v7749 = vadd.f32 %v7460, %v7748
    %v7750 = vpop.f32.mrb[0].mxu0
    %v7751 = vpop.f32.mrb[0].mxu0
    %v7752 = vadd.f32 %v7463, %v7751
    %v7753 = vpop.f32.mrb[0].mxu0
    %7754 = vmatprep.mubr.bf16.mxu0 %v6309
    %7755 = vmatmul.mubr.bf16.gmra.mrb[0].mxu0 %v6308
    %v7756 = vpop.f32.mrb[0].mxu0
    %v7757 = vadd.f32 %v7468, %v7756
    %v7758 = vpop.f32.mrb[0].mxu0
    %v7759 = vpop.f32.mrb[0].mxu0
    %v7760 = vadd.f32 %v7471, %v7759
    %v7761 = vpop.f32.mrb[0].mxu0
    %7762 = vmatprep.mubr.bf16.mxu0 %v6318
    %7763 = vmatmul.mubr.bf16.gmra.mrb[0].mxu0 %v6317
    %v7764 = vpop.f32.mrb[0].mxu0
    %v7765 = vadd.f32 %v7476, %v7764
    %v7766 = vpop.f32.mrb[0].mxu0
    %v7767 = vpop.f32.mrb[0].mxu0
    %v7768 = vadd.f32 %v7479, %v7767
    %v7769 = vpop.f32.mrb[0].mxu0
    %7770 = vmatprep.mubr.bf16.mxu0 %v6327
    %7771 = vmatmul.mubr.bf16.gmra.mrb[0].mxu0 %v6326
    %v7772 = vpop.f32.mrb[0].mxu0
    %v7773 = vadd.f32 %v7484, %v7772
    %v7774 = vpop.f32.mrb[0].mxu0
    %v7775 = vpop.f32.mrb[0].mxu0
    %v7776 = vadd.f32 %v7487, %v7775
    %v7777 = vpop.f32.mrb[0].mxu0
    %7778 = vmatprep.mubr.bf16.mxu0 %v6336
    %7779 = vmatmul.mubr.bf16.gmra.mrb[0].mxu0 %v6335
    %v7780 = vpop.f32.mrb[0].mxu0
    %v7781 = vadd.f32 %v7492, %v7780
    %v7782 = vpop.f32.mrb[0].mxu0
    %v7783 = vpop.f32.mrb[0].mxu0
    %v7784 = vadd.f32 %v7495, %v7783
    %v7785 = vpop.f32.mrb[0].mxu0
    %7786 = vmatprep.mubr.bf16.mxu0 %v6345
    %7787 = vmatmul.mubr.bf16.gmra.mrb[0].mxu0 %v6344
    %v7788 = vpop.f32.mrb[0].mxu0
    %v7789 = vadd.f32 %v7500, %v7788
    %v7790 = vpop.f32.mrb[0].mxu0
    %v7791 = vpop.f32.mrb[0].mxu0
    %v7792 = vadd.f32 %v7503, %v7791
    %v7793 = vpop.f32.mrb[0].mxu0
    %7794 = vmatprep.mubr.bf16.mxu0 %v6354
    %7795 = vmatmul.mubr.bf16.gmra.mrb[0].mxu0 %v6353
    %v7796 = vpop.f32.mrb[0].mxu0
    %v7797 = vadd.f32 %v7508, %v7796
    %v7798 = vpop.f32.mrb[0].mxu0
    %v7799 = vpop.f32.mrb[0].mxu0
    %v7800 = vadd.f32 %v7511, %v7799
    %v7801 = vpop.f32.mrb[0].mxu0
    %7802 = vmatprep.mubr.bf16.mxu0 %v6363
    %7803 = vmatmul.mubr.bf16.gmra.mrb[0].mxu0 %v6362
    %v7804 = vpop.f32.mrb[0].mxu0
    %v7805 = vadd.f32 %v7516, %v7804
    %v7806 = vpop.f32.mrb[0].mxu0
    %v7807 = vpop.f32.mrb[0].mxu0
    %v7808 = vadd.f32 %v7519, %v7807
    %v7809 = vpop.f32.mrb[0].mxu0
    %7810 = vmatprep.mubr.bf16.mxu0 %v6372
    %7811 = vmatmul.mubr.bf16.gmra.mrb[0].mxu0 %v6371
    %v7812 = vpop.f32.mrb[0].mxu0
    %v7813 = vadd.f32 %v7524, %v7812
    %v7814 = vpop.f32.mrb[0].mxu0
    %v7815 = vpop.f32.mrb[0].mxu0
    %v7816 = vadd.f32 %v7527, %v7815
    %v7817 = vpop.f32.mrb[0].mxu0
    %7818 = vdwg.mxu0
    %7819 = vmatprep.subr.bf16.mxu0 0
    %7820 = vmatpush1.bf16.msra.mxu0 %v6856
    %7821 = vmatprep.subr.bf16.mxu0 0
    %7822 = vmatpush1.bf16.msra.mxu0 %v6857
    %7823 = vmatprep.subr.bf16.mxu0 0
    %7824 = vmatpush1.bf16.msra.mxu0 %v6858
    %7825 = vmatprep.subr.bf16.mxu0 0
    %7826 = vmatpush1.bf16.msra.mxu0 %v6859
    %7827 = vmatprep.subr.bf16.mxu0 0
    %7828 = vmatpush1.bf16.msra.mxu0 %v6860
    %7829 = vmatprep.subr.bf16.mxu0 0
    %7830 = vmatpush1.bf16.msra.mxu0 %v6861
    %7831 = vmatprep.subr.bf16.mxu0 0
    %7832 = vmatpush1.bf16.msra.mxu0 %v6862
    %7833 = vmatprep.subr.bf16.mxu0 0
    %7834 = vmatpush1.bf16.msra.mxu0 %v6863
    %7835 = vmatprep.subr.bf16.mxu0 0
    %7836 = vmatpush1.bf16.msra.mxu0 %v6864
    %7837 = vmatprep.subr.bf16.mxu0 0
    %7838 = vmatpush1.bf16.msra.mxu0 %v6865
    %7839 = vmatprep.subr.bf16.mxu0 0
    %7840 = vmatpush1.bf16.msra.mxu0 %v6866
    %7841 = vmatprep.subr.bf16.mxu0 0
    %7842 = vmatpush1.bf16.msra.mxu0 %v6867
    %7843 = vmatprep.subr.bf16.mxu0 0
    %7844 = vmatpush1.bf16.msra.mxu0 %v6868
    %7845 = vmatprep.subr.bf16.mxu0 0
    %7846 = vmatpush1.bf16.msra.mxu0 %v6869
    %7847 = vmatprep.subr.bf16.mxu0 0
    %7848 = vmatpush1.bf16.msra.mxu0 %v6870
    %7849 = vmatprep.subr.bf16.mxu0 0
    %7850 = vmatpush1.bf16.msra.mxu0 %v6871
    %7851 = vmatprep.mubr.bf16.mxu0 %v6095
    %7852 = vmatmul.mubr.bf16.gmra.mrb[0].mxu0 %v6094
    %v7853 = vpop.f32.mrb[0].mxu0
    %v7854 = vadd.f32 %v7565, %v7853
    %v7855 = vpop.f32.mrb[0].mxu0
    %v7856 = vpop.f32.mrb[0].mxu0
    %v7857 = vadd.f32 %v7568, %v7856
    %v7858 = vpop.f32.mrb[0].mxu0
    %7859 = vmatprep.mubr.bf16.mxu0 %v6104
    %7860 = vmatmul.mubr.bf16.gmra.mrb[0].mxu0 %v6103
    %v7861 = vpop.f32.mrb[0].mxu0
    %v7862 = vadd.f32 %v7573, %v7861
    %v7863 = vpop.f32.mrb[0].mxu0
    %v7864 = vpop.f32.mrb[0].mxu0
    %v7865 = vadd.f32 %v7576, %v7864
    %v7866 = vpop.f32.mrb[0].mxu0
    %7867 = vmatprep.mubr.bf16.mxu0 %v6113
    %7868 = vmatmul.mubr.bf16.gmra.mrb[0].mxu0 %v6112
    %v7869 = vpop.f32.mrb[0].mxu0
    %v7870 = vadd.f32 %v7581, %v7869
    %v7871 = vpop.f32.mrb[0].mxu0
    %v7872 = vpop.f32.mrb[0].mxu0
    %v7873 = vadd.f32 %v7584, %v7872
    %v7874 = vpop.f32.mrb[0].mxu0
    %7875 = vmatprep.mubr.bf16.mxu0 %v6122
    %7876 = vmatmul.mubr.bf16.gmra.mrb[0].mxu0 %v6121
    %v7877 = vpop.f32.mrb[0].mxu0
    %v7878 = vadd.f32 %v7589, %v7877
    %v7879 = vpop.f32.mrb[0].mxu0
    %v7880 = vpop.f32.mrb[0].mxu0
    %v7881 = vadd.f32 %v7592, %v7880
    %v7882 = vpop.f32.mrb[0].mxu0
    %7883 = vmatprep.mubr.bf16.mxu0 %v6131
    %7884 = vmatmul.mubr.bf16.gmra.mrb[0].mxu0 %v6130
    %v7885 = vpop.f32.mrb[0].mxu0
    %v7886 = vadd.f32 %v7597, %v7885
    %v7887 = vpop.f32.mrb[0].mxu0
    %v7888 = vpop.f32.mrb[0].mxu0
    %v7889 = vadd.f32 %v7600, %v7888
    %v7890 = vpop.f32.mrb[0].mxu0
    %7891 = vmatprep.mubr.bf16.mxu0 %v6140
    %7892 = vmatmul.mubr.bf16.gmra.mrb[0].mxu0 %v6139
    %v7893 = vpop.f32.mrb[0].mxu0
    %v7894 = vadd.f32 %v7605, %v7893
    %v7895 = vpop.f32.mrb[0].mxu0
    %v7896 = vpop.f32.mrb[0].mxu0
    %v7897 = vadd.f32 %v7608, %v7896
    %v7898 = vpop.f32.mrb[0].mxu0
    %7899 = vmatprep.mubr.bf16.mxu0 %v6149
    %7900 = vmatmul.mubr.bf16.gmra.mrb[0].mxu0 %v6148
    %v7901 = vpop.f32.mrb[0].mxu0
    %v7902 = vadd.f32 %v7613, %v7901
    %v7903 = vpop.f32.mrb[0].mxu0
    %v7904 = vpop.f32.mrb[0].mxu0
    %v7905 = vadd.f32 %v7616, %v7904
    %v7906 = vpop.f32.mrb[0].mxu0
    %7907 = vmatprep.mubr.bf16.mxu0 %v6158
    %7908 = vmatmul.mubr.bf16.gmra.mrb[0].mxu0 %v6157
    %v7909 = vpop.f32.mrb[0].mxu0
    %v7910 = vadd.f32 %v7621, %v7909
    %v7911 = vpop.f32.mrb[0].mxu0
    %v7912 = vpop.f32.mrb[0].mxu0
    %v7913 = vadd.f32 %v7624, %v7912
    %v7914 = vpop.f32.mrb[0].mxu0
    %7915 = vmatprep.mubr.bf16.mxu0 %v6167
    %7916 = vmatmul.mubr.bf16.gmra.mrb[0].mxu0 %v6166
    %v7917 = vpop.f32.mrb[0].mxu0
    %v7918 = vadd.f32 %v7629, %v7917
    %v7919 = vpop.f32.mrb[0].mxu0
    %v7920 = vpop.f32.mrb[0].mxu0
    %v7921 = vadd.f32 %v7632, %v7920
    %v7922 = vpop.f32.mrb[0].mxu0
    %7923 = vmatprep.mubr.bf16.mxu0 %v6176
    %7924 = vmatmul.mubr.bf16.gmra.mrb[0].mxu0 %v6175
    %v7925 = vpop.f32.mrb[0].mxu0
    %v7926 = vadd.f32 %v7637, %v7925
    %v7927 = vpop.f32.mrb[0].mxu0
    %v7928 = vpop.f32.mrb[0].mxu0
    %v7929 = vadd.f32 %v7640, %v7928
    %v7930 = vpop.f32.mrb[0].mxu0
    %7931 = vmatprep.mubr.bf16.mxu0 %v6185
    %7932 = vmatmul.mubr.bf16.gmra.mrb[0].mxu0 %v6184
    %v7933 = vpop.f32.mrb[0].mxu0
    %v7934 = vadd.f32 %v7645, %v7933
    %v7935 = vpop.f32.mrb[0].mxu0
    %v7936 = vpop.f32.mrb[0].mxu0
    %v7937 = vadd.f32 %v7648, %v7936
    %v7938 = vpop.f32.mrb[0].mxu0
    %7939 = vmatprep.mubr.bf16.mxu0 %v6194
    %7940 = vmatmul.mubr.bf16.gmra.mrb[0].mxu0 %v6193
    %v7941 = vpop.f32.mrb[0].mxu0
    %v7942 = vadd.f32 %v7653, %v7941
    %v7943 = vpop.f32.mrb[0].mxu0
    %v7944 = vpop.f32.mrb[0].mxu0
    %v7945 = vadd.f32 %v7656, %v7944
    %v7946 = vpop.f32.mrb[0].mxu0
    %7947 = vmatprep.mubr.bf16.mxu0 %v6203
    %7948 = vmatmul.mubr.bf16.gmra.mrb[0].mxu0 %v6202
    %v7949 = vpop.f32.mrb[0].mxu0
    %v7950 = vadd.f32 %v7661, %v7949
    %v7951 = vpop.f32.mrb[0].mxu0
    %v7952 = vpop.f32.mrb[0].mxu0
    %v7953 = vadd.f32 %v7664, %v7952
    %v7954 = vpop.f32.mrb[0].mxu0
    %7955 = vmatprep.mubr.bf16.mxu0 %v6212
    %7956 = vmatmul.mubr.bf16.gmra.mrb[0].mxu0 %v6211
    %v7957 = vpop.f32.mrb[0].mxu0
    %v7958 = vadd.f32 %v7669, %v7957
    %v7959 = vpop.f32.mrb[0].mxu0
    %v7960 = vpop.f32.mrb[0].mxu0
    %v7961 = vadd.f32 %v7672, %v7960
    %v7962 = vpop.f32.mrb[0].mxu0
    %7963 = vmatprep.mubr.bf16.mxu0 %v6221
    %7964 = vmatmul.mubr.bf16.gmra.mrb[0].mxu0 %v6220
    %v7965 = vpop.f32.mrb[0].mxu0
    %v7966 = vadd.f32 %v7677, %v7965
    %v7967 = vpop.f32.mrb[0].mxu0
    %v7968 = vpop.f32.mrb[0].mxu0
    %v7969 = vadd.f32 %v7680, %v7968
    %v7970 = vpop.f32.mrb[0].mxu0
    %7971 = vmatprep.mubr.bf16.mxu0 %v6230
    %7972 = vmatmul.mubr.bf16.gmra.mrb[0].mxu0 %v6229
    %v7973 = vpop.f32.mrb[0].mxu0
    %v7974 = vadd.f32 %v7685, %v7973
    %v7975 = vpop.f32.mrb[0].mxu0
    %v7976 = vpop.f32.mrb[0].mxu0
    %v7977 = vadd.f32 %v7688, %v7976
    %v7978 = vpop.f32.mrb[0].mxu0
    %7979 = vmatprep.mubr.bf16.mxu0 %v6239
    %7980 = vmatmul.mubr.bf16.gmra.mrb[0].mxu0 %v6238
    %v7981 = vpop.f32.mrb[0].mxu0
    %v7982 = vadd.f32 %v7693, %v7981
    %v7983 = vpop.f32.mrb[0].mxu0
    %v7984 = vpop.f32.mrb[0].mxu0
    %v7985 = vadd.f32 %v7696, %v7984
    %v7986 = vpop.f32.mrb[0].mxu0
    %7987 = vmatprep.mubr.bf16.mxu0 %v6248
    %7988 = vmatmul.mubr.bf16.gmra.mrb[0].mxu0 %v6247
    %v7989 = vpop.f32.mrb[0].mxu0
    %v7990 = vadd.f32 %v7701, %v7989
    %v7991 = vpop.f32.mrb[0].mxu0
    %v7992 = vpop.f32.mrb[0].mxu0
    %v7993 = vadd.f32 %v7704, %v7992
    %v7994 = vpop.f32.mrb[0].mxu0
    %7995 = vmatprep.mubr.bf16.mxu0 %v6257
    %7996 = vmatmul.mubr.bf16.gmra.mrb[0].mxu0 %v6256
    %v7997 = vpop.f32.mrb[0].mxu0
    %v7998 = vadd.f32 %v7709, %v7997
    %v7999 = vpop.f32.mrb[0].mxu0
    %v8000 = vpop.f32.mrb[0].mxu0
    %v8001 = vadd.f32 %v7712, %v8000
    %v8002 = vpop.f32.mrb[0].mxu0
    %8003 = vmatprep.mubr.bf16.mxu0 %v6266
    %8004 = vmatmul.mubr.bf16.gmra.mrb[0].mxu0 %v6265
    %v8005 = vpop.f32.mrb[0].mxu0
    %v8006 = vadd.f32 %v7717, %v8005
    %v8007 = vpop.f32.mrb[0].mxu0
    %v8008 = vpop.f32.mrb[0].mxu0
    %v8009 = vadd.f32 %v7720, %v8008
    %v8010 = vpop.f32.mrb[0].mxu0
    %8011 = vmatprep.mubr.bf16.mxu0 %v6275
    %8012 = vmatmul.mubr.bf16.gmra.mrb[0].mxu0 %v6274
    %v8013 = vpop.f32.mrb[0].mxu0
    %v8014 = vadd.f32 %v7725, %v8013
    %v8015 = vpop.f32.mrb[0].mxu0
    %v8016 = vpop.f32.mrb[0].mxu0
    %v8017 = vadd.f32 %v7728, %v8016
    %v8018 = vpop.f32.mrb[0].mxu0
    %8019 = vmatprep.mubr.bf16.mxu0 %v6284
    %8020 = vmatmul.mubr.bf16.gmra.mrb[0].mxu0 %v6283
    %v8021 = vpop.f32.mrb[0].mxu0
    %v8022 = vadd.f32 %v7733, %v8021
    %v8023 = vpop.f32.mrb[0].mxu0
    %v8024 = vpop.f32.mrb[0].mxu0
    %v8025 = vadd.f32 %v7736, %v8024
    %v8026 = vpop.f32.mrb[0].mxu0
    %8027 = vmatprep.mubr.bf16.mxu0 %v6293
    %8028 = vmatmul.mubr.bf16.gmra.mrb[0].mxu0 %v6292
    %v8029 = vpop.f32.mrb[0].mxu0
    %v8030 = vadd.f32 %v7741, %v8029
    %v8031 = vpop.f32.mrb[0].mxu0
    %v8032 = vpop.f32.mrb[0].mxu0
    %v8033 = vadd.f32 %v7744, %v8032
    %v8034 = vpop.f32.mrb[0].mxu0
    %8035 = vmatprep.mubr.bf16.mxu0 %v6302
    %8036 = vmatmul.mubr.bf16.gmra.mrb[0].mxu0 %v6301
    %v8037 = vpop.f32.mrb[0].mxu0
    %v8038 = vadd.f32 %v7749, %v8037
    %v8039 = vpop.f32.mrb[0].mxu0
    %v8040 = vpop.f32.mrb[0].mxu0
    %v8041 = vadd.f32 %v7752, %v8040
    %v8042 = vpop.f32.mrb[0].mxu0
    %8043 = vmatprep.mubr.bf16.mxu0 %v6311
    %8044 = vmatmul.mubr.bf16.gmra.mrb[0].mxu0 %v6310
    %v8045 = vpop.f32.mrb[0].mxu0
    %v8046 = vadd.f32 %v7757, %v8045
    %v8047 = vpop.f32.mrb[0].mxu0
    %v8048 = vpop.f32.mrb[0].mxu0
    %v8049 = vadd.f32 %v7760, %v8048
    %v8050 = vpop.f32.mrb[0].mxu0
    %8051 = vmatprep.mubr.bf16.mxu0 %v6320
    %8052 = vmatmul.mubr.bf16.gmra.mrb[0].mxu0 %v6319
    %v8053 = vpop.f32.mrb[0].mxu0
    %v8054 = vadd.f32 %v7765, %v8053
    %v8055 = vpop.f32.mrb[0].mxu0
    %v8056 = vpop.f32.mrb[0].mxu0
    %v8057 = vadd.f32 %v7768, %v8056
    %v8058 = vpop.f32.mrb[0].mxu0
    %8059 = vmatprep.mubr.bf16.mxu0 %v6329
    %8060 = vmatmul.mubr.bf16.gmra.mrb[0].mxu0 %v6328
    %v8061 = vpop.f32.mrb[0].mxu0
    %v8062 = vadd.f32 %v7773, %v8061
    %v8063 = vpop.f32.mrb[0].mxu0
    %v8064 = vpop.f32.mrb[0].mxu0
    %v8065 = vadd.f32 %v7776, %v8064
    %v8066 = vpop.f32.mrb[0].mxu0
    %8067 = vmatprep.mubr.bf16.mxu0 %v6338
    %8068 = vmatmul.mubr.bf16.gmra.mrb[0].mxu0 %v6337
    %v8069 = vpop.f32.mrb[0].mxu0
    %v8070 = vadd.f32 %v7781, %v8069
    %v8071 = vpop.f32.mrb[0].mxu0
    %v8072 = vpop.f32.mrb[0].mxu0
    %v8073 = vadd.f32 %v7784, %v8072
    %v8074 = vpop.f32.mrb[0].mxu0
    %8075 = vmatprep.mubr.bf16.mxu0 %v6347
    %8076 = vmatmul.mubr.bf16.gmra.mrb[0].mxu0 %v6346
    %v8077 = vpop.f32.mrb[0].mxu0
    %v8078 = vadd.f32 %v7789, %v8077
    %v8079 = vpop.f32.mrb[0].mxu0
    %v8080 = vpop.f32.mrb[0].mxu0
    %v8081 = vadd.f32 %v7792, %v8080
    %v8082 = vpop.f32.mrb[0].mxu0
    %8083 = vmatprep.mubr.bf16.mxu0 %v6356
    %8084 = vmatmul.mubr.bf16.gmra.mrb[0].mxu0 %v6355
    %v8085 = vpop.f32.mrb[0].mxu0
    %v8086 = vadd.f32 %v7797, %v8085
    %v8087 = vpop.f32.mrb[0].mxu0
    %v8088 = vpop.f32.mrb[0].mxu0
    %v8089 = vadd.f32 %v7800, %v8088
    %v8090 = vpop.f32.mrb[0].mxu0
    %8091 = vmatprep.mubr.bf16.mxu0 %v6365
    %8092 = vmatmul.mubr.bf16.gmra.mrb[0].mxu0 %v6364
    %v8093 = vpop.f32.mrb[0].mxu0
    %v8094 = vadd.f32 %v7805, %v8093
    %v8095 = vpop.f32.mrb[0].mxu0
    %v8096 = vpop.f32.mrb[0].mxu0
    %v8097 = vadd.f32 %v7808, %v8096
    %v8098 = vpop.f32.mrb[0].mxu0
    %8099 = vmatprep.mubr.bf16.mxu0 %v6374
    %8100 = vmatmul.mubr.bf16.gmra.mrb[0].mxu0 %v6373
    %v8101 = vpop.f32.mrb[0].mxu0
    %v8102 = vadd.f32 %v7813, %v8101
    %v8103 = vpop.f32.mrb[0].mxu0
    %v8104 = vpop.f32.mrb[0].mxu0
    %v8105 = vadd.f32 %v7816, %v8104
    %v8106 = vpop.f32.mrb[0].mxu0
    %8107 = vdwg.mxu0
    %8108 = vmatprep.subr.bf16.mxu0 0
    %8109 = vmatpush1.bf16.msra.mxu0 %v6872
    %8110 = vmatprep.subr.bf16.mxu0 0
    %8111 = vmatpush1.bf16.msra.mxu0 %v6873
    %8112 = vmatprep.subr.bf16.mxu0 0
    %8113 = vmatpush1.bf16.msra.mxu0 %v6874
    %8114 = vmatprep.subr.bf16.mxu0 0
    %8115 = vmatpush1.bf16.msra.mxu0 %v6875
    %8116 = vmatprep.subr.bf16.mxu0 0
    %8117 = vmatpush1.bf16.msra.mxu0 %v6876
    %8118 = vmatprep.subr.bf16.mxu0 0
    %8119 = vmatpush1.bf16.msra.mxu0 %v6877
    %8120 = vmatprep.subr.bf16.mxu0 0
    %8121 = vmatpush1.bf16.msra.mxu0 %v6878
    %8122 = vmatprep.subr.bf16.mxu0 0
    %8123 = vmatpush1.bf16.msra.mxu0 %v6879
    %8124 = vmatprep.subr.bf16.mxu0 0
    %8125 = vmatpush1.bf16.msra.mxu0 0
    %8126 = vmatprep.subr.bf16.mxu0 0
    %8127 = vmatpush1.bf16.msra.mxu0 0
    %8128 = vmatprep.subr.bf16.mxu0 0
    %8129 = vmatpush1.bf16.msra.mxu0 0
    %8130 = vmatprep.subr.bf16.mxu0 0
    %8131 = vmatpush1.bf16.msra.mxu0 0
    %8132 = vmatprep.subr.bf16.mxu0 0
    %8133 = vmatpush1.bf16.msra.mxu0 0
    %8134 = vmatprep.subr.bf16.mxu0 0
    %8135 = vmatpush1.bf16.msra.mxu0 0
    %8136 = vmatprep.subr.bf16.mxu0 0
    %8137 = vmatpush1.bf16.msra.mxu0 0
    %8138 = vmatprep.subr.bf16.mxu0 0
    %8139 = vmatpush1.bf16.msra.mxu0 0
    %8140 = vmatprep.mubr.bf16.mxu0 0
    %8141 = vmatmul.mubr.bf16.gmra.mrb[0].mxu0 %v6096
    %v8142 = vpop.f32.mrb[0].mxu0
    %v8143 = vadd.f32 %v7854, %v8142
    %v8144 = vpop.f32.mrb[0].mxu0
    %v8145 = vpop.f32.mrb[0].mxu0
    %v8146 = vadd.f32 %v7857, %v8145
    %v8147 = vpop.f32.mrb[0].mxu0
    %8148 = vmatprep.mubr.bf16.mxu0 0
    %8149 = vmatmul.mubr.bf16.gmra.mrb[0].mxu0 %v6105
    %v8150 = vpop.f32.mrb[0].mxu0
    %v8151 = vadd.f32 %v7862, %v8150
    %v8152 = vpop.f32.mrb[0].mxu0
    %v8153 = vpop.f32.mrb[0].mxu0
    %v8154 = vadd.f32 %v7865, %v8153
    %v8155 = vpop.f32.mrb[0].mxu0
    %8156 = vmatprep.mubr.bf16.mxu0 0
    %8157 = vmatmul.mubr.bf16.gmra.mrb[0].mxu0 %v6114
    %v8158 = vpop.f32.mrb[0].mxu0
    %v8159 = vadd.f32 %v7870, %v8158
    %v8160 = vpop.f32.mrb[0].mxu0
    %v8161 = vpop.f32.mrb[0].mxu0
    %v8162 = vadd.f32 %v7873, %v8161
    %v8163 = vpop.f32.mrb[0].mxu0
    %8164 = vmatprep.mubr.bf16.mxu0 0
    %8165 = vmatmul.mubr.bf16.gmra.mrb[0].mxu0 %v6123
    %v8166 = vpop.f32.mrb[0].mxu0
    %v8167 = vadd.f32 %v7878, %v8166
    %v8168 = vpop.f32.mrb[0].mxu0
    %v8169 = vpop.f32.mrb[0].mxu0
    %v8170 = vadd.f32 %v7881, %v8169
    %v8171 = vpop.f32.mrb[0].mxu0
    %8172 = vmatprep.mubr.bf16.mxu0 0
    %8173 = vmatmul.mubr.bf16.gmra.mrb[0].mxu0 %v6132
    %v8174 = vpop.f32.mrb[0].mxu0
    %v8175 = vadd.f32 %v7886, %v8174
    %v8176 = vpop.f32.mrb[0].mxu0
    %v8177 = vpop.f32.mrb[0].mxu0
    %v8178 = vadd.f32 %v7889, %v8177
    %v8179 = vpop.f32.mrb[0].mxu0
    %8180 = vmatprep.mubr.bf16.mxu0 0
    %8181 = vmatmul.mubr.bf16.gmra.mrb[0].mxu0 %v6141
    %v8182 = vpop.f32.mrb[0].mxu0
    %v8183 = vadd.f32 %v7894, %v8182
    %v8184 = vpop.f32.mrb[0].mxu0
    %v8185 = vpop.f32.mrb[0].mxu0
    %v8186 = vadd.f32 %v7897, %v8185
    %v8187 = vpop.f32.mrb[0].mxu0
    %8188 = vmatprep.mubr.bf16.mxu0 0
    %8189 = vmatmul.mubr.bf16.gmra.mrb[0].mxu0 %v6150
    %v8190 = vpop.f32.mrb[0].mxu0
    %v8191 = vadd.f32 %v7902, %v8190
    %v8192 = vpop.f32.mrb[0].mxu0
    %v8193 = vpop.f32.mrb[0].mxu0
    %v8194 = vadd.f32 %v7905, %v8193
    %v8195 = vpop.f32.mrb[0].mxu0
    %8196 = vmatprep.mubr.bf16.mxu0 0
    %8197 = vmatmul.mubr.bf16.gmra.mrb[0].mxu0 %v6159
    %v8198 = vpop.f32.mrb[0].mxu0
    %v8199 = vadd.f32 %v7910, %v8198
    %v8200 = vpop.f32.mrb[0].mxu0
    %v8201 = vpop.f32.mrb[0].mxu0
    %v8202 = vadd.f32 %v7913, %v8201
    %v8203 = vpop.f32.mrb[0].mxu0
    %8204 = vmatprep.mubr.bf16.mxu0 0
    %8205 = vmatmul.mubr.bf16.gmra.mrb[0].mxu0 %v6168
    %v8206 = vpop.f32.mrb[0].mxu0
    %v8207 = vadd.f32 %v7918, %v8206
    %v8208 = vpop.f32.mrb[0].mxu0
    %v8209 = vpop.f32.mrb[0].mxu0
    %v8210 = vadd.f32 %v7921, %v8209
    %v8211 = vpop.f32.mrb[0].mxu0
    %8212 = vmatprep.mubr.bf16.mxu0 0
    %8213 = vmatmul.mubr.bf16.gmra.mrb[0].mxu0 %v6177
    %v8214 = vpop.f32.mrb[0].mxu0
    %v8215 = vadd.f32 %v7926, %v8214
    %v8216 = vpop.f32.mrb[0].mxu0
    %v8217 = vpop.f32.mrb[0].mxu0
    %v8218 = vadd.f32 %v7929, %v8217
    %v8219 = vpop.f32.mrb[0].mxu0
    %8220 = vmatprep.mubr.bf16.mxu0 0
    %8221 = vmatmul.mubr.bf16.gmra.mrb[0].mxu0 %v6186
    %v8222 = vpop.f32.mrb[0].mxu0
    %v8223 = vadd.f32 %v7934, %v8222
    %v8224 = vpop.f32.mrb[0].mxu0
    %v8225 = vpop.f32.mrb[0].mxu0
    %v8226 = vadd.f32 %v7937, %v8225
    %v8227 = vpop.f32.mrb[0].mxu0
    %8228 = vmatprep.mubr.bf16.mxu0 0
    %8229 = vmatmul.mubr.bf16.gmra.mrb[0].mxu0 %v6195
    %v8230 = vpop.f32.mrb[0].mxu0
    %v8231 = vadd.f32 %v7942, %v8230
    %v8232 = vpop.f32.mrb[0].mxu0
    %v8233 = vpop.f32.mrb[0].mxu0
    %v8234 = vadd.f32 %v7945, %v8233
    %v8235 = vpop.f32.mrb[0].mxu0
    %8236 = vmatprep.mubr.bf16.mxu0 0
    %8237 = vmatmul.mubr.bf16.gmra.mrb[0].mxu0 %v6204
    %v8238 = vpop.f32.mrb[0].mxu0
    %v8239 = vadd.f32 %v7950, %v8238
    %v8240 = vpop.f32.mrb[0].mxu0
    %v8241 = vpop.f32.mrb[0].mxu0
    %v8242 = vadd.f32 %v7953, %v8241
    %v8243 = vpop.f32.mrb[0].mxu0
    %8244 = vmatprep.mubr.bf16.mxu0 0
    %8245 = vmatmul.mubr.bf16.gmra.mrb[0].mxu0 %v6213
    %v8246 = vpop.f32.mrb[0].mxu0
    %v8247 = vadd.f32 %v7958, %v8246
    %v8248 = vpop.f32.mrb[0].mxu0
    %v8249 = vpop.f32.mrb[0].mxu0
    %v8250 = vadd.f32 %v7961, %v8249
    %v8251 = vpop.f32.mrb[0].mxu0
    %8252 = vmatprep.mubr.bf16.mxu0 0
    %8253 = vmatmul.mubr.bf16.gmra.mrb[0].mxu0 %v6222
    %v8254 = vpop.f32.mrb[0].mxu0
    %v8255 = vadd.f32 %v7966, %v8254
    %v8256 = vpop.f32.mrb[0].mxu0
    %v8257 = vpop.f32.mrb[0].mxu0
    %v8258 = vadd.f32 %v7969, %v8257
    %v8259 = vpop.f32.mrb[0].mxu0
    %8260 = vmatprep.mubr.bf16.mxu0 0
    %8261 = vmatmul.mubr.bf16.gmra.mrb[0].mxu0 %v6231
    %v8262 = vpop.f32.mrb[0].mxu0
    %v8263 = vadd.f32 %v7974, %v8262
    %v8264 = vpop.f32.mrb[0].mxu0
    %v8265 = vpop.f32.mrb[0].mxu0
    %v8266 = vadd.f32 %v7977, %v8265
    %v8267 = vpop.f32.mrb[0].mxu0
    %8268 = vmatprep.mubr.bf16.mxu0 0
    %8269 = vmatmul.mubr.bf16.gmra.mrb[0].mxu0 %v6240
    %v8270 = vpop.f32.mrb[0].mxu0
    %v8271 = vadd.f32 %v7982, %v8270
    %v8272 = vpop.f32.mrb[0].mxu0
    %v8273 = vpop.f32.mrb[0].mxu0
    %v8274 = vadd.f32 %v7985, %v8273
    %v8275 = vpop.f32.mrb[0].mxu0
    %8276 = vmatprep.mubr.bf16.mxu0 0
    %8277 = vmatmul.mubr.bf16.gmra.mrb[0].mxu0 %v6249
    %v8278 = vpop.f32.mrb[0].mxu0
    %v8279 = vadd.f32 %v7990, %v8278
    %v8280 = vpop.f32.mrb[0].mxu0
    %v8281 = vpop.f32.mrb[0].mxu0
    %v8282 = vadd.f32 %v7993, %v8281
    %v8283 = vpop.f32.mrb[0].mxu0
    %8284 = vmatprep.mubr.bf16.mxu0 0
    %8285 = vmatmul.mubr.bf16.gmra.mrb[0].mxu0 %v6258
    %v8286 = vpop.f32.mrb[0].mxu0
    %v8287 = vadd.f32 %v7998, %v8286
    %v8288 = vpop.f32.mrb[0].mxu0
    %v8289 = vpop.f32.mrb[0].mxu0
    %v8290 = vadd.f32 %v8001, %v8289
    %v8291 = vpop.f32.mrb[0].mxu0
    %8292 = vmatprep.mubr.bf16.mxu0 0
    %8293 = vmatmul.mubr.bf16.gmra.mrb[0].mxu0 %v6267
    %v8294 = vpop.f32.mrb[0].mxu0
    %v8295 = vadd.f32 %v8006, %v8294
    %v8296 = vpop.f32.mrb[0].mxu0
    %v8297 = vpop.f32.mrb[0].mxu0
    %v8298 = vadd.f32 %v8009, %v8297
    %v8299 = vpop.f32.mrb[0].mxu0
    %8300 = vmatprep.mubr.bf16.mxu0 0
    %8301 = vmatmul.mubr.bf16.gmra.mrb[0].mxu0 %v6276
    %v8302 = vpop.f32.mrb[0].mxu0
    %v8303 = vadd.f32 %v8014, %v8302
    %v8304 = vpop.f32.mrb[0].mxu0
    %v8305 = vpop.f32.mrb[0].mxu0
    %v8306 = vadd.f32 %v8017, %v8305
    %v8307 = vpop.f32.mrb[0].mxu0
    %8308 = vmatprep.mubr.bf16.mxu0 0
    %8309 = vmatmul.mubr.bf16.gmra.mrb[0].mxu0 %v6285
    %v8310 = vpop.f32.mrb[0].mxu0
    %v8311 = vadd.f32 %v8022, %v8310
    %v8312 = vpop.f32.mrb[0].mxu0
    %v8313 = vpop.f32.mrb[0].mxu0
    %v8314 = vadd.f32 %v8025, %v8313
    %v8315 = vpop.f32.mrb[0].mxu0
    %8316 = vmatprep.mubr.bf16.mxu0 0
    %8317 = vmatmul.mubr.bf16.gmra.mrb[0].mxu0 %v6294
    %v8318 = vpop.f32.mrb[0].mxu0
    %v8319 = vadd.f32 %v8030, %v8318
    %v8320 = vpop.f32.mrb[0].mxu0
    %v8321 = vpop.f32.mrb[0].mxu0
    %v8322 = vadd.f32 %v8033, %v8321
    %v8323 = vpop.f32.mrb[0].mxu0
    %8324 = vmatprep.mubr.bf16.mxu0 0
    %8325 = vmatmul.mubr.bf16.gmra.mrb[0].mxu0 %v6303
    %v8326 = vpop.f32.mrb[0].mxu0
    %v8327 = vadd.f32 %v8038, %v8326
    %v8328 = vpop.f32.mrb[0].mxu0
    %v8329 = vpop.f32.mrb[0].mxu0
    %v8330 = vadd.f32 %v8041, %v8329
    %v8331 = vpop.f32.mrb[0].mxu0
    %8332 = vmatprep.mubr.bf16.mxu0 0
    %8333 = vmatmul.mubr.bf16.gmra.mrb[0].mxu0 %v6312
    %v8334 = vpop.f32.mrb[0].mxu0
    %v8335 = vadd.f32 %v8046, %v8334
    %v8336 = vpop.f32.mrb[0].mxu0
    %v8337 = vpop.f32.mrb[0].mxu0
    %v8338 = vadd.f32 %v8049, %v8337
    %v8339 = vpop.f32.mrb[0].mxu0
    %8340 = vmatprep.mubr.bf16.mxu0 0
    %8341 = vmatmul.mubr.bf16.gmra.mrb[0].mxu0 %v6321
    %v8342 = vpop.f32.mrb[0].mxu0
    %v8343 = vadd.f32 %v8054, %v8342
    %v8344 = vpop.f32.mrb[0].mxu0
    %v8345 = vpop.f32.mrb[0].mxu0
    %v8346 = vadd.f32 %v8057, %v8345
    %v8347 = vpop.f32.mrb[0].mxu0
    %8348 = vmatprep.mubr.bf16.mxu0 0
    %8349 = vmatmul.mubr.bf16.gmra.mrb[0].mxu0 %v6330
    %v8350 = vpop.f32.mrb[0].mxu0
    %v8351 = vadd.f32 %v8062, %v8350
    %v8352 = vpop.f32.mrb[0].mxu0
    %v8353 = vpop.f32.mrb[0].mxu0
    %v8354 = vadd.f32 %v8065, %v8353
    %v8355 = vpop.f32.mrb[0].mxu0
    %8356 = vmatprep.mubr.bf16.mxu0 0
    %8357 = vmatmul.mubr.bf16.gmra.mrb[0].mxu0 %v6339
    %v8358 = vpop.f32.mrb[0].mxu0
    %v8359 = vadd.f32 %v8070, %v8358
    %v8360 = vpop.f32.mrb[0].mxu0
    %v8361 = vpop.f32.mrb[0].mxu0
    %v8362 = vadd.f32 %v8073, %v8361
    %v8363 = vpop.f32.mrb[0].mxu0
    %8364 = vmatprep.mubr.bf16.mxu0 0
    %8365 = vmatmul.mubr.bf16.gmra.mrb[0].mxu0 %v6348
    %v8366 = vpop.f32.mrb[0].mxu0
    %v8367 = vadd.f32 %v8078, %v8366
    %v8368 = vpop.f32.mrb[0].mxu0
    %v8369 = vpop.f32.mrb[0].mxu0
    %v8370 = vadd.f32 %v8081, %v8369
    %v8371 = vpop.f32.mrb[0].mxu0
    %8372 = vmatprep.mubr.bf16.mxu0 0
    %8373 = vmatmul.mubr.bf16.gmra.mrb[0].mxu0 %v6357
    %v8374 = vpop.f32.mrb[0].mxu0
    %v8375 = vadd.f32 %v8086, %v8374
    %v8376 = vpop.f32.mrb[0].mxu0
    %v8377 = vpop.f32.mrb[0].mxu0
    %v8378 = vadd.f32 %v8089, %v8377
    %v8379 = vpop.f32.mrb[0].mxu0
    %8380 = vmatprep.mubr.bf16.mxu0 0
    %8381 = vmatmul.mubr.bf16.gmra.mrb[0].mxu0 %v6366
    %v8382 = vpop.f32.mrb[0].mxu0
    %v8383 = vadd.f32 %v8094, %v8382
    %v8384 = vpop.f32.mrb[0].mxu0
    %v8385 = vpop.f32.mrb[0].mxu0
    %v8386 = vadd.f32 %v8097, %v8385
    %v8387 = vpop.f32.mrb[0].mxu0
    %8388 = vmatprep.mubr.bf16.mxu0 0
    %8389 = vmatmul.mubr.bf16.gmra.mrb[0].mxu0 %v6375
    %v8390 = vpop.f32.mrb[0].mxu0
    %v8391 = vadd.f32 %v8102, %v8390
    %v8392 = vpop.f32.mrb[0].mxu0
    %v8393 = vpop.f32.mrb[0].mxu0
    %v8394 = vadd.f32 %v8105, %v8393
    %v8395 = vpop.f32.mrb[0].mxu0
    %8396 = vdwg.mxu0
    %v8397 = vld [vmem:[%s7] sm:$0x1]
    %v8398 = vld [vmem:[%s8] sm:$0x1]
    %v8399 = vadd.f32 %v8143, %v8146
    %v8400 = vadd.f32 %v8399, %v8151
    %v8401 = vadd.f32 %v8400, %v8154
    %v8402 = vadd.f32 %v8401, %v8159
    %v8403 = vadd.f32 %v8402, %v8162
    %v8404 = vadd.f32 %v8403, %v8167
    %v8405 = vadd.f32 %v8404, %v8170
    %v8406 = vadd.f32 %v8405, %v8175
    %v8407 = vadd.f32 %v8406, %v8178
    %v8408 = vadd.f32 %v8407, %v8183
    %v8409 = vadd.f32 %v8408, %v8186
    %v8410 = vadd.f32 %v8409, %v8191
    %v8411 = vadd.f32 %v8410, %v8194
    %v8412 = vadd.f32 %v8411, %v8199
    %v8413 = vadd.f32 %v8412, %v8202
    %v8414 = vadd.f32 %v8413, %v8207
    %v8415 = vadd.f32 %v8414, %v8210
    %v8416 = vadd.f32 %v8415, %v8215
    %v8417 = vadd.f32 %v8416, %v8218
    %v8418 = vadd.f32 %v8417, %v8223
    %v8419 = vadd.f32 %v8418, %v8226
    %v8420 = vadd.f32 %v8419, %v8231
    %v8421 = vadd.f32 %v8420, %v8234
    %v8422 = vadd.f32 %v8421, %v8239
    %v8423 = vadd.f32 %v8422, %v8242
    %v8424 = vadd.f32 %v8423, %v8247
    %v8425 = vadd.f32 %v8424, %v8250
    %v8426 = vadd.f32 %v8425, %v8255
    %v8427 = vadd.f32 %v8426, %v8258
    %v8428 = vadd.f32 %v8427, %v8263
    %v8429 = vadd.f32 %v8428, %v8266
    %v8430 = vadd.f32 %v8429, %v8271
    %v8431 = vadd.f32 %v8430, %v8274
    %v8432 = vadd.f32 %v8431, %v8279
    %v8433 = vadd.f32 %v8432, %v8282
    %v8434 = vadd.f32 %v8433, %v8287
    %v8435 = vadd.f32 %v8434, %v8290
    %v8436 = vadd.f32 %v8435, %v8295
    %v8437 = vadd.f32 %v8436, %v8298
    %v8438 = vadd.f32 %v8437, %v8303
    %v8439 = vadd.f32 %v8438, %v8306
    %v8440 = vadd.f32 %v8439, %v8311
    %v8441 = vadd.f32 %v8440, %v8314
    %v8442 = vadd.f32 %v8441, %v8319
    %v8443 = vadd.f32 %v8442, %v8322
    %v8444 = vadd.f32 %v8443, %v8327
    %v8445 = vadd.f32 %v8444, %v8330
    %v8446 = vadd.f32 %v8445, %v8335
    %v8447 = vadd.f32 %v8446, %v8338
    %v8448 = vadd.f32 %v8447, %v8343
    %v8449 = vadd.f32 %v8448, %v8346
    %v8450 = vadd.f32 %v8449, %v8351
    %v8451 = vadd.f32 %v8450, %v8354
    %v8452 = vadd.f32 %v8451, %v8359
    %v8453 = vadd.f32 %v8452, %v8362
    %v8454 = vadd.f32 %v8453, %v8367
    %v8455 = vadd.f32 %v8454, %v8370
    %v8456 = vadd.f32 %v8455, %v8375
    %v8457 = vadd.f32 %v8456, %v8378
    %v8458 = vadd.f32 %v8457, %v8383
    %v8459 = vadd.f32 %v8458, %v8386
    %v8460 = vadd.f32 %v8459, %v8391
    %v8461 = vadd.f32 %v8460, %v8394
    %v8462 = vrot.slane %v8461, 4
    %v8463 = vadd.f32 %v8461, %v8462
    %v8464 = vrot.slane %v8463, 2
    %v8465 = vadd.f32 %v8463, %v8464
    %v8466 = vrot.slane %v8465, 1
    %v8467 = vadd.f32 %v8465, %v8466
    %v8468 = vmul.f32 %v8467, %v4378
    %v8469 = vsub.f32 %v8143, %v8468
    %v8470 = vsub.f32 %v8146, %v8468
    %v8471 = vsub.f32 %v8151, %v8468
    %v8472 = vsub.f32 %v8154, %v8468
    %v8473 = vsub.f32 %v8159, %v8468
    %v8474 = vsub.f32 %v8162, %v8468
    %v8475 = vsub.f32 %v8167, %v8468
    %v8476 = vsub.f32 %v8170, %v8468
    %v8477 = vsub.f32 %v8175, %v8468
    %v8478 = vsub.f32 %v8178, %v8468
    %v8479 = vsub.f32 %v8183, %v8468
    %v8480 = vsub.f32 %v8186, %v8468
    %v8481 = vsub.f32 %v8191, %v8468
    %v8482 = vsub.f32 %v8194, %v8468
    %v8483 = vsub.f32 %v8199, %v8468
    %v8484 = vsub.f32 %v8202, %v8468
    %v8485 = vsub.f32 %v8207, %v8468
    %v8486 = vsub.f32 %v8210, %v8468
    %v8487 = vsub.f32 %v8215, %v8468
    %v8488 = vsub.f32 %v8218, %v8468
    %v8489 = vsub.f32 %v8223, %v8468
    %v8490 = vsub.f32 %v8226, %v8468
    %v8491 = vsub.f32 %v8231, %v8468
    %v8492 = vsub.f32 %v8234, %v8468
    %v8493 = vsub.f32 %v8239, %v8468
    %v8494 = vsub.f32 %v8242, %v8468
    %v8495 = vsub.f32 %v8247, %v8468
    %v8496 = vsub.f32 %v8250, %v8468
    %v8497 = vsub.f32 %v8255, %v8468
    %v8498 = vsub.f32 %v8258, %v8468
    %v8499 = vsub.f32 %v8263, %v8468
    %v8500 = vsub.f32 %v8266, %v8468
    %v8501 = vsub.f32 %v8271, %v8468
    %v8502 = vsub.f32 %v8274, %v8468
    %v8503 = vsub.f32 %v8279, %v8468
    %v8504 = vsub.f32 %v8282, %v8468
    %v8505 = vsub.f32 %v8287, %v8468
    %v8506 = vsub.f32 %v8290, %v8468
    %v8507 = vsub.f32 %v8295, %v8468
    %v8508 = vsub.f32 %v8298, %v8468
    %v8509 = vsub.f32 %v8303, %v8468
    %v8510 = vsub.f32 %v8306, %v8468
    %v8511 = vsub.f32 %v8311, %v8468
    %v8512 = vsub.f32 %v8314, %v8468
    %v8513 = vsub.f32 %v8319, %v8468
    %v8514 = vsub.f32 %v8322, %v8468
    %v8515 = vsub.f32 %v8327, %v8468
    %v8516 = vsub.f32 %v8330, %v8468
    %v8517 = vsub.f32 %v8335, %v8468
    %v8518 = vsub.f32 %v8338, %v8468
    %v8519 = vsub.f32 %v8343, %v8468
    %v8520 = vsub.f32 %v8346, %v8468
    %v8521 = vsub.f32 %v8351, %v8468
    %v8522 = vsub.f32 %v8354, %v8468
    %v8523 = vsub.f32 %v8359, %v8468
    %v8524 = vsub.f32 %v8362, %v8468
    %v8525 = vsub.f32 %v8367, %v8468
    %v8526 = vsub.f32 %v8370, %v8468
    %v8527 = vsub.f32 %v8375, %v8468
    %v8528 = vsub.f32 %v8378, %v8468
    %v8529 = vsub.f32 %v8383, %v8468
    %v8530 = vsub.f32 %v8386, %v8468
    %v8531 = vsub.f32 %v8391, %v8468
    %v8532 = vsub.f32 %v8394, %v8468
    %v8533 = vmul.f32 %v8469, %v8469
    %v8534 = vmul.f32 %v8470, %v8470
    %v8535 = vmul.f32 %v8471, %v8471
    %v8536 = vmul.f32 %v8472, %v8472
    %v8537 = vmul.f32 %v8473, %v8473
    %v8538 = vmul.f32 %v8474, %v8474
    %v8539 = vmul.f32 %v8475, %v8475
    %v8540 = vmul.f32 %v8476, %v8476
    %v8541 = vmul.f32 %v8477, %v8477
    %v8542 = vmul.f32 %v8478, %v8478
    %v8543 = vmul.f32 %v8479, %v8479
    %v8544 = vmul.f32 %v8480, %v8480
    %v8545 = vmul.f32 %v8481, %v8481
    %v8546 = vmul.f32 %v8482, %v8482
    %v8547 = vmul.f32 %v8483, %v8483
    %v8548 = vmul.f32 %v8484, %v8484
    %v8549 = vmul.f32 %v8485, %v8485
    %v8550 = vmul.f32 %v8486, %v8486
    %v8551 = vmul.f32 %v8487, %v8487
    %v8552 = vmul.f32 %v8488, %v8488
    %v8553 = vmul.f32 %v8489, %v8489
    %v8554 = vmul.f32 %v8490, %v8490
    %v8555 = vmul.f32 %v8491, %v8491
    %v8556 = vmul.f32 %v8492, %v8492
    %v8557 = vmul.f32 %v8493, %v8493
    %v8558 = vmul.f32 %v8494, %v8494
    %v8559 = vmul.f32 %v8495, %v8495
    %v8560 = vmul.f32 %v8496, %v8496
    %v8561 = vmul.f32 %v8497, %v8497
    %v8562 = vmul.f32 %v8498, %v8498
    %v8563 = vmul.f32 %v8499, %v8499
    %v8564 = vmul.f32 %v8500, %v8500
    %v8565 = vmul.f32 %v8501, %v8501
    %v8566 = vmul.f32 %v8502, %v8502
    %v8567 = vmul.f32 %v8503, %v8503
    %v8568 = vmul.f32 %v8504, %v8504
    %v8569 = vmul.f32 %v8505, %v8505
    %v8570 = vmul.f32 %v8506, %v8506
    %v8571 = vmul.f32 %v8507, %v8507
    %v8572 = vmul.f32 %v8508, %v8508
    %v8573 = vmul.f32 %v8509, %v8509
    %v8574 = vmul.f32 %v8510, %v8510
    %v8575 = vmul.f32 %v8511, %v8511
    %v8576 = vmul.f32 %v8512, %v8512
    %v8577 = vmul.f32 %v8513, %v8513
    %v8578 = vmul.f32 %v8514, %v8514
    %v8579 = vmul.f32 %v8515, %v8515
    %v8580 = vmul.f32 %v8516, %v8516
    %v8581 = vmul.f32 %v8517, %v8517
    %v8582 = vmul.f32 %v8518, %v8518
    %v8583 = vmul.f32 %v8519, %v8519
    %v8584 = vmul.f32 %v8520, %v8520
    %v8585 = vmul.f32 %v8521, %v8521
    %v8586 = vmul.f32 %v8522, %v8522
    %v8587 = vmul.f32 %v8523, %v8523
    %v8588 = vmul.f32 %v8524, %v8524
    %v8589 = vmul.f32 %v8525, %v8525
    %v8590 = vmul.f32 %v8526, %v8526
    %v8591 = vmul.f32 %v8527, %v8527
    %v8592 = vmul.f32 %v8528, %v8528
    %v8593 = vmul.f32 %v8529, %v8529
    %v8594 = vmul.f32 %v8530, %v8530
    %v8595 = vmul.f32 %v8531, %v8531
    %v8596 = vmul.f32 %v8532, %v8532
    %v8597 = vadd.f32 %v8533, %v8534
    %v8598 = vadd.f32 %v8597, %v8535
    %v8599 = vadd.f32 %v8598, %v8536
    %v8600 = vadd.f32 %v8599, %v8537
    %v8601 = vadd.f32 %v8600, %v8538
    %v8602 = vadd.f32 %v8601, %v8539
    %v8603 = vadd.f32 %v8602, %v8540
    %v8604 = vadd.f32 %v8603, %v8541
    %v8605 = vadd.f32 %v8604, %v8542
    %v8606 = vadd.f32 %v8605, %v8543
    %v8607 = vadd.f32 %v8606, %v8544
    %v8608 = vadd.f32 %v8607, %v8545
    %v8609 = vadd.f32 %v8608, %v8546
    %v8610 = vadd.f32 %v8609, %v8547
    %v8611 = vadd.f32 %v8610, %v8548
    %v8612 = vadd.f32 %v8611, %v8549
    %v8613 = vadd.f32 %v8612, %v8550
    %v8614 = vadd.f32 %v8613, %v8551
    %v8615 = vadd.f32 %v8614, %v8552
    %v8616 = vadd.f32 %v8615, %v8553
    %v8617 = vadd.f32 %v8616, %v8554
    %v8618 = vadd.f32 %v8617, %v8555
    %v8619 = vadd.f32 %v8618, %v8556
    %v8620 = vadd.f32 %v8619, %v8557
    %v8621 = vadd.f32 %v8620, %v8558
    %v8622 = vadd.f32 %v8621, %v8559
    %v8623 = vadd.f32 %v8622, %v8560
    %v8624 = vadd.f32 %v8623, %v8561
    %v8625 = vadd.f32 %v8624, %v8562
    %v8626 = vadd.f32 %v8625, %v8563
    %v8627 = vadd.f32 %v8626, %v8564
    %v8628 = vadd.f32 %v8627, %v8565
    %v8629 = vadd.f32 %v8628, %v8566
    %v8630 = vadd.f32 %v8629, %v8567
    %v8631 = vadd.f32 %v8630, %v8568
    %v8632 = vadd.f32 %v8631, %v8569
    %v8633 = vadd.f32 %v8632, %v8570
    %v8634 = vadd.f32 %v8633, %v8571
    %v8635 = vadd.f32 %v8634, %v8572
    %v8636 = vadd.f32 %v8635, %v8573
    %v8637 = vadd.f32 %v8636, %v8574
    %v8638 = vadd.f32 %v8637, %v8575
    %v8639 = vadd.f32 %v8638, %v8576
    %v8640 = vadd.f32 %v8639, %v8577
    %v8641 = vadd.f32 %v8640, %v8578
    %v8642 = vadd.f32 %v8641, %v8579
    %v8643 = vadd.f32 %v8642, %v8580
    %v8644 = vadd.f32 %v8643, %v8581
    %v8645 = vadd.f32 %v8644, %v8582
    %v8646 = vadd.f32 %v8645, %v8583
    %v8647 = vadd.f32 %v8646, %v8584
    %v8648 = vadd.f32 %v8647, %v8585
    %v8649 = vadd.f32 %v8648, %v8586
    %v8650 = vadd.f32 %v8649, %v8587
    %v8651 = vadd.f32 %v8650, %v8588
    %v8652 = vadd.f32 %v8651, %v8589
    %v8653 = vadd.f32 %v8652, %v8590
    %v8654 = vadd.f32 %v8653, %v8591
    %v8655 = vadd.f32 %v8654, %v8592
    %v8656 = vadd.f32 %v8655, %v8593
    %v8657 = vadd.f32 %v8656, %v8594
    %v8658 = vadd.f32 %v8657, %v8595
    %v8659 = vadd.f32 %v8658, %v8596
    %v8660 = vrot.slane %v8659, 4
    %v8661 = vadd.f32 %v8659, %v8660
    %v8662 = vrot.slane %v8661, 2
    %v8663 = vadd.f32 %v8661, %v8662
    %v8664 = vrot.slane %v8663, 1
    %v8665 = vadd.f32 %v8663, %v8664
    %v8666 = vmul.f32 %v8665, %v4378
    %v8667 = vadd.f32 %v8666, 1e-05
    %v8668 = vrsqrt.pop %v8667
    %v8669 = vmul.f32 %v8397, %v8668
    %v8671 = vlaneseq
    %v8672 = vshrl.u32 %v8671, 7
    %v8673 = vsub.s32 0, %v8672
    %v8674 = vrot.slane %v8669, %v8673
    %v8676 = vmul.f32 %v8469, %v8674
    %v8677 = vmul.f32 %v8470, %v8674
    %v8678 = vmul.f32 %v8471, %v8674
    %v8679 = vmul.f32 %v8472, %v8674
    %v8680 = vmul.f32 %v8473, %v8674
    %v8681 = vmul.f32 %v8474, %v8674
    %v8682 = vmul.f32 %v8475, %v8674
    %v8683 = vmul.f32 %v8476, %v8674
    %v8684 = vmul.f32 %v8477, %v8674
    %v8685 = vmul.f32 %v8478, %v8674
    %v8686 = vmul.f32 %v8479, %v8674
    %v8687 = vmul.f32 %v8480, %v8674
    %v8688 = vmul.f32 %v8481, %v8674
    %v8689 = vmul.f32 %v8482, %v8674
    %v8690 = vmul.f32 %v8483, %v8674
    %v8691 = vmul.f32 %v8484, %v8674
    %v8692 = vmul.f32 %v8485, %v8674
    %v8693 = vmul.f32 %v8486, %v8674
    %v8694 = vmul.f32 %v8487, %v8674
    %v8695 = vmul.f32 %v8488, %v8674
    %v8696 = vmul.f32 %v8489, %v8674
    %v8697 = vmul.f32 %v8490, %v8674
    %v8698 = vmul.f32 %v8491, %v8674
    %v8699 = vmul.f32 %v8492, %v8674
    %v8700 = vmul.f32 %v8493, %v8674
    %v8701 = vmul.f32 %v8494, %v8674
    %v8702 = vmul.f32 %v8495, %v8674
    %v8703 = vmul.f32 %v8496, %v8674
    %v8704 = vmul.f32 %v8497, %v8674
    %v8705 = vmul.f32 %v8498, %v8674
    %v8706 = vmul.f32 %v8499, %v8674
    %v8707 = vmul.f32 %v8500, %v8674
    %v8708 = vmul.f32 %v8501, %v8674
    %v8709 = vmul.f32 %v8502, %v8674
    %v8710 = vmul.f32 %v8503, %v8674
    %v8711 = vmul.f32 %v8504, %v8674
    %v8712 = vmul.f32 %v8505, %v8674
    %v8713 = vmul.f32 %v8506, %v8674
    %v8714 = vmul.f32 %v8507, %v8674
    %v8715 = vmul.f32 %v8508, %v8674
    %v8716 = vmul.f32 %v8509, %v8674
    %v8717 = vmul.f32 %v8510, %v8674
    %v8718 = vmul.f32 %v8511, %v8674
    %v8719 = vmul.f32 %v8512, %v8674
    %v8720 = vmul.f32 %v8513, %v8674
    %v8721 = vmul.f32 %v8514, %v8674
    %v8722 = vmul.f32 %v8515, %v8674
    %v8723 = vmul.f32 %v8516, %v8674
    %v8724 = vmul.f32 %v8517, %v8674
    %v8725 = vmul.f32 %v8518, %v8674
    %v8726 = vmul.f32 %v8519, %v8674
    %v8727 = vmul.f32 %v8520, %v8674
    %v8728 = vmul.f32 %v8521, %v8674
    %v8729 = vmul.f32 %v8522, %v8674
    %v8730 = vmul.f32 %v8523, %v8674
    %v8731 = vmul.f32 %v8524, %v8674
    %v8732 = vmul.f32 %v8525, %v8674
    %v8733 = vmul.f32 %v8526, %v8674
    %v8734 = vmul.f32 %v8527, %v8674
    %v8735 = vmul.f32 %v8528, %v8674
    %v8736 = vmul.f32 %v8529, %v8674
    %v8737 = vmul.f32 %v8530, %v8674
    %v8738 = vmul.f32 %v8531, %v8674
    %v8739 = vmul.f32 %v8532, %v8674
    %v8741 = vlaneseq
    %v8742 = vshrl.u32 %v8741, 7
    %v8743 = vsub.s32 0, %v8742
    %v8744 = vrot.slane %v8398, %v8743
    %v8746 = vadd.f32 %v8676, %v8744
    %v8747 = vadd.f32 %v8677, %v8744
    %v8748 = vadd.f32 %v8678, %v8744
    %v8749 = vadd.f32 %v8679, %v8744
    %v8750 = vadd.f32 %v8680, %v8744
    %v8751 = vadd.f32 %v8681, %v8744
    %v8752 = vadd.f32 %v8682, %v8744
    %v8753 = vadd.f32 %v8683, %v8744
    %v8754 = vadd.f32 %v8684, %v8744
    %v8755 = vadd.f32 %v8685, %v8744
    %v8756 = vadd.f32 %v8686, %v8744
    %v8757 = vadd.f32 %v8687, %v8744
    %v8758 = vadd.f32 %v8688, %v8744
    %v8759 = vadd.f32 %v8689, %v8744
    %v8760 = vadd.f32 %v8690, %v8744
    %v8761 = vadd.f32 %v8691, %v8744
    %v8762 = vadd.f32 %v8692, %v8744
    %v8763 = vadd.f32 %v8693, %v8744
    %v8764 = vadd.f32 %v8694, %v8744
    %v8765 = vadd.f32 %v8695, %v8744
    %v8766 = vadd.f32 %v8696, %v8744
    %v8767 = vadd.f32 %v8697, %v8744
    %v8768 = vadd.f32 %v8698, %v8744
    %v8769 = vadd.f32 %v8699, %v8744
    %v8770 = vadd.f32 %v8700, %v8744
    %v8771 = vadd.f32 %v8701, %v8744
    %v8772 = vadd.f32 %v8702, %v8744
    %v8773 = vadd.f32 %v8703, %v8744
    %v8774 = vadd.f32 %v8704, %v8744
    %v8775 = vadd.f32 %v8705, %v8744
    %v8776 = vadd.f32 %v8706, %v8744
    %v8777 = vadd.f32 %v8707, %v8744
    %v8778 = vadd.f32 %v8708, %v8744
    %v8779 = vadd.f32 %v8709, %v8744
    %v8780 = vadd.f32 %v8710, %v8744
    %v8781 = vadd.f32 %v8711, %v8744
    %v8782 = vadd.f32 %v8712, %v8744
    %v8783 = vadd.f32 %v8713, %v8744
    %v8784 = vadd.f32 %v8714, %v8744
    %v8785 = vadd.f32 %v8715, %v8744
    %v8786 = vadd.f32 %v8716, %v8744
    %v8787 = vadd.f32 %v8717, %v8744
    %v8788 = vadd.f32 %v8718, %v8744
    %v8789 = vadd.f32 %v8719, %v8744
    %v8790 = vadd.f32 %v8720, %v8744
    %v8791 = vadd.f32 %v8721, %v8744
    %v8792 = vadd.f32 %v8722, %v8744
    %v8793 = vadd.f32 %v8723, %v8744
    %v8794 = vadd.f32 %v8724, %v8744
    %v8795 = vadd.f32 %v8725, %v8744
    %v8796 = vadd.f32 %v8726, %v8744
    %v8797 = vadd.f32 %v8727, %v8744
    %v8798 = vadd.f32 %v8728, %v8744
    %v8799 = vadd.f32 %v8729, %v8744
    %v8800 = vadd.f32 %v8730, %v8744
    %v8801 = vadd.f32 %v8731, %v8744
    %v8802 = vadd.f32 %v8732, %v8744
    %v8803 = vadd.f32 %v8733, %v8744
    %v8804 = vadd.f32 %v8734, %v8744
    %v8805 = vadd.f32 %v8735, %v8744
    %v8806 = vadd.f32 %v8736, %v8744
    %v8807 = vadd.f32 %v8737, %v8744
    %v8808 = vadd.f32 %v8738, %v8744
    %v8809 = vadd.f32 %v8739, %v8744
    %v8810 = vmax.f32 %v8746, 0.0
    %v8811 = vmax.f32 %v8747, 0.0
    %v8812 = vmax.f32 %v8748, 0.0
    %v8813 = vmax.f32 %v8749, 0.0
    %v8814 = vmax.f32 %v8750, 0.0
    %v8815 = vmax.f32 %v8751, 0.0
    %v8816 = vmax.f32 %v8752, 0.0
    %v8817 = vmax.f32 %v8753, 0.0
    %v8818 = vmax.f32 %v8754, 0.0
    %v8819 = vmax.f32 %v8755, 0.0
    %v8820 = vmax.f32 %v8756, 0.0
    %v8821 = vmax.f32 %v8757, 0.0
    %v8822 = vmax.f32 %v8758, 0.0
    %v8823 = vmax.f32 %v8759, 0.0
    %v8824 = vmax.f32 %v8760, 0.0
    %v8825 = vmax.f32 %v8761, 0.0
    %v8826 = vmax.f32 %v8762, 0.0
    %v8827 = vmax.f32 %v8763, 0.0
    %v8828 = vmax.f32 %v8764, 0.0
    %v8829 = vmax.f32 %v8765, 0.0
    %v8830 = vmax.f32 %v8766, 0.0
    %v8831 = vmax.f32 %v8767, 0.0
    %v8832 = vmax.f32 %v8768, 0.0
    %v8833 = vmax.f32 %v8769, 0.0
    %v8834 = vmax.f32 %v8770, 0.0
    %v8835 = vmax.f32 %v8771, 0.0
    %v8836 = vmax.f32 %v8772, 0.0
    %v8837 = vmax.f32 %v8773, 0.0
    %v8838 = vmax.f32 %v8774, 0.0
    %v8839 = vmax.f32 %v8775, 0.0
    %v8840 = vmax.f32 %v8776, 0.0
    %v8841 = vmax.f32 %v8777, 0.0
    %v8842 = vmax.f32 %v8778, 0.0
    %v8843 = vmax.f32 %v8779, 0.0
    %v8844 = vmax.f32 %v8780, 0.0
    %v8845 = vmax.f32 %v8781, 0.0
    %v8846 = vmax.f32 %v8782, 0.0
    %v8847 = vmax.f32 %v8783, 0.0
    %v8848 = vmax.f32 %v8784, 0.0
    %v8849 = vmax.f32 %v8785, 0.0
    %v8850 = vmax.f32 %v8786, 0.0
    %v8851 = vmax.f32 %v8787, 0.0
    %v8852 = vmax.f32 %v8788, 0.0
    %v8853 = vmax.f32 %v8789, 0.0
    %v8854 = vmax.f32 %v8790, 0.0
    %v8855 = vmax.f32 %v8791, 0.0
    %v8856 = vmax.f32 %v8792, 0.0
    %v8857 = vmax.f32 %v8793, 0.0
    %v8858 = vmax.f32 %v8794, 0.0
    %v8859 = vmax.f32 %v8795, 0.0
    %v8860 = vmax.f32 %v8796, 0.0
    %v8861 = vmax.f32 %v8797, 0.0
    %v8862 = vmax.f32 %v8798, 0.0
    %v8863 = vmax.f32 %v8799, 0.0
    %v8864 = vmax.f32 %v8800, 0.0
    %v8865 = vmax.f32 %v8801, 0.0
    %v8866 = vmax.f32 %v8802, 0.0
    %v8867 = vmax.f32 %v8803, 0.0
    %v8868 = vmax.f32 %v8804, 0.0
    %v8869 = vmax.f32 %v8805, 0.0
    %v8870 = vmax.f32 %v8806, 0.0
    %v8871 = vmax.f32 %v8807, 0.0
    %v8872 = vmax.f32 %v8808, 0.0
    %v8873 = vmax.f32 %v8809, 0.0
    %8874 = vst [vmem:[#allocation14] sm:$0xff] %v8810
    %8875 = vst [vmem:[#allocation14 + $0x8] sm:$0xff] %v8811
    %8876 = vst [vmem:[#allocation14 + $0x10] sm:$0xff] %v8812
    %8877 = vst [vmem:[#allocation14 + $0x18] sm:$0xff] %v8813
    %8878 = vst [vmem:[#allocation14 + $0x20] sm:$0xff] %v8814
    %8879 = vst [vmem:[#allocation14 + $0x28] sm:$0xff] %v8815
    %8880 = vst [vmem:[#allocation14 + $0x30] sm:$0xff] %v8816
    %8881 = vst [vmem:[#allocation14 + $0x38] sm:$0xff] %v8817
    %8882 = vst [vmem:[#allocation14 + $0x40] sm:$0xff] %v8818
    %8883 = vst [vmem:[#allocation14 + $0x48] sm:$0xff] %v8819
    %8884 = vst [vmem:[#allocation14 + $0x50] sm:$0xff] %v8820
    %8885 = vst [vmem:[#allocation14 + $0x58] sm:$0xff] %v8821
    %8886 = vst [vmem:[#allocation14 + $0x60] sm:$0xff] %v8822
    %8887 = vst [vmem:[#allocation14 + $0x68] sm:$0xff] %v8823
    %8888 = vst [vmem:[#allocation14 + $0x70] sm:$0xff] %v8824
    %8889 = vst [vmem:[#allocation14 + $0x78] sm:$0xff] %v8825
    %8890 = vst [vmem:[#allocation14 + $0x80] sm:$0xff] %v8826
    %8891 = vst [vmem:[#allocation14 + $0x88] sm:$0xff] %v8827
    %8892 = vst [vmem:[#allocation14 + $0x90] sm:$0xff] %v8828
    %8893 = vst [vmem:[#allocation14 + $0x98] sm:$0xff] %v8829
    %8894 = vst [vmem:[#allocation14 + $0xa0] sm:$0xff] %v8830
    %8895 = vst [vmem:[#allocation14 + $0xa8] sm:$0xff] %v8831
    %8896 = vst [vmem:[#allocation14 + $0xb0] sm:$0xff] %v8832
    %8897 = vst [vmem:[#allocation14 + $0xb8] sm:$0xff] %v8833
    %8898 = vst [vmem:[#allocation14 + $0xc0] sm:$0xff] %v8834
    %8899 = vst [vmem:[#allocation14 + $0xc8] sm:$0xff] %v8835
    %8900 = vst [vmem:[#allocation14 + $0xd0] sm:$0xff] %v8836
    %8901 = vst [vmem:[#allocation14 + $0xd8] sm:$0xff] %v8837
    %8902 = vst [vmem:[#allocation14 + $0xe0] sm:$0xff] %v8838
    %8903 = vst [vmem:[#allocation14 + $0xe8] sm:$0xff] %v8839
    %8904 = vst [vmem:[#allocation14 + $0xf0] sm:$0xff] %v8840
    %8905 = vst [vmem:[#allocation14 + $0xf8] sm:$0xff] %v8841
    %8906 = vst [vmem:[#allocation14 + $0x100] sm:$0xff] %v8842
    %8907 = vst [vmem:[#allocation14 + $0x108] sm:$0xff] %v8843
    %8908 = vst [vmem:[#allocation14 + $0x110] sm:$0xff] %v8844
    %8909 = vst [vmem:[#allocation14 + $0x118] sm:$0xff] %v8845
    %8910 = vst [vmem:[#allocation14 + $0x120] sm:$0xff] %v8846
    %8911 = vst [vmem:[#allocation14 + $0x128] sm:$0xff] %v8847
    %8912 = vst [vmem:[#allocation14 + $0x130] sm:$0xff] %v8848
    %8913 = vst [vmem:[#allocation14 + $0x138] sm:$0xff] %v8849
    %8914 = vst [vmem:[#allocation14 + $0x140] sm:$0xff] %v8850
    %8915 = vst [vmem:[#allocation14 + $0x148] sm:$0xff] %v8851
    %8916 = vst [vmem:[#allocation14 + $0x150] sm:$0xff] %v8852
    %8917 = vst [vmem:[#allocation14 + $0x158] sm:$0xff] %v8853
    %8918 = vst [vmem:[#allocation14 + $0x160] sm:$0xff] %v8854
    %8919 = vst [vmem:[#allocation14 + $0x168] sm:$0xff] %v8855
    %8920 = vst [vmem:[#allocation14 + $0x170] sm:$0xff] %v8856
    %8921 = vst [vmem:[#allocation14 + $0x178] sm:$0xff] %v8857
    %8922 = vst [vmem:[#allocation14 + $0x180] sm:$0xff] %v8858
    %8923 = vst [vmem:[#allocation14 + $0x188] sm:$0xff] %v8859
    %8924 = vst [vmem:[#allocation14 + $0x190] sm:$0xff] %v8860
    %8925 = vst [vmem:[#allocation14 + $0x198] sm:$0xff] %v8861
    %8926 = vst [vmem:[#allocation14 + $0x1a0] sm:$0xff] %v8862
    %8927 = vst [vmem:[#allocation14 + $0x1a8] sm:$0xff] %v8863
    %8928 = vst [vmem:[#allocation14 + $0x1b0] sm:$0xff] %v8864
    %8929 = vst [vmem:[#allocation14 + $0x1b8] sm:$0xff] %v8865
    %8930 = vst [vmem:[#allocation14 + $0x1c0] sm:$0xff] %v8866
    %8931 = vst [vmem:[#allocation14 + $0x1c8] sm:$0xff] %v8867
    %8932 = vst [vmem:[#allocation14 + $0x1d0] sm:$0xff] %v8868
    %8933 = vst [vmem:[#allocation14 + $0x1d8] sm:$0xff] %v8869
    %8934 = vst [vmem:[#allocation14 + $0x1e0] sm:$0xff] %v8870
    %8935 = vst [vmem:[#allocation14 + $0x1e8] sm:$0xff] %v8871
    %8936 = vst [vmem:[#allocation14 + $0x1f0] sm:$0xff] %v8872
    %8937 = vst [vmem:[#allocation14 + $0x1f8] sm:$0xff] %v8873
    // Predicated region
    $region58: #{tpu_custom_call.1} parent=1 // pred_check
      _
    $region59: #{tpu_custom_call.1} parent=1 // pred_check_branch
      %8939 = sbr.rel (0) target = $region61
    $region60: #{tpu_custom_call.1} parent=1 // pred_region
      %s8941 = ssub.s32 8192, 8192
      %8942 = vsyncadd [#allocation7], %s8941
      %s8943 = sshll.u32 [#allocation14], 4
      %s8944 = int_to_ptr.vmem [resolvable:$true] %s8943
      %8949 = dma.vmem_to_hbm [thread:$0]  %s8944, 8192, %s9, [#allocation7], 128, 128, 8
    $region61: #{tpu_custom_call.1} parent=1 // pred_fallthru
      _
    // Predicated region
    $region62: #{tpu_custom_call.1} parent=1 // pred_check
      _
    $region63: #{tpu_custom_call.1} parent=1 // pred_check_branch
      %8951 = sbr.rel (0) target = $region65
    $region64: #{tpu_custom_call.1} parent=1 // pred_region
      %8952 = dma.done [#allocation7], 8192
    $region65: #{tpu_custom_call.1} parent=1 // pred_fallthru
      _
    %8953 = vsyncpa [#allocation6], 1
    %8954 = vsyncpa [#allocation9], 1
    %8955 = vsyncpa [#allocation12], 1
    %8956 = vsyncpa [#allocation7], 1

</llo_original>
